<compile_context>
chip_gen: v6e
topology: v6e:2x2x1
jax: 0.10.0
libtpu: 0.0.40
codegen_flags: <defaults>
</compile_context>

<pallas_src>
import jax
import jax.numpy as jnp
from jax.experimental import pallas as pl
from jax.experimental.pallas import tpu as pltpu

FEATURE_VECTOR_SIZE = 32
PATCH_H = PATCH_W = 9

# bf16 MXU operands only when actually running on TPU hardware; on CPU
# (e.g. Pallas interpret-mode) XLA's DotThunk cannot execute bf16 x bf16 -> f32,
# so fall back to f32 operands there (accumulation is f32 in both cases).
_MXU_DTYPE = jnp.bfloat16 if jax.default_backend() == "tpu" else jnp.float32

# Pairs per grid step.  Multiple of 128 (lane-tiled batch axis).  With bf16
# activations and the branch-fused N=2T matmuls, live VMEM per step at T=1024 is
# ~13 MiB (constant-index weight blocks double-buffered included), which fits
# every generation's budget; the explicit limit below adds headroom.
MAX_PAIRS_PER_TILE = 1024
_VMEM_LIMIT_BYTES = 48 * 1024 * 1024   # safe on v7x (64 MiB phys), ample on v5e/v6e


# --------------------------------------------------------------------------
# Fused Pallas kernel: whole network forward for one tile of patch pairs
# --------------------------------------------------------------------------
def _fused_kernel(l_ref, r_ref, w1_ref, b1_ref, w2_ref, b2_ref, w3_ref,
                  b3_ref, m_ref, o_ref):
    """DiffNormSqrNetwork forward for one tile of T patch pairs.

    l_ref/r_ref : (81, T)     flattened 9x9 left/right patches, batch on lanes,
                              already cast to the MXU operand dtype
    wK_ref      : (outK, inK) dense unrolled conv-K matrix
    bK_ref      : (outK, 1)   f32 bias (tiled over output positions)
    m_ref       : (32, 32)    f32 metric tensor
    o_ref       : (1, T)      f32 squared distances (lane-dense)
    """
    wdt = w1_ref.dtype
    t = l_ref.shape[1]

    # Branch fusion: run the shared ("siamese") feature extractor ONCE on the
    # lane-concatenated [left | right] batch -> one matmul per layer with N=2T.
    x = jnp.concatenate([l_ref[...], r_ref[...]], axis=1)            # (81, 2T)

    h = jnp.dot(w1_ref[...], x, preferred_element_type=jnp.float32)
    h = jnp.maximum(h + b1_ref[...], 0.0).astype(wdt)                # (784, 2T)
    h = jnp.dot(w2_ref[...], h, preferred_element_type=jnp.float32)
    h = jnp.maximum(h + b2_ref[...], 0.0).astype(wdt)                # (800, 2T)
    h = jnp.dot(w3_ref[...], h, preferred_element_type=jnp.float32)
    h = h + b3_ref[...]                                              # (32, 2T) f32

    d = h[:, :t] - h[:, t:]                                          # (32, T)  f32
    dm = jnp.dot(m_ref[...], d, preferred_element_type=jnp.float32)
    # d^T M d per pair; sublane reduction -> lane-dense (1, T) output.  With
    # bf16 operands this may be marginally negative for near-identical patches;
    # left unclamped to keep the original module's semantics.
    o_ref[...] = jnp.sum(dm * d, axis=0, keepdims=True)


# --------------------------------------------------------------------------
# Parameter packing: fold each valid conv into an exact dense matrix
# --------------------------------------------------------------------------
def _conv_to_dense(w_oihw, in_h, in_w):
    """Exact dense matrix of a VALID stride-1 conv.

    Rows are the input flattened in (H, W, Cin) order, columns the output
    flattened in (OH, OW, Cout) order.  Built by pushing the identity basis
    through lax.conv (HIGHEST precision => entries are exact weight copies).
    """
    cout, cin, kh, kw = w_oihw.shape
    n_in = in_h * in_w * cin
    basis = jnp.eye(n_in, dtype=jnp.float32).reshape(n_in, in_h, in_w, cin)
    w_hwio = jnp.transpose(w_oihw, (2, 3, 1, 0))       # (KH, KW, Cin, Cout)
    out = jax.lax.conv_general_dilated(
        basis, w_hwio, window_strides=(1, 1), padding="VALID",
        dimension_numbers=("NHWC", "HWIO", "NHWC"),
        precision=jax.lax.Precision.HIGHEST)            # (n_in, OH, OW, Cout)
    oh, ow = in_h - kh + 1, in_w - kw + 1
    return out.reshape(n_in, oh * ow * cout)


def pack_params(params, mxu_dtype=_MXU_DTYPE):
    """Pack conv weights into transposed dense matrices for the fused kernel.

    Done once per parameter update (see make_diff_norm_sqr_forward), not per
    forward.
    """
    w1d = _conv_to_dense(params["w1"], 9, 9)           # (81, 784)
    w2d = _conv_to_dense(params["w2"], 7, 7)           # (784, 800)
    w3d = _conv_to_dense(params["w3"], 5, 5)           # (800, 32)
    return {
        "w1": w1d.T.astype(mxu_dtype),                                  # (784, 81)
        "b1": jnp.tile(params["b1"], 49)[:, None].astype(jnp.float32),  # (784, 1)
        "w2": w2d.T.astype(mxu_dtype),                                  # (800, 784)
        "b2": jnp.tile(params["b2"], 25)[:, None].astype(jnp.float32),  # (800, 1)
        "w3": w3d.T.astype(mxu_dtype),                                  # (32, 800)
        "b3": params["b3"][:, None].astype(jnp.float32),                # (32, 1)
        "metric": params["metric"].astype(jnp.float32),                 # (32, 32)
    }


def _patches_to_2d(patch_nchw):
    """(B, Cin, H, W) -> (H*W*Cin, B): flatten in HWC order, batch on lanes."""
    b = patch_nchw.shape[0]
    return jnp.transpose(patch_nchw, (0, 2, 3, 1)).reshape(b, -1).T


# --------------------------------------------------------------------------
# Wrapper: batch tiling + single fused pallas_call
# --------------------------------------------------------------------------
_WEIGHT_ORDER = ("w1", "b1", "w2", "b2", "w3", "b3", "metric")


def _round_up(x, m):
    return ((x + m - 1) // m) * m


def _choose_tiling(batch):
    """Return (tile, padded_batch): lane-dense tiles, >=2 steps for big batches."""
    b128 = max(_round_up(batch, 128), 128)      # avoid masked partial stores
    if b128 <= 512:
        return b128, b128                       # single grid step
    # Large batch: cap the tile and guarantee >= 2 grid steps so the "parallel"
    # batch axis can be split across both v7x TensorCores.
    tile = min(MAX_PAIRS_PER_TILE, _round_up(pl.cdiv(b128, 2), 128))
    return tile, _round_up(batch, tile)


def _forward_packed(packed, left2d, right2d):
    n_in, batch = left2d.shape                  # (81, B)
    tile, b_pad = _choose_tiling(batch)
    if b_pad != batch:
        pad = ((0, 0), (0, b_pad - batch))
        left2d = jnp.pad(left2d, pad)
        right2d = jnp.pad(right2d, pad)

    mxu_dtype = packed["w1"].dtype
    left2d = left2d.astype(mxu_dtype)           # halves input HBM traffic on TPU
    right2d = right2d.astype(mxu_dtype)

    batch_spec = pl.BlockSpec((n_in, tile), lambda i: (0, i))

    def rep(x):
        # Constant-index full-array block: fetched once and kept resident across
        # grid steps.  (Single-buffering via pipeline_mode would save ~1.5 MiB
        # more VMEM; skipped here since the budget already has ample headroom.)
        return pl.BlockSpec(x.shape, lambda i: (0, 0))

    weight_bytes = sum(int(packed[k].size) * packed[k].dtype.itemsize
                       for k in _WEIGHT_ORDER)
    flops_per_pair = 4 * (81 * 784 + 784 * 800 + 800 * 32) + 2 * 32 * 32 + 3 * 32
    cost = pl.CostEstimate(
        flops=flops_per_pair * b_pad,
        transcendentals=0,
        bytes_accessed=(2 * n_in * b_pad * left2d.dtype.itemsize
                        + weight_bytes + 4 * b_pad))

    out = pl.pallas_call(
        _fused_kernel,
        out_shape=jax.ShapeDtypeStruct((1, b_pad), jnp.float32),
        grid=(b_pad // tile,),
        in_specs=[batch_spec, batch_spec] + [rep(packed[k]) for k in _WEIGHT_ORDER],
        out_specs=pl.BlockSpec((1, tile), lambda i: (0, i)),
        compiler_params=pltpu.CompilerParams(
            dimension_semantics=("parallel",),
            vmem_limit_bytes=_VMEM_LIMIT_BYTES),
        cost_estimate=cost,
    )(left2d, right2d, *(packed[k] for k in _WEIGHT_ORDER))
    return out[0, :batch]


def make_diff_norm_sqr_forward(params, mxu_dtype=_MXU_DTYPE):
    """Pack parameters ONCE (per parameter update) and return a jitted forward."""
    packed = pack_params(params, mxu_dtype)

    @jax.jit
    def forward(left_patch, right_patch):
        return _forward_packed(packed, _patches_to_2d(left_patch),
                               _patches_to_2d(right_patch))

    return forward


def diff_norm_sqr_network(params, left_patch, right_patch, mxu_dtype=_MXU_DTYPE):
    """One-shot convenience wrapper (packs per call; prefer make_..._forward)."""
    return _forward_packed(pack_params(params, mxu_dtype),
                           _patches_to_2d(left_patch), _patches_to_2d(right_patch))


# --------------------------------------------------------------------------
# Parameter init (deterministic, representative)
# --------------------------------------------------------------------------
def init_params(key):
    ks = jax.random.split(key, 4)

    def conv_w(k, cout, cin, kh, kw):
        fan_in = cin * kh * kw
        return jax.random.normal(k, (cout, cin, kh, kw), jnp.float32) * (2.0 / fan_in) ** 0.5

    params = {
        "w1": conv_w(ks[0], 16, 1, 3, 3),
        "b1": jnp.zeros((16,), jnp.float32),
        "w2": conv_w(ks[1], 32, 16, 3, 3),
        "b2": jnp.zeros((32,), jnp.float32),
        "w3": conv_w(ks[2], FEATURE_VECTOR_SIZE, 32, 5, 5),
        "b3": jnp.zeros((FEATURE_VECTOR_SIZE,), jnp.float32),
    }
    a = jax.random.normal(ks[3], (FEATURE_VECTOR_SIZE, FEATURE_VECTOR_SIZE), jnp.float32)
    params["metric"] = (a @ a.T / FEATURE_VECTOR_SIZE
                        + 0.1 * jnp.eye(FEATURE_VECTOR_SIZE)).astype(jnp.float32)
    return params


# --------------------------------------------------------------------------
# Pure-JAX references (correctness checks only)
# --------------------------------------------------------------------------
def _reference(params, left_patch, right_patch):
    hp = jax.lax.Precision.HIGHEST

    def feats(x):
        def conv(x, w, b, relu):
            y = jax.lax.conv_general_dilated(
                x, w, window_strides=(1, 1), padding="VALID",
                dimension_numbers=("NCHW", "OIHW", "NCHW"), precision=hp)
            y = y + b[None, :, None, None]
            return jnp.maximum(y, 0.0) if relu else y
        h = conv(x, params["w1"], params["b1"], True)
        h = conv(h, params["w2"], params["b2"], True)
        h = conv(h, params["w3"], params["b3"], False)
        return h.reshape(h.shape[0], FEATURE_VECTOR_SIZE)

    d = feats(left_patch) - feats(right_patch)
    return jnp.einsum("bi,ij,bj->b", d, params["metric"], d, precision=hp)


def _packed_reference(params, left_patch, right_patch):
    """Same packed-matrix math as the kernel, in plain f32 JAX (validates packing)."""
    hp = jax.lax.Precision.HIGHEST
    packed = pack_params(params, mxu_dtype=jnp.float32)

    def feats(x2d):
        h = jnp.maximum(jnp.dot(packed["w1"], x2d, precision=hp) + packed["b1"], 0.0)
        h = jnp.maximum(jnp.dot(packed["w2"], h, precision=hp) + packed["b2"], 0.0)
        return jnp.dot(packed["w3"], h, precision=hp) + packed["b3"]

    d = feats(_patches_to_2d(left_patch)) - feats(_patches_to_2d(right_patch))
    dm = jnp.dot(packed["metric"], d, precision=hp)
    return jnp.sum(dm * d, axis=0)


if __name__ == "__main__":
    key = jax.random.PRNGKey(0)
    k_params, k_left, k_right = jax.random.split(key, 3)

    params = init_params(k_params)
    # small stereo patches: batch=2, channels=1, 9x9 (NCHW, PyTorch convention)
    left_patch = jax.random.normal(k_left, (2, 1, 9, 9), jnp.float32)
    right_patch = jax.random.normal(k_right, (2, 1, 9, 9), jnp.float32)

    forward = make_diff_norm_sqr_forward(params)     # pack once, jit once
    out = jax.block_until_ready(forward(left_patch, right_patch))

    ref = jax.block_until_ready(_reference(params, left_patch, right_patch))
    packed_ref = jax.block_until_ready(
        _packed_reference(params, left_patch, right_patch))

    assert out.shape == (2,)
    # The dense-packed (f32) formulation must match the conv reference closely:
    assert jnp.allclose(packed_ref, ref, rtol=1e-3, atol=1e-3), (packed_ref, ref)
    # Kernel tolerance depends on whether the MXU operands are bf16 (TPU) or f32:
    tol = 1e-3 if _MXU_DTYPE == jnp.float32 else 5e-2
    assert jnp.allclose(out, ref, rtol=tol, atol=tol), (out, ref)

    print("KERNEL_OK")
</pallas_src>

<mosaic_0001>
module attributes {stable_mosaic.version = 11 : i64} {
  func.func @_fused_kernel(%arg0: i32, %arg1: memref<81x128xf32, #tpu.memory_space<vmem>>, %arg2: memref<81x128xf32, #tpu.memory_space<vmem>>, %arg3: memref<784x81xf32, #tpu.memory_space<vmem>>, %arg4: memref<784x1xf32, #tpu.memory_space<vmem>>, %arg5: memref<800x784xf32, #tpu.memory_space<vmem>>, %arg6: memref<800x1xf32, #tpu.memory_space<vmem>>, %arg7: memref<32x800xf32, #tpu.memory_space<vmem>>, %arg8: memref<32x1xf32, #tpu.memory_space<vmem>>, %arg9: memref<32x32xf32, #tpu.memory_space<vmem>>, %arg10: memref<1x128xf32, #tpu.memory_space<vmem>>) attributes {dimension_semantics = [#tpu.dimension_semantics<parallel>], iteration_bounds = array<i64: 1>, scalar_prefetch = 0 : i64, scratch_operands = 0 : i64, tpu.core_type = #tpu.core_type<tc>, window_params = [{transform_indices = @transform_0, window_bounds = array<i64: 81, 128>}, {transform_indices = @transform_1, window_bounds = array<i64: 81, 128>}, {pipeline_mode = #tpu.pipeline_mode<synchronous>, transform_indices = @transform_2, window_bounds = array<i64: 784, 81>}, {pipeline_mode = #tpu.pipeline_mode<synchronous>, transform_indices = @transform_3, window_bounds = array<i64: 784, 1>}, {pipeline_mode = #tpu.pipeline_mode<synchronous>, transform_indices = @transform_4, window_bounds = array<i64: 800, 784>}, {pipeline_mode = #tpu.pipeline_mode<synchronous>, transform_indices = @transform_5, window_bounds = array<i64: 800, 1>}, {pipeline_mode = #tpu.pipeline_mode<synchronous>, transform_indices = @transform_6, window_bounds = array<i64: 32, 800>}, {pipeline_mode = #tpu.pipeline_mode<synchronous>, transform_indices = @transform_7, window_bounds = array<i64: 32, 1>}, {pipeline_mode = #tpu.pipeline_mode<synchronous>, transform_indices = @transform_8, window_bounds = array<i64: 32, 32>}, {transform_indices = @transform_9, window_bounds = array<i64: 1, 128>}]} {
    %c0 = arith.constant 0 : index
    %c0_0 = arith.constant 0 : index
    %0 = vector.load %arg1[%c0, %c0_0] : memref<81x128xf32, #tpu.memory_space<vmem>>, vector<81x128xf32>
    %c0_1 = arith.constant 0 : index
    %c0_2 = arith.constant 0 : index
    %1 = vector.load %arg2[%c0_1, %c0_2] : memref<81x128xf32, #tpu.memory_space<vmem>>, vector<81x128xf32>
    %2 = tpu.concatenate %0, %1 in 1 : vector<81x128xf32>, vector<81x128xf32> -> vector<81x256xf32>
    %c0_3 = arith.constant 0 : index
    %c0_4 = arith.constant 0 : index
    %3 = vector.load %arg3[%c0_3, %c0_4] : memref<784x81xf32, #tpu.memory_space<vmem>>, vector<784x81xf32>
    %cst = arith.constant dense<0.000000e+00> : vector<784x256xf32>
    %4 = tpu.matmul %3, %2, %cst {dimension_numbers = #tpu.dot_dimension_numbers<[1], [0], [0], [1], [0, 0, 1, 1], [], []>} : vector<784x81xf32>, vector<81x256xf32>, vector<784x256xf32> -> vector<784x256xf32>
    %c0_5 = arith.constant 0 : index
    %c0_6 = arith.constant 0 : index
    %5 = vector.load %arg4[%c0_5, %c0_6] : memref<784x1xf32, #tpu.memory_space<vmem>>, vector<784x1xf32>
    %6 = vector.broadcast %5 : vector<784x1xf32> to vector<784x256xf32>
    %7 = arith.addf %4, %6 : vector<784x256xf32>
    %cst_7 = arith.constant 0.000000e+00 : f32
    %8 = vector.broadcast %cst_7 : f32 to vector<784x256xf32>
    %9 = arith.maximumf %7, %8 : vector<784x256xf32>
    %c0_8 = arith.constant 0 : index
    %c0_9 = arith.constant 0 : index
    %10 = vector.load %arg5[%c0_8, %c0_9] : memref<800x784xf32, #tpu.memory_space<vmem>>, vector<800x784xf32>
    %cst_10 = arith.constant dense<0.000000e+00> : vector<800x256xf32>
    %11 = tpu.matmul %10, %9, %cst_10 {dimension_numbers = #tpu.dot_dimension_numbers<[1], [0], [0], [1], [0, 0, 1, 1], [], []>} : vector<800x784xf32>, vector<784x256xf32>, vector<800x256xf32> -> vector<800x256xf32>
    %c0_11 = arith.constant 0 : index
    %c0_12 = arith.constant 0 : index
    %12 = vector.load %arg6[%c0_11, %c0_12] : memref<800x1xf32, #tpu.memory_space<vmem>>, vector<800x1xf32>
    %13 = vector.broadcast %12 : vector<800x1xf32> to vector<800x256xf32>
    %14 = arith.addf %11, %13 : vector<800x256xf32>
    %cst_13 = arith.constant 0.000000e+00 : f32
    %15 = vector.broadcast %cst_13 : f32 to vector<800x256xf32>
    %16 = arith.maximumf %14, %15 : vector<800x256xf32>
    %c0_14 = arith.constant 0 : index
    %c0_15 = arith.constant 0 : index
    %17 = vector.load %arg7[%c0_14, %c0_15] : memref<32x800xf32, #tpu.memory_space<vmem>>, vector<32x800xf32>
    %cst_16 = arith.constant dense<0.000000e+00> : vector<32x256xf32>
    %18 = tpu.matmul %17, %16, %cst_16 {dimension_numbers = #tpu.dot_dimension_numbers<[1], [0], [0], [1], [0, 0, 1, 1], [], []>} : vector<32x800xf32>, vector<800x256xf32>, vector<32x256xf32> -> vector<32x256xf32>
    %c0_17 = arith.constant 0 : index
    %c0_18 = arith.constant 0 : index
    %19 = vector.load %arg8[%c0_17, %c0_18] : memref<32x1xf32, #tpu.memory_space<vmem>>, vector<32x1xf32>
    %20 = vector.broadcast %19 : vector<32x1xf32> to vector<32x256xf32>
    %21 = arith.addf %18, %20 : vector<32x256xf32>
    %22 = vector.extract_strided_slice %21 {offsets = [0, 0], sizes = [32, 128], strides = [1, 1]} : vector<32x256xf32> to vector<32x128xf32>
    %23 = vector.extract_strided_slice %21 {offsets = [0, 128], sizes = [32, 128], strides = [1, 1]} : vector<32x256xf32> to vector<32x128xf32>
    %24 = arith.subf %22, %23 : vector<32x128xf32>
    %c0_19 = arith.constant 0 : index
    %c0_20 = arith.constant 0 : index
    %25 = vector.load %arg9[%c0_19, %c0_20] : memref<32x32xf32, #tpu.memory_space<vmem>>, vector<32x32xf32>
    %cst_21 = arith.constant dense<0.000000e+00> : vector<32x128xf32>
    %26 = tpu.matmul %25, %24, %cst_21 {dimension_numbers = #tpu.dot_dimension_numbers<[1], [0], [0], [1], [0, 0, 1, 1], [], []>} : vector<32x32xf32>, vector<32x128xf32>, vector<32x128xf32> -> vector<32x128xf32>
    %27 = arith.mulf %26, %24 : vector<32x128xf32>
    %cst_22 = arith.constant dense<0.000000e+00> : vector<128xf32>
    %28 = vector.multi_reduction <add>, %27, %cst_22 [0] : vector<32x128xf32> to vector<128xf32>
    %29 = vector.shape_cast %28 : vector<128xf32> to vector<1x128xf32>
    %c0_23 = arith.constant 0 : index
    %c0_24 = arith.constant 0 : index
    %30 = vector.load %arg10[%c0_23, %c0_24] : memref<1x128xf32, #tpu.memory_space<vmem>>, vector<1x128xf32>
    tpu.vector_store %arg10[%c0_23, %c0_24], %29 {strides = array<i32>} : memref<1x128xf32, #tpu.memory_space<vmem>>, vector<1x128xf32>,
    return
  }
  func.func @transform_0(%arg0: i32) -> (i32, i32) {
    %c0_i32 = arith.constant 0 : i32
    %c0_i32_0 = arith.constant 0 : i32
    return %c0_i32, %arg0 : i32, i32
  }
  func.func @transform_1(%arg0: i32) -> (i32, i32) {
    %c0_i32 = arith.constant 0 : i32
    %c0_i32_0 = arith.constant 0 : i32
    return %c0_i32, %arg0 : i32, i32
  }
  func.func @transform_2(%arg0: i32) -> (i32, i32) {
    %c0_i32 = arith.constant 0 : i32
    %c0_i32_0 = arith.constant 0 : i32
    %c0_i32_1 = arith.constant 0 : i32
    return %c0_i32, %c0_i32_0 : i32, i32
  }
  func.func @transform_3(%arg0: i32) -> (i32, i32) {
    %c0_i32 = arith.constant 0 : i32
    %c0_i32_0 = arith.constant 0 : i32
    %c0_i32_1 = arith.constant 0 : i32
    return %c0_i32, %c0_i32_0 : i32, i32
  }
  func.func @transform_4(%arg0: i32) -> (i32, i32) {
    %c0_i32 = arith.constant 0 : i32
    %c0_i32_0 = arith.constant 0 : i32
    %c0_i32_1 = arith.constant 0 : i32
    return %c0_i32, %c0_i32_0 : i32, i32
  }
  func.func @transform_5(%arg0: i32) -> (i32, i32) {
    %c0_i32 = arith.constant 0 : i32
    %c0_i32_0 = arith.constant 0 : i32
    %c0_i32_1 = arith.constant 0 : i32
    return %c0_i32, %c0_i32_0 : i32, i32
  }
  func.func @transform_6(%arg0: i32) -> (i32, i32) {
    %c0_i32 = arith.constant 0 : i32
    %c0_i32_0 = arith.constant 0 : i32
    %c0_i32_1 = arith.constant 0 : i32
    return %c0_i32, %c0_i32_0 : i32, i32
  }
  func.func @transform_7(%arg0: i32) -> (i32, i32) {
    %c0_i32 = arith.constant 0 : i32
    %c0_i32_0 = arith.constant 0 : i32
    %c0_i32_1 = arith.constant 0 : i32
    return %c0_i32, %c0_i32_0 : i32, i32
  }
  func.func @transform_8(%arg0: i32) -> (i32, i32) {
    %c0_i32 = arith.constant 0 : i32
    %c0_i32_0 = arith.constant 0 : i32
    %c0_i32_1 = arith.constant 0 : i32
    return %c0_i32, %c0_i32_0 : i32, i32
  }
  func.func @transform_9(%arg0: i32) -> (i32, i32) {
    %c0_i32 = arith.constant 0 : i32
    %c0_i32_0 = arith.constant 0 : i32
    return %c0_i32, %arg0 : i32, i32
  }
}

</mosaic_0001>

<llo_original>
// kernel: forward.1
$region0: #{forward.1}
  #allocation0 [shape = 'u32[]', space=smem, size = 0x4, offset = 0x4, fixed_abs, tag = 'smem constant byte address 0x4 - core index']
  #allocation1 [shape = 'u32[144,128]{1,0:T(1,128)}', space=vmem, size = 0x12000, scoped, tag = 'internal scratch']
  %s0 = inlined_call_operand.vmem [shape: f32[81,128], index: 0, kind: input, shape index: {}]
  %s1 = inlined_call_operand.vmem [shape: f32[81,128], index: 1, kind: input, shape index: {}]
  %s2 = inlined_call_operand.hbm [shape: f32[784,81], index: 2, kind: input, shape index: {}]
  %s3 = inlined_call_operand.vmem [shape: f32[784,1], index: 3, kind: input, shape index: {}]
  %s4 = inlined_call_operand.hbm [shape: f32[800,784], index: 4, kind: input, shape index: {}]
  %s5 = inlined_call_operand.vmem [shape: f32[800,1], index: 5, kind: input, shape index: {}]
  %s6 = inlined_call_operand.hbm [shape: f32[32,800], index: 6, kind: input, shape index: {}]
  %s7 = inlined_call_operand.vmem [shape: f32[32,1], index: 7, kind: input, shape index: {}]
  %s8 = inlined_call_operand.hbm [shape: f32[32,32], index: 8, kind: input, shape index: {}]
  %s9 = inlined_call_operand.vmem [shape: f32[1,128], index: 9, kind: output, shape index: {}]
  %s10 = sld [smem:[#allocation0]]
  $region62: #{forward.1} parent=0
    _
  %s12 = ssub.s32 1, %s10
  %s13 = scalar_select 0, %s12, %s10
  $region1: #{forward.1} parent=0
    #allocation2 [shape = 'u8[401408]{0}', space=vmem, size = 0x62000, scoped, tag = 'input window, operand 2, single buffered']
    #allocation3 [shape = 's32[1]{0}', space=sflag, size = 0x4, scoped, tag = 'scoped memory for forward.1']
    #allocation4 [shape = 'u8[2867200]{0}', space=vmem, size = 0x2bc000, scoped, tag = 'input window, operand 4, single buffered']
    #allocation5 [shape = 's32[1]{0}', space=sflag, size = 0x4, scoped, tag = 'scoped memory for forward.1']
    #allocation6 [shape = 'u8[114688]{0}', space=vmem, size = 0x1c000, scoped, tag = 'input window, operand 6, single buffered']
    #allocation7 [shape = 'u8[16384]{0}', space=vmem, size = 0x4000, scoped, tag = 'input window, operand 8, single buffered']
    #allocation8 [shape = 's32[1]{0}', space=sflag, size = 0x4, scoped, tag = 'scoped memory for forward.1']
    %14 = vsyncpa [#allocation3], 0
    %15 = vsyncpa [#allocation5], 0
    %16 = vsyncpa [#allocation8], 0
    // Predicated region
    $region2: #{forward.1} parent=1 // pred_check
      _
    $region3: #{forward.1} parent=1 // pred_check_branch
      %18 = sbr.rel (0) target = $region5
    $region4: #{forward.1} parent=1 // pred_region
      _
    $region5: #{forward.1} parent=1 // pred_fallthru
      _
    // Predicated region
    $region6: #{forward.1} parent=1 // pred_check
      _
    $region7: #{forward.1} parent=1 // pred_check_branch
      %20 = sbr.rel (0) target = $region9
    $region8: #{forward.1} parent=1 // pred_region
      _
    $region9: #{forward.1} parent=1 // pred_fallthru
      _
    // Predicated region
    $region10: #{forward.1} parent=1 // pred_check
      _
    $region11: #{forward.1} parent=1 // pred_check_branch
      %22 = sbr.rel (0) target = $region13
    $region12: #{forward.1} parent=1 // pred_region
      %s24 = ssub.s32 12544, 12544
      %25 = vsyncadd [#allocation3], %s24
      %s26 = sshll.u32 [#allocation2], 4
      %s27 = int_to_ptr.vmem [resolvable:$true] %s26
      %32 = dma.hbm_to_vmem [thread:$0]  %s2, 12544, %s27, [#allocation3], 128, 128, 8
    $region13: #{forward.1} parent=1 // pred_fallthru
      _
    // Predicated region
    $region14: #{forward.1} parent=1 // pred_check
      _
    $region15: #{forward.1} parent=1 // pred_check_branch
      %34 = sbr.rel (0) target = $region17
    $region16: #{forward.1} parent=1 // pred_region
      _
    $region17: #{forward.1} parent=1 // pred_fallthru
      _
    // Predicated region
    $region18: #{forward.1} parent=1 // pred_check
      _
    $region19: #{forward.1} parent=1 // pred_check_branch
      %36 = sbr.rel (0) target = $region21
    $region20: #{forward.1} parent=1 // pred_region
      %s38 = ssub.s32 89600, 89600
      %39 = vsyncadd [#allocation5], %s38
      %s40 = sshll.u32 [#allocation4], 4
      %s41 = int_to_ptr.vmem [resolvable:$true] %s40
      %46 = dma.hbm_to_vmem [thread:$0]  %s4, 89600, %s41, [#allocation5], 896, 896, 56
    $region21: #{forward.1} parent=1 // pred_fallthru
      _
    // Predicated region
    $region22: #{forward.1} parent=1 // pred_check
      _
    $region23: #{forward.1} parent=1 // pred_check_branch
      %48 = sbr.rel (0) target = $region25
    $region24: #{forward.1} parent=1 // pred_region
      _
    $region25: #{forward.1} parent=1 // pred_fallthru
      _
    // Predicated region
    $region26: #{forward.1} parent=1 // pred_check
      _
    $region27: #{forward.1} parent=1 // pred_check_branch
      %50 = sbr.rel (0) target = $region29
    $region28: #{forward.1} parent=1 // pred_region
      %s52 = ssub.s32 3584, 3584
      %53 = vsyncadd [#allocation5], %s52
      %s54 = sshll.u32 [#allocation6], 4
      %s55 = int_to_ptr.vmem [resolvable:$true] %s54
      %60 = dma.hbm_to_vmem [thread:$0]  %s6, 3584, %s55, [#allocation5], 896, 896, 56
    $region29: #{forward.1} parent=1 // pred_fallthru
      _
    // Predicated region
    $region30: #{forward.1} parent=1 // pred_check
      _
    $region31: #{forward.1} parent=1 // pred_check_branch
      %62 = sbr.rel (0) target = $region33
    $region32: #{forward.1} parent=1 // pred_region
      _
    $region33: #{forward.1} parent=1 // pred_fallthru
      _
    // Predicated region
    $region34: #{forward.1} parent=1 // pred_check
      _
    $region35: #{forward.1} parent=1 // pred_check_branch
      %64 = sbr.rel (0) target = $region37
    $region36: #{forward.1} parent=1 // pred_region
      %s66 = ssub.s32 512, 512
      %67 = vsyncadd [#allocation8], %s66
      %s68 = sshll.u32 [#allocation7], 4
      %s69 = int_to_ptr.vmem [resolvable:$true] %s68
      %74 = dma.hbm_to_vmem [thread:$0]  %s8, 512, %s69, [#allocation8], 128, 128, 8
    $region37: #{forward.1} parent=1 // pred_fallthru
      _
    // Predicated region
    $region38: #{forward.1} parent=1 // pred_check
      _
    $region39: #{forward.1} parent=1 // pred_check_branch
      %76 = sbr.rel (0) target = $region41
    $region40: #{forward.1} parent=1 // pred_region
      %77 = dma.done [#allocation3], 12544
    $region41: #{forward.1} parent=1 // pred_fallthru
      _
    // Predicated region
    $region42: #{forward.1} parent=1 // pred_check
      _
    $region43: #{forward.1} parent=1 // pred_check_branch
      %79 = sbr.rel (0) target = $region45
    $region44: #{forward.1} parent=1 // pred_region
      %80 = dma.done [#allocation5], 89600
    $region45: #{forward.1} parent=1 // pred_fallthru
      _
    // Predicated region
    $region46: #{forward.1} parent=1 // pred_check
      _
    $region47: #{forward.1} parent=1 // pred_check_branch
      %82 = sbr.rel (0) target = $region49
    $region48: #{forward.1} parent=1 // pred_region
      %83 = dma.done [#allocation5], 3584
    $region49: #{forward.1} parent=1 // pred_fallthru
      _
    // Predicated region
    $region50: #{forward.1} parent=1 // pred_check
      _
    $region51: #{forward.1} parent=1 // pred_check_branch
      %85 = sbr.rel (0) target = $region53
    $region52: #{forward.1} parent=1 // pred_region
      %86 = dma.done [#allocation8], 512
    $region53: #{forward.1} parent=1 // pred_fallthru
      _
    %v87 = vld [vmem:[%s0] sm:$0xff]
    %v88 = vld [vmem:[%s0 + $0x8] sm:$0xff]
    %v89 = vld [vmem:[%s0 + $0x10] sm:$0xff]
    %v90 = vld [vmem:[%s0 + $0x18] sm:$0xff]
    %v91 = vld [vmem:[%s0 + $0x20] sm:$0xff]
    %v92 = vld [vmem:[%s0 + $0x28] sm:$0xff]
    %v93 = vld [vmem:[%s0 + $0x30] sm:$0xff]
    %v94 = vld [vmem:[%s0 + $0x38] sm:$0xff]
    %v95 = vld [vmem:[%s0 + $0x40] sm:$0xff]
    %v96 = vld [vmem:[%s0 + $0x48] sm:$0xff]
    %v97 = vld [vmem:[%s0 + $0x50] sm:$0x1]
    %v98 = vld [vmem:[%s1] sm:$0xff]
    %v99 = vld [vmem:[%s1 + $0x8] sm:$0xff]
    %v100 = vld [vmem:[%s1 + $0x10] sm:$0xff]
    %v101 = vld [vmem:[%s1 + $0x18] sm:$0xff]
    %v102 = vld [vmem:[%s1 + $0x20] sm:$0xff]
    %v103 = vld [vmem:[%s1 + $0x28] sm:$0xff]
    %v104 = vld [vmem:[%s1 + $0x30] sm:$0xff]
    %v105 = vld [vmem:[%s1 + $0x38] sm:$0xff]
    %v106 = vld [vmem:[%s1 + $0x40] sm:$0xff]
    %v107 = vld [vmem:[%s1 + $0x48] sm:$0xff]
    %v108 = vld [vmem:[%s1 + $0x50] sm:$0x1]
    %v109 = vld [vmem:[#allocation2] sm:$0xff]
    %v110 = vld [vmem:[#allocation2 + $0x8] sm:$0xff]
    %v111 = vld [vmem:[#allocation2 + $0x10] sm:$0xff]
    %v112 = vld [vmem:[#allocation2 + $0x18] sm:$0xff]
    %v113 = vld [vmem:[#allocation2 + $0x20] sm:$0xff]
    %v114 = vld [vmem:[#allocation2 + $0x28] sm:$0xff]
    %v115 = vld [vmem:[#allocation2 + $0x30] sm:$0xff]
    %v116 = vld [vmem:[#allocation2 + $0x38] sm:$0xff]
    %v117 = vld [vmem:[#allocation2 + $0x40] sm:$0xff]
    %v118 = vld [vmem:[#allocation2 + $0x48] sm:$0xff]
    %v119 = vld [vmem:[#allocation2 + $0x50] sm:$0xff]
    %v120 = vld [vmem:[#allocation2 + $0x58] sm:$0xff]
    %v121 = vld [vmem:[#allocation2 + $0x60] sm:$0xff]
    %v122 = vld [vmem:[#allocation2 + $0x68] sm:$0xff]
    %v123 = vld [vmem:[#allocation2 + $0x70] sm:$0xff]
    %v124 = vld [vmem:[#allocation2 + $0x78] sm:$0xff]
    %v125 = vld [vmem:[#allocation2 + $0x80] sm:$0xff]
    %v126 = vld [vmem:[#allocation2 + $0x88] sm:$0xff]
    %v127 = vld [vmem:[#allocation2 + $0x90] sm:$0xff]
    %v128 = vld [vmem:[#allocation2 + $0x98] sm:$0xff]
    %v129 = vld [vmem:[#allocation2 + $0xa0] sm:$0xff]
    %v130 = vld [vmem:[#allocation2 + $0xa8] sm:$0xff]
    %v131 = vld [vmem:[#allocation2 + $0xb0] sm:$0xff]
    %v132 = vld [vmem:[#allocation2 + $0xb8] sm:$0xff]
    %v133 = vld [vmem:[#allocation2 + $0xc0] sm:$0xff]
    %v134 = vld [vmem:[#allocation2 + $0xc8] sm:$0xff]
    %v135 = vld [vmem:[#allocation2 + $0xd0] sm:$0xff]
    %v136 = vld [vmem:[#allocation2 + $0xd8] sm:$0xff]
    %v137 = vld [vmem:[#allocation2 + $0xe0] sm:$0xff]
    %v138 = vld [vmem:[#allocation2 + $0xe8] sm:$0xff]
    %v139 = vld [vmem:[#allocation2 + $0xf0] sm:$0xff]
    %v140 = vld [vmem:[#allocation2 + $0xf8] sm:$0xff]
    %v141 = vld [vmem:[#allocation2 + $0x100] sm:$0xff]
    %v142 = vld [vmem:[#allocation2 + $0x108] sm:$0xff]
    %v143 = vld [vmem:[#allocation2 + $0x110] sm:$0xff]
    %v144 = vld [vmem:[#allocation2 + $0x118] sm:$0xff]
    %v145 = vld [vmem:[#allocation2 + $0x120] sm:$0xff]
    %v146 = vld [vmem:[#allocation2 + $0x128] sm:$0xff]
    %v147 = vld [vmem:[#allocation2 + $0x130] sm:$0xff]
    %v148 = vld [vmem:[#allocation2 + $0x138] sm:$0xff]
    %v149 = vld [vmem:[#allocation2 + $0x140] sm:$0xff]
    %v150 = vld [vmem:[#allocation2 + $0x148] sm:$0xff]
    %v151 = vld [vmem:[#allocation2 + $0x150] sm:$0xff]
    %v152 = vld [vmem:[#allocation2 + $0x158] sm:$0xff]
    %v153 = vld [vmem:[#allocation2 + $0x160] sm:$0xff]
    %v154 = vld [vmem:[#allocation2 + $0x168] sm:$0xff]
    %v155 = vld [vmem:[#allocation2 + $0x170] sm:$0xff]
    %v156 = vld [vmem:[#allocation2 + $0x178] sm:$0xff]
    %v157 = vld [vmem:[#allocation2 + $0x180] sm:$0xff]
    %v158 = vld [vmem:[#allocation2 + $0x188] sm:$0xff]
    %v159 = vld [vmem:[#allocation2 + $0x190] sm:$0xff]
    %v160 = vld [vmem:[#allocation2 + $0x198] sm:$0xff]
    %v161 = vld [vmem:[#allocation2 + $0x1a0] sm:$0xff]
    %v162 = vld [vmem:[#allocation2 + $0x1a8] sm:$0xff]
    %v163 = vld [vmem:[#allocation2 + $0x1b0] sm:$0xff]
    %v164 = vld [vmem:[#allocation2 + $0x1b8] sm:$0xff]
    %v165 = vld [vmem:[#allocation2 + $0x1c0] sm:$0xff]
    %v166 = vld [vmem:[#allocation2 + $0x1c8] sm:$0xff]
    %v167 = vld [vmem:[#allocation2 + $0x1d0] sm:$0xff]
    %v168 = vld [vmem:[#allocation2 + $0x1d8] sm:$0xff]
    %v169 = vld [vmem:[#allocation2 + $0x1e0] sm:$0xff]
    %v170 = vld [vmem:[#allocation2 + $0x1e8] sm:$0xff]
    %v171 = vld [vmem:[#allocation2 + $0x1f0] sm:$0xff]
    %v172 = vld [vmem:[#allocation2 + $0x1f8] sm:$0xff]
    %v173 = vld [vmem:[#allocation2 + $0x200] sm:$0xff]
    %v174 = vld [vmem:[#allocation2 + $0x208] sm:$0xff]
    %v175 = vld [vmem:[#allocation2 + $0x210] sm:$0xff]
    %v176 = vld [vmem:[#allocation2 + $0x218] sm:$0xff]
    %v177 = vld [vmem:[#allocation2 + $0x220] sm:$0xff]
    %v178 = vld [vmem:[#allocation2 + $0x228] sm:$0xff]
    %v179 = vld [vmem:[#allocation2 + $0x230] sm:$0xff]
    %v180 = vld [vmem:[#allocation2 + $0x238] sm:$0xff]
    %v181 = vld [vmem:[#allocation2 + $0x240] sm:$0xff]
    %v182 = vld [vmem:[#allocation2 + $0x248] sm:$0xff]
    %v183 = vld [vmem:[#allocation2 + $0x250] sm:$0xff]
    %v184 = vld [vmem:[#allocation2 + $0x258] sm:$0xff]
    %v185 = vld [vmem:[#allocation2 + $0x260] sm:$0xff]
    %v186 = vld [vmem:[#allocation2 + $0x268] sm:$0xff]
    %v187 = vld [vmem:[#allocation2 + $0x270] sm:$0xff]
    %v188 = vld [vmem:[#allocation2 + $0x278] sm:$0xff]
    %v189 = vld [vmem:[#allocation2 + $0x280] sm:$0xff]
    %v190 = vld [vmem:[#allocation2 + $0x288] sm:$0xff]
    %v191 = vld [vmem:[#allocation2 + $0x290] sm:$0xff]
    %v192 = vld [vmem:[#allocation2 + $0x298] sm:$0xff]
    %v193 = vld [vmem:[#allocation2 + $0x2a0] sm:$0xff]
    %v194 = vld [vmem:[#allocation2 + $0x2a8] sm:$0xff]
    %v195 = vld [vmem:[#allocation2 + $0x2b0] sm:$0xff]
    %v196 = vld [vmem:[#allocation2 + $0x2b8] sm:$0xff]
    %v197 = vld [vmem:[#allocation2 + $0x2c0] sm:$0xff]
    %v198 = vld [vmem:[#allocation2 + $0x2c8] sm:$0xff]
    %v199 = vld [vmem:[#allocation2 + $0x2d0] sm:$0xff]
    %v200 = vld [vmem:[#allocation2 + $0x2d8] sm:$0xff]
    %v201 = vld [vmem:[#allocation2 + $0x2e0] sm:$0xff]
    %v202 = vld [vmem:[#allocation2 + $0x2e8] sm:$0xff]
    %v203 = vld [vmem:[#allocation2 + $0x2f0] sm:$0xff]
    %v204 = vld [vmem:[#allocation2 + $0x2f8] sm:$0xff]
    %v205 = vld [vmem:[#allocation2 + $0x300] sm:$0xff]
    %v206 = vld [vmem:[#allocation2 + $0x308] sm:$0xff]
    %v207 = vld [vmem:[%s3] sm:$0xff]
    %v208 = vld [vmem:[%s3 + $0x8] sm:$0xff]
    %v209 = vld [vmem:[%s3 + $0x10] sm:$0xff]
    %v210 = vld [vmem:[%s3 + $0x18] sm:$0xff]
    %v211 = vld [vmem:[%s3 + $0x20] sm:$0xff]
    %v212 = vld [vmem:[%s3 + $0x28] sm:$0xff]
    %v213 = vld [vmem:[%s3 + $0x30] sm:$0xff]
    %v214 = vld [vmem:[%s3 + $0x38] sm:$0xff]
    %v215 = vld [vmem:[%s3 + $0x40] sm:$0xff]
    %v216 = vld [vmem:[%s3 + $0x48] sm:$0xff]
    %v217 = vld [vmem:[%s3 + $0x50] sm:$0xff]
    %v218 = vld [vmem:[%s3 + $0x58] sm:$0xff]
    %v219 = vld [vmem:[%s3 + $0x60] sm:$0xff]
    %v220 = vld [vmem:[%s3 + $0x68] sm:$0xff]
    %v221 = vld [vmem:[%s3 + $0x70] sm:$0xff]
    %v222 = vld [vmem:[%s3 + $0x78] sm:$0xff]
    %v223 = vld [vmem:[%s3 + $0x80] sm:$0xff]
    %v224 = vld [vmem:[%s3 + $0x88] sm:$0xff]
    %v225 = vld [vmem:[%s3 + $0x90] sm:$0xff]
    %v226 = vld [vmem:[%s3 + $0x98] sm:$0xff]
    %v227 = vld [vmem:[%s3 + $0xa0] sm:$0xff]
    %v228 = vld [vmem:[%s3 + $0xa8] sm:$0xff]
    %v229 = vld [vmem:[%s3 + $0xb0] sm:$0xff]
    %v230 = vld [vmem:[%s3 + $0xb8] sm:$0xff]
    %v231 = vld [vmem:[%s3 + $0xc0] sm:$0xff]
    %v232 = vld [vmem:[%s3 + $0xc8] sm:$0xff]
    %v233 = vld [vmem:[%s3 + $0xd0] sm:$0xff]
    %v234 = vld [vmem:[%s3 + $0xd8] sm:$0xff]
    %v235 = vld [vmem:[%s3 + $0xe0] sm:$0xff]
    %v236 = vld [vmem:[%s3 + $0xe8] sm:$0xff]
    %v237 = vld [vmem:[%s3 + $0xf0] sm:$0xff]
    %v238 = vld [vmem:[%s3 + $0xf8] sm:$0xff]
    %v239 = vld [vmem:[%s3 + $0x100] sm:$0xff]
    %v240 = vld [vmem:[%s3 + $0x108] sm:$0xff]
    %v241 = vld [vmem:[%s3 + $0x110] sm:$0xff]
    %v242 = vld [vmem:[%s3 + $0x118] sm:$0xff]
    %v243 = vld [vmem:[%s3 + $0x120] sm:$0xff]
    %v244 = vld [vmem:[%s3 + $0x128] sm:$0xff]
    %v245 = vld [vmem:[%s3 + $0x130] sm:$0xff]
    %v246 = vld [vmem:[%s3 + $0x138] sm:$0xff]
    %v247 = vld [vmem:[%s3 + $0x140] sm:$0xff]
    %v248 = vld [vmem:[%s3 + $0x148] sm:$0xff]
    %v249 = vld [vmem:[%s3 + $0x150] sm:$0xff]
    %v250 = vld [vmem:[%s3 + $0x158] sm:$0xff]
    %v251 = vld [vmem:[%s3 + $0x160] sm:$0xff]
    %v252 = vld [vmem:[%s3 + $0x168] sm:$0xff]
    %v253 = vld [vmem:[%s3 + $0x170] sm:$0xff]
    %v254 = vld [vmem:[%s3 + $0x178] sm:$0xff]
    %v255 = vld [vmem:[%s3 + $0x180] sm:$0xff]
    %v256 = vld [vmem:[%s3 + $0x188] sm:$0xff]
    %v257 = vld [vmem:[%s3 + $0x190] sm:$0xff]
    %v258 = vld [vmem:[%s3 + $0x198] sm:$0xff]
    %v259 = vld [vmem:[%s3 + $0x1a0] sm:$0xff]
    %v260 = vld [vmem:[%s3 + $0x1a8] sm:$0xff]
    %v261 = vld [vmem:[%s3 + $0x1b0] sm:$0xff]
    %v262 = vld [vmem:[%s3 + $0x1b8] sm:$0xff]
    %v263 = vld [vmem:[%s3 + $0x1c0] sm:$0xff]
    %v264 = vld [vmem:[%s3 + $0x1c8] sm:$0xff]
    %v265 = vld [vmem:[%s3 + $0x1d0] sm:$0xff]
    %v266 = vld [vmem:[%s3 + $0x1d8] sm:$0xff]
    %v267 = vld [vmem:[%s3 + $0x1e0] sm:$0xff]
    %v268 = vld [vmem:[%s3 + $0x1e8] sm:$0xff]
    %v269 = vld [vmem:[%s3 + $0x1f0] sm:$0xff]
    %v270 = vld [vmem:[%s3 + $0x1f8] sm:$0xff]
    %v271 = vld [vmem:[%s3 + $0x200] sm:$0xff]
    %v272 = vld [vmem:[%s3 + $0x208] sm:$0xff]
    %v273 = vld [vmem:[%s3 + $0x210] sm:$0xff]
    %v274 = vld [vmem:[%s3 + $0x218] sm:$0xff]
    %v275 = vld [vmem:[%s3 + $0x220] sm:$0xff]
    %v276 = vld [vmem:[%s3 + $0x228] sm:$0xff]
    %v277 = vld [vmem:[%s3 + $0x230] sm:$0xff]
    %v278 = vld [vmem:[%s3 + $0x238] sm:$0xff]
    %v279 = vld [vmem:[%s3 + $0x240] sm:$0xff]
    %v280 = vld [vmem:[%s3 + $0x248] sm:$0xff]
    %v281 = vld [vmem:[%s3 + $0x250] sm:$0xff]
    %v282 = vld [vmem:[%s3 + $0x258] sm:$0xff]
    %v283 = vld [vmem:[%s3 + $0x260] sm:$0xff]
    %v284 = vld [vmem:[%s3 + $0x268] sm:$0xff]
    %v285 = vld [vmem:[%s3 + $0x270] sm:$0xff]
    %v286 = vld [vmem:[%s3 + $0x278] sm:$0xff]
    %v287 = vld [vmem:[%s3 + $0x280] sm:$0xff]
    %v288 = vld [vmem:[%s3 + $0x288] sm:$0xff]
    %v289 = vld [vmem:[%s3 + $0x290] sm:$0xff]
    %v290 = vld [vmem:[%s3 + $0x298] sm:$0xff]
    %v291 = vld [vmem:[%s3 + $0x2a0] sm:$0xff]
    %v292 = vld [vmem:[%s3 + $0x2a8] sm:$0xff]
    %v293 = vld [vmem:[%s3 + $0x2b0] sm:$0xff]
    %v294 = vld [vmem:[%s3 + $0x2b8] sm:$0xff]
    %v295 = vld [vmem:[%s3 + $0x2c0] sm:$0xff]
    %v296 = vld [vmem:[%s3 + $0x2c8] sm:$0xff]
    %v297 = vld [vmem:[%s3 + $0x2d0] sm:$0xff]
    %v298 = vld [vmem:[%s3 + $0x2d8] sm:$0xff]
    %v299 = vld [vmem:[%s3 + $0x2e0] sm:$0xff]
    %v300 = vld [vmem:[%s3 + $0x2e8] sm:$0xff]
    %v301 = vld [vmem:[%s3 + $0x2f0] sm:$0xff]
    %v302 = vld [vmem:[%s3 + $0x2f8] sm:$0xff]
    %v303 = vld [vmem:[%s3 + $0x300] sm:$0xff]
    %v304 = vld [vmem:[%s3 + $0x308] sm:$0xff]
    %306 = vset.pattern.permute.xlu0 0
    %307 = vperm.xlu0 %306, %v207
    %v308 = vpop.permute.xlu0 %307
    %311 = vset.pattern.permute.xlu0 0
    %312 = vperm.xlu0 %311, %v208
    %v313 = vpop.permute.xlu0 %312
    %316 = vset.pattern.permute.xlu0 0
    %317 = vperm.xlu0 %316, %v209
    %v318 = vpop.permute.xlu0 %317
    %321 = vset.pattern.permute.xlu0 0
    %322 = vperm.xlu0 %321, %v210
    %v323 = vpop.permute.xlu0 %322
    %326 = vset.pattern.permute.xlu0 0
    %327 = vperm.xlu0 %326, %v211
    %v328 = vpop.permute.xlu0 %327
    %331 = vset.pattern.permute.xlu0 0
    %332 = vperm.xlu0 %331, %v212
    %v333 = vpop.permute.xlu0 %332
    %336 = vset.pattern.permute.xlu0 0
    %337 = vperm.xlu0 %336, %v213
    %v338 = vpop.permute.xlu0 %337
    %341 = vset.pattern.permute.xlu0 0
    %342 = vperm.xlu0 %341, %v214
    %v343 = vpop.permute.xlu0 %342
    %346 = vset.pattern.permute.xlu0 0
    %347 = vperm.xlu0 %346, %v215
    %v348 = vpop.permute.xlu0 %347
    %351 = vset.pattern.permute.xlu0 0
    %352 = vperm.xlu0 %351, %v216
    %v353 = vpop.permute.xlu0 %352
    %356 = vset.pattern.permute.xlu0 0
    %357 = vperm.xlu0 %356, %v217
    %v358 = vpop.permute.xlu0 %357
    %361 = vset.pattern.permute.xlu0 0
    %362 = vperm.xlu0 %361, %v218
    %v363 = vpop.permute.xlu0 %362
    %366 = vset.pattern.permute.xlu0 0
    %367 = vperm.xlu0 %366, %v219
    %v368 = vpop.permute.xlu0 %367
    %371 = vset.pattern.permute.xlu0 0
    %372 = vperm.xlu0 %371, %v220
    %v373 = vpop.permute.xlu0 %372
    %376 = vset.pattern.permute.xlu0 0
    %377 = vperm.xlu0 %376, %v221
    %v378 = vpop.permute.xlu0 %377
    %381 = vset.pattern.permute.xlu0 0
    %382 = vperm.xlu0 %381, %v222
    %v383 = vpop.permute.xlu0 %382
    %386 = vset.pattern.permute.xlu0 0
    %387 = vperm.xlu0 %386, %v223
    %v388 = vpop.permute.xlu0 %387
    %391 = vset.pattern.permute.xlu0 0
    %392 = vperm.xlu0 %391, %v224
    %v393 = vpop.permute.xlu0 %392
    %396 = vset.pattern.permute.xlu0 0
    %397 = vperm.xlu0 %396, %v225
    %v398 = vpop.permute.xlu0 %397
    %401 = vset.pattern.permute.xlu0 0
    %402 = vperm.xlu0 %401, %v226
    %v403 = vpop.permute.xlu0 %402
    %406 = vset.pattern.permute.xlu0 0
    %407 = vperm.xlu0 %406, %v227
    %v408 = vpop.permute.xlu0 %407
    %411 = vset.pattern.permute.xlu0 0
    %412 = vperm.xlu0 %411, %v228
    %v413 = vpop.permute.xlu0 %412
    %416 = vset.pattern.permute.xlu0 0
    %417 = vperm.xlu0 %416, %v229
    %v418 = vpop.permute.xlu0 %417
    %421 = vset.pattern.permute.xlu0 0
    %422 = vperm.xlu0 %421, %v230
    %v423 = vpop.permute.xlu0 %422
    %426 = vset.pattern.permute.xlu0 0
    %427 = vperm.xlu0 %426, %v231
    %v428 = vpop.permute.xlu0 %427
    %431 = vset.pattern.permute.xlu0 0
    %432 = vperm.xlu0 %431, %v232
    %v433 = vpop.permute.xlu0 %432
    %436 = vset.pattern.permute.xlu0 0
    %437 = vperm.xlu0 %436, %v233
    %v438 = vpop.permute.xlu0 %437
    %441 = vset.pattern.permute.xlu0 0
    %442 = vperm.xlu0 %441, %v234
    %v443 = vpop.permute.xlu0 %442
    %446 = vset.pattern.permute.xlu0 0
    %447 = vperm.xlu0 %446, %v235
    %v448 = vpop.permute.xlu0 %447
    %451 = vset.pattern.permute.xlu0 0
    %452 = vperm.xlu0 %451, %v236
    %v453 = vpop.permute.xlu0 %452
    %456 = vset.pattern.permute.xlu0 0
    %457 = vperm.xlu0 %456, %v237
    %v458 = vpop.permute.xlu0 %457
    %461 = vset.pattern.permute.xlu0 0
    %462 = vperm.xlu0 %461, %v238
    %v463 = vpop.permute.xlu0 %462
    %466 = vset.pattern.permute.xlu0 0
    %467 = vperm.xlu0 %466, %v239
    %v468 = vpop.permute.xlu0 %467
    %471 = vset.pattern.permute.xlu0 0
    %472 = vperm.xlu0 %471, %v240
    %v473 = vpop.permute.xlu0 %472
    %476 = vset.pattern.permute.xlu0 0
    %477 = vperm.xlu0 %476, %v241
    %v478 = vpop.permute.xlu0 %477
    %481 = vset.pattern.permute.xlu0 0
    %482 = vperm.xlu0 %481, %v242
    %v483 = vpop.permute.xlu0 %482
    %486 = vset.pattern.permute.xlu0 0
    %487 = vperm.xlu0 %486, %v243
    %v488 = vpop.permute.xlu0 %487
    %491 = vset.pattern.permute.xlu0 0
    %492 = vperm.xlu0 %491, %v244
    %v493 = vpop.permute.xlu0 %492
    %496 = vset.pattern.permute.xlu0 0
    %497 = vperm.xlu0 %496, %v245
    %v498 = vpop.permute.xlu0 %497
    %501 = vset.pattern.permute.xlu0 0
    %502 = vperm.xlu0 %501, %v246
    %v503 = vpop.permute.xlu0 %502
    %506 = vset.pattern.permute.xlu0 0
    %507 = vperm.xlu0 %506, %v247
    %v508 = vpop.permute.xlu0 %507
    %511 = vset.pattern.permute.xlu0 0
    %512 = vperm.xlu0 %511, %v248
    %v513 = vpop.permute.xlu0 %512
    %516 = vset.pattern.permute.xlu0 0
    %517 = vperm.xlu0 %516, %v249
    %v518 = vpop.permute.xlu0 %517
    %521 = vset.pattern.permute.xlu0 0
    %522 = vperm.xlu0 %521, %v250
    %v523 = vpop.permute.xlu0 %522
    %526 = vset.pattern.permute.xlu0 0
    %527 = vperm.xlu0 %526, %v251
    %v528 = vpop.permute.xlu0 %527
    %531 = vset.pattern.permute.xlu0 0
    %532 = vperm.xlu0 %531, %v252
    %v533 = vpop.permute.xlu0 %532
    %536 = vset.pattern.permute.xlu0 0
    %537 = vperm.xlu0 %536, %v253
    %v538 = vpop.permute.xlu0 %537
    %541 = vset.pattern.permute.xlu0 0
    %542 = vperm.xlu0 %541, %v254
    %v543 = vpop.permute.xlu0 %542
    %546 = vset.pattern.permute.xlu0 0
    %547 = vperm.xlu0 %546, %v255
    %v548 = vpop.permute.xlu0 %547
    %551 = vset.pattern.permute.xlu0 0
    %552 = vperm.xlu0 %551, %v256
    %v553 = vpop.permute.xlu0 %552
    %556 = vset.pattern.permute.xlu0 0
    %557 = vperm.xlu0 %556, %v257
    %v558 = vpop.permute.xlu0 %557
    %561 = vset.pattern.permute.xlu0 0
    %562 = vperm.xlu0 %561, %v258
    %v563 = vpop.permute.xlu0 %562
    %566 = vset.pattern.permute.xlu0 0
    %567 = vperm.xlu0 %566, %v259
    %v568 = vpop.permute.xlu0 %567
    %571 = vset.pattern.permute.xlu0 0
    %572 = vperm.xlu0 %571, %v260
    %v573 = vpop.permute.xlu0 %572
    %576 = vset.pattern.permute.xlu0 0
    %577 = vperm.xlu0 %576, %v261
    %v578 = vpop.permute.xlu0 %577
    %581 = vset.pattern.permute.xlu0 0
    %582 = vperm.xlu0 %581, %v262
    %v583 = vpop.permute.xlu0 %582
    %586 = vset.pattern.permute.xlu0 0
    %587 = vperm.xlu0 %586, %v263
    %v588 = vpop.permute.xlu0 %587
    %591 = vset.pattern.permute.xlu0 0
    %592 = vperm.xlu0 %591, %v264
    %v593 = vpop.permute.xlu0 %592
    %596 = vset.pattern.permute.xlu0 0
    %597 = vperm.xlu0 %596, %v265
    %v598 = vpop.permute.xlu0 %597
    %601 = vset.pattern.permute.xlu0 0
    %602 = vperm.xlu0 %601, %v266
    %v603 = vpop.permute.xlu0 %602
    %606 = vset.pattern.permute.xlu0 0
    %607 = vperm.xlu0 %606, %v267
    %v608 = vpop.permute.xlu0 %607
    %611 = vset.pattern.permute.xlu0 0
    %612 = vperm.xlu0 %611, %v268
    %v613 = vpop.permute.xlu0 %612
    %616 = vset.pattern.permute.xlu0 0
    %617 = vperm.xlu0 %616, %v269
    %v618 = vpop.permute.xlu0 %617
    %621 = vset.pattern.permute.xlu0 0
    %622 = vperm.xlu0 %621, %v270
    %v623 = vpop.permute.xlu0 %622
    %626 = vset.pattern.permute.xlu0 0
    %627 = vperm.xlu0 %626, %v271
    %v628 = vpop.permute.xlu0 %627
    %631 = vset.pattern.permute.xlu0 0
    %632 = vperm.xlu0 %631, %v272
    %v633 = vpop.permute.xlu0 %632
    %636 = vset.pattern.permute.xlu0 0
    %637 = vperm.xlu0 %636, %v273
    %v638 = vpop.permute.xlu0 %637
    %641 = vset.pattern.permute.xlu0 0
    %642 = vperm.xlu0 %641, %v274
    %v643 = vpop.permute.xlu0 %642
    %646 = vset.pattern.permute.xlu0 0
    %647 = vperm.xlu0 %646, %v275
    %v648 = vpop.permute.xlu0 %647
    %651 = vset.pattern.permute.xlu0 0
    %652 = vperm.xlu0 %651, %v276
    %v653 = vpop.permute.xlu0 %652
    %656 = vset.pattern.permute.xlu0 0
    %657 = vperm.xlu0 %656, %v277
    %v658 = vpop.permute.xlu0 %657
    %661 = vset.pattern.permute.xlu0 0
    %662 = vperm.xlu0 %661, %v278
    %v663 = vpop.permute.xlu0 %662
    %666 = vset.pattern.permute.xlu0 0
    %667 = vperm.xlu0 %666, %v279
    %v668 = vpop.permute.xlu0 %667
    %671 = vset.pattern.permute.xlu0 0
    %672 = vperm.xlu0 %671, %v280
    %v673 = vpop.permute.xlu0 %672
    %676 = vset.pattern.permute.xlu0 0
    %677 = vperm.xlu0 %676, %v281
    %v678 = vpop.permute.xlu0 %677
    %681 = vset.pattern.permute.xlu0 0
    %682 = vperm.xlu0 %681, %v282
    %v683 = vpop.permute.xlu0 %682
    %686 = vset.pattern.permute.xlu0 0
    %687 = vperm.xlu0 %686, %v283
    %v688 = vpop.permute.xlu0 %687
    %691 = vset.pattern.permute.xlu0 0
    %692 = vperm.xlu0 %691, %v284
    %v693 = vpop.permute.xlu0 %692
    %696 = vset.pattern.permute.xlu0 0
    %697 = vperm.xlu0 %696, %v285
    %v698 = vpop.permute.xlu0 %697
    %701 = vset.pattern.permute.xlu0 0
    %702 = vperm.xlu0 %701, %v286
    %v703 = vpop.permute.xlu0 %702
    %706 = vset.pattern.permute.xlu0 0
    %707 = vperm.xlu0 %706, %v287
    %v708 = vpop.permute.xlu0 %707
    %711 = vset.pattern.permute.xlu0 0
    %712 = vperm.xlu0 %711, %v288
    %v713 = vpop.permute.xlu0 %712
    %716 = vset.pattern.permute.xlu0 0
    %717 = vperm.xlu0 %716, %v289
    %v718 = vpop.permute.xlu0 %717
    %721 = vset.pattern.permute.xlu0 0
    %722 = vperm.xlu0 %721, %v290
    %v723 = vpop.permute.xlu0 %722
    %726 = vset.pattern.permute.xlu0 0
    %727 = vperm.xlu0 %726, %v291
    %v728 = vpop.permute.xlu0 %727
    %731 = vset.pattern.permute.xlu0 0
    %732 = vperm.xlu0 %731, %v292
    %v733 = vpop.permute.xlu0 %732
    %736 = vset.pattern.permute.xlu0 0
    %737 = vperm.xlu0 %736, %v293
    %v738 = vpop.permute.xlu0 %737
    %741 = vset.pattern.permute.xlu0 0
    %742 = vperm.xlu0 %741, %v294
    %v743 = vpop.permute.xlu0 %742
    %746 = vset.pattern.permute.xlu0 0
    %747 = vperm.xlu0 %746, %v295
    %v748 = vpop.permute.xlu0 %747
    %751 = vset.pattern.permute.xlu0 0
    %752 = vperm.xlu0 %751, %v296
    %v753 = vpop.permute.xlu0 %752
    %756 = vset.pattern.permute.xlu0 0
    %757 = vperm.xlu0 %756, %v297
    %v758 = vpop.permute.xlu0 %757
    %761 = vset.pattern.permute.xlu0 0
    %762 = vperm.xlu0 %761, %v298
    %v763 = vpop.permute.xlu0 %762
    %766 = vset.pattern.permute.xlu0 0
    %767 = vperm.xlu0 %766, %v299
    %v768 = vpop.permute.xlu0 %767
    %771 = vset.pattern.permute.xlu0 0
    %772 = vperm.xlu0 %771, %v300
    %v773 = vpop.permute.xlu0 %772
    %776 = vset.pattern.permute.xlu0 0
    %777 = vperm.xlu0 %776, %v301
    %v778 = vpop.permute.xlu0 %777
    %781 = vset.pattern.permute.xlu0 0
    %782 = vperm.xlu0 %781, %v302
    %v783 = vpop.permute.xlu0 %782
    %786 = vset.pattern.permute.xlu0 0
    %787 = vperm.xlu0 %786, %v303
    %v788 = vpop.permute.xlu0 %787
    %791 = vset.pattern.permute.xlu0 0
    %792 = vperm.xlu0 %791, %v304
    %v793 = vpop.permute.xlu0 %792
    %vm795 = vcmask 662528
    %v797 = vsel %vm795, %v109, 0
    %v800 = vsel %vm795, %v110, 0
    %v803 = vsel %vm795, %v111, 0
    %v806 = vsel %vm795, %v112, 0
    %v809 = vsel %vm795, %v113, 0
    %v812 = vsel %vm795, %v114, 0
    %v815 = vsel %vm795, %v115, 0
    %v818 = vsel %vm795, %v116, 0
    %v821 = vsel %vm795, %v117, 0
    %v824 = vsel %vm795, %v118, 0
    %v827 = vsel %vm795, %v119, 0
    %v830 = vsel %vm795, %v120, 0
    %v833 = vsel %vm795, %v121, 0
    %v836 = vsel %vm795, %v122, 0
    %v839 = vsel %vm795, %v123, 0
    %v842 = vsel %vm795, %v124, 0
    %v845 = vsel %vm795, %v125, 0
    %v848 = vsel %vm795, %v126, 0
    %v851 = vsel %vm795, %v127, 0
    %v854 = vsel %vm795, %v128, 0
    %v857 = vsel %vm795, %v129, 0
    %v860 = vsel %vm795, %v130, 0
    %v863 = vsel %vm795, %v131, 0
    %v866 = vsel %vm795, %v132, 0
    %v869 = vsel %vm795, %v133, 0
    %v872 = vsel %vm795, %v134, 0
    %v875 = vsel %vm795, %v135, 0
    %v878 = vsel %vm795, %v136, 0
    %v881 = vsel %vm795, %v137, 0
    %v884 = vsel %vm795, %v138, 0
    %v887 = vsel %vm795, %v139, 0
    %v890 = vsel %vm795, %v140, 0
    %v893 = vsel %vm795, %v141, 0
    %v896 = vsel %vm795, %v142, 0
    %v899 = vsel %vm795, %v143, 0
    %v902 = vsel %vm795, %v144, 0
    %v905 = vsel %vm795, %v145, 0
    %v908 = vsel %vm795, %v146, 0
    %v911 = vsel %vm795, %v147, 0
    %v914 = vsel %vm795, %v148, 0
    %v917 = vsel %vm795, %v149, 0
    %v920 = vsel %vm795, %v150, 0
    %v923 = vsel %vm795, %v151, 0
    %v926 = vsel %vm795, %v152, 0
    %v929 = vsel %vm795, %v153, 0
    %v932 = vsel %vm795, %v154, 0
    %v935 = vsel %vm795, %v155, 0
    %v938 = vsel %vm795, %v156, 0
    %v941 = vsel %vm795, %v157, 0
    %v944 = vsel %vm795, %v158, 0
    %v947 = vsel %vm795, %v159, 0
    %v950 = vsel %vm795, %v160, 0
    %v953 = vsel %vm795, %v161, 0
    %v956 = vsel %vm795, %v162, 0
    %v959 = vsel %vm795, %v163, 0
    %v962 = vsel %vm795, %v164, 0
    %v965 = vsel %vm795, %v165, 0
    %v968 = vsel %vm795, %v166, 0
    %v971 = vsel %vm795, %v167, 0
    %v974 = vsel %vm795, %v168, 0
    %v977 = vsel %vm795, %v169, 0
    %v980 = vsel %vm795, %v170, 0
    %v983 = vsel %vm795, %v171, 0
    %v986 = vsel %vm795, %v172, 0
    %v989 = vsel %vm795, %v173, 0
    %v992 = vsel %vm795, %v174, 0
    %v995 = vsel %vm795, %v175, 0
    %v998 = vsel %vm795, %v176, 0
    %v1001 = vsel %vm795, %v177, 0
    %v1004 = vsel %vm795, %v178, 0
    %v1007 = vsel %vm795, %v179, 0
    %v1010 = vsel %vm795, %v180, 0
    %v1013 = vsel %vm795, %v181, 0
    %v1016 = vsel %vm795, %v182, 0
    %v1019 = vsel %vm795, %v183, 0
    %v1022 = vsel %vm795, %v184, 0
    %v1025 = vsel %vm795, %v185, 0
    %v1028 = vsel %vm795, %v186, 0
    %v1031 = vsel %vm795, %v187, 0
    %v1034 = vsel %vm795, %v188, 0
    %v1037 = vsel %vm795, %v189, 0
    %v1040 = vsel %vm795, %v190, 0
    %v1043 = vsel %vm795, %v191, 0
    %v1046 = vsel %vm795, %v192, 0
    %v1049 = vsel %vm795, %v193, 0
    %v1052 = vsel %vm795, %v194, 0
    %v1055 = vsel %vm795, %v195, 0
    %v1058 = vsel %vm795, %v196, 0
    %v1061 = vsel %vm795, %v197, 0
    %v1064 = vsel %vm795, %v198, 0
    %v1067 = vsel %vm795, %v199, 0
    %v1070 = vsel %vm795, %v200, 0
    %v1073 = vsel %vm795, %v201, 0
    %v1076 = vsel %vm795, %v202, 0
    %v1079 = vsel %vm795, %v203, 0
    %v1082 = vsel %vm795, %v204, 0
    %v1085 = vsel %vm795, %v205, 0
    %v1088 = vsel %vm795, %v206, 0
    %vm1090 = vcmask 1040384
    %v1092 = vsel %vm1090, %v97, 0
    %v1095 = vsel %vm1090, %v108, 0
    %1097 = vmatprep.subr.mxu0 0.0
    %1098 = vmatpush1.msra.mxu0 0.0
    %1099 = vmatprep.subr.mxu0 0.0
    %1100 = vmatpush1.msra.mxu0 0.0
    %1101 = vmatprep.subr.mxu0 0.0
    %1102 = vmatpush1.msra.mxu0 0.0
    %1103 = vmatprep.subr.mxu0 0.0
    %1104 = vmatpush1.msra.mxu0 0.0
    %1105 = vmatprep.subr.mxu0 0.0
    %1106 = vmatpush1.msra.mxu0 0.0
    %1107 = vmatprep.subr.mxu0 %v1095
    %1108 = vmatpush1.msra.mxu0 %v1092
    %1109 = vmatprep.subr.mxu0 %v107
    %1110 = vmatpush1.msra.mxu0 %v96
    %1111 = vmatprep.subr.mxu0 %v106
    %1112 = vmatpush1.msra.mxu0 %v95
    %1113 = vmatprep.subr.mxu0 %v105
    %1114 = vmatpush1.msra.mxu0 %v94
    %1115 = vmatprep.subr.mxu0 %v104
    %1116 = vmatpush1.msra.mxu0 %v93
    %1117 = vmatprep.subr.mxu0 %v103
    %1118 = vmatpush1.msra.mxu0 %v92
    %1119 = vmatprep.subr.mxu0 %v102
    %1120 = vmatpush1.msra.mxu0 %v91
    %1121 = vmatprep.subr.mxu0 %v101
    %1122 = vmatpush1.msra.mxu0 %v90
    %1123 = vmatprep.subr.mxu0 %v100
    %1124 = vmatpush1.msra.mxu0 %v89
    %1125 = vmatprep.subr.mxu0 %v99
    %1126 = vmatpush1.msra.mxu0 %v88
    %1127 = vmatprep.subr.mxu0 %v98
    %1128 = vmatpush1.msra.mxu0 %v87
    %1129 = vmatprep.subr.mxu0 0.0
    %1130 = vmatpush2.msra.mxu0 0.0
    %1131 = vmatprep.subr.mxu0 0.0
    %1132 = vmatpush2.msra.mxu0 0.0
    %1133 = vmatprep.subr.mxu0 0.0
    %1134 = vmatpush2.msra.mxu0 0.0
    %1135 = vmatprep.subr.mxu0 0.0
    %1136 = vmatpush2.msra.mxu0 0.0
    %1137 = vmatprep.subr.mxu0 0.0
    %1138 = vmatpush2.msra.mxu0 0.0
    %1139 = vmatprep.subr.mxu0 0.0
    %1140 = vmatpush2.msra.mxu0 0.0
    %1141 = vmatprep.subr.mxu0 0.0
    %1142 = vmatpush2.msra.mxu0 0.0
    %1143 = vmatprep.subr.mxu0 0.0
    %1144 = vmatpush2.msra.mxu0 0.0
    %1145 = vmatprep.subr.mxu0 0.0
    %1146 = vmatpush2.msra.mxu0 0.0
    %1147 = vmatprep.subr.mxu0 0.0
    %1148 = vmatpush2.msra.mxu0 0.0
    %1149 = vmatprep.subr.mxu0 0.0
    %1150 = vmatpush2.msra.mxu0 0.0
    %1151 = vmatprep.subr.mxu0 0.0
    %1152 = vmatpush2.msra.mxu0 0.0
    %1153 = vmatprep.subr.mxu0 0.0
    %1154 = vmatpush2.msra.mxu0 0.0
    %1155 = vmatprep.subr.mxu0 0.0
    %1156 = vmatpush2.msra.mxu0 0.0
    %1157 = vmatprep.subr.mxu0 0.0
    %1158 = vmatpush2.msra.mxu0 0.0
    %1159 = vmatprep.subr.mxu0 0.0
    %1160 = vmatpush2.msra.mxu0 0.0
    %1161 = vmatprep.mubr.f32.mxu0 0.0
    %1162 = vmatmul.mubr.f32.gmra.mxu0 %v797
    %v1163 = vpop.f32.mrf.mxu0
    %v1164 = vadd.f32 %v308, %v1163
    %v1165 = vpop.f32.mrf.mxu0
    %v1166 = vadd.f32 %v308, %v1165
    %1167 = vmatprep.mubr.f32.mxu0 0.0
    %1168 = vmatmul.mubr.f32.gmra.mxu0 %v800
    %v1169 = vpop.f32.mrf.mxu0
    %v1170 = vadd.f32 %v313, %v1169
    %v1171 = vpop.f32.mrf.mxu0
    %v1172 = vadd.f32 %v313, %v1171
    %1173 = vmatprep.mubr.f32.mxu0 0.0
    %1174 = vmatmul.mubr.f32.gmra.mxu0 %v803
    %v1175 = vpop.f32.mrf.mxu0
    %v1176 = vadd.f32 %v318, %v1175
    %v1177 = vpop.f32.mrf.mxu0
    %v1178 = vadd.f32 %v318, %v1177
    %1179 = vmatprep.mubr.f32.mxu0 0.0
    %1180 = vmatmul.mubr.f32.gmra.mxu0 %v806
    %v1181 = vpop.f32.mrf.mxu0
    %v1182 = vadd.f32 %v323, %v1181
    %v1183 = vpop.f32.mrf.mxu0
    %v1184 = vadd.f32 %v323, %v1183
    %1185 = vmatprep.mubr.f32.mxu0 0.0
    %1186 = vmatmul.mubr.f32.gmra.mxu0 %v809
    %v1187 = vpop.f32.mrf.mxu0
    %v1188 = vadd.f32 %v328, %v1187
    %v1189 = vpop.f32.mrf.mxu0
    %v1190 = vadd.f32 %v328, %v1189
    %1191 = vmatprep.mubr.f32.mxu0 0.0
    %1192 = vmatmul.mubr.f32.gmra.mxu0 %v812
    %v1193 = vpop.f32.mrf.mxu0
    %v1194 = vadd.f32 %v333, %v1193
    %v1195 = vpop.f32.mrf.mxu0
    %v1196 = vadd.f32 %v333, %v1195
    %1197 = vmatprep.mubr.f32.mxu0 0.0
    %1198 = vmatmul.mubr.f32.gmra.mxu0 %v815
    %v1199 = vpop.f32.mrf.mxu0
    %v1200 = vadd.f32 %v338, %v1199
    %v1201 = vpop.f32.mrf.mxu0
    %v1202 = vadd.f32 %v338, %v1201
    %1203 = vmatprep.mubr.f32.mxu0 0.0
    %1204 = vmatmul.mubr.f32.gmra.mxu0 %v818
    %v1205 = vpop.f32.mrf.mxu0
    %v1206 = vadd.f32 %v343, %v1205
    %v1207 = vpop.f32.mrf.mxu0
    %v1208 = vadd.f32 %v343, %v1207
    %1209 = vmatprep.mubr.f32.mxu0 0.0
    %1210 = vmatmul.mubr.f32.gmra.mxu0 %v821
    %v1211 = vpop.f32.mrf.mxu0
    %v1212 = vadd.f32 %v348, %v1211
    %v1213 = vpop.f32.mrf.mxu0
    %v1214 = vadd.f32 %v348, %v1213
    %1215 = vmatprep.mubr.f32.mxu0 0.0
    %1216 = vmatmul.mubr.f32.gmra.mxu0 %v824
    %v1217 = vpop.f32.mrf.mxu0
    %v1218 = vadd.f32 %v353, %v1217
    %v1219 = vpop.f32.mrf.mxu0
    %v1220 = vadd.f32 %v353, %v1219
    %1221 = vmatprep.mubr.f32.mxu0 0.0
    %1222 = vmatmul.mubr.f32.gmra.mxu0 %v827
    %v1223 = vpop.f32.mrf.mxu0
    %v1224 = vadd.f32 %v358, %v1223
    %v1225 = vpop.f32.mrf.mxu0
    %v1226 = vadd.f32 %v358, %v1225
    %1227 = vmatprep.mubr.f32.mxu0 0.0
    %1228 = vmatmul.mubr.f32.gmra.mxu0 %v830
    %v1229 = vpop.f32.mrf.mxu0
    %v1230 = vadd.f32 %v363, %v1229
    %v1231 = vpop.f32.mrf.mxu0
    %v1232 = vadd.f32 %v363, %v1231
    %1233 = vmatprep.mubr.f32.mxu0 0.0
    %1234 = vmatmul.mubr.f32.gmra.mxu0 %v833
    %v1235 = vpop.f32.mrf.mxu0
    %v1236 = vadd.f32 %v368, %v1235
    %v1237 = vpop.f32.mrf.mxu0
    %v1238 = vadd.f32 %v368, %v1237
    %1239 = vmatprep.mubr.f32.mxu0 0.0
    %1240 = vmatmul.mubr.f32.gmra.mxu0 %v836
    %v1241 = vpop.f32.mrf.mxu0
    %v1242 = vadd.f32 %v373, %v1241
    %v1243 = vpop.f32.mrf.mxu0
    %v1244 = vadd.f32 %v373, %v1243
    %1245 = vmatprep.mubr.f32.mxu0 0.0
    %1246 = vmatmul.mubr.f32.gmra.mxu0 %v839
    %v1247 = vpop.f32.mrf.mxu0
    %v1248 = vadd.f32 %v378, %v1247
    %v1249 = vpop.f32.mrf.mxu0
    %v1250 = vadd.f32 %v378, %v1249
    %1251 = vmatprep.mubr.f32.mxu0 0.0
    %1252 = vmatmul.mubr.f32.gmra.mxu0 %v842
    %v1253 = vpop.f32.mrf.mxu0
    %v1254 = vadd.f32 %v383, %v1253
    %v1255 = vpop.f32.mrf.mxu0
    %v1256 = vadd.f32 %v383, %v1255
    %1257 = vmatprep.mubr.f32.mxu0 0.0
    %1258 = vmatmul.mubr.f32.gmra.mxu0 %v845
    %v1259 = vpop.f32.mrf.mxu0
    %v1260 = vadd.f32 %v388, %v1259
    %v1261 = vpop.f32.mrf.mxu0
    %v1262 = vadd.f32 %v388, %v1261
    %1263 = vmatprep.mubr.f32.mxu0 0.0
    %1264 = vmatmul.mubr.f32.gmra.mxu0 %v848
    %v1265 = vpop.f32.mrf.mxu0
    %v1266 = vadd.f32 %v393, %v1265
    %v1267 = vpop.f32.mrf.mxu0
    %v1268 = vadd.f32 %v393, %v1267
    %1269 = vmatprep.mubr.f32.mxu0 0.0
    %1270 = vmatmul.mubr.f32.gmra.mxu0 %v851
    %v1271 = vpop.f32.mrf.mxu0
    %v1272 = vadd.f32 %v398, %v1271
    %v1273 = vpop.f32.mrf.mxu0
    %v1274 = vadd.f32 %v398, %v1273
    %1275 = vmatprep.mubr.f32.mxu0 0.0
    %1276 = vmatmul.mubr.f32.gmra.mxu0 %v854
    %v1277 = vpop.f32.mrf.mxu0
    %v1278 = vadd.f32 %v403, %v1277
    %v1279 = vpop.f32.mrf.mxu0
    %v1280 = vadd.f32 %v403, %v1279
    %1281 = vmatprep.mubr.f32.mxu0 0.0
    %1282 = vmatmul.mubr.f32.gmra.mxu0 %v857
    %v1283 = vpop.f32.mrf.mxu0
    %v1284 = vadd.f32 %v408, %v1283
    %v1285 = vpop.f32.mrf.mxu0
    %v1286 = vadd.f32 %v408, %v1285
    %1287 = vmatprep.mubr.f32.mxu0 0.0
    %1288 = vmatmul.mubr.f32.gmra.mxu0 %v860
    %v1289 = vpop.f32.mrf.mxu0
    %v1290 = vadd.f32 %v413, %v1289
    %v1291 = vpop.f32.mrf.mxu0
    %v1292 = vadd.f32 %v413, %v1291
    %1293 = vmatprep.mubr.f32.mxu0 0.0
    %1294 = vmatmul.mubr.f32.gmra.mxu0 %v863
    %v1295 = vpop.f32.mrf.mxu0
    %v1296 = vadd.f32 %v418, %v1295
    %v1297 = vpop.f32.mrf.mxu0
    %v1298 = vadd.f32 %v418, %v1297
    %1299 = vmatprep.mubr.f32.mxu0 0.0
    %1300 = vmatmul.mubr.f32.gmra.mxu0 %v866
    %v1301 = vpop.f32.mrf.mxu0
    %v1302 = vadd.f32 %v423, %v1301
    %v1303 = vpop.f32.mrf.mxu0
    %v1304 = vadd.f32 %v423, %v1303
    %1305 = vmatprep.mubr.f32.mxu0 0.0
    %1306 = vmatmul.mubr.f32.gmra.mxu0 %v869
    %v1307 = vpop.f32.mrf.mxu0
    %v1308 = vadd.f32 %v428, %v1307
    %v1309 = vpop.f32.mrf.mxu0
    %v1310 = vadd.f32 %v428, %v1309
    %1311 = vmatprep.mubr.f32.mxu0 0.0
    %1312 = vmatmul.mubr.f32.gmra.mxu0 %v872
    %v1313 = vpop.f32.mrf.mxu0
    %v1314 = vadd.f32 %v433, %v1313
    %v1315 = vpop.f32.mrf.mxu0
    %v1316 = vadd.f32 %v433, %v1315
    %1317 = vmatprep.mubr.f32.mxu0 0.0
    %1318 = vmatmul.mubr.f32.gmra.mxu0 %v875
    %v1319 = vpop.f32.mrf.mxu0
    %v1320 = vadd.f32 %v438, %v1319
    %v1321 = vpop.f32.mrf.mxu0
    %v1322 = vadd.f32 %v438, %v1321
    %1323 = vmatprep.mubr.f32.mxu0 0.0
    %1324 = vmatmul.mubr.f32.gmra.mxu0 %v878
    %v1325 = vpop.f32.mrf.mxu0
    %v1326 = vadd.f32 %v443, %v1325
    %v1327 = vpop.f32.mrf.mxu0
    %v1328 = vadd.f32 %v443, %v1327
    %1329 = vmatprep.mubr.f32.mxu0 0.0
    %1330 = vmatmul.mubr.f32.gmra.mxu0 %v881
    %v1331 = vpop.f32.mrf.mxu0
    %v1332 = vadd.f32 %v448, %v1331
    %v1333 = vpop.f32.mrf.mxu0
    %v1334 = vadd.f32 %v448, %v1333
    %1335 = vmatprep.mubr.f32.mxu0 0.0
    %1336 = vmatmul.mubr.f32.gmra.mxu0 %v884
    %v1337 = vpop.f32.mrf.mxu0
    %v1338 = vadd.f32 %v453, %v1337
    %v1339 = vpop.f32.mrf.mxu0
    %v1340 = vadd.f32 %v453, %v1339
    %1341 = vmatprep.mubr.f32.mxu0 0.0
    %1342 = vmatmul.mubr.f32.gmra.mxu0 %v887
    %v1343 = vpop.f32.mrf.mxu0
    %v1344 = vadd.f32 %v458, %v1343
    %v1345 = vpop.f32.mrf.mxu0
    %v1346 = vadd.f32 %v458, %v1345
    %1347 = vmatprep.mubr.f32.mxu0 0.0
    %1348 = vmatmul.mubr.f32.gmra.mxu0 %v890
    %v1349 = vpop.f32.mrf.mxu0
    %v1350 = vadd.f32 %v463, %v1349
    %v1351 = vpop.f32.mrf.mxu0
    %v1352 = vadd.f32 %v463, %v1351
    %1353 = vmatprep.mubr.f32.mxu0 0.0
    %1354 = vmatmul.mubr.f32.gmra.mxu0 %v893
    %v1355 = vpop.f32.mrf.mxu0
    %v1356 = vadd.f32 %v468, %v1355
    %v1357 = vpop.f32.mrf.mxu0
    %v1358 = vadd.f32 %v468, %v1357
    %1359 = vmatprep.mubr.f32.mxu0 0.0
    %1360 = vmatmul.mubr.f32.gmra.mxu0 %v896
    %v1361 = vpop.f32.mrf.mxu0
    %v1362 = vadd.f32 %v473, %v1361
    %v1363 = vpop.f32.mrf.mxu0
    %v1364 = vadd.f32 %v473, %v1363
    %1365 = vmatprep.mubr.f32.mxu0 0.0
    %1366 = vmatmul.mubr.f32.gmra.mxu0 %v899
    %v1367 = vpop.f32.mrf.mxu0
    %v1368 = vadd.f32 %v478, %v1367
    %v1369 = vpop.f32.mrf.mxu0
    %v1370 = vadd.f32 %v478, %v1369
    %1371 = vmatprep.mubr.f32.mxu0 0.0
    %1372 = vmatmul.mubr.f32.gmra.mxu0 %v902
    %v1373 = vpop.f32.mrf.mxu0
    %v1374 = vadd.f32 %v483, %v1373
    %v1375 = vpop.f32.mrf.mxu0
    %v1376 = vadd.f32 %v483, %v1375
    %1377 = vmatprep.mubr.f32.mxu0 0.0
    %1378 = vmatmul.mubr.f32.gmra.mxu0 %v905
    %v1379 = vpop.f32.mrf.mxu0
    %v1380 = vadd.f32 %v488, %v1379
    %v1381 = vpop.f32.mrf.mxu0
    %v1382 = vadd.f32 %v488, %v1381
    %1383 = vmatprep.mubr.f32.mxu0 0.0
    %1384 = vmatmul.mubr.f32.gmra.mxu0 %v908
    %v1385 = vpop.f32.mrf.mxu0
    %v1386 = vadd.f32 %v493, %v1385
    %v1387 = vpop.f32.mrf.mxu0
    %v1388 = vadd.f32 %v493, %v1387
    %1389 = vmatprep.mubr.f32.mxu0 0.0
    %1390 = vmatmul.mubr.f32.gmra.mxu0 %v911
    %v1391 = vpop.f32.mrf.mxu0
    %v1392 = vadd.f32 %v498, %v1391
    %v1393 = vpop.f32.mrf.mxu0
    %v1394 = vadd.f32 %v498, %v1393
    %1395 = vmatprep.mubr.f32.mxu0 0.0
    %1396 = vmatmul.mubr.f32.gmra.mxu0 %v914
    %v1397 = vpop.f32.mrf.mxu0
    %v1398 = vadd.f32 %v503, %v1397
    %v1399 = vpop.f32.mrf.mxu0
    %v1400 = vadd.f32 %v503, %v1399
    %1401 = vmatprep.mubr.f32.mxu0 0.0
    %1402 = vmatmul.mubr.f32.gmra.mxu0 %v917
    %v1403 = vpop.f32.mrf.mxu0
    %v1404 = vadd.f32 %v508, %v1403
    %v1405 = vpop.f32.mrf.mxu0
    %v1406 = vadd.f32 %v508, %v1405
    %1407 = vmatprep.mubr.f32.mxu0 0.0
    %1408 = vmatmul.mubr.f32.gmra.mxu0 %v920
    %v1409 = vpop.f32.mrf.mxu0
    %v1410 = vadd.f32 %v513, %v1409
    %v1411 = vpop.f32.mrf.mxu0
    %v1412 = vadd.f32 %v513, %v1411
    %1413 = vmatprep.mubr.f32.mxu0 0.0
    %1414 = vmatmul.mubr.f32.gmra.mxu0 %v923
    %v1415 = vpop.f32.mrf.mxu0
    %v1416 = vadd.f32 %v518, %v1415
    %v1417 = vpop.f32.mrf.mxu0
    %v1418 = vadd.f32 %v518, %v1417
    %1419 = vmatprep.mubr.f32.mxu0 0.0
    %1420 = vmatmul.mubr.f32.gmra.mxu0 %v926
    %v1421 = vpop.f32.mrf.mxu0
    %v1422 = vadd.f32 %v523, %v1421
    %v1423 = vpop.f32.mrf.mxu0
    %v1424 = vadd.f32 %v523, %v1423
    %1425 = vmatprep.mubr.f32.mxu0 0.0
    %1426 = vmatmul.mubr.f32.gmra.mxu0 %v929
    %v1427 = vpop.f32.mrf.mxu0
    %v1428 = vadd.f32 %v528, %v1427
    %v1429 = vpop.f32.mrf.mxu0
    %v1430 = vadd.f32 %v528, %v1429
    %1431 = vmatprep.mubr.f32.mxu0 0.0
    %1432 = vmatmul.mubr.f32.gmra.mxu0 %v932
    %v1433 = vpop.f32.mrf.mxu0
    %v1434 = vadd.f32 %v533, %v1433
    %v1435 = vpop.f32.mrf.mxu0
    %v1436 = vadd.f32 %v533, %v1435
    %1437 = vmatprep.mubr.f32.mxu0 0.0
    %1438 = vmatmul.mubr.f32.gmra.mxu0 %v935
    %v1439 = vpop.f32.mrf.mxu0
    %v1440 = vadd.f32 %v538, %v1439
    %v1441 = vpop.f32.mrf.mxu0
    %v1442 = vadd.f32 %v538, %v1441
    %1443 = vmatprep.mubr.f32.mxu0 0.0
    %1444 = vmatmul.mubr.f32.gmra.mxu0 %v938
    %v1445 = vpop.f32.mrf.mxu0
    %v1446 = vadd.f32 %v543, %v1445
    %v1447 = vpop.f32.mrf.mxu0
    %v1448 = vadd.f32 %v543, %v1447
    %1449 = vmatprep.mubr.f32.mxu0 0.0
    %1450 = vmatmul.mubr.f32.gmra.mxu0 %v941
    %v1451 = vpop.f32.mrf.mxu0
    %v1452 = vadd.f32 %v548, %v1451
    %v1453 = vpop.f32.mrf.mxu0
    %v1454 = vadd.f32 %v548, %v1453
    %1455 = vmatprep.mubr.f32.mxu0 0.0
    %1456 = vmatmul.mubr.f32.gmra.mxu0 %v944
    %v1457 = vpop.f32.mrf.mxu0
    %v1458 = vadd.f32 %v553, %v1457
    %v1459 = vpop.f32.mrf.mxu0
    %v1460 = vadd.f32 %v553, %v1459
    %1461 = vmatprep.mubr.f32.mxu0 0.0
    %1462 = vmatmul.mubr.f32.gmra.mxu0 %v947
    %v1463 = vpop.f32.mrf.mxu0
    %v1464 = vadd.f32 %v558, %v1463
    %v1465 = vpop.f32.mrf.mxu0
    %v1466 = vadd.f32 %v558, %v1465
    %1467 = vmatprep.mubr.f32.mxu0 0.0
    %1468 = vmatmul.mubr.f32.gmra.mxu0 %v950
    %v1469 = vpop.f32.mrf.mxu0
    %v1470 = vadd.f32 %v563, %v1469
    %v1471 = vpop.f32.mrf.mxu0
    %v1472 = vadd.f32 %v563, %v1471
    %1473 = vmatprep.mubr.f32.mxu0 0.0
    %1474 = vmatmul.mubr.f32.gmra.mxu0 %v953
    %v1475 = vpop.f32.mrf.mxu0
    %v1476 = vadd.f32 %v568, %v1475
    %v1477 = vpop.f32.mrf.mxu0
    %v1478 = vadd.f32 %v568, %v1477
    %1479 = vmatprep.mubr.f32.mxu0 0.0
    %1480 = vmatmul.mubr.f32.gmra.mxu0 %v956
    %v1481 = vpop.f32.mrf.mxu0
    %v1482 = vadd.f32 %v573, %v1481
    %v1483 = vpop.f32.mrf.mxu0
    %v1484 = vadd.f32 %v573, %v1483
    %1485 = vmatprep.mubr.f32.mxu0 0.0
    %1486 = vmatmul.mubr.f32.gmra.mxu0 %v959
    %v1487 = vpop.f32.mrf.mxu0
    %v1488 = vadd.f32 %v578, %v1487
    %v1489 = vpop.f32.mrf.mxu0
    %v1490 = vadd.f32 %v578, %v1489
    %1491 = vmatprep.mubr.f32.mxu0 0.0
    %1492 = vmatmul.mubr.f32.gmra.mxu0 %v962
    %v1493 = vpop.f32.mrf.mxu0
    %v1494 = vadd.f32 %v583, %v1493
    %v1495 = vpop.f32.mrf.mxu0
    %v1496 = vadd.f32 %v583, %v1495
    %1497 = vmatprep.mubr.f32.mxu0 0.0
    %1498 = vmatmul.mubr.f32.gmra.mxu0 %v965
    %v1499 = vpop.f32.mrf.mxu0
    %v1500 = vadd.f32 %v588, %v1499
    %v1501 = vpop.f32.mrf.mxu0
    %v1502 = vadd.f32 %v588, %v1501
    %1503 = vmatprep.mubr.f32.mxu0 0.0
    %1504 = vmatmul.mubr.f32.gmra.mxu0 %v968
    %v1505 = vpop.f32.mrf.mxu0
    %v1506 = vadd.f32 %v593, %v1505
    %v1507 = vpop.f32.mrf.mxu0
    %v1508 = vadd.f32 %v593, %v1507
    %1509 = vmatprep.mubr.f32.mxu0 0.0
    %1510 = vmatmul.mubr.f32.gmra.mxu0 %v971
    %v1511 = vpop.f32.mrf.mxu0
    %v1512 = vadd.f32 %v598, %v1511
    %v1513 = vpop.f32.mrf.mxu0
    %v1514 = vadd.f32 %v598, %v1513
    %1515 = vmatprep.mubr.f32.mxu0 0.0
    %1516 = vmatmul.mubr.f32.gmra.mxu0 %v974
    %v1517 = vpop.f32.mrf.mxu0
    %v1518 = vadd.f32 %v603, %v1517
    %v1519 = vpop.f32.mrf.mxu0
    %v1520 = vadd.f32 %v603, %v1519
    %1521 = vmatprep.mubr.f32.mxu0 0.0
    %1522 = vmatmul.mubr.f32.gmra.mxu0 %v977
    %v1523 = vpop.f32.mrf.mxu0
    %v1524 = vadd.f32 %v608, %v1523
    %v1525 = vpop.f32.mrf.mxu0
    %v1526 = vadd.f32 %v608, %v1525
    %1527 = vmatprep.mubr.f32.mxu0 0.0
    %1528 = vmatmul.mubr.f32.gmra.mxu0 %v980
    %v1529 = vpop.f32.mrf.mxu0
    %v1530 = vadd.f32 %v613, %v1529
    %v1531 = vpop.f32.mrf.mxu0
    %v1532 = vadd.f32 %v613, %v1531
    %1533 = vmatprep.mubr.f32.mxu0 0.0
    %1534 = vmatmul.mubr.f32.gmra.mxu0 %v983
    %v1535 = vpop.f32.mrf.mxu0
    %v1536 = vadd.f32 %v618, %v1535
    %v1537 = vpop.f32.mrf.mxu0
    %v1538 = vadd.f32 %v618, %v1537
    %1539 = vmatprep.mubr.f32.mxu0 0.0
    %1540 = vmatmul.mubr.f32.gmra.mxu0 %v986
    %v1541 = vpop.f32.mrf.mxu0
    %v1542 = vadd.f32 %v623, %v1541
    %v1543 = vpop.f32.mrf.mxu0
    %v1544 = vadd.f32 %v623, %v1543
    %1545 = vmatprep.mubr.f32.mxu0 0.0
    %1546 = vmatmul.mubr.f32.gmra.mxu0 %v989
    %v1547 = vpop.f32.mrf.mxu0
    %v1548 = vadd.f32 %v628, %v1547
    %v1549 = vpop.f32.mrf.mxu0
    %v1550 = vadd.f32 %v628, %v1549
    %1551 = vmatprep.mubr.f32.mxu0 0.0
    %1552 = vmatmul.mubr.f32.gmra.mxu0 %v992
    %v1553 = vpop.f32.mrf.mxu0
    %v1554 = vadd.f32 %v633, %v1553
    %v1555 = vpop.f32.mrf.mxu0
    %v1556 = vadd.f32 %v633, %v1555
    %1557 = vmatprep.mubr.f32.mxu0 0.0
    %1558 = vmatmul.mubr.f32.gmra.mxu0 %v995
    %v1559 = vpop.f32.mrf.mxu0
    %v1560 = vadd.f32 %v638, %v1559
    %v1561 = vpop.f32.mrf.mxu0
    %v1562 = vadd.f32 %v638, %v1561
    %1563 = vmatprep.mubr.f32.mxu0 0.0
    %1564 = vmatmul.mubr.f32.gmra.mxu0 %v998
    %v1565 = vpop.f32.mrf.mxu0
    %v1566 = vadd.f32 %v643, %v1565
    %v1567 = vpop.f32.mrf.mxu0
    %v1568 = vadd.f32 %v643, %v1567
    %1569 = vmatprep.mubr.f32.mxu0 0.0
    %1570 = vmatmul.mubr.f32.gmra.mxu0 %v1001
    %v1571 = vpop.f32.mrf.mxu0
    %v1572 = vadd.f32 %v648, %v1571
    %v1573 = vpop.f32.mrf.mxu0
    %v1574 = vadd.f32 %v648, %v1573
    %1575 = vmatprep.mubr.f32.mxu0 0.0
    %1576 = vmatmul.mubr.f32.gmra.mxu0 %v1004
    %v1577 = vpop.f32.mrf.mxu0
    %v1578 = vadd.f32 %v653, %v1577
    %v1579 = vpop.f32.mrf.mxu0
    %v1580 = vadd.f32 %v653, %v1579
    %1581 = vmatprep.mubr.f32.mxu0 0.0
    %1582 = vmatmul.mubr.f32.gmra.mxu0 %v1007
    %v1583 = vpop.f32.mrf.mxu0
    %v1584 = vadd.f32 %v658, %v1583
    %v1585 = vpop.f32.mrf.mxu0
    %v1586 = vadd.f32 %v658, %v1585
    %1587 = vmatprep.mubr.f32.mxu0 0.0
    %1588 = vmatmul.mubr.f32.gmra.mxu0 %v1010
    %v1589 = vpop.f32.mrf.mxu0
    %v1590 = vadd.f32 %v663, %v1589
    %v1591 = vpop.f32.mrf.mxu0
    %v1592 = vadd.f32 %v663, %v1591
    %1593 = vmatprep.mubr.f32.mxu0 0.0
    %1594 = vmatmul.mubr.f32.gmra.mxu0 %v1013
    %v1595 = vpop.f32.mrf.mxu0
    %v1596 = vadd.f32 %v668, %v1595
    %v1597 = vpop.f32.mrf.mxu0
    %v1598 = vadd.f32 %v668, %v1597
    %1599 = vmatprep.mubr.f32.mxu0 0.0
    %1600 = vmatmul.mubr.f32.gmra.mxu0 %v1016
    %v1601 = vpop.f32.mrf.mxu0
    %v1602 = vadd.f32 %v673, %v1601
    %v1603 = vpop.f32.mrf.mxu0
    %v1604 = vadd.f32 %v673, %v1603
    %1605 = vmatprep.mubr.f32.mxu0 0.0
    %1606 = vmatmul.mubr.f32.gmra.mxu0 %v1019
    %v1607 = vpop.f32.mrf.mxu0
    %v1608 = vadd.f32 %v678, %v1607
    %v1609 = vpop.f32.mrf.mxu0
    %v1610 = vadd.f32 %v678, %v1609
    %1611 = vmatprep.mubr.f32.mxu0 0.0
    %1612 = vmatmul.mubr.f32.gmra.mxu0 %v1022
    %v1613 = vpop.f32.mrf.mxu0
    %v1614 = vadd.f32 %v683, %v1613
    %v1615 = vpop.f32.mrf.mxu0
    %v1616 = vadd.f32 %v683, %v1615
    %1617 = vmatprep.mubr.f32.mxu0 0.0
    %1618 = vmatmul.mubr.f32.gmra.mxu0 %v1025
    %v1619 = vpop.f32.mrf.mxu0
    %v1620 = vadd.f32 %v688, %v1619
    %v1621 = vpop.f32.mrf.mxu0
    %v1622 = vadd.f32 %v688, %v1621
    %1623 = vmatprep.mubr.f32.mxu0 0.0
    %1624 = vmatmul.mubr.f32.gmra.mxu0 %v1028
    %v1625 = vpop.f32.mrf.mxu0
    %v1626 = vadd.f32 %v693, %v1625
    %v1627 = vpop.f32.mrf.mxu0
    %v1628 = vadd.f32 %v693, %v1627
    %1629 = vmatprep.mubr.f32.mxu0 0.0
    %1630 = vmatmul.mubr.f32.gmra.mxu0 %v1031
    %v1631 = vpop.f32.mrf.mxu0
    %v1632 = vadd.f32 %v698, %v1631
    %v1633 = vpop.f32.mrf.mxu0
    %v1634 = vadd.f32 %v698, %v1633
    %1635 = vmatprep.mubr.f32.mxu0 0.0
    %1636 = vmatmul.mubr.f32.gmra.mxu0 %v1034
    %v1637 = vpop.f32.mrf.mxu0
    %v1638 = vadd.f32 %v703, %v1637
    %v1639 = vpop.f32.mrf.mxu0
    %v1640 = vadd.f32 %v703, %v1639
    %1641 = vmatprep.mubr.f32.mxu0 0.0
    %1642 = vmatmul.mubr.f32.gmra.mxu0 %v1037
    %v1643 = vpop.f32.mrf.mxu0
    %v1644 = vadd.f32 %v708, %v1643
    %v1645 = vpop.f32.mrf.mxu0
    %v1646 = vadd.f32 %v708, %v1645
    %1647 = vmatprep.mubr.f32.mxu0 0.0
    %1648 = vmatmul.mubr.f32.gmra.mxu0 %v1040
    %v1649 = vpop.f32.mrf.mxu0
    %v1650 = vadd.f32 %v713, %v1649
    %v1651 = vpop.f32.mrf.mxu0
    %v1652 = vadd.f32 %v713, %v1651
    %1653 = vmatprep.mubr.f32.mxu0 0.0
    %1654 = vmatmul.mubr.f32.gmra.mxu0 %v1043
    %v1655 = vpop.f32.mrf.mxu0
    %v1656 = vadd.f32 %v718, %v1655
    %v1657 = vpop.f32.mrf.mxu0
    %v1658 = vadd.f32 %v718, %v1657
    %1659 = vmatprep.mubr.f32.mxu0 0.0
    %1660 = vmatmul.mubr.f32.gmra.mxu0 %v1046
    %v1661 = vpop.f32.mrf.mxu0
    %v1662 = vadd.f32 %v723, %v1661
    %v1663 = vpop.f32.mrf.mxu0
    %v1664 = vadd.f32 %v723, %v1663
    %1665 = vmatprep.mubr.f32.mxu0 0.0
    %1666 = vmatmul.mubr.f32.gmra.mxu0 %v1049
    %v1667 = vpop.f32.mrf.mxu0
    %v1668 = vadd.f32 %v728, %v1667
    %v1669 = vpop.f32.mrf.mxu0
    %v1670 = vadd.f32 %v728, %v1669
    %1671 = vmatprep.mubr.f32.mxu0 0.0
    %1672 = vmatmul.mubr.f32.gmra.mxu0 %v1052
    %v1673 = vpop.f32.mrf.mxu0
    %v1674 = vadd.f32 %v733, %v1673
    %v1675 = vpop.f32.mrf.mxu0
    %v1676 = vadd.f32 %v733, %v1675
    %1677 = vmatprep.mubr.f32.mxu0 0.0
    %1678 = vmatmul.mubr.f32.gmra.mxu0 %v1055
    %v1679 = vpop.f32.mrf.mxu0
    %v1680 = vadd.f32 %v738, %v1679
    %v1681 = vpop.f32.mrf.mxu0
    %v1682 = vadd.f32 %v738, %v1681
    %1683 = vmatprep.mubr.f32.mxu0 0.0
    %1684 = vmatmul.mubr.f32.gmra.mxu0 %v1058
    %v1685 = vpop.f32.mrf.mxu0
    %v1686 = vadd.f32 %v743, %v1685
    %v1687 = vpop.f32.mrf.mxu0
    %v1688 = vadd.f32 %v743, %v1687
    %1689 = vmatprep.mubr.f32.mxu0 0.0
    %1690 = vmatmul.mubr.f32.gmra.mxu0 %v1061
    %v1691 = vpop.f32.mrf.mxu0
    %v1692 = vadd.f32 %v748, %v1691
    %v1693 = vpop.f32.mrf.mxu0
    %v1694 = vadd.f32 %v748, %v1693
    %1695 = vmatprep.mubr.f32.mxu0 0.0
    %1696 = vmatmul.mubr.f32.gmra.mxu0 %v1064
    %v1697 = vpop.f32.mrf.mxu0
    %v1698 = vadd.f32 %v753, %v1697
    %v1699 = vpop.f32.mrf.mxu0
    %v1700 = vadd.f32 %v753, %v1699
    %1701 = vmatprep.mubr.f32.mxu0 0.0
    %1702 = vmatmul.mubr.f32.gmra.mxu0 %v1067
    %v1703 = vpop.f32.mrf.mxu0
    %v1704 = vadd.f32 %v758, %v1703
    %v1705 = vpop.f32.mrf.mxu0
    %v1706 = vadd.f32 %v758, %v1705
    %1707 = vmatprep.mubr.f32.mxu0 0.0
    %1708 = vmatmul.mubr.f32.gmra.mxu0 %v1070
    %v1709 = vpop.f32.mrf.mxu0
    %v1710 = vadd.f32 %v763, %v1709
    %v1711 = vpop.f32.mrf.mxu0
    %v1712 = vadd.f32 %v763, %v1711
    %1713 = vmatprep.mubr.f32.mxu0 0.0
    %1714 = vmatmul.mubr.f32.gmra.mxu0 %v1073
    %v1715 = vpop.f32.mrf.mxu0
    %v1716 = vadd.f32 %v768, %v1715
    %v1717 = vpop.f32.mrf.mxu0
    %v1718 = vadd.f32 %v768, %v1717
    %1719 = vmatprep.mubr.f32.mxu0 0.0
    %1720 = vmatmul.mubr.f32.gmra.mxu0 %v1076
    %v1721 = vpop.f32.mrf.mxu0
    %v1722 = vadd.f32 %v773, %v1721
    %v1723 = vpop.f32.mrf.mxu0
    %v1724 = vadd.f32 %v773, %v1723
    %1725 = vmatprep.mubr.f32.mxu0 0.0
    %1726 = vmatmul.mubr.f32.gmra.mxu0 %v1079
    %v1727 = vpop.f32.mrf.mxu0
    %v1728 = vadd.f32 %v778, %v1727
    %v1729 = vpop.f32.mrf.mxu0
    %v1730 = vadd.f32 %v778, %v1729
    %1731 = vmatprep.mubr.f32.mxu0 0.0
    %1732 = vmatmul.mubr.f32.gmra.mxu0 %v1082
    %v1733 = vpop.f32.mrf.mxu0
    %v1734 = vadd.f32 %v783, %v1733
    %v1735 = vpop.f32.mrf.mxu0
    %v1736 = vadd.f32 %v783, %v1735
    %1737 = vmatprep.mubr.f32.mxu0 0.0
    %1738 = vmatmul.mubr.f32.gmra.mxu0 %v1085
    %v1739 = vpop.f32.mrf.mxu0
    %v1740 = vadd.f32 %v788, %v1739
    %v1741 = vpop.f32.mrf.mxu0
    %v1742 = vadd.f32 %v788, %v1741
    %1743 = vmatprep.mubr.f32.mxu0 0.0
    %1744 = vmatmul.mubr.f32.gmra.mxu0 %v1088
    %v1745 = vpop.f32.mrf.mxu0
    %v1746 = vadd.f32 %v793, %v1745
    %v1747 = vpop.f32.mrf.mxu0
    %v1748 = vadd.f32 %v793, %v1747
    %1749 = vdwg.mxu0
    %v1750 = vmax.f32 %v1164, 0.0
    %v1751 = vmax.f32 %v1166, 0.0
    %v1752 = vmax.f32 %v1170, 0.0
    %v1753 = vmax.f32 %v1172, 0.0
    %v1754 = vmax.f32 %v1176, 0.0
    %v1755 = vmax.f32 %v1178, 0.0
    %v1756 = vmax.f32 %v1182, 0.0
    %v1757 = vmax.f32 %v1184, 0.0
    %v1758 = vmax.f32 %v1188, 0.0
    %v1759 = vmax.f32 %v1190, 0.0
    %v1760 = vmax.f32 %v1194, 0.0
    %v1761 = vmax.f32 %v1196, 0.0
    %v1762 = vmax.f32 %v1200, 0.0
    %v1763 = vmax.f32 %v1202, 0.0
    %v1764 = vmax.f32 %v1206, 0.0
    %v1765 = vmax.f32 %v1208, 0.0
    %v1766 = vmax.f32 %v1212, 0.0
    %v1767 = vmax.f32 %v1214, 0.0
    %v1768 = vmax.f32 %v1218, 0.0
    %v1769 = vmax.f32 %v1220, 0.0
    %v1770 = vmax.f32 %v1224, 0.0
    %v1771 = vmax.f32 %v1226, 0.0
    %v1772 = vmax.f32 %v1230, 0.0
    %v1773 = vmax.f32 %v1232, 0.0
    %v1774 = vmax.f32 %v1236, 0.0
    %v1775 = vmax.f32 %v1238, 0.0
    %v1776 = vmax.f32 %v1242, 0.0
    %v1777 = vmax.f32 %v1244, 0.0
    %v1778 = vmax.f32 %v1248, 0.0
    %v1779 = vmax.f32 %v1250, 0.0
    %v1780 = vmax.f32 %v1254, 0.0
    %v1781 = vmax.f32 %v1256, 0.0
    %v1782 = vmax.f32 %v1260, 0.0
    %v1783 = vmax.f32 %v1262, 0.0
    %v1784 = vmax.f32 %v1266, 0.0
    %v1785 = vmax.f32 %v1268, 0.0
    %v1786 = vmax.f32 %v1272, 0.0
    %v1787 = vmax.f32 %v1274, 0.0
    %v1788 = vmax.f32 %v1278, 0.0
    %v1789 = vmax.f32 %v1280, 0.0
    %v1790 = vmax.f32 %v1284, 0.0
    %v1791 = vmax.f32 %v1286, 0.0
    %v1792 = vmax.f32 %v1290, 0.0
    %v1793 = vmax.f32 %v1292, 0.0
    %v1794 = vmax.f32 %v1296, 0.0
    %v1795 = vmax.f32 %v1298, 0.0
    %v1796 = vmax.f32 %v1302, 0.0
    %v1797 = vmax.f32 %v1304, 0.0
    %v1798 = vmax.f32 %v1308, 0.0
    %v1799 = vmax.f32 %v1310, 0.0
    %v1800 = vmax.f32 %v1314, 0.0
    %v1801 = vmax.f32 %v1316, 0.0
    %v1802 = vmax.f32 %v1320, 0.0
    %v1803 = vmax.f32 %v1322, 0.0
    %v1804 = vmax.f32 %v1326, 0.0
    %v1805 = vmax.f32 %v1328, 0.0
    %v1806 = vmax.f32 %v1332, 0.0
    %v1807 = vmax.f32 %v1334, 0.0
    %v1808 = vmax.f32 %v1338, 0.0
    %v1809 = vmax.f32 %v1340, 0.0
    %v1810 = vmax.f32 %v1344, 0.0
    %v1811 = vmax.f32 %v1346, 0.0
    %v1812 = vmax.f32 %v1350, 0.0
    %v1813 = vmax.f32 %v1352, 0.0
    %v1814 = vmax.f32 %v1356, 0.0
    %v1815 = vmax.f32 %v1358, 0.0
    %v1816 = vmax.f32 %v1362, 0.0
    %v1817 = vmax.f32 %v1364, 0.0
    %v1818 = vmax.f32 %v1368, 0.0
    %v1819 = vmax.f32 %v1370, 0.0
    %v1820 = vmax.f32 %v1374, 0.0
    %v1821 = vmax.f32 %v1376, 0.0
    %v1822 = vmax.f32 %v1380, 0.0
    %v1823 = vmax.f32 %v1382, 0.0
    %v1824 = vmax.f32 %v1386, 0.0
    %v1825 = vmax.f32 %v1388, 0.0
    %v1826 = vmax.f32 %v1392, 0.0
    %v1827 = vmax.f32 %v1394, 0.0
    %v1828 = vmax.f32 %v1398, 0.0
    %v1829 = vmax.f32 %v1400, 0.0
    %v1830 = vmax.f32 %v1404, 0.0
    %v1831 = vmax.f32 %v1406, 0.0
    %v1832 = vmax.f32 %v1410, 0.0
    %v1833 = vmax.f32 %v1412, 0.0
    %v1834 = vmax.f32 %v1416, 0.0
    %v1835 = vmax.f32 %v1418, 0.0
    %v1836 = vmax.f32 %v1422, 0.0
    %v1837 = vmax.f32 %v1424, 0.0
    %v1838 = vmax.f32 %v1428, 0.0
    %v1839 = vmax.f32 %v1430, 0.0
    %v1840 = vmax.f32 %v1434, 0.0
    %v1841 = vmax.f32 %v1436, 0.0
    %v1842 = vmax.f32 %v1440, 0.0
    %v1843 = vmax.f32 %v1442, 0.0
    %v1844 = vmax.f32 %v1446, 0.0
    %v1845 = vmax.f32 %v1448, 0.0
    %v1846 = vmax.f32 %v1452, 0.0
    %v1847 = vmax.f32 %v1454, 0.0
    %v1848 = vmax.f32 %v1458, 0.0
    %v1849 = vmax.f32 %v1460, 0.0
    %v1850 = vmax.f32 %v1464, 0.0
    %v1851 = vmax.f32 %v1466, 0.0
    %v1852 = vmax.f32 %v1470, 0.0
    %v1853 = vmax.f32 %v1472, 0.0
    %v1854 = vmax.f32 %v1476, 0.0
    %v1855 = vmax.f32 %v1478, 0.0
    %v1856 = vmax.f32 %v1482, 0.0
    %v1857 = vmax.f32 %v1484, 0.0
    %v1858 = vmax.f32 %v1488, 0.0
    %v1859 = vmax.f32 %v1490, 0.0
    %v1860 = vmax.f32 %v1494, 0.0
    %v1861 = vmax.f32 %v1496, 0.0
    %v1862 = vmax.f32 %v1500, 0.0
    %v1863 = vmax.f32 %v1502, 0.0
    %v1864 = vmax.f32 %v1506, 0.0
    %v1865 = vmax.f32 %v1508, 0.0
    %v1866 = vmax.f32 %v1512, 0.0
    %v1867 = vmax.f32 %v1514, 0.0
    %v1868 = vmax.f32 %v1518, 0.0
    %v1869 = vmax.f32 %v1520, 0.0
    %v1870 = vmax.f32 %v1524, 0.0
    %v1871 = vmax.f32 %v1526, 0.0
    %v1872 = vmax.f32 %v1530, 0.0
    %v1873 = vmax.f32 %v1532, 0.0
    %v1874 = vmax.f32 %v1536, 0.0
    %v1875 = vmax.f32 %v1538, 0.0
    %v1876 = vmax.f32 %v1542, 0.0
    %v1877 = vmax.f32 %v1544, 0.0
    %v1878 = vmax.f32 %v1548, 0.0
    %v1879 = vmax.f32 %v1550, 0.0
    %v1880 = vmax.f32 %v1554, 0.0
    %v1881 = vmax.f32 %v1556, 0.0
    %v1882 = vmax.f32 %v1560, 0.0
    %v1883 = vmax.f32 %v1562, 0.0
    %v1884 = vmax.f32 %v1566, 0.0
    %v1885 = vmax.f32 %v1568, 0.0
    %v1886 = vmax.f32 %v1572, 0.0
    %v1887 = vmax.f32 %v1574, 0.0
    %v1888 = vmax.f32 %v1578, 0.0
    %v1889 = vmax.f32 %v1580, 0.0
    %v1890 = vmax.f32 %v1584, 0.0
    %v1891 = vmax.f32 %v1586, 0.0
    %v1892 = vmax.f32 %v1590, 0.0
    %v1893 = vmax.f32 %v1592, 0.0
    %v1894 = vmax.f32 %v1596, 0.0
    %v1895 = vmax.f32 %v1598, 0.0
    %v1896 = vmax.f32 %v1602, 0.0
    %v1897 = vmax.f32 %v1604, 0.0
    %v1898 = vmax.f32 %v1608, 0.0
    %v1899 = vmax.f32 %v1610, 0.0
    %v1900 = vmax.f32 %v1614, 0.0
    %v1901 = vmax.f32 %v1616, 0.0
    %v1902 = vmax.f32 %v1620, 0.0
    %v1903 = vmax.f32 %v1622, 0.0
    %v1904 = vmax.f32 %v1626, 0.0
    %v1905 = vmax.f32 %v1628, 0.0
    %v1906 = vmax.f32 %v1632, 0.0
    %v1907 = vmax.f32 %v1634, 0.0
    %v1908 = vmax.f32 %v1638, 0.0
    %v1909 = vmax.f32 %v1640, 0.0
    %v1910 = vmax.f32 %v1644, 0.0
    %v1911 = vmax.f32 %v1646, 0.0
    %v1912 = vmax.f32 %v1650, 0.0
    %v1913 = vmax.f32 %v1652, 0.0
    %v1914 = vmax.f32 %v1656, 0.0
    %v1915 = vmax.f32 %v1658, 0.0
    %v1916 = vmax.f32 %v1662, 0.0
    %v1917 = vmax.f32 %v1664, 0.0
    %v1918 = vmax.f32 %v1668, 0.0
    %v1919 = vmax.f32 %v1670, 0.0
    %v1920 = vmax.f32 %v1674, 0.0
    %v1921 = vmax.f32 %v1676, 0.0
    %v1922 = vmax.f32 %v1680, 0.0
    %v1923 = vmax.f32 %v1682, 0.0
    %v1924 = vmax.f32 %v1686, 0.0
    %v1925 = vmax.f32 %v1688, 0.0
    %v1926 = vmax.f32 %v1692, 0.0
    %v1927 = vmax.f32 %v1694, 0.0
    %v1928 = vmax.f32 %v1698, 0.0
    %v1929 = vmax.f32 %v1700, 0.0
    %v1930 = vmax.f32 %v1704, 0.0
    %v1931 = vmax.f32 %v1706, 0.0
    %v1932 = vmax.f32 %v1710, 0.0
    %v1933 = vmax.f32 %v1712, 0.0
    %v1934 = vmax.f32 %v1716, 0.0
    %v1935 = vmax.f32 %v1718, 0.0
    %v1936 = vmax.f32 %v1722, 0.0
    %v1937 = vmax.f32 %v1724, 0.0
    %v1938 = vmax.f32 %v1728, 0.0
    %v1939 = vmax.f32 %v1730, 0.0
    %v1940 = vmax.f32 %v1734, 0.0
    %v1941 = vmax.f32 %v1736, 0.0
    %v1942 = vmax.f32 %v1740, 0.0
    %v1943 = vmax.f32 %v1742, 0.0
    %v1944 = vmax.f32 %v1746, 0.0
    %v1945 = vmax.f32 %v1748, 0.0
    %v1946 = vld [vmem:[#allocation4] sm:$0xff]
    %v1947 = vld [vmem:[#allocation4 + $0x8] sm:$0xff]
    %v1948 = vld [vmem:[#allocation4 + $0x10] sm:$0xff]
    %v1949 = vld [vmem:[#allocation4 + $0x18] sm:$0xff]
    %v1950 = vld [vmem:[#allocation4 + $0x20] sm:$0xff]
    %v1951 = vld [vmem:[#allocation4 + $0x28] sm:$0xff]
    %v1952 = vld [vmem:[#allocation4 + $0x30] sm:$0xff]
    %v1953 = vld [vmem:[#allocation4 + $0x38] sm:$0xff]
    %v1954 = vld [vmem:[#allocation4 + $0x40] sm:$0xff]
    %v1955 = vld [vmem:[#allocation4 + $0x48] sm:$0xff]
    %v1956 = vld [vmem:[#allocation4 + $0x50] sm:$0xff]
    %v1957 = vld [vmem:[#allocation4 + $0x58] sm:$0xff]
    %v1958 = vld [vmem:[#allocation4 + $0x60] sm:$0xff]
    %v1959 = vld [vmem:[#allocation4 + $0x68] sm:$0xff]
    %v1960 = vld [vmem:[#allocation4 + $0x70] sm:$0xff]
    %v1961 = vld [vmem:[#allocation4 + $0x78] sm:$0xff]
    %v1962 = vld [vmem:[#allocation4 + $0x80] sm:$0xff]
    %v1963 = vld [vmem:[#allocation4 + $0x88] sm:$0xff]
    %v1964 = vld [vmem:[#allocation4 + $0x90] sm:$0xff]
    %v1965 = vld [vmem:[#allocation4 + $0x98] sm:$0xff]
    %v1966 = vld [vmem:[#allocation4 + $0xa0] sm:$0xff]
    %v1967 = vld [vmem:[#allocation4 + $0xa8] sm:$0xff]
    %v1968 = vld [vmem:[#allocation4 + $0xb0] sm:$0xff]
    %v1969 = vld [vmem:[#allocation4 + $0xb8] sm:$0xff]
    %v1970 = vld [vmem:[#allocation4 + $0xc0] sm:$0xff]
    %v1971 = vld [vmem:[#allocation4 + $0xc8] sm:$0xff]
    %v1972 = vld [vmem:[#allocation4 + $0xd0] sm:$0xff]
    %v1973 = vld [vmem:[#allocation4 + $0xd8] sm:$0xff]
    %v1974 = vld [vmem:[#allocation4 + $0xe0] sm:$0xff]
    %v1975 = vld [vmem:[#allocation4 + $0xe8] sm:$0xff]
    %v1976 = vld [vmem:[#allocation4 + $0xf0] sm:$0xff]
    %v1977 = vld [vmem:[#allocation4 + $0xf8] sm:$0xff]
    %v1978 = vld [vmem:[#allocation4 + $0x100] sm:$0xff]
    %v1979 = vld [vmem:[#allocation4 + $0x108] sm:$0xff]
    %v1980 = vld [vmem:[#allocation4 + $0x110] sm:$0xff]
    %v1981 = vld [vmem:[#allocation4 + $0x118] sm:$0xff]
    %v1982 = vld [vmem:[#allocation4 + $0x120] sm:$0xff]
    %v1983 = vld [vmem:[#allocation4 + $0x128] sm:$0xff]
    %v1984 = vld [vmem:[#allocation4 + $0x130] sm:$0xff]
    %v1985 = vld [vmem:[#allocation4 + $0x138] sm:$0xff]
    %v1986 = vld [vmem:[#allocation4 + $0x140] sm:$0xff]
    %v1987 = vld [vmem:[#allocation4 + $0x148] sm:$0xff]
    %v1988 = vld [vmem:[#allocation4 + $0x150] sm:$0xff]
    %v1989 = vld [vmem:[#allocation4 + $0x158] sm:$0xff]
    %v1990 = vld [vmem:[#allocation4 + $0x160] sm:$0xff]
    %v1991 = vld [vmem:[#allocation4 + $0x168] sm:$0xff]
    %v1992 = vld [vmem:[#allocation4 + $0x170] sm:$0xff]
    %v1993 = vld [vmem:[#allocation4 + $0x178] sm:$0xff]
    %v1994 = vld [vmem:[#allocation4 + $0x180] sm:$0xff]
    %v1995 = vld [vmem:[#allocation4 + $0x188] sm:$0xff]
    %v1996 = vld [vmem:[#allocation4 + $0x190] sm:$0xff]
    %v1997 = vld [vmem:[#allocation4 + $0x198] sm:$0xff]
    %v1998 = vld [vmem:[#allocation4 + $0x1a0] sm:$0xff]
    %v1999 = vld [vmem:[#allocation4 + $0x1a8] sm:$0xff]
    %v2000 = vld [vmem:[#allocation4 + $0x1b0] sm:$0xff]
    %v2001 = vld [vmem:[#allocation4 + $0x1b8] sm:$0xff]
    %v2002 = vld [vmem:[#allocation4 + $0x1c0] sm:$0xff]
    %v2003 = vld [vmem:[#allocation4 + $0x1c8] sm:$0xff]
    %v2004 = vld [vmem:[#allocation4 + $0x1d0] sm:$0xff]
    %v2005 = vld [vmem:[#allocation4 + $0x1d8] sm:$0xff]
    %v2006 = vld [vmem:[#allocation4 + $0x1e0] sm:$0xff]
    %v2007 = vld [vmem:[#allocation4 + $0x1e8] sm:$0xff]
    %v2008 = vld [vmem:[#allocation4 + $0x1f0] sm:$0xff]
    %v2009 = vld [vmem:[#allocation4 + $0x1f8] sm:$0xff]
    %v2010 = vld [vmem:[#allocation4 + $0x200] sm:$0xff]
    %v2011 = vld [vmem:[#allocation4 + $0x208] sm:$0xff]
    %v2012 = vld [vmem:[#allocation4 + $0x210] sm:$0xff]
    %v2013 = vld [vmem:[#allocation4 + $0x218] sm:$0xff]
    %v2014 = vld [vmem:[#allocation4 + $0x220] sm:$0xff]
    %v2015 = vld [vmem:[#allocation4 + $0x228] sm:$0xff]
    %v2016 = vld [vmem:[#allocation4 + $0x230] sm:$0xff]
    %v2017 = vld [vmem:[#allocation4 + $0x238] sm:$0xff]
    %v2018 = vld [vmem:[#allocation4 + $0x240] sm:$0xff]
    %v2019 = vld [vmem:[#allocation4 + $0x248] sm:$0xff]
    %v2020 = vld [vmem:[#allocation4 + $0x250] sm:$0xff]
    %v2021 = vld [vmem:[#allocation4 + $0x258] sm:$0xff]
    %v2022 = vld [vmem:[#allocation4 + $0x260] sm:$0xff]
    %v2023 = vld [vmem:[#allocation4 + $0x268] sm:$0xff]
    %v2024 = vld [vmem:[#allocation4 + $0x270] sm:$0xff]
    %v2025 = vld [vmem:[#allocation4 + $0x278] sm:$0xff]
    %v2026 = vld [vmem:[#allocation4 + $0x280] sm:$0xff]
    %v2027 = vld [vmem:[#allocation4 + $0x288] sm:$0xff]
    %v2028 = vld [vmem:[#allocation4 + $0x290] sm:$0xff]
    %v2029 = vld [vmem:[#allocation4 + $0x298] sm:$0xff]
    %v2030 = vld [vmem:[#allocation4 + $0x2a0] sm:$0xff]
    %v2031 = vld [vmem:[#allocation4 + $0x2a8] sm:$0xff]
    %v2032 = vld [vmem:[#allocation4 + $0x2b0] sm:$0xff]
    %v2033 = vld [vmem:[#allocation4 + $0x2b8] sm:$0xff]
    %v2034 = vld [vmem:[#allocation4 + $0x2c0] sm:$0xff]
    %v2035 = vld [vmem:[#allocation4 + $0x2c8] sm:$0xff]
    %v2036 = vld [vmem:[#allocation4 + $0x2d0] sm:$0xff]
    %v2037 = vld [vmem:[#allocation4 + $0x2d8] sm:$0xff]
    %v2038 = vld [vmem:[#allocation4 + $0x2e0] sm:$0xff]
    %v2039 = vld [vmem:[#allocation4 + $0x2e8] sm:$0xff]
    %v2040 = vld [vmem:[#allocation4 + $0x2f0] sm:$0xff]
    %v2041 = vld [vmem:[#allocation4 + $0x2f8] sm:$0xff]
    %v2042 = vld [vmem:[#allocation4 + $0x300] sm:$0xff]
    %v2043 = vld [vmem:[#allocation4 + $0x308] sm:$0xff]
    %v2044 = vld [vmem:[#allocation4 + $0x310] sm:$0xff]
    %v2045 = vld [vmem:[#allocation4 + $0x318] sm:$0xff]
    %v2046 = vld [vmem:[#allocation4 + $0x320] sm:$0xff]
    %v2047 = vld [vmem:[#allocation4 + $0x328] sm:$0xff]
    %v2048 = vld [vmem:[#allocation4 + $0x330] sm:$0xff]
    %v2049 = vld [vmem:[#allocation4 + $0x338] sm:$0xff]
    %v2050 = vld [vmem:[#allocation4 + $0x340] sm:$0xff]
    %v2051 = vld [vmem:[#allocation4 + $0x348] sm:$0xff]
    %v2052 = vld [vmem:[#allocation4 + $0x350] sm:$0xff]
    %v2053 = vld [vmem:[#allocation4 + $0x358] sm:$0xff]
    %v2054 = vld [vmem:[#allocation4 + $0x360] sm:$0xff]
    %v2055 = vld [vmem:[#allocation4 + $0x368] sm:$0xff]
    %v2056 = vld [vmem:[#allocation4 + $0x370] sm:$0xff]
    %v2057 = vld [vmem:[#allocation4 + $0x378] sm:$0xff]
    %v2058 = vld [vmem:[#allocation4 + $0x380] sm:$0xff]
    %v2059 = vld [vmem:[#allocation4 + $0x388] sm:$0xff]
    %v2060 = vld [vmem:[#allocation4 + $0x390] sm:$0xff]
    %v2061 = vld [vmem:[#allocation4 + $0x398] sm:$0xff]
    %v2062 = vld [vmem:[#allocation4 + $0x3a0] sm:$0xff]
    %v2063 = vld [vmem:[#allocation4 + $0x3a8] sm:$0xff]
    %v2064 = vld [vmem:[#allocation4 + $0x3b0] sm:$0xff]
    %v2065 = vld [vmem:[#allocation4 + $0x3b8] sm:$0xff]
    %v2066 = vld [vmem:[#allocation4 + $0x3c0] sm:$0xff]
    %v2067 = vld [vmem:[#allocation4 + $0x3c8] sm:$0xff]
    %v2068 = vld [vmem:[#allocation4 + $0x3d0] sm:$0xff]
    %v2069 = vld [vmem:[#allocation4 + $0x3d8] sm:$0xff]
    %v2070 = vld [vmem:[#allocation4 + $0x3e0] sm:$0xff]
    %v2071 = vld [vmem:[#allocation4 + $0x3e8] sm:$0xff]
    %v2072 = vld [vmem:[#allocation4 + $0x3f0] sm:$0xff]
    %v2073 = vld [vmem:[#allocation4 + $0x3f8] sm:$0xff]
    %v2074 = vld [vmem:[#allocation4 + $0x400] sm:$0xff]
    %v2075 = vld [vmem:[#allocation4 + $0x408] sm:$0xff]
    %v2076 = vld [vmem:[#allocation4 + $0x410] sm:$0xff]
    %v2077 = vld [vmem:[#allocation4 + $0x418] sm:$0xff]
    %v2078 = vld [vmem:[#allocation4 + $0x420] sm:$0xff]
    %v2079 = vld [vmem:[#allocation4 + $0x428] sm:$0xff]
    %v2080 = vld [vmem:[#allocation4 + $0x430] sm:$0xff]
    %v2081 = vld [vmem:[#allocation4 + $0x438] sm:$0xff]
    %v2082 = vld [vmem:[#allocation4 + $0x440] sm:$0xff]
    %v2083 = vld [vmem:[#allocation4 + $0x448] sm:$0xff]
    %v2084 = vld [vmem:[#allocation4 + $0x450] sm:$0xff]
    %v2085 = vld [vmem:[#allocation4 + $0x458] sm:$0xff]
    %v2086 = vld [vmem:[#allocation4 + $0x460] sm:$0xff]
    %v2087 = vld [vmem:[#allocation4 + $0x468] sm:$0xff]
    %v2088 = vld [vmem:[#allocation4 + $0x470] sm:$0xff]
    %v2089 = vld [vmem:[#allocation4 + $0x478] sm:$0xff]
    %v2090 = vld [vmem:[#allocation4 + $0x480] sm:$0xff]
    %v2091 = vld [vmem:[#allocation4 + $0x488] sm:$0xff]
    %v2092 = vld [vmem:[#allocation4 + $0x490] sm:$0xff]
    %v2093 = vld [vmem:[#allocation4 + $0x498] sm:$0xff]
    %v2094 = vld [vmem:[#allocation4 + $0x4a0] sm:$0xff]
    %v2095 = vld [vmem:[#allocation4 + $0x4a8] sm:$0xff]
    %v2096 = vld [vmem:[#allocation4 + $0x4b0] sm:$0xff]
    %v2097 = vld [vmem:[#allocation4 + $0x4b8] sm:$0xff]
    %v2098 = vld [vmem:[#allocation4 + $0x4c0] sm:$0xff]
    %v2099 = vld [vmem:[#allocation4 + $0x4c8] sm:$0xff]
    %v2100 = vld [vmem:[#allocation4 + $0x4d0] sm:$0xff]
    %v2101 = vld [vmem:[#allocation4 + $0x4d8] sm:$0xff]
    %v2102 = vld [vmem:[#allocation4 + $0x4e0] sm:$0xff]
    %v2103 = vld [vmem:[#allocation4 + $0x4e8] sm:$0xff]
    %v2104 = vld [vmem:[#allocation4 + $0x4f0] sm:$0xff]
    %v2105 = vld [vmem:[#allocation4 + $0x4f8] sm:$0xff]
    %v2106 = vld [vmem:[#allocation4 + $0x500] sm:$0xff]
    %v2107 = vld [vmem:[#allocation4 + $0x508] sm:$0xff]
    %v2108 = vld [vmem:[#allocation4 + $0x510] sm:$0xff]
    %v2109 = vld [vmem:[#allocation4 + $0x518] sm:$0xff]
    %v2110 = vld [vmem:[#allocation4 + $0x520] sm:$0xff]
    %v2111 = vld [vmem:[#allocation4 + $0x528] sm:$0xff]
    %v2112 = vld [vmem:[#allocation4 + $0x530] sm:$0xff]
    %v2113 = vld [vmem:[#allocation4 + $0x538] sm:$0xff]
    %v2114 = vld [vmem:[#allocation4 + $0x540] sm:$0xff]
    %v2115 = vld [vmem:[#allocation4 + $0x548] sm:$0xff]
    %v2116 = vld [vmem:[#allocation4 + $0x550] sm:$0xff]
    %v2117 = vld [vmem:[#allocation4 + $0x558] sm:$0xff]
    %v2118 = vld [vmem:[#allocation4 + $0x560] sm:$0xff]
    %v2119 = vld [vmem:[#allocation4 + $0x568] sm:$0xff]
    %v2120 = vld [vmem:[#allocation4 + $0x570] sm:$0xff]
    %v2121 = vld [vmem:[#allocation4 + $0x578] sm:$0xff]
    %v2122 = vld [vmem:[#allocation4 + $0x580] sm:$0xff]
    %v2123 = vld [vmem:[#allocation4 + $0x588] sm:$0xff]
    %v2124 = vld [vmem:[#allocation4 + $0x590] sm:$0xff]
    %v2125 = vld [vmem:[#allocation4 + $0x598] sm:$0xff]
    %v2126 = vld [vmem:[#allocation4 + $0x5a0] sm:$0xff]
    %v2127 = vld [vmem:[#allocation4 + $0x5a8] sm:$0xff]
    %v2128 = vld [vmem:[#allocation4 + $0x5b0] sm:$0xff]
    %v2129 = vld [vmem:[#allocation4 + $0x5b8] sm:$0xff]
    %v2130 = vld [vmem:[#allocation4 + $0x5c0] sm:$0xff]
    %v2131 = vld [vmem:[#allocation4 + $0x5c8] sm:$0xff]
    %v2132 = vld [vmem:[#allocation4 + $0x5d0] sm:$0xff]
    %v2133 = vld [vmem:[#allocation4 + $0x5d8] sm:$0xff]
    %v2134 = vld [vmem:[#allocation4 + $0x5e0] sm:$0xff]
    %v2135 = vld [vmem:[#allocation4 + $0x5e8] sm:$0xff]
    %v2136 = vld [vmem:[#allocation4 + $0x5f0] sm:$0xff]
    %v2137 = vld [vmem:[#allocation4 + $0x5f8] sm:$0xff]
    %v2138 = vld [vmem:[#allocation4 + $0x600] sm:$0xff]
    %v2139 = vld [vmem:[#allocation4 + $0x608] sm:$0xff]
    %v2140 = vld [vmem:[#allocation4 + $0x610] sm:$0xff]
    %v2141 = vld [vmem:[#allocation4 + $0x618] sm:$0xff]
    %v2142 = vld [vmem:[#allocation4 + $0x620] sm:$0xff]
    %v2143 = vld [vmem:[#allocation4 + $0x628] sm:$0xff]
    %v2144 = vld [vmem:[#allocation4 + $0x630] sm:$0xff]
    %v2145 = vld [vmem:[#allocation4 + $0x638] sm:$0xff]
    %v2146 = vld [vmem:[#allocation4 + $0x640] sm:$0xff]
    %v2147 = vld [vmem:[#allocation4 + $0x648] sm:$0xff]
    %v2148 = vld [vmem:[#allocation4 + $0x650] sm:$0xff]
    %v2149 = vld [vmem:[#allocation4 + $0x658] sm:$0xff]
    %v2150 = vld [vmem:[#allocation4 + $0x660] sm:$0xff]
    %v2151 = vld [vmem:[#allocation4 + $0x668] sm:$0xff]
    %v2152 = vld [vmem:[#allocation4 + $0x670] sm:$0xff]
    %v2153 = vld [vmem:[#allocation4 + $0x678] sm:$0xff]
    %v2154 = vld [vmem:[#allocation4 + $0x680] sm:$0xff]
    %v2155 = vld [vmem:[#allocation4 + $0x688] sm:$0xff]
    %v2156 = vld [vmem:[#allocation4 + $0x690] sm:$0xff]
    %v2157 = vld [vmem:[#allocation4 + $0x698] sm:$0xff]
    %v2158 = vld [vmem:[#allocation4 + $0x6a0] sm:$0xff]
    %v2159 = vld [vmem:[#allocation4 + $0x6a8] sm:$0xff]
    %v2160 = vld [vmem:[#allocation4 + $0x6b0] sm:$0xff]
    %v2161 = vld [vmem:[#allocation4 + $0x6b8] sm:$0xff]
    %v2162 = vld [vmem:[#allocation4 + $0x6c0] sm:$0xff]
    %v2163 = vld [vmem:[#allocation4 + $0x6c8] sm:$0xff]
    %v2164 = vld [vmem:[#allocation4 + $0x6d0] sm:$0xff]
    %v2165 = vld [vmem:[#allocation4 + $0x6d8] sm:$0xff]
    %v2166 = vld [vmem:[#allocation4 + $0x6e0] sm:$0xff]
    %v2167 = vld [vmem:[#allocation4 + $0x6e8] sm:$0xff]
    %v2168 = vld [vmem:[#allocation4 + $0x6f0] sm:$0xff]
    %v2169 = vld [vmem:[#allocation4 + $0x6f8] sm:$0xff]
    %v2170 = vld [vmem:[#allocation4 + $0x700] sm:$0xff]
    %v2171 = vld [vmem:[#allocation4 + $0x708] sm:$0xff]
    %v2172 = vld [vmem:[#allocation4 + $0x710] sm:$0xff]
    %v2173 = vld [vmem:[#allocation4 + $0x718] sm:$0xff]
    %v2174 = vld [vmem:[#allocation4 + $0x720] sm:$0xff]
    %v2175 = vld [vmem:[#allocation4 + $0x728] sm:$0xff]
    %v2176 = vld [vmem:[#allocation4 + $0x730] sm:$0xff]
    %v2177 = vld [vmem:[#allocation4 + $0x738] sm:$0xff]
    %v2178 = vld [vmem:[#allocation4 + $0x740] sm:$0xff]
    %v2179 = vld [vmem:[#allocation4 + $0x748] sm:$0xff]
    %v2180 = vld [vmem:[#allocation4 + $0x750] sm:$0xff]
    %v2181 = vld [vmem:[#allocation4 + $0x758] sm:$0xff]
    %v2182 = vld [vmem:[#allocation4 + $0x760] sm:$0xff]
    %v2183 = vld [vmem:[#allocation4 + $0x768] sm:$0xff]
    %v2184 = vld [vmem:[#allocation4 + $0x770] sm:$0xff]
    %v2185 = vld [vmem:[#allocation4 + $0x778] sm:$0xff]
    %v2186 = vld [vmem:[#allocation4 + $0x780] sm:$0xff]
    %v2187 = vld [vmem:[#allocation4 + $0x788] sm:$0xff]
    %v2188 = vld [vmem:[#allocation4 + $0x790] sm:$0xff]
    %v2189 = vld [vmem:[#allocation4 + $0x798] sm:$0xff]
    %v2190 = vld [vmem:[#allocation4 + $0x7a0] sm:$0xff]
    %v2191 = vld [vmem:[#allocation4 + $0x7a8] sm:$0xff]
    %v2192 = vld [vmem:[#allocation4 + $0x7b0] sm:$0xff]
    %v2193 = vld [vmem:[#allocation4 + $0x7b8] sm:$0xff]
    %v2194 = vld [vmem:[#allocation4 + $0x7c0] sm:$0xff]
    %v2195 = vld [vmem:[#allocation4 + $0x7c8] sm:$0xff]
    %v2196 = vld [vmem:[#allocation4 + $0x7d0] sm:$0xff]
    %v2197 = vld [vmem:[#allocation4 + $0x7d8] sm:$0xff]
    %v2198 = vld [vmem:[#allocation4 + $0x7e0] sm:$0xff]
    %v2199 = vld [vmem:[#allocation4 + $0x7e8] sm:$0xff]
    %v2200 = vld [vmem:[#allocation4 + $0x7f0] sm:$0xff]
    %v2201 = vld [vmem:[#allocation4 + $0x7f8] sm:$0xff]
    %v2202 = vld [vmem:[#allocation4 + $0x800] sm:$0xff]
    %v2203 = vld [vmem:[#allocation4 + $0x808] sm:$0xff]
    %v2204 = vld [vmem:[#allocation4 + $0x810] sm:$0xff]
    %v2205 = vld [vmem:[#allocation4 + $0x818] sm:$0xff]
    %v2206 = vld [vmem:[#allocation4 + $0x820] sm:$0xff]
    %v2207 = vld [vmem:[#allocation4 + $0x828] sm:$0xff]
    %v2208 = vld [vmem:[#allocation4 + $0x830] sm:$0xff]
    %v2209 = vld [vmem:[#allocation4 + $0x838] sm:$0xff]
    %v2210 = vld [vmem:[#allocation4 + $0x840] sm:$0xff]
    %v2211 = vld [vmem:[#allocation4 + $0x848] sm:$0xff]
    %v2212 = vld [vmem:[#allocation4 + $0x850] sm:$0xff]
    %v2213 = vld [vmem:[#allocation4 + $0x858] sm:$0xff]
    %v2214 = vld [vmem:[#allocation4 + $0x860] sm:$0xff]
    %v2215 = vld [vmem:[#allocation4 + $0x868] sm:$0xff]
    %v2216 = vld [vmem:[#allocation4 + $0x870] sm:$0xff]
    %v2217 = vld [vmem:[#allocation4 + $0x878] sm:$0xff]
    %v2218 = vld [vmem:[#allocation4 + $0x880] sm:$0xff]
    %v2219 = vld [vmem:[#allocation4 + $0x888] sm:$0xff]
    %v2220 = vld [vmem:[#allocation4 + $0x890] sm:$0xff]
    %v2221 = vld [vmem:[#allocation4 + $0x898] sm:$0xff]
    %v2222 = vld [vmem:[#allocation4 + $0x8a0] sm:$0xff]
    %v2223 = vld [vmem:[#allocation4 + $0x8a8] sm:$0xff]
    %v2224 = vld [vmem:[#allocation4 + $0x8b0] sm:$0xff]
    %v2225 = vld [vmem:[#allocation4 + $0x8b8] sm:$0xff]
    %v2226 = vld [vmem:[#allocation4 + $0x8c0] sm:$0xff]
    %v2227 = vld [vmem:[#allocation4 + $0x8c8] sm:$0xff]
    %v2228 = vld [vmem:[#allocation4 + $0x8d0] sm:$0xff]
    %v2229 = vld [vmem:[#allocation4 + $0x8d8] sm:$0xff]
    %v2230 = vld [vmem:[#allocation4 + $0x8e0] sm:$0xff]
    %v2231 = vld [vmem:[#allocation4 + $0x8e8] sm:$0xff]
    %v2232 = vld [vmem:[#allocation4 + $0x8f0] sm:$0xff]
    %v2233 = vld [vmem:[#allocation4 + $0x8f8] sm:$0xff]
    %v2234 = vld [vmem:[#allocation4 + $0x900] sm:$0xff]
    %v2235 = vld [vmem:[#allocation4 + $0x908] sm:$0xff]
    %v2236 = vld [vmem:[#allocation4 + $0x910] sm:$0xff]
    %v2237 = vld [vmem:[#allocation4 + $0x918] sm:$0xff]
    %v2238 = vld [vmem:[#allocation4 + $0x920] sm:$0xff]
    %v2239 = vld [vmem:[#allocation4 + $0x928] sm:$0xff]
    %v2240 = vld [vmem:[#allocation4 + $0x930] sm:$0xff]
    %v2241 = vld [vmem:[#allocation4 + $0x938] sm:$0xff]
    %v2242 = vld [vmem:[#allocation4 + $0x940] sm:$0xff]
    %v2243 = vld [vmem:[#allocation4 + $0x948] sm:$0xff]
    %v2244 = vld [vmem:[#allocation4 + $0x950] sm:$0xff]
    %v2245 = vld [vmem:[#allocation4 + $0x958] sm:$0xff]
    %v2246 = vld [vmem:[#allocation4 + $0x960] sm:$0xff]
    %v2247 = vld [vmem:[#allocation4 + $0x968] sm:$0xff]
    %v2248 = vld [vmem:[#allocation4 + $0x970] sm:$0xff]
    %v2249 = vld [vmem:[#allocation4 + $0x978] sm:$0xff]
    %v2250 = vld [vmem:[#allocation4 + $0x980] sm:$0xff]
    %v2251 = vld [vmem:[#allocation4 + $0x988] sm:$0xff]
    %v2252 = vld [vmem:[#allocation4 + $0x990] sm:$0xff]
    %v2253 = vld [vmem:[#allocation4 + $0x998] sm:$0xff]
    %v2254 = vld [vmem:[#allocation4 + $0x9a0] sm:$0xff]
    %v2255 = vld [vmem:[#allocation4 + $0x9a8] sm:$0xff]
    %v2256 = vld [vmem:[#allocation4 + $0x9b0] sm:$0xff]
    %v2257 = vld [vmem:[#allocation4 + $0x9b8] sm:$0xff]
    %v2258 = vld [vmem:[#allocation4 + $0x9c0] sm:$0xff]
    %v2259 = vld [vmem:[#allocation4 + $0x9c8] sm:$0xff]
    %v2260 = vld [vmem:[#allocation4 + $0x9d0] sm:$0xff]
    %v2261 = vld [vmem:[#allocation4 + $0x9d8] sm:$0xff]
    %v2262 = vld [vmem:[#allocation4 + $0x9e0] sm:$0xff]
    %v2263 = vld [vmem:[#allocation4 + $0x9e8] sm:$0xff]
    %v2264 = vld [vmem:[#allocation4 + $0x9f0] sm:$0xff]
    %v2265 = vld [vmem:[#allocation4 + $0x9f8] sm:$0xff]
    %v2266 = vld [vmem:[#allocation4 + $0xa00] sm:$0xff]
    %v2267 = vld [vmem:[#allocation4 + $0xa08] sm:$0xff]
    %v2268 = vld [vmem:[#allocation4 + $0xa10] sm:$0xff]
    %v2269 = vld [vmem:[#allocation4 + $0xa18] sm:$0xff]
    %v2270 = vld [vmem:[#allocation4 + $0xa20] sm:$0xff]
    %v2271 = vld [vmem:[#allocation4 + $0xa28] sm:$0xff]
    %v2272 = vld [vmem:[#allocation4 + $0xa30] sm:$0xff]
    %v2273 = vld [vmem:[#allocation4 + $0xa38] sm:$0xff]
    %v2274 = vld [vmem:[#allocation4 + $0xa40] sm:$0xff]
    %v2275 = vld [vmem:[#allocation4 + $0xa48] sm:$0xff]
    %v2276 = vld [vmem:[#allocation4 + $0xa50] sm:$0xff]
    %v2277 = vld [vmem:[#allocation4 + $0xa58] sm:$0xff]
    %v2278 = vld [vmem:[#allocation4 + $0xa60] sm:$0xff]
    %v2279 = vld [vmem:[#allocation4 + $0xa68] sm:$0xff]
    %v2280 = vld [vmem:[#allocation4 + $0xa70] sm:$0xff]
    %v2281 = vld [vmem:[#allocation4 + $0xa78] sm:$0xff]
    %v2282 = vld [vmem:[#allocation4 + $0xa80] sm:$0xff]
    %v2283 = vld [vmem:[#allocation4 + $0xa88] sm:$0xff]
    %v2284 = vld [vmem:[#allocation4 + $0xa90] sm:$0xff]
    %v2285 = vld [vmem:[#allocation4 + $0xa98] sm:$0xff]
    %v2286 = vld [vmem:[#allocation4 + $0xaa0] sm:$0xff]
    %v2287 = vld [vmem:[#allocation4 + $0xaa8] sm:$0xff]
    %v2288 = vld [vmem:[#allocation4 + $0xab0] sm:$0xff]
    %v2289 = vld [vmem:[#allocation4 + $0xab8] sm:$0xff]
    %v2290 = vld [vmem:[#allocation4 + $0xac0] sm:$0xff]
    %v2291 = vld [vmem:[#allocation4 + $0xac8] sm:$0xff]
    %v2292 = vld [vmem:[#allocation4 + $0xad0] sm:$0xff]
    %v2293 = vld [vmem:[#allocation4 + $0xad8] sm:$0xff]
    %v2294 = vld [vmem:[#allocation4 + $0xae0] sm:$0xff]
    %v2295 = vld [vmem:[#allocation4 + $0xae8] sm:$0xff]
    %v2296 = vld [vmem:[#allocation4 + $0xaf0] sm:$0xff]
    %v2297 = vld [vmem:[#allocation4 + $0xaf8] sm:$0xff]
    %v2298 = vld [vmem:[#allocation4 + $0xb00] sm:$0xff]
    %v2299 = vld [vmem:[#allocation4 + $0xb08] sm:$0xff]
    %v2300 = vld [vmem:[#allocation4 + $0xb10] sm:$0xff]
    %v2301 = vld [vmem:[#allocation4 + $0xb18] sm:$0xff]
    %v2302 = vld [vmem:[#allocation4 + $0xb20] sm:$0xff]
    %v2303 = vld [vmem:[#allocation4 + $0xb28] sm:$0xff]
    %v2304 = vld [vmem:[#allocation4 + $0xb30] sm:$0xff]
    %v2305 = vld [vmem:[#allocation4 + $0xb38] sm:$0xff]
    %v2306 = vld [vmem:[#allocation4 + $0xb40] sm:$0xff]
    %v2307 = vld [vmem:[#allocation4 + $0xb48] sm:$0xff]
    %v2308 = vld [vmem:[#allocation4 + $0xb50] sm:$0xff]
    %v2309 = vld [vmem:[#allocation4 + $0xb58] sm:$0xff]
    %v2310 = vld [vmem:[#allocation4 + $0xb60] sm:$0xff]
    %v2311 = vld [vmem:[#allocation4 + $0xb68] sm:$0xff]
    %v2312 = vld [vmem:[#allocation4 + $0xb70] sm:$0xff]
    %v2313 = vld [vmem:[#allocation4 + $0xb78] sm:$0xff]
    %v2314 = vld [vmem:[#allocation4 + $0xb80] sm:$0xff]
    %v2315 = vld [vmem:[#allocation4 + $0xb88] sm:$0xff]
    %v2316 = vld [vmem:[#allocation4 + $0xb90] sm:$0xff]
    %v2317 = vld [vmem:[#allocation4 + $0xb98] sm:$0xff]
    %v2318 = vld [vmem:[#allocation4 + $0xba0] sm:$0xff]
    %v2319 = vld [vmem:[#allocation4 + $0xba8] sm:$0xff]
    %v2320 = vld [vmem:[#allocation4 + $0xbb0] sm:$0xff]
    %v2321 = vld [vmem:[#allocation4 + $0xbb8] sm:$0xff]
    %v2322 = vld [vmem:[#allocation4 + $0xbc0] sm:$0xff]
    %v2323 = vld [vmem:[#allocation4 + $0xbc8] sm:$0xff]
    %v2324 = vld [vmem:[#allocation4 + $0xbd0] sm:$0xff]
    %v2325 = vld [vmem:[#allocation4 + $0xbd8] sm:$0xff]
    %v2326 = vld [vmem:[#allocation4 + $0xbe0] sm:$0xff]
    %v2327 = vld [vmem:[#allocation4 + $0xbe8] sm:$0xff]
    %v2328 = vld [vmem:[#allocation4 + $0xbf0] sm:$0xff]
    %v2329 = vld [vmem:[#allocation4 + $0xbf8] sm:$0xff]
    %v2330 = vld [vmem:[#allocation4 + $0xc00] sm:$0xff]
    %v2331 = vld [vmem:[#allocation4 + $0xc08] sm:$0xff]
    %v2332 = vld [vmem:[#allocation4 + $0xc10] sm:$0xff]
    %v2333 = vld [vmem:[#allocation4 + $0xc18] sm:$0xff]
    %v2334 = vld [vmem:[#allocation4 + $0xc20] sm:$0xff]
    %v2335 = vld [vmem:[#allocation4 + $0xc28] sm:$0xff]
    %v2336 = vld [vmem:[#allocation4 + $0xc30] sm:$0xff]
    %v2337 = vld [vmem:[#allocation4 + $0xc38] sm:$0xff]
    %v2338 = vld [vmem:[#allocation4 + $0xc40] sm:$0xff]
    %v2339 = vld [vmem:[#allocation4 + $0xc48] sm:$0xff]
    %v2340 = vld [vmem:[#allocation4 + $0xc50] sm:$0xff]
    %v2341 = vld [vmem:[#allocation4 + $0xc58] sm:$0xff]
    %v2342 = vld [vmem:[#allocation4 + $0xc60] sm:$0xff]
    %v2343 = vld [vmem:[#allocation4 + $0xc68] sm:$0xff]
    %v2344 = vld [vmem:[#allocation4 + $0xc70] sm:$0xff]
    %v2345 = vld [vmem:[#allocation4 + $0xc78] sm:$0xff]
    %v2346 = vld [vmem:[#allocation4 + $0xc80] sm:$0xff]
    %v2347 = vld [vmem:[#allocation4 + $0xc88] sm:$0xff]
    %v2348 = vld [vmem:[#allocation4 + $0xc90] sm:$0xff]
    %v2349 = vld [vmem:[#allocation4 + $0xc98] sm:$0xff]
    %v2350 = vld [vmem:[#allocation4 + $0xca0] sm:$0xff]
    %v2351 = vld [vmem:[#allocation4 + $0xca8] sm:$0xff]
    %v2352 = vld [vmem:[#allocation4 + $0xcb0] sm:$0xff]
    %v2353 = vld [vmem:[#allocation4 + $0xcb8] sm:$0xff]
    %v2354 = vld [vmem:[#allocation4 + $0xcc0] sm:$0xff]
    %v2355 = vld [vmem:[#allocation4 + $0xcc8] sm:$0xff]
    %v2356 = vld [vmem:[#allocation4 + $0xcd0] sm:$0xff]
    %v2357 = vld [vmem:[#allocation4 + $0xcd8] sm:$0xff]
    %v2358 = vld [vmem:[#allocation4 + $0xce0] sm:$0xff]
    %v2359 = vld [vmem:[#allocation4 + $0xce8] sm:$0xff]
    %v2360 = vld [vmem:[#allocation4 + $0xcf0] sm:$0xff]
    %v2361 = vld [vmem:[#allocation4 + $0xcf8] sm:$0xff]
    %v2362 = vld [vmem:[#allocation4 + $0xd00] sm:$0xff]
    %v2363 = vld [vmem:[#allocation4 + $0xd08] sm:$0xff]
    %v2364 = vld [vmem:[#allocation4 + $0xd10] sm:$0xff]
    %v2365 = vld [vmem:[#allocation4 + $0xd18] sm:$0xff]
    %v2366 = vld [vmem:[#allocation4 + $0xd20] sm:$0xff]
    %v2367 = vld [vmem:[#allocation4 + $0xd28] sm:$0xff]
    %v2368 = vld [vmem:[#allocation4 + $0xd30] sm:$0xff]
    %v2369 = vld [vmem:[#allocation4 + $0xd38] sm:$0xff]
    %v2370 = vld [vmem:[#allocation4 + $0xd40] sm:$0xff]
    %v2371 = vld [vmem:[#allocation4 + $0xd48] sm:$0xff]
    %v2372 = vld [vmem:[#allocation4 + $0xd50] sm:$0xff]
    %v2373 = vld [vmem:[#allocation4 + $0xd58] sm:$0xff]
    %v2374 = vld [vmem:[#allocation4 + $0xd60] sm:$0xff]
    %v2375 = vld [vmem:[#allocation4 + $0xd68] sm:$0xff]
    %v2376 = vld [vmem:[#allocation4 + $0xd70] sm:$0xff]
    %v2377 = vld [vmem:[#allocation4 + $0xd78] sm:$0xff]
    %v2378 = vld [vmem:[#allocation4 + $0xd80] sm:$0xff]
    %v2379 = vld [vmem:[#allocation4 + $0xd88] sm:$0xff]
    %v2380 = vld [vmem:[#allocation4 + $0xd90] sm:$0xff]
    %v2381 = vld [vmem:[#allocation4 + $0xd98] sm:$0xff]
    %v2382 = vld [vmem:[#allocation4 + $0xda0] sm:$0xff]
    %v2383 = vld [vmem:[#allocation4 + $0xda8] sm:$0xff]
    %v2384 = vld [vmem:[#allocation4 + $0xdb0] sm:$0xff]
    %v2385 = vld [vmem:[#allocation4 + $0xdb8] sm:$0xff]
    %v2386 = vld [vmem:[#allocation4 + $0xdc0] sm:$0xff]
    %v2387 = vld [vmem:[#allocation4 + $0xdc8] sm:$0xff]
    %v2388 = vld [vmem:[#allocation4 + $0xdd0] sm:$0xff]
    %v2389 = vld [vmem:[#allocation4 + $0xdd8] sm:$0xff]
    %v2390 = vld [vmem:[#allocation4 + $0xde0] sm:$0xff]
    %v2391 = vld [vmem:[#allocation4 + $0xde8] sm:$0xff]
    %v2392 = vld [vmem:[#allocation4 + $0xdf0] sm:$0xff]
    %v2393 = vld [vmem:[#allocation4 + $0xdf8] sm:$0xff]
    %v2394 = vld [vmem:[#allocation4 + $0xe00] sm:$0xff]
    %v2395 = vld [vmem:[#allocation4 + $0xe08] sm:$0xff]
    %v2396 = vld [vmem:[#allocation4 + $0xe10] sm:$0xff]
    %v2397 = vld [vmem:[#allocation4 + $0xe18] sm:$0xff]
    %v2398 = vld [vmem:[#allocation4 + $0xe20] sm:$0xff]
    %v2399 = vld [vmem:[#allocation4 + $0xe28] sm:$0xff]
    %v2400 = vld [vmem:[#allocation4 + $0xe30] sm:$0xff]
    %v2401 = vld [vmem:[#allocation4 + $0xe38] sm:$0xff]
    %v2402 = vld [vmem:[#allocation4 + $0xe40] sm:$0xff]
    %v2403 = vld [vmem:[#allocation4 + $0xe48] sm:$0xff]
    %v2404 = vld [vmem:[#allocation4 + $0xe50] sm:$0xff]
    %v2405 = vld [vmem:[#allocation4 + $0xe58] sm:$0xff]
    %v2406 = vld [vmem:[#allocation4 + $0xe60] sm:$0xff]
    %v2407 = vld [vmem:[#allocation4 + $0xe68] sm:$0xff]
    %v2408 = vld [vmem:[#allocation4 + $0xe70] sm:$0xff]
    %v2409 = vld [vmem:[#allocation4 + $0xe78] sm:$0xff]
    %v2410 = vld [vmem:[#allocation4 + $0xe80] sm:$0xff]
    %v2411 = vld [vmem:[#allocation4 + $0xe88] sm:$0xff]
    %v2412 = vld [vmem:[#allocation4 + $0xe90] sm:$0xff]
    %v2413 = vld [vmem:[#allocation4 + $0xe98] sm:$0xff]
    %v2414 = vld [vmem:[#allocation4 + $0xea0] sm:$0xff]
    %v2415 = vld [vmem:[#allocation4 + $0xea8] sm:$0xff]
    %v2416 = vld [vmem:[#allocation4 + $0xeb0] sm:$0xff]
    %v2417 = vld [vmem:[#allocation4 + $0xeb8] sm:$0xff]
    %v2418 = vld [vmem:[#allocation4 + $0xec0] sm:$0xff]
    %v2419 = vld [vmem:[#allocation4 + $0xec8] sm:$0xff]
    %v2420 = vld [vmem:[#allocation4 + $0xed0] sm:$0xff]
    %v2421 = vld [vmem:[#allocation4 + $0xed8] sm:$0xff]
    %v2422 = vld [vmem:[#allocation4 + $0xee0] sm:$0xff]
    %v2423 = vld [vmem:[#allocation4 + $0xee8] sm:$0xff]
    %v2424 = vld [vmem:[#allocation4 + $0xef0] sm:$0xff]
    %v2425 = vld [vmem:[#allocation4 + $0xef8] sm:$0xff]
    %v2426 = vld [vmem:[#allocation4 + $0xf00] sm:$0xff]
    %v2427 = vld [vmem:[#allocation4 + $0xf08] sm:$0xff]
    %v2428 = vld [vmem:[#allocation4 + $0xf10] sm:$0xff]
    %v2429 = vld [vmem:[#allocation4 + $0xf18] sm:$0xff]
    %v2430 = vld [vmem:[#allocation4 + $0xf20] sm:$0xff]
    %v2431 = vld [vmem:[#allocation4 + $0xf28] sm:$0xff]
    %v2432 = vld [vmem:[#allocation4 + $0xf30] sm:$0xff]
    %v2433 = vld [vmem:[#allocation4 + $0xf38] sm:$0xff]
    %v2434 = vld [vmem:[#allocation4 + $0xf40] sm:$0xff]
    %v2435 = vld [vmem:[#allocation4 + $0xf48] sm:$0xff]
    %v2436 = vld [vmem:[#allocation4 + $0xf50] sm:$0xff]
    %v2437 = vld [vmem:[#allocation4 + $0xf58] sm:$0xff]
    %v2438 = vld [vmem:[#allocation4 + $0xf60] sm:$0xff]
    %v2439 = vld [vmem:[#allocation4 + $0xf68] sm:$0xff]
    %v2440 = vld [vmem:[#allocation4 + $0xf70] sm:$0xff]
    %v2441 = vld [vmem:[#allocation4 + $0xf78] sm:$0xff]
    %v2442 = vld [vmem:[#allocation4 + $0xf80] sm:$0xff]
    %v2443 = vld [vmem:[#allocation4 + $0xf88] sm:$0xff]
    %v2444 = vld [vmem:[#allocation4 + $0xf90] sm:$0xff]
    %v2445 = vld [vmem:[#allocation4 + $0xf98] sm:$0xff]
    %v2446 = vld [vmem:[#allocation4 + $0xfa0] sm:$0xff]
    %v2447 = vld [vmem:[#allocation4 + $0xfa8] sm:$0xff]
    %v2448 = vld [vmem:[#allocation4 + $0xfb0] sm:$0xff]
    %v2449 = vld [vmem:[#allocation4 + $0xfb8] sm:$0xff]
    %v2450 = vld [vmem:[#allocation4 + $0xfc0] sm:$0xff]
    %v2451 = vld [vmem:[#allocation4 + $0xfc8] sm:$0xff]
    %v2452 = vld [vmem:[#allocation4 + $0xfd0] sm:$0xff]
    %v2453 = vld [vmem:[#allocation4 + $0xfd8] sm:$0xff]
    %v2454 = vld [vmem:[#allocation4 + $0xfe0] sm:$0xff]
    %v2455 = vld [vmem:[#allocation4 + $0xfe8] sm:$0xff]
    %v2456 = vld [vmem:[#allocation4 + $0xff0] sm:$0xff]
    %v2457 = vld [vmem:[#allocation4 + $0xff8] sm:$0xff]
    %v2458 = vld [vmem:[#allocation4 + $0x1000] sm:$0xff]
    %v2459 = vld [vmem:[#allocation4 + $0x1008] sm:$0xff]
    %v2460 = vld [vmem:[#allocation4 + $0x1010] sm:$0xff]
    %v2461 = vld [vmem:[#allocation4 + $0x1018] sm:$0xff]
    %v2462 = vld [vmem:[#allocation4 + $0x1020] sm:$0xff]
    %v2463 = vld [vmem:[#allocation4 + $0x1028] sm:$0xff]
    %v2464 = vld [vmem:[#allocation4 + $0x1030] sm:$0xff]
    %v2465 = vld [vmem:[#allocation4 + $0x1038] sm:$0xff]
    %v2466 = vld [vmem:[#allocation4 + $0x1040] sm:$0xff]
    %v2467 = vld [vmem:[#allocation4 + $0x1048] sm:$0xff]
    %v2468 = vld [vmem:[#allocation4 + $0x1050] sm:$0xff]
    %v2469 = vld [vmem:[#allocation4 + $0x1058] sm:$0xff]
    %v2470 = vld [vmem:[#allocation4 + $0x1060] sm:$0xff]
    %v2471 = vld [vmem:[#allocation4 + $0x1068] sm:$0xff]
    %v2472 = vld [vmem:[#allocation4 + $0x1070] sm:$0xff]
    %v2473 = vld [vmem:[#allocation4 + $0x1078] sm:$0xff]
    %v2474 = vld [vmem:[#allocation4 + $0x1080] sm:$0xff]
    %v2475 = vld [vmem:[#allocation4 + $0x1088] sm:$0xff]
    %v2476 = vld [vmem:[#allocation4 + $0x1090] sm:$0xff]
    %v2477 = vld [vmem:[#allocation4 + $0x1098] sm:$0xff]
    %v2478 = vld [vmem:[#allocation4 + $0x10a0] sm:$0xff]
    %v2479 = vld [vmem:[#allocation4 + $0x10a8] sm:$0xff]
    %v2480 = vld [vmem:[#allocation4 + $0x10b0] sm:$0xff]
    %v2481 = vld [vmem:[#allocation4 + $0x10b8] sm:$0xff]
    %v2482 = vld [vmem:[#allocation4 + $0x10c0] sm:$0xff]
    %v2483 = vld [vmem:[#allocation4 + $0x10c8] sm:$0xff]
    %v2484 = vld [vmem:[#allocation4 + $0x10d0] sm:$0xff]
    %v2485 = vld [vmem:[#allocation4 + $0x10d8] sm:$0xff]
    %v2486 = vld [vmem:[#allocation4 + $0x10e0] sm:$0xff]
    %v2487 = vld [vmem:[#allocation4 + $0x10e8] sm:$0xff]
    %v2488 = vld [vmem:[#allocation4 + $0x10f0] sm:$0xff]
    %v2489 = vld [vmem:[#allocation4 + $0x10f8] sm:$0xff]
    %v2490 = vld [vmem:[#allocation4 + $0x1100] sm:$0xff]
    %v2491 = vld [vmem:[#allocation4 + $0x1108] sm:$0xff]
    %v2492 = vld [vmem:[#allocation4 + $0x1110] sm:$0xff]
    %v2493 = vld [vmem:[#allocation4 + $0x1118] sm:$0xff]
    %v2494 = vld [vmem:[#allocation4 + $0x1120] sm:$0xff]
    %v2495 = vld [vmem:[#allocation4 + $0x1128] sm:$0xff]
    %v2496 = vld [vmem:[#allocation4 + $0x1130] sm:$0xff]
    %v2497 = vld [vmem:[#allocation4 + $0x1138] sm:$0xff]
    %v2498 = vld [vmem:[#allocation4 + $0x1140] sm:$0xff]
    %v2499 = vld [vmem:[#allocation4 + $0x1148] sm:$0xff]
    %v2500 = vld [vmem:[#allocation4 + $0x1150] sm:$0xff]
    %v2501 = vld [vmem:[#allocation4 + $0x1158] sm:$0xff]
    %v2502 = vld [vmem:[#allocation4 + $0x1160] sm:$0xff]
    %v2503 = vld [vmem:[#allocation4 + $0x1168] sm:$0xff]
    %v2504 = vld [vmem:[#allocation4 + $0x1170] sm:$0xff]
    %v2505 = vld [vmem:[#allocation4 + $0x1178] sm:$0xff]
    %v2506 = vld [vmem:[#allocation4 + $0x1180] sm:$0xff]
    %v2507 = vld [vmem:[#allocation4 + $0x1188] sm:$0xff]
    %v2508 = vld [vmem:[#allocation4 + $0x1190] sm:$0xff]
    %v2509 = vld [vmem:[#allocation4 + $0x1198] sm:$0xff]
    %v2510 = vld [vmem:[#allocation4 + $0x11a0] sm:$0xff]
    %v2511 = vld [vmem:[#allocation4 + $0x11a8] sm:$0xff]
    %v2512 = vld [vmem:[#allocation4 + $0x11b0] sm:$0xff]
    %v2513 = vld [vmem:[#allocation4 + $0x11b8] sm:$0xff]
    %v2514 = vld [vmem:[#allocation4 + $0x11c0] sm:$0xff]
    %v2515 = vld [vmem:[#allocation4 + $0x11c8] sm:$0xff]
    %v2516 = vld [vmem:[#allocation4 + $0x11d0] sm:$0xff]
    %v2517 = vld [vmem:[#allocation4 + $0x11d8] sm:$0xff]
    %v2518 = vld [vmem:[#allocation4 + $0x11e0] sm:$0xff]
    %v2519 = vld [vmem:[#allocation4 + $0x11e8] sm:$0xff]
    %v2520 = vld [vmem:[#allocation4 + $0x11f0] sm:$0xff]
    %v2521 = vld [vmem:[#allocation4 + $0x11f8] sm:$0xff]
    %v2522 = vld [vmem:[#allocation4 + $0x1200] sm:$0xff]
    %v2523 = vld [vmem:[#allocation4 + $0x1208] sm:$0xff]
    %v2524 = vld [vmem:[#allocation4 + $0x1210] sm:$0xff]
    %v2525 = vld [vmem:[#allocation4 + $0x1218] sm:$0xff]
    %v2526 = vld [vmem:[#allocation4 + $0x1220] sm:$0xff]
    %v2527 = vld [vmem:[#allocation4 + $0x1228] sm:$0xff]
    %v2528 = vld [vmem:[#allocation4 + $0x1230] sm:$0xff]
    %v2529 = vld [vmem:[#allocation4 + $0x1238] sm:$0xff]
    %v2530 = vld [vmem:[#allocation4 + $0x1240] sm:$0xff]
    %v2531 = vld [vmem:[#allocation4 + $0x1248] sm:$0xff]
    %v2532 = vld [vmem:[#allocation4 + $0x1250] sm:$0xff]
    %v2533 = vld [vmem:[#allocation4 + $0x1258] sm:$0xff]
    %v2534 = vld [vmem:[#allocation4 + $0x1260] sm:$0xff]
    %v2535 = vld [vmem:[#allocation4 + $0x1268] sm:$0xff]
    %v2536 = vld [vmem:[#allocation4 + $0x1270] sm:$0xff]
    %v2537 = vld [vmem:[#allocation4 + $0x1278] sm:$0xff]
    %v2538 = vld [vmem:[#allocation4 + $0x1280] sm:$0xff]
    %v2539 = vld [vmem:[#allocation4 + $0x1288] sm:$0xff]
    %v2540 = vld [vmem:[#allocation4 + $0x1290] sm:$0xff]
    %v2541 = vld [vmem:[#allocation4 + $0x1298] sm:$0xff]
    %v2542 = vld [vmem:[#allocation4 + $0x12a0] sm:$0xff]
    %v2543 = vld [vmem:[#allocation4 + $0x12a8] sm:$0xff]
    %v2544 = vld [vmem:[#allocation4 + $0x12b0] sm:$0xff]
    %v2545 = vld [vmem:[#allocation4 + $0x12b8] sm:$0xff]
    %v2546 = vld [vmem:[#allocation4 + $0x12c0] sm:$0xff]
    %v2547 = vld [vmem:[#allocation4 + $0x12c8] sm:$0xff]
    %v2548 = vld [vmem:[#allocation4 + $0x12d0] sm:$0xff]
    %v2549 = vld [vmem:[#allocation4 + $0x12d8] sm:$0xff]
    %v2550 = vld [vmem:[#allocation4 + $0x12e0] sm:$0xff]
    %v2551 = vld [vmem:[#allocation4 + $0x12e8] sm:$0xff]
    %v2552 = vld [vmem:[#allocation4 + $0x12f0] sm:$0xff]
    %v2553 = vld [vmem:[#allocation4 + $0x12f8] sm:$0xff]
    %v2554 = vld [vmem:[#allocation4 + $0x1300] sm:$0xff]
    %v2555 = vld [vmem:[#allocation4 + $0x1308] sm:$0xff]
    %v2556 = vld [vmem:[#allocation4 + $0x1310] sm:$0xff]
    %v2557 = vld [vmem:[#allocation4 + $0x1318] sm:$0xff]
    %v2558 = vld [vmem:[#allocation4 + $0x1320] sm:$0xff]
    %v2559 = vld [vmem:[#allocation4 + $0x1328] sm:$0xff]
    %v2560 = vld [vmem:[#allocation4 + $0x1330] sm:$0xff]
    %v2561 = vld [vmem:[#allocation4 + $0x1338] sm:$0xff]
    %v2562 = vld [vmem:[#allocation4 + $0x1340] sm:$0xff]
    %v2563 = vld [vmem:[#allocation4 + $0x1348] sm:$0xff]
    %v2564 = vld [vmem:[#allocation4 + $0x1350] sm:$0xff]
    %v2565 = vld [vmem:[#allocation4 + $0x1358] sm:$0xff]
    %v2566 = vld [vmem:[#allocation4 + $0x1360] sm:$0xff]
    %v2567 = vld [vmem:[#allocation4 + $0x1368] sm:$0xff]
    %v2568 = vld [vmem:[#allocation4 + $0x1370] sm:$0xff]
    %v2569 = vld [vmem:[#allocation4 + $0x1378] sm:$0xff]
    %v2570 = vld [vmem:[#allocation4 + $0x1380] sm:$0xff]
    %v2571 = vld [vmem:[#allocation4 + $0x1388] sm:$0xff]
    %v2572 = vld [vmem:[#allocation4 + $0x1390] sm:$0xff]
    %v2573 = vld [vmem:[#allocation4 + $0x1398] sm:$0xff]
    %v2574 = vld [vmem:[#allocation4 + $0x13a0] sm:$0xff]
    %v2575 = vld [vmem:[#allocation4 + $0x13a8] sm:$0xff]
    %v2576 = vld [vmem:[#allocation4 + $0x13b0] sm:$0xff]
    %v2577 = vld [vmem:[#allocation4 + $0x13b8] sm:$0xff]
    %v2578 = vld [vmem:[#allocation4 + $0x13c0] sm:$0xff]
    %v2579 = vld [vmem:[#allocation4 + $0x13c8] sm:$0xff]
    %v2580 = vld [vmem:[#allocation4 + $0x13d0] sm:$0xff]
    %v2581 = vld [vmem:[#allocation4 + $0x13d8] sm:$0xff]
    %v2582 = vld [vmem:[#allocation4 + $0x13e0] sm:$0xff]
    %v2583 = vld [vmem:[#allocation4 + $0x13e8] sm:$0xff]
    %v2584 = vld [vmem:[#allocation4 + $0x13f0] sm:$0xff]
    %v2585 = vld [vmem:[#allocation4 + $0x13f8] sm:$0xff]
    %v2586 = vld [vmem:[#allocation4 + $0x1400] sm:$0xff]
    %v2587 = vld [vmem:[#allocation4 + $0x1408] sm:$0xff]
    %v2588 = vld [vmem:[#allocation4 + $0x1410] sm:$0xff]
    %v2589 = vld [vmem:[#allocation4 + $0x1418] sm:$0xff]
    %v2590 = vld [vmem:[#allocation4 + $0x1420] sm:$0xff]
    %v2591 = vld [vmem:[#allocation4 + $0x1428] sm:$0xff]
    %v2592 = vld [vmem:[#allocation4 + $0x1430] sm:$0xff]
    %v2593 = vld [vmem:[#allocation4 + $0x1438] sm:$0xff]
    %v2594 = vld [vmem:[#allocation4 + $0x1440] sm:$0xff]
    %v2595 = vld [vmem:[#allocation4 + $0x1448] sm:$0xff]
    %v2596 = vld [vmem:[#allocation4 + $0x1450] sm:$0xff]
    %v2597 = vld [vmem:[#allocation4 + $0x1458] sm:$0xff]
    %v2598 = vld [vmem:[#allocation4 + $0x1460] sm:$0xff]
    %v2599 = vld [vmem:[#allocation4 + $0x1468] sm:$0xff]
    %v2600 = vld [vmem:[#allocation4 + $0x1470] sm:$0xff]
    %v2601 = vld [vmem:[#allocation4 + $0x1478] sm:$0xff]
    %v2602 = vld [vmem:[#allocation4 + $0x1480] sm:$0xff]
    %v2603 = vld [vmem:[#allocation4 + $0x1488] sm:$0xff]
    %v2604 = vld [vmem:[#allocation4 + $0x1490] sm:$0xff]
    %v2605 = vld [vmem:[#allocation4 + $0x1498] sm:$0xff]
    %v2606 = vld [vmem:[#allocation4 + $0x14a0] sm:$0xff]
    %v2607 = vld [vmem:[#allocation4 + $0x14a8] sm:$0xff]
    %v2608 = vld [vmem:[#allocation4 + $0x14b0] sm:$0xff]
    %v2609 = vld [vmem:[#allocation4 + $0x14b8] sm:$0xff]
    %v2610 = vld [vmem:[#allocation4 + $0x14c0] sm:$0xff]
    %v2611 = vld [vmem:[#allocation4 + $0x14c8] sm:$0xff]
    %v2612 = vld [vmem:[#allocation4 + $0x14d0] sm:$0xff]
    %v2613 = vld [vmem:[#allocation4 + $0x14d8] sm:$0xff]
    %v2614 = vld [vmem:[#allocation4 + $0x14e0] sm:$0xff]
    %v2615 = vld [vmem:[#allocation4 + $0x14e8] sm:$0xff]
    %v2616 = vld [vmem:[#allocation4 + $0x14f0] sm:$0xff]
    %v2617 = vld [vmem:[#allocation4 + $0x14f8] sm:$0xff]
    %v2618 = vld [vmem:[#allocation4 + $0x1500] sm:$0xff]
    %v2619 = vld [vmem:[#allocation4 + $0x1508] sm:$0xff]
    %v2620 = vld [vmem:[#allocation4 + $0x1510] sm:$0xff]
    %v2621 = vld [vmem:[#allocation4 + $0x1518] sm:$0xff]
    %v2622 = vld [vmem:[#allocation4 + $0x1520] sm:$0xff]
    %v2623 = vld [vmem:[#allocation4 + $0x1528] sm:$0xff]
    %v2624 = vld [vmem:[#allocation4 + $0x1530] sm:$0xff]
    %v2625 = vld [vmem:[#allocation4 + $0x1538] sm:$0xff]
    %v2626 = vld [vmem:[#allocation4 + $0x1540] sm:$0xff]
    %v2627 = vld [vmem:[#allocation4 + $0x1548] sm:$0xff]
    %v2628 = vld [vmem:[#allocation4 + $0x1550] sm:$0xff]
    %v2629 = vld [vmem:[#allocation4 + $0x1558] sm:$0xff]
    %v2630 = vld [vmem:[#allocation4 + $0x1560] sm:$0xff]
    %v2631 = vld [vmem:[#allocation4 + $0x1568] sm:$0xff]
    %v2632 = vld [vmem:[#allocation4 + $0x1570] sm:$0xff]
    %v2633 = vld [vmem:[#allocation4 + $0x1578] sm:$0xff]
    %v2634 = vld [vmem:[#allocation4 + $0x1580] sm:$0xff]
    %v2635 = vld [vmem:[#allocation4 + $0x1588] sm:$0xff]
    %v2636 = vld [vmem:[#allocation4 + $0x1590] sm:$0xff]
    %v2637 = vld [vmem:[#allocation4 + $0x1598] sm:$0xff]
    %v2638 = vld [vmem:[#allocation4 + $0x15a0] sm:$0xff]
    %v2639 = vld [vmem:[#allocation4 + $0x15a8] sm:$0xff]
    %v2640 = vld [vmem:[#allocation4 + $0x15b0] sm:$0xff]
    %v2641 = vld [vmem:[#allocation4 + $0x15b8] sm:$0xff]
    %v2642 = vld [vmem:[#allocation4 + $0x15c0] sm:$0xff]
    %v2643 = vld [vmem:[#allocation4 + $0x15c8] sm:$0xff]
    %v2644 = vld [vmem:[#allocation4 + $0x15d0] sm:$0xff]
    %v2645 = vld [vmem:[#allocation4 + $0x15d8] sm:$0xff]
    %v2646 = vld [vmem:[%s5] sm:$0xff]
    %v2647 = vld [vmem:[%s5 + $0x8] sm:$0xff]
    %v2648 = vld [vmem:[%s5 + $0x10] sm:$0xff]
    %v2649 = vld [vmem:[%s5 + $0x18] sm:$0xff]
    %v2650 = vld [vmem:[%s5 + $0x20] sm:$0xff]
    %v2651 = vld [vmem:[%s5 + $0x28] sm:$0xff]
    %v2652 = vld [vmem:[%s5 + $0x30] sm:$0xff]
    %v2653 = vld [vmem:[%s5 + $0x38] sm:$0xff]
    %v2654 = vld [vmem:[%s5 + $0x40] sm:$0xff]
    %v2655 = vld [vmem:[%s5 + $0x48] sm:$0xff]
    %v2656 = vld [vmem:[%s5 + $0x50] sm:$0xff]
    %v2657 = vld [vmem:[%s5 + $0x58] sm:$0xff]
    %v2658 = vld [vmem:[%s5 + $0x60] sm:$0xff]
    %v2659 = vld [vmem:[%s5 + $0x68] sm:$0xff]
    %v2660 = vld [vmem:[%s5 + $0x70] sm:$0xff]
    %v2661 = vld [vmem:[%s5 + $0x78] sm:$0xff]
    %v2662 = vld [vmem:[%s5 + $0x80] sm:$0xff]
    %v2663 = vld [vmem:[%s5 + $0x88] sm:$0xff]
    %v2664 = vld [vmem:[%s5 + $0x90] sm:$0xff]
    %v2665 = vld [vmem:[%s5 + $0x98] sm:$0xff]
    %v2666 = vld [vmem:[%s5 + $0xa0] sm:$0xff]
    %v2667 = vld [vmem:[%s5 + $0xa8] sm:$0xff]
    %v2668 = vld [vmem:[%s5 + $0xb0] sm:$0xff]
    %v2669 = vld [vmem:[%s5 + $0xb8] sm:$0xff]
    %v2670 = vld [vmem:[%s5 + $0xc0] sm:$0xff]
    %v2671 = vld [vmem:[%s5 + $0xc8] sm:$0xff]
    %v2672 = vld [vmem:[%s5 + $0xd0] sm:$0xff]
    %v2673 = vld [vmem:[%s5 + $0xd8] sm:$0xff]
    %v2674 = vld [vmem:[%s5 + $0xe0] sm:$0xff]
    %v2675 = vld [vmem:[%s5 + $0xe8] sm:$0xff]
    %v2676 = vld [vmem:[%s5 + $0xf0] sm:$0xff]
    %v2677 = vld [vmem:[%s5 + $0xf8] sm:$0xff]
    %v2678 = vld [vmem:[%s5 + $0x100] sm:$0xff]
    %v2679 = vld [vmem:[%s5 + $0x108] sm:$0xff]
    %v2680 = vld [vmem:[%s5 + $0x110] sm:$0xff]
    %v2681 = vld [vmem:[%s5 + $0x118] sm:$0xff]
    %v2682 = vld [vmem:[%s5 + $0x120] sm:$0xff]
    %v2683 = vld [vmem:[%s5 + $0x128] sm:$0xff]
    %v2684 = vld [vmem:[%s5 + $0x130] sm:$0xff]
    %v2685 = vld [vmem:[%s5 + $0x138] sm:$0xff]
    %v2686 = vld [vmem:[%s5 + $0x140] sm:$0xff]
    %v2687 = vld [vmem:[%s5 + $0x148] sm:$0xff]
    %v2688 = vld [vmem:[%s5 + $0x150] sm:$0xff]
    %v2689 = vld [vmem:[%s5 + $0x158] sm:$0xff]
    %v2690 = vld [vmem:[%s5 + $0x160] sm:$0xff]
    %v2691 = vld [vmem:[%s5 + $0x168] sm:$0xff]
    %v2692 = vld [vmem:[%s5 + $0x170] sm:$0xff]
    %v2693 = vld [vmem:[%s5 + $0x178] sm:$0xff]
    %v2694 = vld [vmem:[%s5 + $0x180] sm:$0xff]
    %v2695 = vld [vmem:[%s5 + $0x188] sm:$0xff]
    %v2696 = vld [vmem:[%s5 + $0x190] sm:$0xff]
    %v2697 = vld [vmem:[%s5 + $0x198] sm:$0xff]
    %v2698 = vld [vmem:[%s5 + $0x1a0] sm:$0xff]
    %v2699 = vld [vmem:[%s5 + $0x1a8] sm:$0xff]
    %v2700 = vld [vmem:[%s5 + $0x1b0] sm:$0xff]
    %v2701 = vld [vmem:[%s5 + $0x1b8] sm:$0xff]
    %v2702 = vld [vmem:[%s5 + $0x1c0] sm:$0xff]
    %v2703 = vld [vmem:[%s5 + $0x1c8] sm:$0xff]
    %v2704 = vld [vmem:[%s5 + $0x1d0] sm:$0xff]
    %v2705 = vld [vmem:[%s5 + $0x1d8] sm:$0xff]
    %v2706 = vld [vmem:[%s5 + $0x1e0] sm:$0xff]
    %v2707 = vld [vmem:[%s5 + $0x1e8] sm:$0xff]
    %v2708 = vld [vmem:[%s5 + $0x1f0] sm:$0xff]
    %v2709 = vld [vmem:[%s5 + $0x1f8] sm:$0xff]
    %v2710 = vld [vmem:[%s5 + $0x200] sm:$0xff]
    %v2711 = vld [vmem:[%s5 + $0x208] sm:$0xff]
    %v2712 = vld [vmem:[%s5 + $0x210] sm:$0xff]
    %v2713 = vld [vmem:[%s5 + $0x218] sm:$0xff]
    %v2714 = vld [vmem:[%s5 + $0x220] sm:$0xff]
    %v2715 = vld [vmem:[%s5 + $0x228] sm:$0xff]
    %v2716 = vld [vmem:[%s5 + $0x230] sm:$0xff]
    %v2717 = vld [vmem:[%s5 + $0x238] sm:$0xff]
    %v2718 = vld [vmem:[%s5 + $0x240] sm:$0xff]
    %v2719 = vld [vmem:[%s5 + $0x248] sm:$0xff]
    %v2720 = vld [vmem:[%s5 + $0x250] sm:$0xff]
    %v2721 = vld [vmem:[%s5 + $0x258] sm:$0xff]
    %v2722 = vld [vmem:[%s5 + $0x260] sm:$0xff]
    %v2723 = vld [vmem:[%s5 + $0x268] sm:$0xff]
    %v2724 = vld [vmem:[%s5 + $0x270] sm:$0xff]
    %v2725 = vld [vmem:[%s5 + $0x278] sm:$0xff]
    %v2726 = vld [vmem:[%s5 + $0x280] sm:$0xff]
    %v2727 = vld [vmem:[%s5 + $0x288] sm:$0xff]
    %v2728 = vld [vmem:[%s5 + $0x290] sm:$0xff]
    %v2729 = vld [vmem:[%s5 + $0x298] sm:$0xff]
    %v2730 = vld [vmem:[%s5 + $0x2a0] sm:$0xff]
    %v2731 = vld [vmem:[%s5 + $0x2a8] sm:$0xff]
    %v2732 = vld [vmem:[%s5 + $0x2b0] sm:$0xff]
    %v2733 = vld [vmem:[%s5 + $0x2b8] sm:$0xff]
    %v2734 = vld [vmem:[%s5 + $0x2c0] sm:$0xff]
    %v2735 = vld [vmem:[%s5 + $0x2c8] sm:$0xff]
    %v2736 = vld [vmem:[%s5 + $0x2d0] sm:$0xff]
    %v2737 = vld [vmem:[%s5 + $0x2d8] sm:$0xff]
    %v2738 = vld [vmem:[%s5 + $0x2e0] sm:$0xff]
    %v2739 = vld [vmem:[%s5 + $0x2e8] sm:$0xff]
    %v2740 = vld [vmem:[%s5 + $0x2f0] sm:$0xff]
    %v2741 = vld [vmem:[%s5 + $0x2f8] sm:$0xff]
    %v2742 = vld [vmem:[%s5 + $0x300] sm:$0xff]
    %v2743 = vld [vmem:[%s5 + $0x308] sm:$0xff]
    %v2744 = vld [vmem:[%s5 + $0x310] sm:$0xff]
    %v2745 = vld [vmem:[%s5 + $0x318] sm:$0xff]
    %2747 = vset.pattern.permute.xlu0 0
    %2748 = vperm.xlu0 %2747, %v2646
    %v2749 = vpop.permute.xlu0 %2748
    %2752 = vset.pattern.permute.xlu0 0
    %2753 = vperm.xlu0 %2752, %v2647
    %v2754 = vpop.permute.xlu0 %2753
    %2757 = vset.pattern.permute.xlu0 0
    %2758 = vperm.xlu0 %2757, %v2648
    %v2759 = vpop.permute.xlu0 %2758
    %2762 = vset.pattern.permute.xlu0 0
    %2763 = vperm.xlu0 %2762, %v2649
    %v2764 = vpop.permute.xlu0 %2763
    %2767 = vset.pattern.permute.xlu0 0
    %2768 = vperm.xlu0 %2767, %v2650
    %v2769 = vpop.permute.xlu0 %2768
    %2772 = vset.pattern.permute.xlu0 0
    %2773 = vperm.xlu0 %2772, %v2651
    %v2774 = vpop.permute.xlu0 %2773
    %2777 = vset.pattern.permute.xlu0 0
    %2778 = vperm.xlu0 %2777, %v2652
    %v2779 = vpop.permute.xlu0 %2778
    %2782 = vset.pattern.permute.xlu0 0
    %2783 = vperm.xlu0 %2782, %v2653
    %v2784 = vpop.permute.xlu0 %2783
    %2787 = vset.pattern.permute.xlu0 0
    %2788 = vperm.xlu0 %2787, %v2654
    %v2789 = vpop.permute.xlu0 %2788
    %2792 = vset.pattern.permute.xlu0 0
    %2793 = vperm.xlu0 %2792, %v2655
    %v2794 = vpop.permute.xlu0 %2793
    %2797 = vset.pattern.permute.xlu0 0
    %2798 = vperm.xlu0 %2797, %v2656
    %v2799 = vpop.permute.xlu0 %2798
    %2802 = vset.pattern.permute.xlu0 0
    %2803 = vperm.xlu0 %2802, %v2657
    %v2804 = vpop.permute.xlu0 %2803
    %2807 = vset.pattern.permute.xlu0 0
    %2808 = vperm.xlu0 %2807, %v2658
    %v2809 = vpop.permute.xlu0 %2808
    %2812 = vset.pattern.permute.xlu0 0
    %2813 = vperm.xlu0 %2812, %v2659
    %v2814 = vpop.permute.xlu0 %2813
    %2817 = vset.pattern.permute.xlu0 0
    %2818 = vperm.xlu0 %2817, %v2660
    %v2819 = vpop.permute.xlu0 %2818
    %2822 = vset.pattern.permute.xlu0 0
    %2823 = vperm.xlu0 %2822, %v2661
    %v2824 = vpop.permute.xlu0 %2823
    %2827 = vset.pattern.permute.xlu0 0
    %2828 = vperm.xlu0 %2827, %v2662
    %v2829 = vpop.permute.xlu0 %2828
    %2832 = vset.pattern.permute.xlu0 0
    %2833 = vperm.xlu0 %2832, %v2663
    %v2834 = vpop.permute.xlu0 %2833
    %2837 = vset.pattern.permute.xlu0 0
    %2838 = vperm.xlu0 %2837, %v2664
    %v2839 = vpop.permute.xlu0 %2838
    %2842 = vset.pattern.permute.xlu0 0
    %2843 = vperm.xlu0 %2842, %v2665
    %v2844 = vpop.permute.xlu0 %2843
    %2847 = vset.pattern.permute.xlu0 0
    %2848 = vperm.xlu0 %2847, %v2666
    %v2849 = vpop.permute.xlu0 %2848
    %2852 = vset.pattern.permute.xlu0 0
    %2853 = vperm.xlu0 %2852, %v2667
    %v2854 = vpop.permute.xlu0 %2853
    %2857 = vset.pattern.permute.xlu0 0
    %2858 = vperm.xlu0 %2857, %v2668
    %v2859 = vpop.permute.xlu0 %2858
    %2862 = vset.pattern.permute.xlu0 0
    %2863 = vperm.xlu0 %2862, %v2669
    %v2864 = vpop.permute.xlu0 %2863
    %2867 = vset.pattern.permute.xlu0 0
    %2868 = vperm.xlu0 %2867, %v2670
    %v2869 = vpop.permute.xlu0 %2868
    %2872 = vset.pattern.permute.xlu0 0
    %2873 = vperm.xlu0 %2872, %v2671
    %v2874 = vpop.permute.xlu0 %2873
    %2877 = vset.pattern.permute.xlu0 0
    %2878 = vperm.xlu0 %2877, %v2672
    %v2879 = vpop.permute.xlu0 %2878
    %2882 = vset.pattern.permute.xlu0 0
    %2883 = vperm.xlu0 %2882, %v2673
    %v2884 = vpop.permute.xlu0 %2883
    %2887 = vset.pattern.permute.xlu0 0
    %2888 = vperm.xlu0 %2887, %v2674
    %v2889 = vpop.permute.xlu0 %2888
    %2892 = vset.pattern.permute.xlu0 0
    %2893 = vperm.xlu0 %2892, %v2675
    %v2894 = vpop.permute.xlu0 %2893
    %2897 = vset.pattern.permute.xlu0 0
    %2898 = vperm.xlu0 %2897, %v2676
    %v2899 = vpop.permute.xlu0 %2898
    %2902 = vset.pattern.permute.xlu0 0
    %2903 = vperm.xlu0 %2902, %v2677
    %v2904 = vpop.permute.xlu0 %2903
    %2907 = vset.pattern.permute.xlu0 0
    %2908 = vperm.xlu0 %2907, %v2678
    %v2909 = vpop.permute.xlu0 %2908
    %2912 = vset.pattern.permute.xlu0 0
    %2913 = vperm.xlu0 %2912, %v2679
    %v2914 = vpop.permute.xlu0 %2913
    %2917 = vset.pattern.permute.xlu0 0
    %2918 = vperm.xlu0 %2917, %v2680
    %v2919 = vpop.permute.xlu0 %2918
    %2922 = vset.pattern.permute.xlu0 0
    %2923 = vperm.xlu0 %2922, %v2681
    %v2924 = vpop.permute.xlu0 %2923
    %2927 = vset.pattern.permute.xlu0 0
    %2928 = vperm.xlu0 %2927, %v2682
    %v2929 = vpop.permute.xlu0 %2928
    %2932 = vset.pattern.permute.xlu0 0
    %2933 = vperm.xlu0 %2932, %v2683
    %v2934 = vpop.permute.xlu0 %2933
    %2937 = vset.pattern.permute.xlu0 0
    %2938 = vperm.xlu0 %2937, %v2684
    %v2939 = vpop.permute.xlu0 %2938
    %2942 = vset.pattern.permute.xlu0 0
    %2943 = vperm.xlu0 %2942, %v2685
    %v2944 = vpop.permute.xlu0 %2943
    %2947 = vset.pattern.permute.xlu0 0
    %2948 = vperm.xlu0 %2947, %v2686
    %v2949 = vpop.permute.xlu0 %2948
    %2952 = vset.pattern.permute.xlu0 0
    %2953 = vperm.xlu0 %2952, %v2687
    %v2954 = vpop.permute.xlu0 %2953
    %2957 = vset.pattern.permute.xlu0 0
    %2958 = vperm.xlu0 %2957, %v2688
    %v2959 = vpop.permute.xlu0 %2958
    %2962 = vset.pattern.permute.xlu0 0
    %2963 = vperm.xlu0 %2962, %v2689
    %v2964 = vpop.permute.xlu0 %2963
    %2967 = vset.pattern.permute.xlu0 0
    %2968 = vperm.xlu0 %2967, %v2690
    %v2969 = vpop.permute.xlu0 %2968
    %2972 = vset.pattern.permute.xlu0 0
    %2973 = vperm.xlu0 %2972, %v2691
    %v2974 = vpop.permute.xlu0 %2973
    %2977 = vset.pattern.permute.xlu0 0
    %2978 = vperm.xlu0 %2977, %v2692
    %v2979 = vpop.permute.xlu0 %2978
    %2982 = vset.pattern.permute.xlu0 0
    %2983 = vperm.xlu0 %2982, %v2693
    %v2984 = vpop.permute.xlu0 %2983
    %2987 = vset.pattern.permute.xlu0 0
    %2988 = vperm.xlu0 %2987, %v2694
    %v2989 = vpop.permute.xlu0 %2988
    %2992 = vset.pattern.permute.xlu0 0
    %2993 = vperm.xlu0 %2992, %v2695
    %v2994 = vpop.permute.xlu0 %2993
    %2997 = vset.pattern.permute.xlu0 0
    %2998 = vperm.xlu0 %2997, %v2696
    %v2999 = vpop.permute.xlu0 %2998
    %3002 = vset.pattern.permute.xlu0 0
    %3003 = vperm.xlu0 %3002, %v2697
    %v3004 = vpop.permute.xlu0 %3003
    %3007 = vset.pattern.permute.xlu0 0
    %3008 = vperm.xlu0 %3007, %v2698
    %v3009 = vpop.permute.xlu0 %3008
    %3012 = vset.pattern.permute.xlu0 0
    %3013 = vperm.xlu0 %3012, %v2699
    %v3014 = vpop.permute.xlu0 %3013
    %3017 = vset.pattern.permute.xlu0 0
    %3018 = vperm.xlu0 %3017, %v2700
    %v3019 = vpop.permute.xlu0 %3018
    %3022 = vset.pattern.permute.xlu0 0
    %3023 = vperm.xlu0 %3022, %v2701
    %v3024 = vpop.permute.xlu0 %3023
    %3027 = vset.pattern.permute.xlu0 0
    %3028 = vperm.xlu0 %3027, %v2702
    %v3029 = vpop.permute.xlu0 %3028
    %3032 = vset.pattern.permute.xlu0 0
    %3033 = vperm.xlu0 %3032, %v2703
    %v3034 = vpop.permute.xlu0 %3033
    %3037 = vset.pattern.permute.xlu0 0
    %3038 = vperm.xlu0 %3037, %v2704
    %v3039 = vpop.permute.xlu0 %3038
    %3042 = vset.pattern.permute.xlu0 0
    %3043 = vperm.xlu0 %3042, %v2705
    %v3044 = vpop.permute.xlu0 %3043
    %3047 = vset.pattern.permute.xlu0 0
    %3048 = vperm.xlu0 %3047, %v2706
    %v3049 = vpop.permute.xlu0 %3048
    %3052 = vset.pattern.permute.xlu0 0
    %3053 = vperm.xlu0 %3052, %v2707
    %v3054 = vpop.permute.xlu0 %3053
    %3057 = vset.pattern.permute.xlu0 0
    %3058 = vperm.xlu0 %3057, %v2708
    %v3059 = vpop.permute.xlu0 %3058
    %3062 = vset.pattern.permute.xlu0 0
    %3063 = vperm.xlu0 %3062, %v2709
    %v3064 = vpop.permute.xlu0 %3063
    %3067 = vset.pattern.permute.xlu0 0
    %3068 = vperm.xlu0 %3067, %v2710
    %v3069 = vpop.permute.xlu0 %3068
    %3072 = vset.pattern.permute.xlu0 0
    %3073 = vperm.xlu0 %3072, %v2711
    %v3074 = vpop.permute.xlu0 %3073
    %3077 = vset.pattern.permute.xlu0 0
    %3078 = vperm.xlu0 %3077, %v2712
    %v3079 = vpop.permute.xlu0 %3078
    %3082 = vset.pattern.permute.xlu0 0
    %3083 = vperm.xlu0 %3082, %v2713
    %v3084 = vpop.permute.xlu0 %3083
    %3087 = vset.pattern.permute.xlu0 0
    %3088 = vperm.xlu0 %3087, %v2714
    %v3089 = vpop.permute.xlu0 %3088
    %3092 = vset.pattern.permute.xlu0 0
    %3093 = vperm.xlu0 %3092, %v2715
    %v3094 = vpop.permute.xlu0 %3093
    %3097 = vset.pattern.permute.xlu0 0
    %3098 = vperm.xlu0 %3097, %v2716
    %v3099 = vpop.permute.xlu0 %3098
    %3102 = vset.pattern.permute.xlu0 0
    %3103 = vperm.xlu0 %3102, %v2717
    %v3104 = vpop.permute.xlu0 %3103
    %3107 = vset.pattern.permute.xlu0 0
    %3108 = vperm.xlu0 %3107, %v2718
    %v3109 = vpop.permute.xlu0 %3108
    %3112 = vset.pattern.permute.xlu0 0
    %3113 = vperm.xlu0 %3112, %v2719
    %v3114 = vpop.permute.xlu0 %3113
    %3117 = vset.pattern.permute.xlu0 0
    %3118 = vperm.xlu0 %3117, %v2720
    %v3119 = vpop.permute.xlu0 %3118
    %3122 = vset.pattern.permute.xlu0 0
    %3123 = vperm.xlu0 %3122, %v2721
    %v3124 = vpop.permute.xlu0 %3123
    %3127 = vset.pattern.permute.xlu0 0
    %3128 = vperm.xlu0 %3127, %v2722
    %v3129 = vpop.permute.xlu0 %3128
    %3132 = vset.pattern.permute.xlu0 0
    %3133 = vperm.xlu0 %3132, %v2723
    %v3134 = vpop.permute.xlu0 %3133
    %3137 = vset.pattern.permute.xlu0 0
    %3138 = vperm.xlu0 %3137, %v2724
    %v3139 = vpop.permute.xlu0 %3138
    %3142 = vset.pattern.permute.xlu0 0
    %3143 = vperm.xlu0 %3142, %v2725
    %v3144 = vpop.permute.xlu0 %3143
    %3147 = vset.pattern.permute.xlu0 0
    %3148 = vperm.xlu0 %3147, %v2726
    %v3149 = vpop.permute.xlu0 %3148
    %3152 = vset.pattern.permute.xlu0 0
    %3153 = vperm.xlu0 %3152, %v2727
    %v3154 = vpop.permute.xlu0 %3153
    %3157 = vset.pattern.permute.xlu0 0
    %3158 = vperm.xlu0 %3157, %v2728
    %v3159 = vpop.permute.xlu0 %3158
    %3162 = vset.pattern.permute.xlu0 0
    %3163 = vperm.xlu0 %3162, %v2729
    %v3164 = vpop.permute.xlu0 %3163
    %3167 = vset.pattern.permute.xlu0 0
    %3168 = vperm.xlu0 %3167, %v2730
    %v3169 = vpop.permute.xlu0 %3168
    %3172 = vset.pattern.permute.xlu0 0
    %3173 = vperm.xlu0 %3172, %v2731
    %v3174 = vpop.permute.xlu0 %3173
    %3177 = vset.pattern.permute.xlu0 0
    %3178 = vperm.xlu0 %3177, %v2732
    %v3179 = vpop.permute.xlu0 %3178
    %3182 = vset.pattern.permute.xlu0 0
    %3183 = vperm.xlu0 %3182, %v2733
    %v3184 = vpop.permute.xlu0 %3183
    %3187 = vset.pattern.permute.xlu0 0
    %3188 = vperm.xlu0 %3187, %v2734
    %v3189 = vpop.permute.xlu0 %3188
    %3192 = vset.pattern.permute.xlu0 0
    %3193 = vperm.xlu0 %3192, %v2735
    %v3194 = vpop.permute.xlu0 %3193
    %3197 = vset.pattern.permute.xlu0 0
    %3198 = vperm.xlu0 %3197, %v2736
    %v3199 = vpop.permute.xlu0 %3198
    %3202 = vset.pattern.permute.xlu0 0
    %3203 = vperm.xlu0 %3202, %v2737
    %v3204 = vpop.permute.xlu0 %3203
    %3207 = vset.pattern.permute.xlu0 0
    %3208 = vperm.xlu0 %3207, %v2738
    %v3209 = vpop.permute.xlu0 %3208
    %3212 = vset.pattern.permute.xlu0 0
    %3213 = vperm.xlu0 %3212, %v2739
    %v3214 = vpop.permute.xlu0 %3213
    %3217 = vset.pattern.permute.xlu0 0
    %3218 = vperm.xlu0 %3217, %v2740
    %v3219 = vpop.permute.xlu0 %3218
    %3222 = vset.pattern.permute.xlu0 0
    %3223 = vperm.xlu0 %3222, %v2741
    %v3224 = vpop.permute.xlu0 %3223
    %3227 = vset.pattern.permute.xlu0 0
    %3228 = vperm.xlu0 %3227, %v2742
    %v3229 = vpop.permute.xlu0 %3228
    %3232 = vset.pattern.permute.xlu0 0
    %3233 = vperm.xlu0 %3232, %v2743
    %v3234 = vpop.permute.xlu0 %3233
    %3237 = vset.pattern.permute.xlu0 0
    %3238 = vperm.xlu0 %3237, %v2744
    %v3239 = vpop.permute.xlu0 %3238
    %3242 = vset.pattern.permute.xlu0 0
    %3243 = vperm.xlu0 %3242, %v2745
    %v3244 = vpop.permute.xlu0 %3243
    %vm3246 = vcmask 130048
    %v3248 = vsel %vm3246, %v1952, 0
    %v3251 = vsel %vm3246, %v1959, 0
    %v3254 = vsel %vm3246, %v1966, 0
    %v3257 = vsel %vm3246, %v1973, 0
    %v3260 = vsel %vm3246, %v1980, 0
    %v3263 = vsel %vm3246, %v1987, 0
    %v3266 = vsel %vm3246, %v1994, 0
    %v3269 = vsel %vm3246, %v2001, 0
    %v3272 = vsel %vm3246, %v2008, 0
    %v3275 = vsel %vm3246, %v2015, 0
    %v3278 = vsel %vm3246, %v2022, 0
    %v3281 = vsel %vm3246, %v2029, 0
    %v3284 = vsel %vm3246, %v2036, 0
    %v3287 = vsel %vm3246, %v2043, 0
    %v3290 = vsel %vm3246, %v2050, 0
    %v3293 = vsel %vm3246, %v2057, 0
    %v3296 = vsel %vm3246, %v2064, 0
    %v3299 = vsel %vm3246, %v2071, 0
    %v3302 = vsel %vm3246, %v2078, 0
    %v3305 = vsel %vm3246, %v2085, 0
    %v3308 = vsel %vm3246, %v2092, 0
    %v3311 = vsel %vm3246, %v2099, 0
    %v3314 = vsel %vm3246, %v2106, 0
    %v3317 = vsel %vm3246, %v2113, 0
    %v3320 = vsel %vm3246, %v2120, 0
    %v3323 = vsel %vm3246, %v2127, 0
    %v3326 = vsel %vm3246, %v2134, 0
    %v3329 = vsel %vm3246, %v2141, 0
    %v3332 = vsel %vm3246, %v2148, 0
    %v3335 = vsel %vm3246, %v2155, 0
    %v3338 = vsel %vm3246, %v2162, 0
    %v3341 = vsel %vm3246, %v2169, 0
    %v3344 = vsel %vm3246, %v2176, 0
    %v3347 = vsel %vm3246, %v2183, 0
    %v3350 = vsel %vm3246, %v2190, 0
    %v3353 = vsel %vm3246, %v2197, 0
    %v3356 = vsel %vm3246, %v2204, 0
    %v3359 = vsel %vm3246, %v2211, 0
    %v3362 = vsel %vm3246, %v2218, 0
    %v3365 = vsel %vm3246, %v2225, 0
    %v3368 = vsel %vm3246, %v2232, 0
    %v3371 = vsel %vm3246, %v2239, 0
    %v3374 = vsel %vm3246, %v2246, 0
    %v3377 = vsel %vm3246, %v2253, 0
    %v3380 = vsel %vm3246, %v2260, 0
    %v3383 = vsel %vm3246, %v2267, 0
    %v3386 = vsel %vm3246, %v2274, 0
    %v3389 = vsel %vm3246, %v2281, 0
    %v3392 = vsel %vm3246, %v2288, 0
    %v3395 = vsel %vm3246, %v2295, 0
    %v3398 = vsel %vm3246, %v2302, 0
    %v3401 = vsel %vm3246, %v2309, 0
    %v3404 = vsel %vm3246, %v2316, 0
    %v3407 = vsel %vm3246, %v2323, 0
    %v3410 = vsel %vm3246, %v2330, 0
    %v3413 = vsel %vm3246, %v2337, 0
    %v3416 = vsel %vm3246, %v2344, 0
    %v3419 = vsel %vm3246, %v2351, 0
    %v3422 = vsel %vm3246, %v2358, 0
    %v3425 = vsel %vm3246, %v2365, 0
    %v3428 = vsel %vm3246, %v2372, 0
    %v3431 = vsel %vm3246, %v2379, 0
    %v3434 = vsel %vm3246, %v2386, 0
    %v3437 = vsel %vm3246, %v2393, 0
    %v3440 = vsel %vm3246, %v2400, 0
    %v3443 = vsel %vm3246, %v2407, 0
    %v3446 = vsel %vm3246, %v2414, 0
    %v3449 = vsel %vm3246, %v2421, 0
    %v3452 = vsel %vm3246, %v2428, 0
    %v3455 = vsel %vm3246, %v2435, 0
    %v3458 = vsel %vm3246, %v2442, 0
    %v3461 = vsel %vm3246, %v2449, 0
    %v3464 = vsel %vm3246, %v2456, 0
    %v3467 = vsel %vm3246, %v2463, 0
    %v3470 = vsel %vm3246, %v2470, 0
    %v3473 = vsel %vm3246, %v2477, 0
    %v3476 = vsel %vm3246, %v2484, 0
    %v3479 = vsel %vm3246, %v2491, 0
    %v3482 = vsel %vm3246, %v2498, 0
    %v3485 = vsel %vm3246, %v2505, 0
    %v3488 = vsel %vm3246, %v2512, 0
    %v3491 = vsel %vm3246, %v2519, 0
    %v3494 = vsel %vm3246, %v2526, 0
    %v3497 = vsel %vm3246, %v2533, 0
    %v3500 = vsel %vm3246, %v2540, 0
    %v3503 = vsel %vm3246, %v2547, 0
    %v3506 = vsel %vm3246, %v2554, 0
    %v3509 = vsel %vm3246, %v2561, 0
    %v3512 = vsel %vm3246, %v2568, 0
    %v3515 = vsel %vm3246, %v2575, 0
    %v3518 = vsel %vm3246, %v2582, 0
    %v3521 = vsel %vm3246, %v2589, 0
    %v3524 = vsel %vm3246, %v2596, 0
    %v3527 = vsel %vm3246, %v2603, 0
    %v3530 = vsel %vm3246, %v2610, 0
    %v3533 = vsel %vm3246, %v2617, 0
    %v3536 = vsel %vm3246, %v2624, 0
    %v3539 = vsel %vm3246, %v2631, 0
    %v3542 = vsel %vm3246, %v2638, 0
    %v3545 = vsel %vm3246, %v2645, 0
    %3547 = vmatprep.subr.mxu0 %v1781
    %3548 = vmatpush1.msra.mxu0 %v1780
    %3549 = vmatprep.subr.mxu0 %v1779
    %3550 = vmatpush1.msra.mxu0 %v1778
    %3551 = vmatprep.subr.mxu0 %v1777
    %3552 = vmatpush1.msra.mxu0 %v1776
    %3553 = vmatprep.subr.mxu0 %v1775
    %3554 = vmatpush1.msra.mxu0 %v1774
    %3555 = vmatprep.subr.mxu0 %v1773
    %3556 = vmatpush1.msra.mxu0 %v1772
    %3557 = vmatprep.subr.mxu0 %v1771
    %3558 = vmatpush1.msra.mxu0 %v1770
    %3559 = vmatprep.subr.mxu0 %v1769
    %3560 = vmatpush1.msra.mxu0 %v1768
    %3561 = vmatprep.subr.mxu0 %v1767
    %3562 = vmatpush1.msra.mxu0 %v1766
    %3563 = vmatprep.subr.mxu0 %v1765
    %3564 = vmatpush1.msra.mxu0 %v1764
    %3565 = vmatprep.subr.mxu0 %v1763
    %3566 = vmatpush1.msra.mxu0 %v1762
    %3567 = vmatprep.subr.mxu0 %v1761
    %3568 = vmatpush1.msra.mxu0 %v1760
    %3569 = vmatprep.subr.mxu0 %v1759
    %3570 = vmatpush1.msra.mxu0 %v1758
    %3571 = vmatprep.subr.mxu0 %v1757
    %3572 = vmatpush1.msra.mxu0 %v1756
    %3573 = vmatprep.subr.mxu0 %v1755
    %3574 = vmatpush1.msra.mxu0 %v1754
    %3575 = vmatprep.subr.mxu0 %v1753
    %3576 = vmatpush1.msra.mxu0 %v1752
    %3577 = vmatprep.subr.mxu0 %v1751
    %3578 = vmatpush1.msra.mxu0 %v1750
    %3579 = vmatprep.subr.mxu0 %v1813
    %3580 = vmatpush2.msra.mxu0 %v1812
    %3581 = vmatprep.subr.mxu0 %v1811
    %3582 = vmatpush2.msra.mxu0 %v1810
    %3583 = vmatprep.subr.mxu0 %v1809
    %3584 = vmatpush2.msra.mxu0 %v1808
    %3585 = vmatprep.subr.mxu0 %v1807
    %3586 = vmatpush2.msra.mxu0 %v1806
    %3587 = vmatprep.subr.mxu0 %v1805
    %3588 = vmatpush2.msra.mxu0 %v1804
    %3589 = vmatprep.subr.mxu0 %v1803
    %3590 = vmatpush2.msra.mxu0 %v1802
    %3591 = vmatprep.subr.mxu0 %v1801
    %3592 = vmatpush2.msra.mxu0 %v1800
    %3593 = vmatprep.subr.mxu0 %v1799
    %3594 = vmatpush2.msra.mxu0 %v1798
    %3595 = vmatprep.subr.mxu0 %v1797
    %3596 = vmatpush2.msra.mxu0 %v1796
    %3597 = vmatprep.subr.mxu0 %v1795
    %3598 = vmatpush2.msra.mxu0 %v1794
    %3599 = vmatprep.subr.mxu0 %v1793
    %3600 = vmatpush2.msra.mxu0 %v1792
    %3601 = vmatprep.subr.mxu0 %v1791
    %3602 = vmatpush2.msra.mxu0 %v1790
    %3603 = vmatprep.subr.mxu0 %v1789
    %3604 = vmatpush2.msra.mxu0 %v1788
    %3605 = vmatprep.subr.mxu0 %v1787
    %3606 = vmatpush2.msra.mxu0 %v1786
    %3607 = vmatprep.subr.mxu0 %v1785
    %3608 = vmatpush2.msra.mxu0 %v1784
    %3609 = vmatprep.subr.mxu0 %v1783
    %3610 = vmatpush2.msra.mxu0 %v1782
    %3611 = vmatprep.mubr.f32.mxu0 %v1947
    %3612 = vmatmul.mubr.f32.gmra.mxu0 %v1946
    %v3613 = vpop.f32.mrf.mxu0
    %v3614 = vadd.f32 %v2749, %v3613
    %v3615 = vpop.f32.mrf.mxu0
    %v3616 = vadd.f32 %v2749, %v3615
    %3617 = vmatprep.mubr.f32.mxu0 %v1954
    %3618 = vmatmul.mubr.f32.gmra.mxu0 %v1953
    %v3619 = vpop.f32.mrf.mxu0
    %v3620 = vadd.f32 %v2754, %v3619
    %v3621 = vpop.f32.mrf.mxu0
    %v3622 = vadd.f32 %v2754, %v3621
    %3623 = vmatprep.mubr.f32.mxu0 %v1961
    %3624 = vmatmul.mubr.f32.gmra.mxu0 %v1960
    %v3625 = vpop.f32.mrf.mxu0
    %v3626 = vadd.f32 %v2759, %v3625
    %v3627 = vpop.f32.mrf.mxu0
    %v3628 = vadd.f32 %v2759, %v3627
    %3629 = vmatprep.mubr.f32.mxu0 %v1968
    %3630 = vmatmul.mubr.f32.gmra.mxu0 %v1967
    %v3631 = vpop.f32.mrf.mxu0
    %v3632 = vadd.f32 %v2764, %v3631
    %v3633 = vpop.f32.mrf.mxu0
    %v3634 = vadd.f32 %v2764, %v3633
    %3635 = vmatprep.mubr.f32.mxu0 %v1975
    %3636 = vmatmul.mubr.f32.gmra.mxu0 %v1974
    %v3637 = vpop.f32.mrf.mxu0
    %v3638 = vadd.f32 %v2769, %v3637
    %v3639 = vpop.f32.mrf.mxu0
    %v3640 = vadd.f32 %v2769, %v3639
    %3641 = vmatprep.mubr.f32.mxu0 %v1982
    %3642 = vmatmul.mubr.f32.gmra.mxu0 %v1981
    %v3643 = vpop.f32.mrf.mxu0
    %v3644 = vadd.f32 %v2774, %v3643
    %v3645 = vpop.f32.mrf.mxu0
    %v3646 = vadd.f32 %v2774, %v3645
    %3647 = vmatprep.mubr.f32.mxu0 %v1989
    %3648 = vmatmul.mubr.f32.gmra.mxu0 %v1988
    %v3649 = vpop.f32.mrf.mxu0
    %v3650 = vadd.f32 %v2779, %v3649
    %v3651 = vpop.f32.mrf.mxu0
    %v3652 = vadd.f32 %v2779, %v3651
    %3653 = vmatprep.mubr.f32.mxu0 %v1996
    %3654 = vmatmul.mubr.f32.gmra.mxu0 %v1995
    %v3655 = vpop.f32.mrf.mxu0
    %v3656 = vadd.f32 %v2784, %v3655
    %v3657 = vpop.f32.mrf.mxu0
    %v3658 = vadd.f32 %v2784, %v3657
    %3659 = vmatprep.mubr.f32.mxu0 %v2003
    %3660 = vmatmul.mubr.f32.gmra.mxu0 %v2002
    %v3661 = vpop.f32.mrf.mxu0
    %v3662 = vadd.f32 %v2789, %v3661
    %v3663 = vpop.f32.mrf.mxu0
    %v3664 = vadd.f32 %v2789, %v3663
    %3665 = vmatprep.mubr.f32.mxu0 %v2010
    %3666 = vmatmul.mubr.f32.gmra.mxu0 %v2009
    %v3667 = vpop.f32.mrf.mxu0
    %v3668 = vadd.f32 %v2794, %v3667
    %v3669 = vpop.f32.mrf.mxu0
    %v3670 = vadd.f32 %v2794, %v3669
    %3671 = vmatprep.mubr.f32.mxu0 %v2017
    %3672 = vmatmul.mubr.f32.gmra.mxu0 %v2016
    %v3673 = vpop.f32.mrf.mxu0
    %v3674 = vadd.f32 %v2799, %v3673
    %v3675 = vpop.f32.mrf.mxu0
    %v3676 = vadd.f32 %v2799, %v3675
    %3677 = vmatprep.mubr.f32.mxu0 %v2024
    %3678 = vmatmul.mubr.f32.gmra.mxu0 %v2023
    %v3679 = vpop.f32.mrf.mxu0
    %v3680 = vadd.f32 %v2804, %v3679
    %v3681 = vpop.f32.mrf.mxu0
    %v3682 = vadd.f32 %v2804, %v3681
    %3683 = vmatprep.mubr.f32.mxu0 %v2031
    %3684 = vmatmul.mubr.f32.gmra.mxu0 %v2030
    %v3685 = vpop.f32.mrf.mxu0
    %v3686 = vadd.f32 %v2809, %v3685
    %v3687 = vpop.f32.mrf.mxu0
    %v3688 = vadd.f32 %v2809, %v3687
    %3689 = vmatprep.mubr.f32.mxu0 %v2038
    %3690 = vmatmul.mubr.f32.gmra.mxu0 %v2037
    %v3691 = vpop.f32.mrf.mxu0
    %v3692 = vadd.f32 %v2814, %v3691
    %v3693 = vpop.f32.mrf.mxu0
    %v3694 = vadd.f32 %v2814, %v3693
    %3695 = vmatprep.mubr.f32.mxu0 %v2045
    %3696 = vmatmul.mubr.f32.gmra.mxu0 %v2044
    %v3697 = vpop.f32.mrf.mxu0
    %v3698 = vadd.f32 %v2819, %v3697
    %v3699 = vpop.f32.mrf.mxu0
    %v3700 = vadd.f32 %v2819, %v3699
    %3701 = vmatprep.mubr.f32.mxu0 %v2052
    %3702 = vmatmul.mubr.f32.gmra.mxu0 %v2051
    %v3703 = vpop.f32.mrf.mxu0
    %v3704 = vadd.f32 %v2824, %v3703
    %v3705 = vpop.f32.mrf.mxu0
    %v3706 = vadd.f32 %v2824, %v3705
    %3707 = vmatprep.mubr.f32.mxu0 %v2059
    %3708 = vmatmul.mubr.f32.gmra.mxu0 %v2058
    %v3709 = vpop.f32.mrf.mxu0
    %v3710 = vadd.f32 %v2829, %v3709
    %v3711 = vpop.f32.mrf.mxu0
    %v3712 = vadd.f32 %v2829, %v3711
    %3713 = vmatprep.mubr.f32.mxu0 %v2066
    %3714 = vmatmul.mubr.f32.gmra.mxu0 %v2065
    %v3715 = vpop.f32.mrf.mxu0
    %v3716 = vadd.f32 %v2834, %v3715
    %v3717 = vpop.f32.mrf.mxu0
    %v3718 = vadd.f32 %v2834, %v3717
    %3719 = vmatprep.mubr.f32.mxu0 %v2073
    %3720 = vmatmul.mubr.f32.gmra.mxu0 %v2072
    %v3721 = vpop.f32.mrf.mxu0
    %v3722 = vadd.f32 %v2839, %v3721
    %v3723 = vpop.f32.mrf.mxu0
    %v3724 = vadd.f32 %v2839, %v3723
    %3725 = vmatprep.mubr.f32.mxu0 %v2080
    %3726 = vmatmul.mubr.f32.gmra.mxu0 %v2079
    %v3727 = vpop.f32.mrf.mxu0
    %v3728 = vadd.f32 %v2844, %v3727
    %v3729 = vpop.f32.mrf.mxu0
    %v3730 = vadd.f32 %v2844, %v3729
    %3731 = vmatprep.mubr.f32.mxu0 %v2087
    %3732 = vmatmul.mubr.f32.gmra.mxu0 %v2086
    %v3733 = vpop.f32.mrf.mxu0
    %v3734 = vadd.f32 %v2849, %v3733
    %v3735 = vpop.f32.mrf.mxu0
    %v3736 = vadd.f32 %v2849, %v3735
    %3737 = vmatprep.mubr.f32.mxu0 %v2094
    %3738 = vmatmul.mubr.f32.gmra.mxu0 %v2093
    %v3739 = vpop.f32.mrf.mxu0
    %v3740 = vadd.f32 %v2854, %v3739
    %v3741 = vpop.f32.mrf.mxu0
    %v3742 = vadd.f32 %v2854, %v3741
    %3743 = vmatprep.mubr.f32.mxu0 %v2101
    %3744 = vmatmul.mubr.f32.gmra.mxu0 %v2100
    %v3745 = vpop.f32.mrf.mxu0
    %v3746 = vadd.f32 %v2859, %v3745
    %v3747 = vpop.f32.mrf.mxu0
    %v3748 = vadd.f32 %v2859, %v3747
    %3749 = vmatprep.mubr.f32.mxu0 %v2108
    %3750 = vmatmul.mubr.f32.gmra.mxu0 %v2107
    %v3751 = vpop.f32.mrf.mxu0
    %v3752 = vadd.f32 %v2864, %v3751
    %v3753 = vpop.f32.mrf.mxu0
    %v3754 = vadd.f32 %v2864, %v3753
    %3755 = vmatprep.mubr.f32.mxu0 %v2115
    %3756 = vmatmul.mubr.f32.gmra.mxu0 %v2114
    %v3757 = vpop.f32.mrf.mxu0
    %v3758 = vadd.f32 %v2869, %v3757
    %v3759 = vpop.f32.mrf.mxu0
    %v3760 = vadd.f32 %v2869, %v3759
    %3761 = vmatprep.mubr.f32.mxu0 %v2122
    %3762 = vmatmul.mubr.f32.gmra.mxu0 %v2121
    %v3763 = vpop.f32.mrf.mxu0
    %v3764 = vadd.f32 %v2874, %v3763
    %v3765 = vpop.f32.mrf.mxu0
    %v3766 = vadd.f32 %v2874, %v3765
    %3767 = vmatprep.mubr.f32.mxu0 %v2129
    %3768 = vmatmul.mubr.f32.gmra.mxu0 %v2128
    %v3769 = vpop.f32.mrf.mxu0
    %v3770 = vadd.f32 %v2879, %v3769
    %v3771 = vpop.f32.mrf.mxu0
    %v3772 = vadd.f32 %v2879, %v3771
    %3773 = vmatprep.mubr.f32.mxu0 %v2136
    %3774 = vmatmul.mubr.f32.gmra.mxu0 %v2135
    %v3775 = vpop.f32.mrf.mxu0
    %v3776 = vadd.f32 %v2884, %v3775
    %v3777 = vpop.f32.mrf.mxu0
    %v3778 = vadd.f32 %v2884, %v3777
    %3779 = vmatprep.mubr.f32.mxu0 %v2143
    %3780 = vmatmul.mubr.f32.gmra.mxu0 %v2142
    %v3781 = vpop.f32.mrf.mxu0
    %v3782 = vadd.f32 %v2889, %v3781
    %v3783 = vpop.f32.mrf.mxu0
    %v3784 = vadd.f32 %v2889, %v3783
    %3785 = vmatprep.mubr.f32.mxu0 %v2150
    %3786 = vmatmul.mubr.f32.gmra.mxu0 %v2149
    %v3787 = vpop.f32.mrf.mxu0
    %v3788 = vadd.f32 %v2894, %v3787
    %v3789 = vpop.f32.mrf.mxu0
    %v3790 = vadd.f32 %v2894, %v3789
    %3791 = vmatprep.mubr.f32.mxu0 %v2157
    %3792 = vmatmul.mubr.f32.gmra.mxu0 %v2156
    %v3793 = vpop.f32.mrf.mxu0
    %v3794 = vadd.f32 %v2899, %v3793
    %v3795 = vpop.f32.mrf.mxu0
    %v3796 = vadd.f32 %v2899, %v3795
    %3797 = vmatprep.mubr.f32.mxu0 %v2164
    %3798 = vmatmul.mubr.f32.gmra.mxu0 %v2163
    %v3799 = vpop.f32.mrf.mxu0
    %v3800 = vadd.f32 %v2904, %v3799
    %v3801 = vpop.f32.mrf.mxu0
    %v3802 = vadd.f32 %v2904, %v3801
    %3803 = vmatprep.mubr.f32.mxu0 %v2171
    %3804 = vmatmul.mubr.f32.gmra.mxu0 %v2170
    %v3805 = vpop.f32.mrf.mxu0
    %v3806 = vadd.f32 %v2909, %v3805
    %v3807 = vpop.f32.mrf.mxu0
    %v3808 = vadd.f32 %v2909, %v3807
    %3809 = vmatprep.mubr.f32.mxu0 %v2178
    %3810 = vmatmul.mubr.f32.gmra.mxu0 %v2177
    %v3811 = vpop.f32.mrf.mxu0
    %v3812 = vadd.f32 %v2914, %v3811
    %v3813 = vpop.f32.mrf.mxu0
    %v3814 = vadd.f32 %v2914, %v3813
    %3815 = vmatprep.mubr.f32.mxu0 %v2185
    %3816 = vmatmul.mubr.f32.gmra.mxu0 %v2184
    %v3817 = vpop.f32.mrf.mxu0
    %v3818 = vadd.f32 %v2919, %v3817
    %v3819 = vpop.f32.mrf.mxu0
    %v3820 = vadd.f32 %v2919, %v3819
    %3821 = vmatprep.mubr.f32.mxu0 %v2192
    %3822 = vmatmul.mubr.f32.gmra.mxu0 %v2191
    %v3823 = vpop.f32.mrf.mxu0
    %v3824 = vadd.f32 %v2924, %v3823
    %v3825 = vpop.f32.mrf.mxu0
    %v3826 = vadd.f32 %v2924, %v3825
    %3827 = vmatprep.mubr.f32.mxu0 %v2199
    %3828 = vmatmul.mubr.f32.gmra.mxu0 %v2198
    %v3829 = vpop.f32.mrf.mxu0
    %v3830 = vadd.f32 %v2929, %v3829
    %v3831 = vpop.f32.mrf.mxu0
    %v3832 = vadd.f32 %v2929, %v3831
    %3833 = vmatprep.mubr.f32.mxu0 %v2206
    %3834 = vmatmul.mubr.f32.gmra.mxu0 %v2205
    %v3835 = vpop.f32.mrf.mxu0
    %v3836 = vadd.f32 %v2934, %v3835
    %v3837 = vpop.f32.mrf.mxu0
    %v3838 = vadd.f32 %v2934, %v3837
    %3839 = vmatprep.mubr.f32.mxu0 %v2213
    %3840 = vmatmul.mubr.f32.gmra.mxu0 %v2212
    %v3841 = vpop.f32.mrf.mxu0
    %v3842 = vadd.f32 %v2939, %v3841
    %v3843 = vpop.f32.mrf.mxu0
    %v3844 = vadd.f32 %v2939, %v3843
    %3845 = vmatprep.mubr.f32.mxu0 %v2220
    %3846 = vmatmul.mubr.f32.gmra.mxu0 %v2219
    %v3847 = vpop.f32.mrf.mxu0
    %v3848 = vadd.f32 %v2944, %v3847
    %v3849 = vpop.f32.mrf.mxu0
    %v3850 = vadd.f32 %v2944, %v3849
    %3851 = vmatprep.mubr.f32.mxu0 %v2227
    %3852 = vmatmul.mubr.f32.gmra.mxu0 %v2226
    %v3853 = vpop.f32.mrf.mxu0
    %v3854 = vadd.f32 %v2949, %v3853
    %v3855 = vpop.f32.mrf.mxu0
    %v3856 = vadd.f32 %v2949, %v3855
    %3857 = vmatprep.mubr.f32.mxu0 %v2234
    %3858 = vmatmul.mubr.f32.gmra.mxu0 %v2233
    %v3859 = vpop.f32.mrf.mxu0
    %v3860 = vadd.f32 %v2954, %v3859
    %v3861 = vpop.f32.mrf.mxu0
    %v3862 = vadd.f32 %v2954, %v3861
    %3863 = vmatprep.mubr.f32.mxu0 %v2241
    %3864 = vmatmul.mubr.f32.gmra.mxu0 %v2240
    %v3865 = vpop.f32.mrf.mxu0
    %v3866 = vadd.f32 %v2959, %v3865
    %v3867 = vpop.f32.mrf.mxu0
    %v3868 = vadd.f32 %v2959, %v3867
    %3869 = vmatprep.mubr.f32.mxu0 %v2248
    %3870 = vmatmul.mubr.f32.gmra.mxu0 %v2247
    %v3871 = vpop.f32.mrf.mxu0
    %v3872 = vadd.f32 %v2964, %v3871
    %v3873 = vpop.f32.mrf.mxu0
    %v3874 = vadd.f32 %v2964, %v3873
    %3875 = vmatprep.mubr.f32.mxu0 %v2255
    %3876 = vmatmul.mubr.f32.gmra.mxu0 %v2254
    %v3877 = vpop.f32.mrf.mxu0
    %v3878 = vadd.f32 %v2969, %v3877
    %v3879 = vpop.f32.mrf.mxu0
    %v3880 = vadd.f32 %v2969, %v3879
    %3881 = vmatprep.mubr.f32.mxu0 %v2262
    %3882 = vmatmul.mubr.f32.gmra.mxu0 %v2261
    %v3883 = vpop.f32.mrf.mxu0
    %v3884 = vadd.f32 %v2974, %v3883
    %v3885 = vpop.f32.mrf.mxu0
    %v3886 = vadd.f32 %v2974, %v3885
    %3887 = vmatprep.mubr.f32.mxu0 %v2269
    %3888 = vmatmul.mubr.f32.gmra.mxu0 %v2268
    %v3889 = vpop.f32.mrf.mxu0
    %v3890 = vadd.f32 %v2979, %v3889
    %v3891 = vpop.f32.mrf.mxu0
    %v3892 = vadd.f32 %v2979, %v3891
    %3893 = vmatprep.mubr.f32.mxu0 %v2276
    %3894 = vmatmul.mubr.f32.gmra.mxu0 %v2275
    %v3895 = vpop.f32.mrf.mxu0
    %v3896 = vadd.f32 %v2984, %v3895
    %v3897 = vpop.f32.mrf.mxu0
    %v3898 = vadd.f32 %v2984, %v3897
    %3899 = vmatprep.mubr.f32.mxu0 %v2283
    %3900 = vmatmul.mubr.f32.gmra.mxu0 %v2282
    %v3901 = vpop.f32.mrf.mxu0
    %v3902 = vadd.f32 %v2989, %v3901
    %v3903 = vpop.f32.mrf.mxu0
    %v3904 = vadd.f32 %v2989, %v3903
    %3905 = vmatprep.mubr.f32.mxu0 %v2290
    %3906 = vmatmul.mubr.f32.gmra.mxu0 %v2289
    %v3907 = vpop.f32.mrf.mxu0
    %v3908 = vadd.f32 %v2994, %v3907
    %v3909 = vpop.f32.mrf.mxu0
    %v3910 = vadd.f32 %v2994, %v3909
    %3911 = vmatprep.mubr.f32.mxu0 %v2297
    %3912 = vmatmul.mubr.f32.gmra.mxu0 %v2296
    %v3913 = vpop.f32.mrf.mxu0
    %v3914 = vadd.f32 %v2999, %v3913
    %v3915 = vpop.f32.mrf.mxu0
    %v3916 = vadd.f32 %v2999, %v3915
    %3917 = vmatprep.mubr.f32.mxu0 %v2304
    %3918 = vmatmul.mubr.f32.gmra.mxu0 %v2303
    %v3919 = vpop.f32.mrf.mxu0
    %v3920 = vadd.f32 %v3004, %v3919
    %v3921 = vpop.f32.mrf.mxu0
    %v3922 = vadd.f32 %v3004, %v3921
    %3923 = vmatprep.mubr.f32.mxu0 %v2311
    %3924 = vmatmul.mubr.f32.gmra.mxu0 %v2310
    %v3925 = vpop.f32.mrf.mxu0
    %v3926 = vadd.f32 %v3009, %v3925
    %v3927 = vpop.f32.mrf.mxu0
    %v3928 = vadd.f32 %v3009, %v3927
    %3929 = vmatprep.mubr.f32.mxu0 %v2318
    %3930 = vmatmul.mubr.f32.gmra.mxu0 %v2317
    %v3931 = vpop.f32.mrf.mxu0
    %v3932 = vadd.f32 %v3014, %v3931
    %v3933 = vpop.f32.mrf.mxu0
    %v3934 = vadd.f32 %v3014, %v3933
    %3935 = vmatprep.mubr.f32.mxu0 %v2325
    %3936 = vmatmul.mubr.f32.gmra.mxu0 %v2324
    %v3937 = vpop.f32.mrf.mxu0
    %v3938 = vadd.f32 %v3019, %v3937
    %v3939 = vpop.f32.mrf.mxu0
    %v3940 = vadd.f32 %v3019, %v3939
    %3941 = vmatprep.mubr.f32.mxu0 %v2332
    %3942 = vmatmul.mubr.f32.gmra.mxu0 %v2331
    %v3943 = vpop.f32.mrf.mxu0
    %v3944 = vadd.f32 %v3024, %v3943
    %v3945 = vpop.f32.mrf.mxu0
    %v3946 = vadd.f32 %v3024, %v3945
    %3947 = vmatprep.mubr.f32.mxu0 %v2339
    %3948 = vmatmul.mubr.f32.gmra.mxu0 %v2338
    %v3949 = vpop.f32.mrf.mxu0
    %v3950 = vadd.f32 %v3029, %v3949
    %v3951 = vpop.f32.mrf.mxu0
    %v3952 = vadd.f32 %v3029, %v3951
    %3953 = vmatprep.mubr.f32.mxu0 %v2346
    %3954 = vmatmul.mubr.f32.gmra.mxu0 %v2345
    %v3955 = vpop.f32.mrf.mxu0
    %v3956 = vadd.f32 %v3034, %v3955
    %v3957 = vpop.f32.mrf.mxu0
    %v3958 = vadd.f32 %v3034, %v3957
    %3959 = vmatprep.mubr.f32.mxu0 %v2353
    %3960 = vmatmul.mubr.f32.gmra.mxu0 %v2352
    %v3961 = vpop.f32.mrf.mxu0
    %v3962 = vadd.f32 %v3039, %v3961
    %v3963 = vpop.f32.mrf.mxu0
    %v3964 = vadd.f32 %v3039, %v3963
    %3965 = vmatprep.mubr.f32.mxu0 %v2360
    %3966 = vmatmul.mubr.f32.gmra.mxu0 %v2359
    %v3967 = vpop.f32.mrf.mxu0
    %v3968 = vadd.f32 %v3044, %v3967
    %v3969 = vpop.f32.mrf.mxu0
    %v3970 = vadd.f32 %v3044, %v3969
    %3971 = vmatprep.mubr.f32.mxu0 %v2367
    %3972 = vmatmul.mubr.f32.gmra.mxu0 %v2366
    %v3973 = vpop.f32.mrf.mxu0
    %v3974 = vadd.f32 %v3049, %v3973
    %v3975 = vpop.f32.mrf.mxu0
    %v3976 = vadd.f32 %v3049, %v3975
    %3977 = vmatprep.mubr.f32.mxu0 %v2374
    %3978 = vmatmul.mubr.f32.gmra.mxu0 %v2373
    %v3979 = vpop.f32.mrf.mxu0
    %v3980 = vadd.f32 %v3054, %v3979
    %v3981 = vpop.f32.mrf.mxu0
    %v3982 = vadd.f32 %v3054, %v3981
    %3983 = vmatprep.mubr.f32.mxu0 %v2381
    %3984 = vmatmul.mubr.f32.gmra.mxu0 %v2380
    %v3985 = vpop.f32.mrf.mxu0
    %v3986 = vadd.f32 %v3059, %v3985
    %v3987 = vpop.f32.mrf.mxu0
    %v3988 = vadd.f32 %v3059, %v3987
    %3989 = vmatprep.mubr.f32.mxu0 %v2388
    %3990 = vmatmul.mubr.f32.gmra.mxu0 %v2387
    %v3991 = vpop.f32.mrf.mxu0
    %v3992 = vadd.f32 %v3064, %v3991
    %v3993 = vpop.f32.mrf.mxu0
    %v3994 = vadd.f32 %v3064, %v3993
    %3995 = vmatprep.mubr.f32.mxu0 %v2395
    %3996 = vmatmul.mubr.f32.gmra.mxu0 %v2394
    %v3997 = vpop.f32.mrf.mxu0
    %v3998 = vadd.f32 %v3069, %v3997
    %v3999 = vpop.f32.mrf.mxu0
    %v4000 = vadd.f32 %v3069, %v3999
    %4001 = vmatprep.mubr.f32.mxu0 %v2402
    %4002 = vmatmul.mubr.f32.gmra.mxu0 %v2401
    %v4003 = vpop.f32.mrf.mxu0
    %v4004 = vadd.f32 %v3074, %v4003
    %v4005 = vpop.f32.mrf.mxu0
    %v4006 = vadd.f32 %v3074, %v4005
    %4007 = vmatprep.mubr.f32.mxu0 %v2409
    %4008 = vmatmul.mubr.f32.gmra.mxu0 %v2408
    %v4009 = vpop.f32.mrf.mxu0
    %v4010 = vadd.f32 %v3079, %v4009
    %v4011 = vpop.f32.mrf.mxu0
    %v4012 = vadd.f32 %v3079, %v4011
    %4013 = vmatprep.mubr.f32.mxu0 %v2416
    %4014 = vmatmul.mubr.f32.gmra.mxu0 %v2415
    %v4015 = vpop.f32.mrf.mxu0
    %v4016 = vadd.f32 %v3084, %v4015
    %v4017 = vpop.f32.mrf.mxu0
    %v4018 = vadd.f32 %v3084, %v4017
    %4019 = vmatprep.mubr.f32.mxu0 %v2423
    %4020 = vmatmul.mubr.f32.gmra.mxu0 %v2422
    %v4021 = vpop.f32.mrf.mxu0
    %v4022 = vadd.f32 %v3089, %v4021
    %v4023 = vpop.f32.mrf.mxu0
    %v4024 = vadd.f32 %v3089, %v4023
    %4025 = vmatprep.mubr.f32.mxu0 %v2430
    %4026 = vmatmul.mubr.f32.gmra.mxu0 %v2429
    %v4027 = vpop.f32.mrf.mxu0
    %v4028 = vadd.f32 %v3094, %v4027
    %v4029 = vpop.f32.mrf.mxu0
    %v4030 = vadd.f32 %v3094, %v4029
    %4031 = vmatprep.mubr.f32.mxu0 %v2437
    %4032 = vmatmul.mubr.f32.gmra.mxu0 %v2436
    %v4033 = vpop.f32.mrf.mxu0
    %v4034 = vadd.f32 %v3099, %v4033
    %v4035 = vpop.f32.mrf.mxu0
    %v4036 = vadd.f32 %v3099, %v4035
    %4037 = vmatprep.mubr.f32.mxu0 %v2444
    %4038 = vmatmul.mubr.f32.gmra.mxu0 %v2443
    %v4039 = vpop.f32.mrf.mxu0
    %v4040 = vadd.f32 %v3104, %v4039
    %v4041 = vpop.f32.mrf.mxu0
    %v4042 = vadd.f32 %v3104, %v4041
    %4043 = vmatprep.mubr.f32.mxu0 %v2451
    %4044 = vmatmul.mubr.f32.gmra.mxu0 %v2450
    %v4045 = vpop.f32.mrf.mxu0
    %v4046 = vadd.f32 %v3109, %v4045
    %v4047 = vpop.f32.mrf.mxu0
    %v4048 = vadd.f32 %v3109, %v4047
    %4049 = vmatprep.mubr.f32.mxu0 %v2458
    %4050 = vmatmul.mubr.f32.gmra.mxu0 %v2457
    %v4051 = vpop.f32.mrf.mxu0
    %v4052 = vadd.f32 %v3114, %v4051
    %v4053 = vpop.f32.mrf.mxu0
    %v4054 = vadd.f32 %v3114, %v4053
    %4055 = vmatprep.mubr.f32.mxu0 %v2465
    %4056 = vmatmul.mubr.f32.gmra.mxu0 %v2464
    %v4057 = vpop.f32.mrf.mxu0
    %v4058 = vadd.f32 %v3119, %v4057
    %v4059 = vpop.f32.mrf.mxu0
    %v4060 = vadd.f32 %v3119, %v4059
    %4061 = vmatprep.mubr.f32.mxu0 %v2472
    %4062 = vmatmul.mubr.f32.gmra.mxu0 %v2471
    %v4063 = vpop.f32.mrf.mxu0
    %v4064 = vadd.f32 %v3124, %v4063
    %v4065 = vpop.f32.mrf.mxu0
    %v4066 = vadd.f32 %v3124, %v4065
    %4067 = vmatprep.mubr.f32.mxu0 %v2479
    %4068 = vmatmul.mubr.f32.gmra.mxu0 %v2478
    %v4069 = vpop.f32.mrf.mxu0
    %v4070 = vadd.f32 %v3129, %v4069
    %v4071 = vpop.f32.mrf.mxu0
    %v4072 = vadd.f32 %v3129, %v4071
    %4073 = vmatprep.mubr.f32.mxu0 %v2486
    %4074 = vmatmul.mubr.f32.gmra.mxu0 %v2485
    %v4075 = vpop.f32.mrf.mxu0
    %v4076 = vadd.f32 %v3134, %v4075
    %v4077 = vpop.f32.mrf.mxu0
    %v4078 = vadd.f32 %v3134, %v4077
    %4079 = vmatprep.mubr.f32.mxu0 %v2493
    %4080 = vmatmul.mubr.f32.gmra.mxu0 %v2492
    %v4081 = vpop.f32.mrf.mxu0
    %v4082 = vadd.f32 %v3139, %v4081
    %v4083 = vpop.f32.mrf.mxu0
    %v4084 = vadd.f32 %v3139, %v4083
    %4085 = vmatprep.mubr.f32.mxu0 %v2500
    %4086 = vmatmul.mubr.f32.gmra.mxu0 %v2499
    %v4087 = vpop.f32.mrf.mxu0
    %v4088 = vadd.f32 %v3144, %v4087
    %v4089 = vpop.f32.mrf.mxu0
    %v4090 = vadd.f32 %v3144, %v4089
    %4091 = vmatprep.mubr.f32.mxu0 %v2507
    %4092 = vmatmul.mubr.f32.gmra.mxu0 %v2506
    %v4093 = vpop.f32.mrf.mxu0
    %v4094 = vadd.f32 %v3149, %v4093
    %v4095 = vpop.f32.mrf.mxu0
    %v4096 = vadd.f32 %v3149, %v4095
    %4097 = vmatprep.mubr.f32.mxu0 %v2514
    %4098 = vmatmul.mubr.f32.gmra.mxu0 %v2513
    %v4099 = vpop.f32.mrf.mxu0
    %v4100 = vadd.f32 %v3154, %v4099
    %v4101 = vpop.f32.mrf.mxu0
    %v4102 = vadd.f32 %v3154, %v4101
    %4103 = vmatprep.mubr.f32.mxu0 %v2521
    %4104 = vmatmul.mubr.f32.gmra.mxu0 %v2520
    %v4105 = vpop.f32.mrf.mxu0
    %v4106 = vadd.f32 %v3159, %v4105
    %v4107 = vpop.f32.mrf.mxu0
    %v4108 = vadd.f32 %v3159, %v4107
    %4109 = vmatprep.mubr.f32.mxu0 %v2528
    %4110 = vmatmul.mubr.f32.gmra.mxu0 %v2527
    %v4111 = vpop.f32.mrf.mxu0
    %v4112 = vadd.f32 %v3164, %v4111
    %v4113 = vpop.f32.mrf.mxu0
    %v4114 = vadd.f32 %v3164, %v4113
    %4115 = vmatprep.mubr.f32.mxu0 %v2535
    %4116 = vmatmul.mubr.f32.gmra.mxu0 %v2534
    %v4117 = vpop.f32.mrf.mxu0
    %v4118 = vadd.f32 %v3169, %v4117
    %v4119 = vpop.f32.mrf.mxu0
    %v4120 = vadd.f32 %v3169, %v4119
    %4121 = vmatprep.mubr.f32.mxu0 %v2542
    %4122 = vmatmul.mubr.f32.gmra.mxu0 %v2541
    %v4123 = vpop.f32.mrf.mxu0
    %v4124 = vadd.f32 %v3174, %v4123
    %v4125 = vpop.f32.mrf.mxu0
    %v4126 = vadd.f32 %v3174, %v4125
    %4127 = vmatprep.mubr.f32.mxu0 %v2549
    %4128 = vmatmul.mubr.f32.gmra.mxu0 %v2548
    %v4129 = vpop.f32.mrf.mxu0
    %v4130 = vadd.f32 %v3179, %v4129
    %v4131 = vpop.f32.mrf.mxu0
    %v4132 = vadd.f32 %v3179, %v4131
    %4133 = vmatprep.mubr.f32.mxu0 %v2556
    %4134 = vmatmul.mubr.f32.gmra.mxu0 %v2555
    %v4135 = vpop.f32.mrf.mxu0
    %v4136 = vadd.f32 %v3184, %v4135
    %v4137 = vpop.f32.mrf.mxu0
    %v4138 = vadd.f32 %v3184, %v4137
    %4139 = vmatprep.mubr.f32.mxu0 %v2563
    %4140 = vmatmul.mubr.f32.gmra.mxu0 %v2562
    %v4141 = vpop.f32.mrf.mxu0
    %v4142 = vadd.f32 %v3189, %v4141
    %v4143 = vpop.f32.mrf.mxu0
    %v4144 = vadd.f32 %v3189, %v4143
    %4145 = vmatprep.mubr.f32.mxu0 %v2570
    %4146 = vmatmul.mubr.f32.gmra.mxu0 %v2569
    %v4147 = vpop.f32.mrf.mxu0
    %v4148 = vadd.f32 %v3194, %v4147
    %v4149 = vpop.f32.mrf.mxu0
    %v4150 = vadd.f32 %v3194, %v4149
    %4151 = vmatprep.mubr.f32.mxu0 %v2577
    %4152 = vmatmul.mubr.f32.gmra.mxu0 %v2576
    %v4153 = vpop.f32.mrf.mxu0
    %v4154 = vadd.f32 %v3199, %v4153
    %v4155 = vpop.f32.mrf.mxu0
    %v4156 = vadd.f32 %v3199, %v4155
    %4157 = vmatprep.mubr.f32.mxu0 %v2584
    %4158 = vmatmul.mubr.f32.gmra.mxu0 %v2583
    %v4159 = vpop.f32.mrf.mxu0
    %v4160 = vadd.f32 %v3204, %v4159
    %v4161 = vpop.f32.mrf.mxu0
    %v4162 = vadd.f32 %v3204, %v4161
    %4163 = vmatprep.mubr.f32.mxu0 %v2591
    %4164 = vmatmul.mubr.f32.gmra.mxu0 %v2590
    %v4165 = vpop.f32.mrf.mxu0
    %v4166 = vadd.f32 %v3209, %v4165
    %v4167 = vpop.f32.mrf.mxu0
    %v4168 = vadd.f32 %v3209, %v4167
    %4169 = vmatprep.mubr.f32.mxu0 %v2598
    %4170 = vmatmul.mubr.f32.gmra.mxu0 %v2597
    %v4171 = vpop.f32.mrf.mxu0
    %v4172 = vadd.f32 %v3214, %v4171
    %v4173 = vpop.f32.mrf.mxu0
    %v4174 = vadd.f32 %v3214, %v4173
    %4175 = vmatprep.mubr.f32.mxu0 %v2605
    %4176 = vmatmul.mubr.f32.gmra.mxu0 %v2604
    %v4177 = vpop.f32.mrf.mxu0
    %v4178 = vadd.f32 %v3219, %v4177
    %v4179 = vpop.f32.mrf.mxu0
    %v4180 = vadd.f32 %v3219, %v4179
    %4181 = vmatprep.mubr.f32.mxu0 %v2612
    %4182 = vmatmul.mubr.f32.gmra.mxu0 %v2611
    %v4183 = vpop.f32.mrf.mxu0
    %v4184 = vadd.f32 %v3224, %v4183
    %v4185 = vpop.f32.mrf.mxu0
    %v4186 = vadd.f32 %v3224, %v4185
    %4187 = vmatprep.mubr.f32.mxu0 %v2619
    %4188 = vmatmul.mubr.f32.gmra.mxu0 %v2618
    %v4189 = vpop.f32.mrf.mxu0
    %v4190 = vadd.f32 %v3229, %v4189
    %v4191 = vpop.f32.mrf.mxu0
    %v4192 = vadd.f32 %v3229, %v4191
    %4193 = vmatprep.mubr.f32.mxu0 %v2626
    %4194 = vmatmul.mubr.f32.gmra.mxu0 %v2625
    %v4195 = vpop.f32.mrf.mxu0
    %v4196 = vadd.f32 %v3234, %v4195
    %v4197 = vpop.f32.mrf.mxu0
    %v4198 = vadd.f32 %v3234, %v4197
    %4199 = vmatprep.mubr.f32.mxu0 %v2633
    %4200 = vmatmul.mubr.f32.gmra.mxu0 %v2632
    %v4201 = vpop.f32.mrf.mxu0
    %v4202 = vadd.f32 %v3239, %v4201
    %v4203 = vpop.f32.mrf.mxu0
    %v4204 = vadd.f32 %v3239, %v4203
    %4205 = vmatprep.mubr.f32.mxu0 %v2640
    %4206 = vmatmul.mubr.f32.gmra.mxu0 %v2639
    %v4207 = vpop.f32.mrf.mxu0
    %v4208 = vadd.f32 %v3244, %v4207
    %v4209 = vpop.f32.mrf.mxu0
    %v4210 = vadd.f32 %v3244, %v4209
    %4211 = vdwg.mxu0
    %4212 = vmatprep.subr.mxu0 %v1845
    %4213 = vmatpush1.msra.mxu0 %v1844
    %4214 = vmatprep.subr.mxu0 %v1843
    %4215 = vmatpush1.msra.mxu0 %v1842
    %4216 = vmatprep.subr.mxu0 %v1841
    %4217 = vmatpush1.msra.mxu0 %v1840
    %4218 = vmatprep.subr.mxu0 %v1839
    %4219 = vmatpush1.msra.mxu0 %v1838
    %4220 = vmatprep.subr.mxu0 %v1837
    %4221 = vmatpush1.msra.mxu0 %v1836
    %4222 = vmatprep.subr.mxu0 %v1835
    %4223 = vmatpush1.msra.mxu0 %v1834
    %4224 = vmatprep.subr.mxu0 %v1833
    %4225 = vmatpush1.msra.mxu0 %v1832
    %4226 = vmatprep.subr.mxu0 %v1831
    %4227 = vmatpush1.msra.mxu0 %v1830
    %4228 = vmatprep.subr.mxu0 %v1829
    %4229 = vmatpush1.msra.mxu0 %v1828
    %4230 = vmatprep.subr.mxu0 %v1827
    %4231 = vmatpush1.msra.mxu0 %v1826
    %4232 = vmatprep.subr.mxu0 %v1825
    %4233 = vmatpush1.msra.mxu0 %v1824
    %4234 = vmatprep.subr.mxu0 %v1823
    %4235 = vmatpush1.msra.mxu0 %v1822
    %4236 = vmatprep.subr.mxu0 %v1821
    %4237 = vmatpush1.msra.mxu0 %v1820
    %4238 = vmatprep.subr.mxu0 %v1819
    %4239 = vmatpush1.msra.mxu0 %v1818
    %4240 = vmatprep.subr.mxu0 %v1817
    %4241 = vmatpush1.msra.mxu0 %v1816
    %4242 = vmatprep.subr.mxu0 %v1815
    %4243 = vmatpush1.msra.mxu0 %v1814
    %4244 = vmatprep.subr.mxu0 %v1877
    %4245 = vmatpush2.msra.mxu0 %v1876
    %4246 = vmatprep.subr.mxu0 %v1875
    %4247 = vmatpush2.msra.mxu0 %v1874
    %4248 = vmatprep.subr.mxu0 %v1873
    %4249 = vmatpush2.msra.mxu0 %v1872
    %4250 = vmatprep.subr.mxu0 %v1871
    %4251 = vmatpush2.msra.mxu0 %v1870
    %4252 = vmatprep.subr.mxu0 %v1869
    %4253 = vmatpush2.msra.mxu0 %v1868
    %4254 = vmatprep.subr.mxu0 %v1867
    %4255 = vmatpush2.msra.mxu0 %v1866
    %4256 = vmatprep.subr.mxu0 %v1865
    %4257 = vmatpush2.msra.mxu0 %v1864
    %4258 = vmatprep.subr.mxu0 %v1863
    %4259 = vmatpush2.msra.mxu0 %v1862
    %4260 = vmatprep.subr.mxu0 %v1861
    %4261 = vmatpush2.msra.mxu0 %v1860
    %4262 = vmatprep.subr.mxu0 %v1859
    %4263 = vmatpush2.msra.mxu0 %v1858
    %4264 = vmatprep.subr.mxu0 %v1857
    %4265 = vmatpush2.msra.mxu0 %v1856
    %4266 = vmatprep.subr.mxu0 %v1855
    %4267 = vmatpush2.msra.mxu0 %v1854
    %4268 = vmatprep.subr.mxu0 %v1853
    %4269 = vmatpush2.msra.mxu0 %v1852
    %4270 = vmatprep.subr.mxu0 %v1851
    %4271 = vmatpush2.msra.mxu0 %v1850
    %4272 = vmatprep.subr.mxu0 %v1849
    %4273 = vmatpush2.msra.mxu0 %v1848
    %4274 = vmatprep.subr.mxu0 %v1847
    %4275 = vmatpush2.msra.mxu0 %v1846
    %4276 = vmatprep.mubr.f32.mxu0 %v1949
    %4277 = vmatmul.mubr.f32.gmra.mxu0 %v1948
    %v4278 = vpop.f32.mrf.mxu0
    %v4279 = vadd.f32 %v3614, %v4278
    %v4280 = vpop.f32.mrf.mxu0
    %v4281 = vadd.f32 %v3616, %v4280
    %4282 = vmatprep.mubr.f32.mxu0 %v1956
    %4283 = vmatmul.mubr.f32.gmra.mxu0 %v1955
    %v4284 = vpop.f32.mrf.mxu0
    %v4285 = vadd.f32 %v3620, %v4284
    %v4286 = vpop.f32.mrf.mxu0
    %v4287 = vadd.f32 %v3622, %v4286
    %4288 = vmatprep.mubr.f32.mxu0 %v1963
    %4289 = vmatmul.mubr.f32.gmra.mxu0 %v1962
    %v4290 = vpop.f32.mrf.mxu0
    %v4291 = vadd.f32 %v3626, %v4290
    %v4292 = vpop.f32.mrf.mxu0
    %v4293 = vadd.f32 %v3628, %v4292
    %4294 = vmatprep.mubr.f32.mxu0 %v1970
    %4295 = vmatmul.mubr.f32.gmra.mxu0 %v1969
    %v4296 = vpop.f32.mrf.mxu0
    %v4297 = vadd.f32 %v3632, %v4296
    %v4298 = vpop.f32.mrf.mxu0
    %v4299 = vadd.f32 %v3634, %v4298
    %4300 = vmatprep.mubr.f32.mxu0 %v1977
    %4301 = vmatmul.mubr.f32.gmra.mxu0 %v1976
    %v4302 = vpop.f32.mrf.mxu0
    %v4303 = vadd.f32 %v3638, %v4302
    %v4304 = vpop.f32.mrf.mxu0
    %v4305 = vadd.f32 %v3640, %v4304
    %4306 = vmatprep.mubr.f32.mxu0 %v1984
    %4307 = vmatmul.mubr.f32.gmra.mxu0 %v1983
    %v4308 = vpop.f32.mrf.mxu0
    %v4309 = vadd.f32 %v3644, %v4308
    %v4310 = vpop.f32.mrf.mxu0
    %v4311 = vadd.f32 %v3646, %v4310
    %4312 = vmatprep.mubr.f32.mxu0 %v1991
    %4313 = vmatmul.mubr.f32.gmra.mxu0 %v1990
    %v4314 = vpop.f32.mrf.mxu0
    %v4315 = vadd.f32 %v3650, %v4314
    %v4316 = vpop.f32.mrf.mxu0
    %v4317 = vadd.f32 %v3652, %v4316
    %4318 = vmatprep.mubr.f32.mxu0 %v1998
    %4319 = vmatmul.mubr.f32.gmra.mxu0 %v1997
    %v4320 = vpop.f32.mrf.mxu0
    %v4321 = vadd.f32 %v3656, %v4320
    %v4322 = vpop.f32.mrf.mxu0
    %v4323 = vadd.f32 %v3658, %v4322
    %4324 = vmatprep.mubr.f32.mxu0 %v2005
    %4325 = vmatmul.mubr.f32.gmra.mxu0 %v2004
    %v4326 = vpop.f32.mrf.mxu0
    %v4327 = vadd.f32 %v3662, %v4326
    %v4328 = vpop.f32.mrf.mxu0
    %v4329 = vadd.f32 %v3664, %v4328
    %4330 = vmatprep.mubr.f32.mxu0 %v2012
    %4331 = vmatmul.mubr.f32.gmra.mxu0 %v2011
    %v4332 = vpop.f32.mrf.mxu0
    %v4333 = vadd.f32 %v3668, %v4332
    %v4334 = vpop.f32.mrf.mxu0
    %v4335 = vadd.f32 %v3670, %v4334
    %4336 = vmatprep.mubr.f32.mxu0 %v2019
    %4337 = vmatmul.mubr.f32.gmra.mxu0 %v2018
    %v4338 = vpop.f32.mrf.mxu0
    %v4339 = vadd.f32 %v3674, %v4338
    %v4340 = vpop.f32.mrf.mxu0
    %v4341 = vadd.f32 %v3676, %v4340
    %4342 = vmatprep.mubr.f32.mxu0 %v2026
    %4343 = vmatmul.mubr.f32.gmra.mxu0 %v2025
    %v4344 = vpop.f32.mrf.mxu0
    %v4345 = vadd.f32 %v3680, %v4344
    %v4346 = vpop.f32.mrf.mxu0
    %v4347 = vadd.f32 %v3682, %v4346
    %4348 = vmatprep.mubr.f32.mxu0 %v2033
    %4349 = vmatmul.mubr.f32.gmra.mxu0 %v2032
    %v4350 = vpop.f32.mrf.mxu0
    %v4351 = vadd.f32 %v3686, %v4350
    %v4352 = vpop.f32.mrf.mxu0
    %v4353 = vadd.f32 %v3688, %v4352
    %4354 = vmatprep.mubr.f32.mxu0 %v2040
    %4355 = vmatmul.mubr.f32.gmra.mxu0 %v2039
    %v4356 = vpop.f32.mrf.mxu0
    %v4357 = vadd.f32 %v3692, %v4356
    %v4358 = vpop.f32.mrf.mxu0
    %v4359 = vadd.f32 %v3694, %v4358
    %4360 = vmatprep.mubr.f32.mxu0 %v2047
    %4361 = vmatmul.mubr.f32.gmra.mxu0 %v2046
    %v4362 = vpop.f32.mrf.mxu0
    %v4363 = vadd.f32 %v3698, %v4362
    %v4364 = vpop.f32.mrf.mxu0
    %v4365 = vadd.f32 %v3700, %v4364
    %4366 = vmatprep.mubr.f32.mxu0 %v2054
    %4367 = vmatmul.mubr.f32.gmra.mxu0 %v2053
    %v4368 = vpop.f32.mrf.mxu0
    %v4369 = vadd.f32 %v3704, %v4368
    %v4370 = vpop.f32.mrf.mxu0
    %v4371 = vadd.f32 %v3706, %v4370
    %4372 = vmatprep.mubr.f32.mxu0 %v2061
    %4373 = vmatmul.mubr.f32.gmra.mxu0 %v2060
    %v4374 = vpop.f32.mrf.mxu0
    %v4375 = vadd.f32 %v3710, %v4374
    %v4376 = vpop.f32.mrf.mxu0
    %v4377 = vadd.f32 %v3712, %v4376
    %4378 = vmatprep.mubr.f32.mxu0 %v2068
    %4379 = vmatmul.mubr.f32.gmra.mxu0 %v2067
    %v4380 = vpop.f32.mrf.mxu0
    %v4381 = vadd.f32 %v3716, %v4380
    %v4382 = vpop.f32.mrf.mxu0
    %v4383 = vadd.f32 %v3718, %v4382
    %4384 = vmatprep.mubr.f32.mxu0 %v2075
    %4385 = vmatmul.mubr.f32.gmra.mxu0 %v2074
    %v4386 = vpop.f32.mrf.mxu0
    %v4387 = vadd.f32 %v3722, %v4386
    %v4388 = vpop.f32.mrf.mxu0
    %v4389 = vadd.f32 %v3724, %v4388
    %4390 = vmatprep.mubr.f32.mxu0 %v2082
    %4391 = vmatmul.mubr.f32.gmra.mxu0 %v2081
    %v4392 = vpop.f32.mrf.mxu0
    %v4393 = vadd.f32 %v3728, %v4392
    %v4394 = vpop.f32.mrf.mxu0
    %v4395 = vadd.f32 %v3730, %v4394
    %4396 = vmatprep.mubr.f32.mxu0 %v2089
    %4397 = vmatmul.mubr.f32.gmra.mxu0 %v2088
    %v4398 = vpop.f32.mrf.mxu0
    %v4399 = vadd.f32 %v3734, %v4398
    %v4400 = vpop.f32.mrf.mxu0
    %v4401 = vadd.f32 %v3736, %v4400
    %4402 = vmatprep.mubr.f32.mxu0 %v2096
    %4403 = vmatmul.mubr.f32.gmra.mxu0 %v2095
    %v4404 = vpop.f32.mrf.mxu0
    %v4405 = vadd.f32 %v3740, %v4404
    %v4406 = vpop.f32.mrf.mxu0
    %v4407 = vadd.f32 %v3742, %v4406
    %4408 = vmatprep.mubr.f32.mxu0 %v2103
    %4409 = vmatmul.mubr.f32.gmra.mxu0 %v2102
    %v4410 = vpop.f32.mrf.mxu0
    %v4411 = vadd.f32 %v3746, %v4410
    %v4412 = vpop.f32.mrf.mxu0
    %v4413 = vadd.f32 %v3748, %v4412
    %4414 = vmatprep.mubr.f32.mxu0 %v2110
    %4415 = vmatmul.mubr.f32.gmra.mxu0 %v2109
    %v4416 = vpop.f32.mrf.mxu0
    %v4417 = vadd.f32 %v3752, %v4416
    %v4418 = vpop.f32.mrf.mxu0
    %v4419 = vadd.f32 %v3754, %v4418
    %4420 = vmatprep.mubr.f32.mxu0 %v2117
    %4421 = vmatmul.mubr.f32.gmra.mxu0 %v2116
    %v4422 = vpop.f32.mrf.mxu0
    %v4423 = vadd.f32 %v3758, %v4422
    %v4424 = vpop.f32.mrf.mxu0
    %v4425 = vadd.f32 %v3760, %v4424
    %4426 = vmatprep.mubr.f32.mxu0 %v2124
    %4427 = vmatmul.mubr.f32.gmra.mxu0 %v2123
    %v4428 = vpop.f32.mrf.mxu0
    %v4429 = vadd.f32 %v3764, %v4428
    %v4430 = vpop.f32.mrf.mxu0
    %v4431 = vadd.f32 %v3766, %v4430
    %4432 = vmatprep.mubr.f32.mxu0 %v2131
    %4433 = vmatmul.mubr.f32.gmra.mxu0 %v2130
    %v4434 = vpop.f32.mrf.mxu0
    %v4435 = vadd.f32 %v3770, %v4434
    %v4436 = vpop.f32.mrf.mxu0
    %v4437 = vadd.f32 %v3772, %v4436
    %4438 = vmatprep.mubr.f32.mxu0 %v2138
    %4439 = vmatmul.mubr.f32.gmra.mxu0 %v2137
    %v4440 = vpop.f32.mrf.mxu0
    %v4441 = vadd.f32 %v3776, %v4440
    %v4442 = vpop.f32.mrf.mxu0
    %v4443 = vadd.f32 %v3778, %v4442
    %4444 = vmatprep.mubr.f32.mxu0 %v2145
    %4445 = vmatmul.mubr.f32.gmra.mxu0 %v2144
    %v4446 = vpop.f32.mrf.mxu0
    %v4447 = vadd.f32 %v3782, %v4446
    %v4448 = vpop.f32.mrf.mxu0
    %v4449 = vadd.f32 %v3784, %v4448
    %4450 = vmatprep.mubr.f32.mxu0 %v2152
    %4451 = vmatmul.mubr.f32.gmra.mxu0 %v2151
    %v4452 = vpop.f32.mrf.mxu0
    %v4453 = vadd.f32 %v3788, %v4452
    %v4454 = vpop.f32.mrf.mxu0
    %v4455 = vadd.f32 %v3790, %v4454
    %4456 = vmatprep.mubr.f32.mxu0 %v2159
    %4457 = vmatmul.mubr.f32.gmra.mxu0 %v2158
    %v4458 = vpop.f32.mrf.mxu0
    %v4459 = vadd.f32 %v3794, %v4458
    %v4460 = vpop.f32.mrf.mxu0
    %v4461 = vadd.f32 %v3796, %v4460
    %4462 = vmatprep.mubr.f32.mxu0 %v2166
    %4463 = vmatmul.mubr.f32.gmra.mxu0 %v2165
    %v4464 = vpop.f32.mrf.mxu0
    %v4465 = vadd.f32 %v3800, %v4464
    %v4466 = vpop.f32.mrf.mxu0
    %v4467 = vadd.f32 %v3802, %v4466
    %4468 = vmatprep.mubr.f32.mxu0 %v2173
    %4469 = vmatmul.mubr.f32.gmra.mxu0 %v2172
    %v4470 = vpop.f32.mrf.mxu0
    %v4471 = vadd.f32 %v3806, %v4470
    %v4472 = vpop.f32.mrf.mxu0
    %v4473 = vadd.f32 %v3808, %v4472
    %4474 = vmatprep.mubr.f32.mxu0 %v2180
    %4475 = vmatmul.mubr.f32.gmra.mxu0 %v2179
    %v4476 = vpop.f32.mrf.mxu0
    %v4477 = vadd.f32 %v3812, %v4476
    %v4478 = vpop.f32.mrf.mxu0
    %v4479 = vadd.f32 %v3814, %v4478
    %4480 = vmatprep.mubr.f32.mxu0 %v2187
    %4481 = vmatmul.mubr.f32.gmra.mxu0 %v2186
    %v4482 = vpop.f32.mrf.mxu0
    %v4483 = vadd.f32 %v3818, %v4482
    %v4484 = vpop.f32.mrf.mxu0
    %v4485 = vadd.f32 %v3820, %v4484
    %4486 = vmatprep.mubr.f32.mxu0 %v2194
    %4487 = vmatmul.mubr.f32.gmra.mxu0 %v2193
    %v4488 = vpop.f32.mrf.mxu0
    %v4489 = vadd.f32 %v3824, %v4488
    %v4490 = vpop.f32.mrf.mxu0
    %v4491 = vadd.f32 %v3826, %v4490
    %4492 = vmatprep.mubr.f32.mxu0 %v2201
    %4493 = vmatmul.mubr.f32.gmra.mxu0 %v2200
    %v4494 = vpop.f32.mrf.mxu0
    %v4495 = vadd.f32 %v3830, %v4494
    %v4496 = vpop.f32.mrf.mxu0
    %v4497 = vadd.f32 %v3832, %v4496
    %4498 = vmatprep.mubr.f32.mxu0 %v2208
    %4499 = vmatmul.mubr.f32.gmra.mxu0 %v2207
    %v4500 = vpop.f32.mrf.mxu0
    %v4501 = vadd.f32 %v3836, %v4500
    %v4502 = vpop.f32.mrf.mxu0
    %v4503 = vadd.f32 %v3838, %v4502
    %4504 = vmatprep.mubr.f32.mxu0 %v2215
    %4505 = vmatmul.mubr.f32.gmra.mxu0 %v2214
    %v4506 = vpop.f32.mrf.mxu0
    %v4507 = vadd.f32 %v3842, %v4506
    %v4508 = vpop.f32.mrf.mxu0
    %v4509 = vadd.f32 %v3844, %v4508
    %4510 = vmatprep.mubr.f32.mxu0 %v2222
    %4511 = vmatmul.mubr.f32.gmra.mxu0 %v2221
    %v4512 = vpop.f32.mrf.mxu0
    %v4513 = vadd.f32 %v3848, %v4512
    %v4514 = vpop.f32.mrf.mxu0
    %v4515 = vadd.f32 %v3850, %v4514
    %4516 = vmatprep.mubr.f32.mxu0 %v2229
    %4517 = vmatmul.mubr.f32.gmra.mxu0 %v2228
    %v4518 = vpop.f32.mrf.mxu0
    %v4519 = vadd.f32 %v3854, %v4518
    %v4520 = vpop.f32.mrf.mxu0
    %v4521 = vadd.f32 %v3856, %v4520
    %4522 = vmatprep.mubr.f32.mxu0 %v2236
    %4523 = vmatmul.mubr.f32.gmra.mxu0 %v2235
    %v4524 = vpop.f32.mrf.mxu0
    %v4525 = vadd.f32 %v3860, %v4524
    %v4526 = vpop.f32.mrf.mxu0
    %v4527 = vadd.f32 %v3862, %v4526
    %4528 = vmatprep.mubr.f32.mxu0 %v2243
    %4529 = vmatmul.mubr.f32.gmra.mxu0 %v2242
    %v4530 = vpop.f32.mrf.mxu0
    %v4531 = vadd.f32 %v3866, %v4530
    %v4532 = vpop.f32.mrf.mxu0
    %v4533 = vadd.f32 %v3868, %v4532
    %4534 = vmatprep.mubr.f32.mxu0 %v2250
    %4535 = vmatmul.mubr.f32.gmra.mxu0 %v2249
    %v4536 = vpop.f32.mrf.mxu0
    %v4537 = vadd.f32 %v3872, %v4536
    %v4538 = vpop.f32.mrf.mxu0
    %v4539 = vadd.f32 %v3874, %v4538
    %4540 = vmatprep.mubr.f32.mxu0 %v2257
    %4541 = vmatmul.mubr.f32.gmra.mxu0 %v2256
    %v4542 = vpop.f32.mrf.mxu0
    %v4543 = vadd.f32 %v3878, %v4542
    %v4544 = vpop.f32.mrf.mxu0
    %v4545 = vadd.f32 %v3880, %v4544
    %4546 = vmatprep.mubr.f32.mxu0 %v2264
    %4547 = vmatmul.mubr.f32.gmra.mxu0 %v2263
    %v4548 = vpop.f32.mrf.mxu0
    %v4549 = vadd.f32 %v3884, %v4548
    %v4550 = vpop.f32.mrf.mxu0
    %v4551 = vadd.f32 %v3886, %v4550
    %4552 = vmatprep.mubr.f32.mxu0 %v2271
    %4553 = vmatmul.mubr.f32.gmra.mxu0 %v2270
    %v4554 = vpop.f32.mrf.mxu0
    %v4555 = vadd.f32 %v3890, %v4554
    %v4556 = vpop.f32.mrf.mxu0
    %v4557 = vadd.f32 %v3892, %v4556
    %4558 = vmatprep.mubr.f32.mxu0 %v2278
    %4559 = vmatmul.mubr.f32.gmra.mxu0 %v2277
    %v4560 = vpop.f32.mrf.mxu0
    %v4561 = vadd.f32 %v3896, %v4560
    %v4562 = vpop.f32.mrf.mxu0
    %v4563 = vadd.f32 %v3898, %v4562
    %4564 = vmatprep.mubr.f32.mxu0 %v2285
    %4565 = vmatmul.mubr.f32.gmra.mxu0 %v2284
    %v4566 = vpop.f32.mrf.mxu0
    %v4567 = vadd.f32 %v3902, %v4566
    %v4568 = vpop.f32.mrf.mxu0
    %v4569 = vadd.f32 %v3904, %v4568
    %4570 = vmatprep.mubr.f32.mxu0 %v2292
    %4571 = vmatmul.mubr.f32.gmra.mxu0 %v2291
    %v4572 = vpop.f32.mrf.mxu0
    %v4573 = vadd.f32 %v3908, %v4572
    %v4574 = vpop.f32.mrf.mxu0
    %v4575 = vadd.f32 %v3910, %v4574
    %4576 = vmatprep.mubr.f32.mxu0 %v2299
    %4577 = vmatmul.mubr.f32.gmra.mxu0 %v2298
    %v4578 = vpop.f32.mrf.mxu0
    %v4579 = vadd.f32 %v3914, %v4578
    %v4580 = vpop.f32.mrf.mxu0
    %v4581 = vadd.f32 %v3916, %v4580
    %4582 = vmatprep.mubr.f32.mxu0 %v2306
    %4583 = vmatmul.mubr.f32.gmra.mxu0 %v2305
    %v4584 = vpop.f32.mrf.mxu0
    %v4585 = vadd.f32 %v3920, %v4584
    %v4586 = vpop.f32.mrf.mxu0
    %v4587 = vadd.f32 %v3922, %v4586
    %4588 = vmatprep.mubr.f32.mxu0 %v2313
    %4589 = vmatmul.mubr.f32.gmra.mxu0 %v2312
    %v4590 = vpop.f32.mrf.mxu0
    %v4591 = vadd.f32 %v3926, %v4590
    %v4592 = vpop.f32.mrf.mxu0
    %v4593 = vadd.f32 %v3928, %v4592
    %4594 = vmatprep.mubr.f32.mxu0 %v2320
    %4595 = vmatmul.mubr.f32.gmra.mxu0 %v2319
    %v4596 = vpop.f32.mrf.mxu0
    %v4597 = vadd.f32 %v3932, %v4596
    %v4598 = vpop.f32.mrf.mxu0
    %v4599 = vadd.f32 %v3934, %v4598
    %4600 = vmatprep.mubr.f32.mxu0 %v2327
    %4601 = vmatmul.mubr.f32.gmra.mxu0 %v2326
    %v4602 = vpop.f32.mrf.mxu0
    %v4603 = vadd.f32 %v3938, %v4602
    %v4604 = vpop.f32.mrf.mxu0
    %v4605 = vadd.f32 %v3940, %v4604
    %4606 = vmatprep.mubr.f32.mxu0 %v2334
    %4607 = vmatmul.mubr.f32.gmra.mxu0 %v2333
    %v4608 = vpop.f32.mrf.mxu0
    %v4609 = vadd.f32 %v3944, %v4608
    %v4610 = vpop.f32.mrf.mxu0
    %v4611 = vadd.f32 %v3946, %v4610
    %4612 = vmatprep.mubr.f32.mxu0 %v2341
    %4613 = vmatmul.mubr.f32.gmra.mxu0 %v2340
    %v4614 = vpop.f32.mrf.mxu0
    %v4615 = vadd.f32 %v3950, %v4614
    %v4616 = vpop.f32.mrf.mxu0
    %v4617 = vadd.f32 %v3952, %v4616
    %4618 = vmatprep.mubr.f32.mxu0 %v2348
    %4619 = vmatmul.mubr.f32.gmra.mxu0 %v2347
    %v4620 = vpop.f32.mrf.mxu0
    %v4621 = vadd.f32 %v3956, %v4620
    %v4622 = vpop.f32.mrf.mxu0
    %v4623 = vadd.f32 %v3958, %v4622
    %4624 = vmatprep.mubr.f32.mxu0 %v2355
    %4625 = vmatmul.mubr.f32.gmra.mxu0 %v2354
    %v4626 = vpop.f32.mrf.mxu0
    %v4627 = vadd.f32 %v3962, %v4626
    %v4628 = vpop.f32.mrf.mxu0
    %v4629 = vadd.f32 %v3964, %v4628
    %4630 = vmatprep.mubr.f32.mxu0 %v2362
    %4631 = vmatmul.mubr.f32.gmra.mxu0 %v2361
    %v4632 = vpop.f32.mrf.mxu0
    %v4633 = vadd.f32 %v3968, %v4632
    %v4634 = vpop.f32.mrf.mxu0
    %v4635 = vadd.f32 %v3970, %v4634
    %4636 = vmatprep.mubr.f32.mxu0 %v2369
    %4637 = vmatmul.mubr.f32.gmra.mxu0 %v2368
    %v4638 = vpop.f32.mrf.mxu0
    %v4639 = vadd.f32 %v3974, %v4638
    %v4640 = vpop.f32.mrf.mxu0
    %v4641 = vadd.f32 %v3976, %v4640
    %4642 = vmatprep.mubr.f32.mxu0 %v2376
    %4643 = vmatmul.mubr.f32.gmra.mxu0 %v2375
    %v4644 = vpop.f32.mrf.mxu0
    %v4645 = vadd.f32 %v3980, %v4644
    %v4646 = vpop.f32.mrf.mxu0
    %v4647 = vadd.f32 %v3982, %v4646
    %4648 = vmatprep.mubr.f32.mxu0 %v2383
    %4649 = vmatmul.mubr.f32.gmra.mxu0 %v2382
    %v4650 = vpop.f32.mrf.mxu0
    %v4651 = vadd.f32 %v3986, %v4650
    %v4652 = vpop.f32.mrf.mxu0
    %v4653 = vadd.f32 %v3988, %v4652
    %4654 = vmatprep.mubr.f32.mxu0 %v2390
    %4655 = vmatmul.mubr.f32.gmra.mxu0 %v2389
    %v4656 = vpop.f32.mrf.mxu0
    %v4657 = vadd.f32 %v3992, %v4656
    %v4658 = vpop.f32.mrf.mxu0
    %v4659 = vadd.f32 %v3994, %v4658
    %4660 = vmatprep.mubr.f32.mxu0 %v2397
    %4661 = vmatmul.mubr.f32.gmra.mxu0 %v2396
    %v4662 = vpop.f32.mrf.mxu0
    %v4663 = vadd.f32 %v3998, %v4662
    %v4664 = vpop.f32.mrf.mxu0
    %v4665 = vadd.f32 %v4000, %v4664
    %4666 = vmatprep.mubr.f32.mxu0 %v2404
    %4667 = vmatmul.mubr.f32.gmra.mxu0 %v2403
    %v4668 = vpop.f32.mrf.mxu0
    %v4669 = vadd.f32 %v4004, %v4668
    %v4670 = vpop.f32.mrf.mxu0
    %v4671 = vadd.f32 %v4006, %v4670
    %4672 = vmatprep.mubr.f32.mxu0 %v2411
    %4673 = vmatmul.mubr.f32.gmra.mxu0 %v2410
    %v4674 = vpop.f32.mrf.mxu0
    %v4675 = vadd.f32 %v4010, %v4674
    %v4676 = vpop.f32.mrf.mxu0
    %v4677 = vadd.f32 %v4012, %v4676
    %4678 = vmatprep.mubr.f32.mxu0 %v2418
    %4679 = vmatmul.mubr.f32.gmra.mxu0 %v2417
    %v4680 = vpop.f32.mrf.mxu0
    %v4681 = vadd.f32 %v4016, %v4680
    %v4682 = vpop.f32.mrf.mxu0
    %v4683 = vadd.f32 %v4018, %v4682
    %4684 = vmatprep.mubr.f32.mxu0 %v2425
    %4685 = vmatmul.mubr.f32.gmra.mxu0 %v2424
    %v4686 = vpop.f32.mrf.mxu0
    %v4687 = vadd.f32 %v4022, %v4686
    %v4688 = vpop.f32.mrf.mxu0
    %v4689 = vadd.f32 %v4024, %v4688
    %4690 = vmatprep.mubr.f32.mxu0 %v2432
    %4691 = vmatmul.mubr.f32.gmra.mxu0 %v2431
    %v4692 = vpop.f32.mrf.mxu0
    %v4693 = vadd.f32 %v4028, %v4692
    %v4694 = vpop.f32.mrf.mxu0
    %v4695 = vadd.f32 %v4030, %v4694
    %4696 = vmatprep.mubr.f32.mxu0 %v2439
    %4697 = vmatmul.mubr.f32.gmra.mxu0 %v2438
    %v4698 = vpop.f32.mrf.mxu0
    %v4699 = vadd.f32 %v4034, %v4698
    %v4700 = vpop.f32.mrf.mxu0
    %v4701 = vadd.f32 %v4036, %v4700
    %4702 = vmatprep.mubr.f32.mxu0 %v2446
    %4703 = vmatmul.mubr.f32.gmra.mxu0 %v2445
    %v4704 = vpop.f32.mrf.mxu0
    %v4705 = vadd.f32 %v4040, %v4704
    %v4706 = vpop.f32.mrf.mxu0
    %v4707 = vadd.f32 %v4042, %v4706
    %4708 = vmatprep.mubr.f32.mxu0 %v2453
    %4709 = vmatmul.mubr.f32.gmra.mxu0 %v2452
    %v4710 = vpop.f32.mrf.mxu0
    %v4711 = vadd.f32 %v4046, %v4710
    %v4712 = vpop.f32.mrf.mxu0
    %v4713 = vadd.f32 %v4048, %v4712
    %4714 = vmatprep.mubr.f32.mxu0 %v2460
    %4715 = vmatmul.mubr.f32.gmra.mxu0 %v2459
    %v4716 = vpop.f32.mrf.mxu0
    %v4717 = vadd.f32 %v4052, %v4716
    %v4718 = vpop.f32.mrf.mxu0
    %v4719 = vadd.f32 %v4054, %v4718
    %4720 = vmatprep.mubr.f32.mxu0 %v2467
    %4721 = vmatmul.mubr.f32.gmra.mxu0 %v2466
    %v4722 = vpop.f32.mrf.mxu0
    %v4723 = vadd.f32 %v4058, %v4722
    %v4724 = vpop.f32.mrf.mxu0
    %v4725 = vadd.f32 %v4060, %v4724
    %4726 = vmatprep.mubr.f32.mxu0 %v2474
    %4727 = vmatmul.mubr.f32.gmra.mxu0 %v2473
    %v4728 = vpop.f32.mrf.mxu0
    %v4729 = vadd.f32 %v4064, %v4728
    %v4730 = vpop.f32.mrf.mxu0
    %v4731 = vadd.f32 %v4066, %v4730
    %4732 = vmatprep.mubr.f32.mxu0 %v2481
    %4733 = vmatmul.mubr.f32.gmra.mxu0 %v2480
    %v4734 = vpop.f32.mrf.mxu0
    %v4735 = vadd.f32 %v4070, %v4734
    %v4736 = vpop.f32.mrf.mxu0
    %v4737 = vadd.f32 %v4072, %v4736
    %4738 = vmatprep.mubr.f32.mxu0 %v2488
    %4739 = vmatmul.mubr.f32.gmra.mxu0 %v2487
    %v4740 = vpop.f32.mrf.mxu0
    %v4741 = vadd.f32 %v4076, %v4740
    %v4742 = vpop.f32.mrf.mxu0
    %v4743 = vadd.f32 %v4078, %v4742
    %4744 = vmatprep.mubr.f32.mxu0 %v2495
    %4745 = vmatmul.mubr.f32.gmra.mxu0 %v2494
    %v4746 = vpop.f32.mrf.mxu0
    %v4747 = vadd.f32 %v4082, %v4746
    %v4748 = vpop.f32.mrf.mxu0
    %v4749 = vadd.f32 %v4084, %v4748
    %4750 = vmatprep.mubr.f32.mxu0 %v2502
    %4751 = vmatmul.mubr.f32.gmra.mxu0 %v2501
    %v4752 = vpop.f32.mrf.mxu0
    %v4753 = vadd.f32 %v4088, %v4752
    %v4754 = vpop.f32.mrf.mxu0
    %v4755 = vadd.f32 %v4090, %v4754
    %4756 = vmatprep.mubr.f32.mxu0 %v2509
    %4757 = vmatmul.mubr.f32.gmra.mxu0 %v2508
    %v4758 = vpop.f32.mrf.mxu0
    %v4759 = vadd.f32 %v4094, %v4758
    %v4760 = vpop.f32.mrf.mxu0
    %v4761 = vadd.f32 %v4096, %v4760
    %4762 = vmatprep.mubr.f32.mxu0 %v2516
    %4763 = vmatmul.mubr.f32.gmra.mxu0 %v2515
    %v4764 = vpop.f32.mrf.mxu0
    %v4765 = vadd.f32 %v4100, %v4764
    %v4766 = vpop.f32.mrf.mxu0
    %v4767 = vadd.f32 %v4102, %v4766
    %4768 = vmatprep.mubr.f32.mxu0 %v2523
    %4769 = vmatmul.mubr.f32.gmra.mxu0 %v2522
    %v4770 = vpop.f32.mrf.mxu0
    %v4771 = vadd.f32 %v4106, %v4770
    %v4772 = vpop.f32.mrf.mxu0
    %v4773 = vadd.f32 %v4108, %v4772
    %4774 = vmatprep.mubr.f32.mxu0 %v2530
    %4775 = vmatmul.mubr.f32.gmra.mxu0 %v2529
    %v4776 = vpop.f32.mrf.mxu0
    %v4777 = vadd.f32 %v4112, %v4776
    %v4778 = vpop.f32.mrf.mxu0
    %v4779 = vadd.f32 %v4114, %v4778
    %4780 = vmatprep.mubr.f32.mxu0 %v2537
    %4781 = vmatmul.mubr.f32.gmra.mxu0 %v2536
    %v4782 = vpop.f32.mrf.mxu0
    %v4783 = vadd.f32 %v4118, %v4782
    %v4784 = vpop.f32.mrf.mxu0
    %v4785 = vadd.f32 %v4120, %v4784
    %4786 = vmatprep.mubr.f32.mxu0 %v2544
    %4787 = vmatmul.mubr.f32.gmra.mxu0 %v2543
    %v4788 = vpop.f32.mrf.mxu0
    %v4789 = vadd.f32 %v4124, %v4788
    %v4790 = vpop.f32.mrf.mxu0
    %v4791 = vadd.f32 %v4126, %v4790
    %4792 = vmatprep.mubr.f32.mxu0 %v2551
    %4793 = vmatmul.mubr.f32.gmra.mxu0 %v2550
    %v4794 = vpop.f32.mrf.mxu0
    %v4795 = vadd.f32 %v4130, %v4794
    %v4796 = vpop.f32.mrf.mxu0
    %v4797 = vadd.f32 %v4132, %v4796
    %4798 = vmatprep.mubr.f32.mxu0 %v2558
    %4799 = vmatmul.mubr.f32.gmra.mxu0 %v2557
    %v4800 = vpop.f32.mrf.mxu0
    %v4801 = vadd.f32 %v4136, %v4800
    %v4802 = vpop.f32.mrf.mxu0
    %v4803 = vadd.f32 %v4138, %v4802
    %4804 = vmatprep.mubr.f32.mxu0 %v2565
    %4805 = vmatmul.mubr.f32.gmra.mxu0 %v2564
    %v4806 = vpop.f32.mrf.mxu0
    %v4807 = vadd.f32 %v4142, %v4806
    %v4808 = vpop.f32.mrf.mxu0
    %v4809 = vadd.f32 %v4144, %v4808
    %4810 = vmatprep.mubr.f32.mxu0 %v2572
    %4811 = vmatmul.mubr.f32.gmra.mxu0 %v2571
    %v4812 = vpop.f32.mrf.mxu0
    %v4813 = vadd.f32 %v4148, %v4812
    %v4814 = vpop.f32.mrf.mxu0
    %v4815 = vadd.f32 %v4150, %v4814
    %4816 = vmatprep.mubr.f32.mxu0 %v2579
    %4817 = vmatmul.mubr.f32.gmra.mxu0 %v2578
    %v4818 = vpop.f32.mrf.mxu0
    %v4819 = vadd.f32 %v4154, %v4818
    %v4820 = vpop.f32.mrf.mxu0
    %v4821 = vadd.f32 %v4156, %v4820
    %4822 = vmatprep.mubr.f32.mxu0 %v2586
    %4823 = vmatmul.mubr.f32.gmra.mxu0 %v2585
    %v4824 = vpop.f32.mrf.mxu0
    %v4825 = vadd.f32 %v4160, %v4824
    %v4826 = vpop.f32.mrf.mxu0
    %v4827 = vadd.f32 %v4162, %v4826
    %4828 = vmatprep.mubr.f32.mxu0 %v2593
    %4829 = vmatmul.mubr.f32.gmra.mxu0 %v2592
    %v4830 = vpop.f32.mrf.mxu0
    %v4831 = vadd.f32 %v4166, %v4830
    %v4832 = vpop.f32.mrf.mxu0
    %v4833 = vadd.f32 %v4168, %v4832
    %4834 = vmatprep.mubr.f32.mxu0 %v2600
    %4835 = vmatmul.mubr.f32.gmra.mxu0 %v2599
    %v4836 = vpop.f32.mrf.mxu0
    %v4837 = vadd.f32 %v4172, %v4836
    %v4838 = vpop.f32.mrf.mxu0
    %v4839 = vadd.f32 %v4174, %v4838
    %4840 = vmatprep.mubr.f32.mxu0 %v2607
    %4841 = vmatmul.mubr.f32.gmra.mxu0 %v2606
    %v4842 = vpop.f32.mrf.mxu0
    %v4843 = vadd.f32 %v4178, %v4842
    %v4844 = vpop.f32.mrf.mxu0
    %v4845 = vadd.f32 %v4180, %v4844
    %4846 = vmatprep.mubr.f32.mxu0 %v2614
    %4847 = vmatmul.mubr.f32.gmra.mxu0 %v2613
    %v4848 = vpop.f32.mrf.mxu0
    %v4849 = vadd.f32 %v4184, %v4848
    %v4850 = vpop.f32.mrf.mxu0
    %v4851 = vadd.f32 %v4186, %v4850
    %4852 = vmatprep.mubr.f32.mxu0 %v2621
    %4853 = vmatmul.mubr.f32.gmra.mxu0 %v2620
    %v4854 = vpop.f32.mrf.mxu0
    %v4855 = vadd.f32 %v4190, %v4854
    %v4856 = vpop.f32.mrf.mxu0
    %v4857 = vadd.f32 %v4192, %v4856
    %4858 = vmatprep.mubr.f32.mxu0 %v2628
    %4859 = vmatmul.mubr.f32.gmra.mxu0 %v2627
    %v4860 = vpop.f32.mrf.mxu0
    %v4861 = vadd.f32 %v4196, %v4860
    %v4862 = vpop.f32.mrf.mxu0
    %v4863 = vadd.f32 %v4198, %v4862
    %4864 = vmatprep.mubr.f32.mxu0 %v2635
    %4865 = vmatmul.mubr.f32.gmra.mxu0 %v2634
    %v4866 = vpop.f32.mrf.mxu0
    %v4867 = vadd.f32 %v4202, %v4866
    %v4868 = vpop.f32.mrf.mxu0
    %v4869 = vadd.f32 %v4204, %v4868
    %4870 = vmatprep.mubr.f32.mxu0 %v2642
    %4871 = vmatmul.mubr.f32.gmra.mxu0 %v2641
    %v4872 = vpop.f32.mrf.mxu0
    %v4873 = vadd.f32 %v4208, %v4872
    %v4874 = vpop.f32.mrf.mxu0
    %v4875 = vadd.f32 %v4210, %v4874
    %4876 = vdwg.mxu0
    %4877 = vmatprep.subr.mxu0 %v1909
    %4878 = vmatpush1.msra.mxu0 %v1908
    %4879 = vmatprep.subr.mxu0 %v1907
    %4880 = vmatpush1.msra.mxu0 %v1906
    %4881 = vmatprep.subr.mxu0 %v1905
    %4882 = vmatpush1.msra.mxu0 %v1904
    %4883 = vmatprep.subr.mxu0 %v1903
    %4884 = vmatpush1.msra.mxu0 %v1902
    %4885 = vmatprep.subr.mxu0 %v1901
    %4886 = vmatpush1.msra.mxu0 %v1900
    %4887 = vmatprep.subr.mxu0 %v1899
    %4888 = vmatpush1.msra.mxu0 %v1898
    %4889 = vmatprep.subr.mxu0 %v1897
    %4890 = vmatpush1.msra.mxu0 %v1896
    %4891 = vmatprep.subr.mxu0 %v1895
    %4892 = vmatpush1.msra.mxu0 %v1894
    %4893 = vmatprep.subr.mxu0 %v1893
    %4894 = vmatpush1.msra.mxu0 %v1892
    %4895 = vmatprep.subr.mxu0 %v1891
    %4896 = vmatpush1.msra.mxu0 %v1890
    %4897 = vmatprep.subr.mxu0 %v1889
    %4898 = vmatpush1.msra.mxu0 %v1888
    %4899 = vmatprep.subr.mxu0 %v1887
    %4900 = vmatpush1.msra.mxu0 %v1886
    %4901 = vmatprep.subr.mxu0 %v1885
    %4902 = vmatpush1.msra.mxu0 %v1884
    %4903 = vmatprep.subr.mxu0 %v1883
    %4904 = vmatpush1.msra.mxu0 %v1882
    %4905 = vmatprep.subr.mxu0 %v1881
    %4906 = vmatpush1.msra.mxu0 %v1880
    %4907 = vmatprep.subr.mxu0 %v1879
    %4908 = vmatpush1.msra.mxu0 %v1878
    %4909 = vmatprep.subr.mxu0 %v1941
    %4910 = vmatpush2.msra.mxu0 %v1940
    %4911 = vmatprep.subr.mxu0 %v1939
    %4912 = vmatpush2.msra.mxu0 %v1938
    %4913 = vmatprep.subr.mxu0 %v1937
    %4914 = vmatpush2.msra.mxu0 %v1936
    %4915 = vmatprep.subr.mxu0 %v1935
    %4916 = vmatpush2.msra.mxu0 %v1934
    %4917 = vmatprep.subr.mxu0 %v1933
    %4918 = vmatpush2.msra.mxu0 %v1932
    %4919 = vmatprep.subr.mxu0 %v1931
    %4920 = vmatpush2.msra.mxu0 %v1930
    %4921 = vmatprep.subr.mxu0 %v1929
    %4922 = vmatpush2.msra.mxu0 %v1928
    %4923 = vmatprep.subr.mxu0 %v1927
    %4924 = vmatpush2.msra.mxu0 %v1926
    %4925 = vmatprep.subr.mxu0 %v1925
    %4926 = vmatpush2.msra.mxu0 %v1924
    %4927 = vmatprep.subr.mxu0 %v1923
    %4928 = vmatpush2.msra.mxu0 %v1922
    %4929 = vmatprep.subr.mxu0 %v1921
    %4930 = vmatpush2.msra.mxu0 %v1920
    %4931 = vmatprep.subr.mxu0 %v1919
    %4932 = vmatpush2.msra.mxu0 %v1918
    %4933 = vmatprep.subr.mxu0 %v1917
    %4934 = vmatpush2.msra.mxu0 %v1916
    %4935 = vmatprep.subr.mxu0 %v1915
    %4936 = vmatpush2.msra.mxu0 %v1914
    %4937 = vmatprep.subr.mxu0 %v1913
    %4938 = vmatpush2.msra.mxu0 %v1912
    %4939 = vmatprep.subr.mxu0 %v1911
    %4940 = vmatpush2.msra.mxu0 %v1910
    %4941 = vmatprep.mubr.f32.mxu0 %v1951
    %4942 = vmatmul.mubr.f32.gmra.mxu0 %v1950
    %v4943 = vpop.f32.mrf.mxu0
    %v4944 = vadd.f32 %v4279, %v4943
    %v4945 = vpop.f32.mrf.mxu0
    %v4946 = vadd.f32 %v4281, %v4945
    %4947 = vmatprep.mubr.f32.mxu0 %v1958
    %4948 = vmatmul.mubr.f32.gmra.mxu0 %v1957
    %v4949 = vpop.f32.mrf.mxu0
    %v4950 = vadd.f32 %v4285, %v4949
    %v4951 = vpop.f32.mrf.mxu0
    %v4952 = vadd.f32 %v4287, %v4951
    %4953 = vmatprep.mubr.f32.mxu0 %v1965
    %4954 = vmatmul.mubr.f32.gmra.mxu0 %v1964
    %v4955 = vpop.f32.mrf.mxu0
    %v4956 = vadd.f32 %v4291, %v4955
    %v4957 = vpop.f32.mrf.mxu0
    %v4958 = vadd.f32 %v4293, %v4957
    %4959 = vmatprep.mubr.f32.mxu0 %v1972
    %4960 = vmatmul.mubr.f32.gmra.mxu0 %v1971
    %v4961 = vpop.f32.mrf.mxu0
    %v4962 = vadd.f32 %v4297, %v4961
    %v4963 = vpop.f32.mrf.mxu0
    %v4964 = vadd.f32 %v4299, %v4963
    %4965 = vmatprep.mubr.f32.mxu0 %v1979
    %4966 = vmatmul.mubr.f32.gmra.mxu0 %v1978
    %v4967 = vpop.f32.mrf.mxu0
    %v4968 = vadd.f32 %v4303, %v4967
    %v4969 = vpop.f32.mrf.mxu0
    %v4970 = vadd.f32 %v4305, %v4969
    %4971 = vmatprep.mubr.f32.mxu0 %v1986
    %4972 = vmatmul.mubr.f32.gmra.mxu0 %v1985
    %v4973 = vpop.f32.mrf.mxu0
    %v4974 = vadd.f32 %v4309, %v4973
    %v4975 = vpop.f32.mrf.mxu0
    %v4976 = vadd.f32 %v4311, %v4975
    %4977 = vmatprep.mubr.f32.mxu0 %v1993
    %4978 = vmatmul.mubr.f32.gmra.mxu0 %v1992
    %v4979 = vpop.f32.mrf.mxu0
    %v4980 = vadd.f32 %v4315, %v4979
    %v4981 = vpop.f32.mrf.mxu0
    %v4982 = vadd.f32 %v4317, %v4981
    %4983 = vmatprep.mubr.f32.mxu0 %v2000
    %4984 = vmatmul.mubr.f32.gmra.mxu0 %v1999
    %v4985 = vpop.f32.mrf.mxu0
    %v4986 = vadd.f32 %v4321, %v4985
    %v4987 = vpop.f32.mrf.mxu0
    %v4988 = vadd.f32 %v4323, %v4987
    %4989 = vmatprep.mubr.f32.mxu0 %v2007
    %4990 = vmatmul.mubr.f32.gmra.mxu0 %v2006
    %v4991 = vpop.f32.mrf.mxu0
    %v4992 = vadd.f32 %v4327, %v4991
    %v4993 = vpop.f32.mrf.mxu0
    %v4994 = vadd.f32 %v4329, %v4993
    %4995 = vmatprep.mubr.f32.mxu0 %v2014
    %4996 = vmatmul.mubr.f32.gmra.mxu0 %v2013
    %v4997 = vpop.f32.mrf.mxu0
    %v4998 = vadd.f32 %v4333, %v4997
    %v4999 = vpop.f32.mrf.mxu0
    %v5000 = vadd.f32 %v4335, %v4999
    %5001 = vmatprep.mubr.f32.mxu0 %v2021
    %5002 = vmatmul.mubr.f32.gmra.mxu0 %v2020
    %v5003 = vpop.f32.mrf.mxu0
    %v5004 = vadd.f32 %v4339, %v5003
    %v5005 = vpop.f32.mrf.mxu0
    %v5006 = vadd.f32 %v4341, %v5005
    %5007 = vmatprep.mubr.f32.mxu0 %v2028
    %5008 = vmatmul.mubr.f32.gmra.mxu0 %v2027
    %v5009 = vpop.f32.mrf.mxu0
    %v5010 = vadd.f32 %v4345, %v5009
    %v5011 = vpop.f32.mrf.mxu0
    %v5012 = vadd.f32 %v4347, %v5011
    %5013 = vmatprep.mubr.f32.mxu0 %v2035
    %5014 = vmatmul.mubr.f32.gmra.mxu0 %v2034
    %v5015 = vpop.f32.mrf.mxu0
    %v5016 = vadd.f32 %v4351, %v5015
    %v5017 = vpop.f32.mrf.mxu0
    %v5018 = vadd.f32 %v4353, %v5017
    %5019 = vmatprep.mubr.f32.mxu0 %v2042
    %5020 = vmatmul.mubr.f32.gmra.mxu0 %v2041
    %v5021 = vpop.f32.mrf.mxu0
    %v5022 = vadd.f32 %v4357, %v5021
    %v5023 = vpop.f32.mrf.mxu0
    %v5024 = vadd.f32 %v4359, %v5023
    %5025 = vmatprep.mubr.f32.mxu0 %v2049
    %5026 = vmatmul.mubr.f32.gmra.mxu0 %v2048
    %v5027 = vpop.f32.mrf.mxu0
    %v5028 = vadd.f32 %v4363, %v5027
    %v5029 = vpop.f32.mrf.mxu0
    %v5030 = vadd.f32 %v4365, %v5029
    %5031 = vmatprep.mubr.f32.mxu0 %v2056
    %5032 = vmatmul.mubr.f32.gmra.mxu0 %v2055
    %v5033 = vpop.f32.mrf.mxu0
    %v5034 = vadd.f32 %v4369, %v5033
    %v5035 = vpop.f32.mrf.mxu0
    %v5036 = vadd.f32 %v4371, %v5035
    %5037 = vmatprep.mubr.f32.mxu0 %v2063
    %5038 = vmatmul.mubr.f32.gmra.mxu0 %v2062
    %v5039 = vpop.f32.mrf.mxu0
    %v5040 = vadd.f32 %v4375, %v5039
    %v5041 = vpop.f32.mrf.mxu0
    %v5042 = vadd.f32 %v4377, %v5041
    %5043 = vmatprep.mubr.f32.mxu0 %v2070
    %5044 = vmatmul.mubr.f32.gmra.mxu0 %v2069
    %v5045 = vpop.f32.mrf.mxu0
    %v5046 = vadd.f32 %v4381, %v5045
    %v5047 = vpop.f32.mrf.mxu0
    %v5048 = vadd.f32 %v4383, %v5047
    %5049 = vmatprep.mubr.f32.mxu0 %v2077
    %5050 = vmatmul.mubr.f32.gmra.mxu0 %v2076
    %v5051 = vpop.f32.mrf.mxu0
    %v5052 = vadd.f32 %v4387, %v5051
    %v5053 = vpop.f32.mrf.mxu0
    %v5054 = vadd.f32 %v4389, %v5053
    %5055 = vmatprep.mubr.f32.mxu0 %v2084
    %5056 = vmatmul.mubr.f32.gmra.mxu0 %v2083
    %v5057 = vpop.f32.mrf.mxu0
    %v5058 = vadd.f32 %v4393, %v5057
    %v5059 = vpop.f32.mrf.mxu0
    %v5060 = vadd.f32 %v4395, %v5059
    %5061 = vmatprep.mubr.f32.mxu0 %v2091
    %5062 = vmatmul.mubr.f32.gmra.mxu0 %v2090
    %v5063 = vpop.f32.mrf.mxu0
    %v5064 = vadd.f32 %v4399, %v5063
    %v5065 = vpop.f32.mrf.mxu0
    %v5066 = vadd.f32 %v4401, %v5065
    %5067 = vmatprep.mubr.f32.mxu0 %v2098
    %5068 = vmatmul.mubr.f32.gmra.mxu0 %v2097
    %v5069 = vpop.f32.mrf.mxu0
    %v5070 = vadd.f32 %v4405, %v5069
    %v5071 = vpop.f32.mrf.mxu0
    %v5072 = vadd.f32 %v4407, %v5071
    %5073 = vmatprep.mubr.f32.mxu0 %v2105
    %5074 = vmatmul.mubr.f32.gmra.mxu0 %v2104
    %v5075 = vpop.f32.mrf.mxu0
    %v5076 = vadd.f32 %v4411, %v5075
    %v5077 = vpop.f32.mrf.mxu0
    %v5078 = vadd.f32 %v4413, %v5077
    %5079 = vmatprep.mubr.f32.mxu0 %v2112
    %5080 = vmatmul.mubr.f32.gmra.mxu0 %v2111
    %v5081 = vpop.f32.mrf.mxu0
    %v5082 = vadd.f32 %v4417, %v5081
    %v5083 = vpop.f32.mrf.mxu0
    %v5084 = vadd.f32 %v4419, %v5083
    %5085 = vmatprep.mubr.f32.mxu0 %v2119
    %5086 = vmatmul.mubr.f32.gmra.mxu0 %v2118
    %v5087 = vpop.f32.mrf.mxu0
    %v5088 = vadd.f32 %v4423, %v5087
    %v5089 = vpop.f32.mrf.mxu0
    %v5090 = vadd.f32 %v4425, %v5089
    %5091 = vmatprep.mubr.f32.mxu0 %v2126
    %5092 = vmatmul.mubr.f32.gmra.mxu0 %v2125
    %v5093 = vpop.f32.mrf.mxu0
    %v5094 = vadd.f32 %v4429, %v5093
    %v5095 = vpop.f32.mrf.mxu0
    %v5096 = vadd.f32 %v4431, %v5095
    %5097 = vmatprep.mubr.f32.mxu0 %v2133
    %5098 = vmatmul.mubr.f32.gmra.mxu0 %v2132
    %v5099 = vpop.f32.mrf.mxu0
    %v5100 = vadd.f32 %v4435, %v5099
    %v5101 = vpop.f32.mrf.mxu0
    %v5102 = vadd.f32 %v4437, %v5101
    %5103 = vmatprep.mubr.f32.mxu0 %v2140
    %5104 = vmatmul.mubr.f32.gmra.mxu0 %v2139
    %v5105 = vpop.f32.mrf.mxu0
    %v5106 = vadd.f32 %v4441, %v5105
    %v5107 = vpop.f32.mrf.mxu0
    %v5108 = vadd.f32 %v4443, %v5107
    %5109 = vmatprep.mubr.f32.mxu0 %v2147
    %5110 = vmatmul.mubr.f32.gmra.mxu0 %v2146
    %v5111 = vpop.f32.mrf.mxu0
    %v5112 = vadd.f32 %v4447, %v5111
    %v5113 = vpop.f32.mrf.mxu0
    %v5114 = vadd.f32 %v4449, %v5113
    %5115 = vmatprep.mubr.f32.mxu0 %v2154
    %5116 = vmatmul.mubr.f32.gmra.mxu0 %v2153
    %v5117 = vpop.f32.mrf.mxu0
    %v5118 = vadd.f32 %v4453, %v5117
    %v5119 = vpop.f32.mrf.mxu0
    %v5120 = vadd.f32 %v4455, %v5119
    %5121 = vmatprep.mubr.f32.mxu0 %v2161
    %5122 = vmatmul.mubr.f32.gmra.mxu0 %v2160
    %v5123 = vpop.f32.mrf.mxu0
    %v5124 = vadd.f32 %v4459, %v5123
    %v5125 = vpop.f32.mrf.mxu0
    %v5126 = vadd.f32 %v4461, %v5125
    %5127 = vmatprep.mubr.f32.mxu0 %v2168
    %5128 = vmatmul.mubr.f32.gmra.mxu0 %v2167
    %v5129 = vpop.f32.mrf.mxu0
    %v5130 = vadd.f32 %v4465, %v5129
    %v5131 = vpop.f32.mrf.mxu0
    %v5132 = vadd.f32 %v4467, %v5131
    %5133 = vmatprep.mubr.f32.mxu0 %v2175
    %5134 = vmatmul.mubr.f32.gmra.mxu0 %v2174
    %v5135 = vpop.f32.mrf.mxu0
    %v5136 = vadd.f32 %v4471, %v5135
    %v5137 = vpop.f32.mrf.mxu0
    %v5138 = vadd.f32 %v4473, %v5137
    %5139 = vmatprep.mubr.f32.mxu0 %v2182
    %5140 = vmatmul.mubr.f32.gmra.mxu0 %v2181
    %v5141 = vpop.f32.mrf.mxu0
    %v5142 = vadd.f32 %v4477, %v5141
    %v5143 = vpop.f32.mrf.mxu0
    %v5144 = vadd.f32 %v4479, %v5143
    %5145 = vmatprep.mubr.f32.mxu0 %v2189
    %5146 = vmatmul.mubr.f32.gmra.mxu0 %v2188
    %v5147 = vpop.f32.mrf.mxu0
    %v5148 = vadd.f32 %v4483, %v5147
    %v5149 = vpop.f32.mrf.mxu0
    %v5150 = vadd.f32 %v4485, %v5149
    %5151 = vmatprep.mubr.f32.mxu0 %v2196
    %5152 = vmatmul.mubr.f32.gmra.mxu0 %v2195
    %v5153 = vpop.f32.mrf.mxu0
    %v5154 = vadd.f32 %v4489, %v5153
    %v5155 = vpop.f32.mrf.mxu0
    %v5156 = vadd.f32 %v4491, %v5155
    %5157 = vmatprep.mubr.f32.mxu0 %v2203
    %5158 = vmatmul.mubr.f32.gmra.mxu0 %v2202
    %v5159 = vpop.f32.mrf.mxu0
    %v5160 = vadd.f32 %v4495, %v5159
    %v5161 = vpop.f32.mrf.mxu0
    %v5162 = vadd.f32 %v4497, %v5161
    %5163 = vmatprep.mubr.f32.mxu0 %v2210
    %5164 = vmatmul.mubr.f32.gmra.mxu0 %v2209
    %v5165 = vpop.f32.mrf.mxu0
    %v5166 = vadd.f32 %v4501, %v5165
    %v5167 = vpop.f32.mrf.mxu0
    %v5168 = vadd.f32 %v4503, %v5167
    %5169 = vmatprep.mubr.f32.mxu0 %v2217
    %5170 = vmatmul.mubr.f32.gmra.mxu0 %v2216
    %v5171 = vpop.f32.mrf.mxu0
    %v5172 = vadd.f32 %v4507, %v5171
    %v5173 = vpop.f32.mrf.mxu0
    %v5174 = vadd.f32 %v4509, %v5173
    %5175 = vmatprep.mubr.f32.mxu0 %v2224
    %5176 = vmatmul.mubr.f32.gmra.mxu0 %v2223
    %v5177 = vpop.f32.mrf.mxu0
    %v5178 = vadd.f32 %v4513, %v5177
    %v5179 = vpop.f32.mrf.mxu0
    %v5180 = vadd.f32 %v4515, %v5179
    %5181 = vmatprep.mubr.f32.mxu0 %v2231
    %5182 = vmatmul.mubr.f32.gmra.mxu0 %v2230
    %v5183 = vpop.f32.mrf.mxu0
    %v5184 = vadd.f32 %v4519, %v5183
    %v5185 = vpop.f32.mrf.mxu0
    %v5186 = vadd.f32 %v4521, %v5185
    %5187 = vmatprep.mubr.f32.mxu0 %v2238
    %5188 = vmatmul.mubr.f32.gmra.mxu0 %v2237
    %v5189 = vpop.f32.mrf.mxu0
    %v5190 = vadd.f32 %v4525, %v5189
    %v5191 = vpop.f32.mrf.mxu0
    %v5192 = vadd.f32 %v4527, %v5191
    %5193 = vmatprep.mubr.f32.mxu0 %v2245
    %5194 = vmatmul.mubr.f32.gmra.mxu0 %v2244
    %v5195 = vpop.f32.mrf.mxu0
    %v5196 = vadd.f32 %v4531, %v5195
    %v5197 = vpop.f32.mrf.mxu0
    %v5198 = vadd.f32 %v4533, %v5197
    %5199 = vmatprep.mubr.f32.mxu0 %v2252
    %5200 = vmatmul.mubr.f32.gmra.mxu0 %v2251
    %v5201 = vpop.f32.mrf.mxu0
    %v5202 = vadd.f32 %v4537, %v5201
    %v5203 = vpop.f32.mrf.mxu0
    %v5204 = vadd.f32 %v4539, %v5203
    %5205 = vmatprep.mubr.f32.mxu0 %v2259
    %5206 = vmatmul.mubr.f32.gmra.mxu0 %v2258
    %v5207 = vpop.f32.mrf.mxu0
    %v5208 = vadd.f32 %v4543, %v5207
    %v5209 = vpop.f32.mrf.mxu0
    %v5210 = vadd.f32 %v4545, %v5209
    %5211 = vmatprep.mubr.f32.mxu0 %v2266
    %5212 = vmatmul.mubr.f32.gmra.mxu0 %v2265
    %v5213 = vpop.f32.mrf.mxu0
    %v5214 = vadd.f32 %v4549, %v5213
    %v5215 = vpop.f32.mrf.mxu0
    %v5216 = vadd.f32 %v4551, %v5215
    %5217 = vmatprep.mubr.f32.mxu0 %v2273
    %5218 = vmatmul.mubr.f32.gmra.mxu0 %v2272
    %v5219 = vpop.f32.mrf.mxu0
    %v5220 = vadd.f32 %v4555, %v5219
    %v5221 = vpop.f32.mrf.mxu0
    %v5222 = vadd.f32 %v4557, %v5221
    %5223 = vmatprep.mubr.f32.mxu0 %v2280
    %5224 = vmatmul.mubr.f32.gmra.mxu0 %v2279
    %v5225 = vpop.f32.mrf.mxu0
    %v5226 = vadd.f32 %v4561, %v5225
    %v5227 = vpop.f32.mrf.mxu0
    %v5228 = vadd.f32 %v4563, %v5227
    %5229 = vmatprep.mubr.f32.mxu0 %v2287
    %5230 = vmatmul.mubr.f32.gmra.mxu0 %v2286
    %v5231 = vpop.f32.mrf.mxu0
    %v5232 = vadd.f32 %v4567, %v5231
    %v5233 = vpop.f32.mrf.mxu0
    %v5234 = vadd.f32 %v4569, %v5233
    %5235 = vmatprep.mubr.f32.mxu0 %v2294
    %5236 = vmatmul.mubr.f32.gmra.mxu0 %v2293
    %v5237 = vpop.f32.mrf.mxu0
    %v5238 = vadd.f32 %v4573, %v5237
    %v5239 = vpop.f32.mrf.mxu0
    %v5240 = vadd.f32 %v4575, %v5239
    %5241 = vmatprep.mubr.f32.mxu0 %v2301
    %5242 = vmatmul.mubr.f32.gmra.mxu0 %v2300
    %v5243 = vpop.f32.mrf.mxu0
    %v5244 = vadd.f32 %v4579, %v5243
    %v5245 = vpop.f32.mrf.mxu0
    %v5246 = vadd.f32 %v4581, %v5245
    %5247 = vmatprep.mubr.f32.mxu0 %v2308
    %5248 = vmatmul.mubr.f32.gmra.mxu0 %v2307
    %v5249 = vpop.f32.mrf.mxu0
    %v5250 = vadd.f32 %v4585, %v5249
    %v5251 = vpop.f32.mrf.mxu0
    %v5252 = vadd.f32 %v4587, %v5251
    %5253 = vmatprep.mubr.f32.mxu0 %v2315
    %5254 = vmatmul.mubr.f32.gmra.mxu0 %v2314
    %v5255 = vpop.f32.mrf.mxu0
    %v5256 = vadd.f32 %v4591, %v5255
    %v5257 = vpop.f32.mrf.mxu0
    %v5258 = vadd.f32 %v4593, %v5257
    %5259 = vmatprep.mubr.f32.mxu0 %v2322
    %5260 = vmatmul.mubr.f32.gmra.mxu0 %v2321
    %v5261 = vpop.f32.mrf.mxu0
    %v5262 = vadd.f32 %v4597, %v5261
    %v5263 = vpop.f32.mrf.mxu0
    %v5264 = vadd.f32 %v4599, %v5263
    %5265 = vmatprep.mubr.f32.mxu0 %v2329
    %5266 = vmatmul.mubr.f32.gmra.mxu0 %v2328
    %v5267 = vpop.f32.mrf.mxu0
    %v5268 = vadd.f32 %v4603, %v5267
    %v5269 = vpop.f32.mrf.mxu0
    %v5270 = vadd.f32 %v4605, %v5269
    %5271 = vmatprep.mubr.f32.mxu0 %v2336
    %5272 = vmatmul.mubr.f32.gmra.mxu0 %v2335
    %v5273 = vpop.f32.mrf.mxu0
    %v5274 = vadd.f32 %v4609, %v5273
    %v5275 = vpop.f32.mrf.mxu0
    %v5276 = vadd.f32 %v4611, %v5275
    %5277 = vmatprep.mubr.f32.mxu0 %v2343
    %5278 = vmatmul.mubr.f32.gmra.mxu0 %v2342
    %v5279 = vpop.f32.mrf.mxu0
    %v5280 = vadd.f32 %v4615, %v5279
    %v5281 = vpop.f32.mrf.mxu0
    %v5282 = vadd.f32 %v4617, %v5281
    %5283 = vmatprep.mubr.f32.mxu0 %v2350
    %5284 = vmatmul.mubr.f32.gmra.mxu0 %v2349
    %v5285 = vpop.f32.mrf.mxu0
    %v5286 = vadd.f32 %v4621, %v5285
    %v5287 = vpop.f32.mrf.mxu0
    %v5288 = vadd.f32 %v4623, %v5287
    %5289 = vmatprep.mubr.f32.mxu0 %v2357
    %5290 = vmatmul.mubr.f32.gmra.mxu0 %v2356
    %v5291 = vpop.f32.mrf.mxu0
    %v5292 = vadd.f32 %v4627, %v5291
    %v5293 = vpop.f32.mrf.mxu0
    %v5294 = vadd.f32 %v4629, %v5293
    %5295 = vmatprep.mubr.f32.mxu0 %v2364
    %5296 = vmatmul.mubr.f32.gmra.mxu0 %v2363
    %v5297 = vpop.f32.mrf.mxu0
    %v5298 = vadd.f32 %v4633, %v5297
    %v5299 = vpop.f32.mrf.mxu0
    %v5300 = vadd.f32 %v4635, %v5299
    %5301 = vmatprep.mubr.f32.mxu0 %v2371
    %5302 = vmatmul.mubr.f32.gmra.mxu0 %v2370
    %v5303 = vpop.f32.mrf.mxu0
    %v5304 = vadd.f32 %v4639, %v5303
    %v5305 = vpop.f32.mrf.mxu0
    %v5306 = vadd.f32 %v4641, %v5305
    %5307 = vmatprep.mubr.f32.mxu0 %v2378
    %5308 = vmatmul.mubr.f32.gmra.mxu0 %v2377
    %v5309 = vpop.f32.mrf.mxu0
    %v5310 = vadd.f32 %v4645, %v5309
    %v5311 = vpop.f32.mrf.mxu0
    %v5312 = vadd.f32 %v4647, %v5311
    %5313 = vmatprep.mubr.f32.mxu0 %v2385
    %5314 = vmatmul.mubr.f32.gmra.mxu0 %v2384
    %v5315 = vpop.f32.mrf.mxu0
    %v5316 = vadd.f32 %v4651, %v5315
    %v5317 = vpop.f32.mrf.mxu0
    %v5318 = vadd.f32 %v4653, %v5317
    %5319 = vmatprep.mubr.f32.mxu0 %v2392
    %5320 = vmatmul.mubr.f32.gmra.mxu0 %v2391
    %v5321 = vpop.f32.mrf.mxu0
    %v5322 = vadd.f32 %v4657, %v5321
    %v5323 = vpop.f32.mrf.mxu0
    %v5324 = vadd.f32 %v4659, %v5323
    %5325 = vmatprep.mubr.f32.mxu0 %v2399
    %5326 = vmatmul.mubr.f32.gmra.mxu0 %v2398
    %v5327 = vpop.f32.mrf.mxu0
    %v5328 = vadd.f32 %v4663, %v5327
    %v5329 = vpop.f32.mrf.mxu0
    %v5330 = vadd.f32 %v4665, %v5329
    %5331 = vmatprep.mubr.f32.mxu0 %v2406
    %5332 = vmatmul.mubr.f32.gmra.mxu0 %v2405
    %v5333 = vpop.f32.mrf.mxu0
    %v5334 = vadd.f32 %v4669, %v5333
    %v5335 = vpop.f32.mrf.mxu0
    %v5336 = vadd.f32 %v4671, %v5335
    %5337 = vmatprep.mubr.f32.mxu0 %v2413
    %5338 = vmatmul.mubr.f32.gmra.mxu0 %v2412
    %v5339 = vpop.f32.mrf.mxu0
    %v5340 = vadd.f32 %v4675, %v5339
    %v5341 = vpop.f32.mrf.mxu0
    %v5342 = vadd.f32 %v4677, %v5341
    %5343 = vmatprep.mubr.f32.mxu0 %v2420
    %5344 = vmatmul.mubr.f32.gmra.mxu0 %v2419
    %v5345 = vpop.f32.mrf.mxu0
    %v5346 = vadd.f32 %v4681, %v5345
    %v5347 = vpop.f32.mrf.mxu0
    %v5348 = vadd.f32 %v4683, %v5347
    %5349 = vmatprep.mubr.f32.mxu0 %v2427
    %5350 = vmatmul.mubr.f32.gmra.mxu0 %v2426
    %v5351 = vpop.f32.mrf.mxu0
    %v5352 = vadd.f32 %v4687, %v5351
    %v5353 = vpop.f32.mrf.mxu0
    %v5354 = vadd.f32 %v4689, %v5353
    %5355 = vmatprep.mubr.f32.mxu0 %v2434
    %5356 = vmatmul.mubr.f32.gmra.mxu0 %v2433
    %v5357 = vpop.f32.mrf.mxu0
    %v5358 = vadd.f32 %v4693, %v5357
    %v5359 = vpop.f32.mrf.mxu0
    %v5360 = vadd.f32 %v4695, %v5359
    %5361 = vmatprep.mubr.f32.mxu0 %v2441
    %5362 = vmatmul.mubr.f32.gmra.mxu0 %v2440
    %v5363 = vpop.f32.mrf.mxu0
    %v5364 = vadd.f32 %v4699, %v5363
    %v5365 = vpop.f32.mrf.mxu0
    %v5366 = vadd.f32 %v4701, %v5365
    %5367 = vmatprep.mubr.f32.mxu0 %v2448
    %5368 = vmatmul.mubr.f32.gmra.mxu0 %v2447
    %v5369 = vpop.f32.mrf.mxu0
    %v5370 = vadd.f32 %v4705, %v5369
    %v5371 = vpop.f32.mrf.mxu0
    %v5372 = vadd.f32 %v4707, %v5371
    %5373 = vmatprep.mubr.f32.mxu0 %v2455
    %5374 = vmatmul.mubr.f32.gmra.mxu0 %v2454
    %v5375 = vpop.f32.mrf.mxu0
    %v5376 = vadd.f32 %v4711, %v5375
    %v5377 = vpop.f32.mrf.mxu0
    %v5378 = vadd.f32 %v4713, %v5377
    %5379 = vmatprep.mubr.f32.mxu0 %v2462
    %5380 = vmatmul.mubr.f32.gmra.mxu0 %v2461
    %v5381 = vpop.f32.mrf.mxu0
    %v5382 = vadd.f32 %v4717, %v5381
    %v5383 = vpop.f32.mrf.mxu0
    %v5384 = vadd.f32 %v4719, %v5383
    %5385 = vmatprep.mubr.f32.mxu0 %v2469
    %5386 = vmatmul.mubr.f32.gmra.mxu0 %v2468
    %v5387 = vpop.f32.mrf.mxu0
    %v5388 = vadd.f32 %v4723, %v5387
    %v5389 = vpop.f32.mrf.mxu0
    %v5390 = vadd.f32 %v4725, %v5389
    %5391 = vmatprep.mubr.f32.mxu0 %v2476
    %5392 = vmatmul.mubr.f32.gmra.mxu0 %v2475
    %v5393 = vpop.f32.mrf.mxu0
    %v5394 = vadd.f32 %v4729, %v5393
    %v5395 = vpop.f32.mrf.mxu0
    %v5396 = vadd.f32 %v4731, %v5395
    %5397 = vmatprep.mubr.f32.mxu0 %v2483
    %5398 = vmatmul.mubr.f32.gmra.mxu0 %v2482
    %v5399 = vpop.f32.mrf.mxu0
    %v5400 = vadd.f32 %v4735, %v5399
    %v5401 = vpop.f32.mrf.mxu0
    %v5402 = vadd.f32 %v4737, %v5401
    %5403 = vmatprep.mubr.f32.mxu0 %v2490
    %5404 = vmatmul.mubr.f32.gmra.mxu0 %v2489
    %v5405 = vpop.f32.mrf.mxu0
    %v5406 = vadd.f32 %v4741, %v5405
    %v5407 = vpop.f32.mrf.mxu0
    %v5408 = vadd.f32 %v4743, %v5407
    %5409 = vmatprep.mubr.f32.mxu0 %v2497
    %5410 = vmatmul.mubr.f32.gmra.mxu0 %v2496
    %v5411 = vpop.f32.mrf.mxu0
    %v5412 = vadd.f32 %v4747, %v5411
    %v5413 = vpop.f32.mrf.mxu0
    %v5414 = vadd.f32 %v4749, %v5413
    %5415 = vmatprep.mubr.f32.mxu0 %v2504
    %5416 = vmatmul.mubr.f32.gmra.mxu0 %v2503
    %v5417 = vpop.f32.mrf.mxu0
    %v5418 = vadd.f32 %v4753, %v5417
    %v5419 = vpop.f32.mrf.mxu0
    %v5420 = vadd.f32 %v4755, %v5419
    %5421 = vmatprep.mubr.f32.mxu0 %v2511
    %5422 = vmatmul.mubr.f32.gmra.mxu0 %v2510
    %v5423 = vpop.f32.mrf.mxu0
    %v5424 = vadd.f32 %v4759, %v5423
    %v5425 = vpop.f32.mrf.mxu0
    %v5426 = vadd.f32 %v4761, %v5425
    %5427 = vmatprep.mubr.f32.mxu0 %v2518
    %5428 = vmatmul.mubr.f32.gmra.mxu0 %v2517
    %v5429 = vpop.f32.mrf.mxu0
    %v5430 = vadd.f32 %v4765, %v5429
    %v5431 = vpop.f32.mrf.mxu0
    %v5432 = vadd.f32 %v4767, %v5431
    %5433 = vmatprep.mubr.f32.mxu0 %v2525
    %5434 = vmatmul.mubr.f32.gmra.mxu0 %v2524
    %v5435 = vpop.f32.mrf.mxu0
    %v5436 = vadd.f32 %v4771, %v5435
    %v5437 = vpop.f32.mrf.mxu0
    %v5438 = vadd.f32 %v4773, %v5437
    %5439 = vmatprep.mubr.f32.mxu0 %v2532
    %5440 = vmatmul.mubr.f32.gmra.mxu0 %v2531
    %v5441 = vpop.f32.mrf.mxu0
    %v5442 = vadd.f32 %v4777, %v5441
    %v5443 = vpop.f32.mrf.mxu0
    %v5444 = vadd.f32 %v4779, %v5443
    %5445 = vmatprep.mubr.f32.mxu0 %v2539
    %5446 = vmatmul.mubr.f32.gmra.mxu0 %v2538
    %v5447 = vpop.f32.mrf.mxu0
    %v5448 = vadd.f32 %v4783, %v5447
    %v5449 = vpop.f32.mrf.mxu0
    %v5450 = vadd.f32 %v4785, %v5449
    %5451 = vmatprep.mubr.f32.mxu0 %v2546
    %5452 = vmatmul.mubr.f32.gmra.mxu0 %v2545
    %v5453 = vpop.f32.mrf.mxu0
    %v5454 = vadd.f32 %v4789, %v5453
    %v5455 = vpop.f32.mrf.mxu0
    %v5456 = vadd.f32 %v4791, %v5455
    %5457 = vmatprep.mubr.f32.mxu0 %v2553
    %5458 = vmatmul.mubr.f32.gmra.mxu0 %v2552
    %v5459 = vpop.f32.mrf.mxu0
    %v5460 = vadd.f32 %v4795, %v5459
    %v5461 = vpop.f32.mrf.mxu0
    %v5462 = vadd.f32 %v4797, %v5461
    %5463 = vmatprep.mubr.f32.mxu0 %v2560
    %5464 = vmatmul.mubr.f32.gmra.mxu0 %v2559
    %v5465 = vpop.f32.mrf.mxu0
    %v5466 = vadd.f32 %v4801, %v5465
    %v5467 = vpop.f32.mrf.mxu0
    %v5468 = vadd.f32 %v4803, %v5467
    %5469 = vmatprep.mubr.f32.mxu0 %v2567
    %5470 = vmatmul.mubr.f32.gmra.mxu0 %v2566
    %v5471 = vpop.f32.mrf.mxu0
    %v5472 = vadd.f32 %v4807, %v5471
    %v5473 = vpop.f32.mrf.mxu0
    %v5474 = vadd.f32 %v4809, %v5473
    %5475 = vmatprep.mubr.f32.mxu0 %v2574
    %5476 = vmatmul.mubr.f32.gmra.mxu0 %v2573
    %v5477 = vpop.f32.mrf.mxu0
    %v5478 = vadd.f32 %v4813, %v5477
    %v5479 = vpop.f32.mrf.mxu0
    %v5480 = vadd.f32 %v4815, %v5479
    %5481 = vmatprep.mubr.f32.mxu0 %v2581
    %5482 = vmatmul.mubr.f32.gmra.mxu0 %v2580
    %v5483 = vpop.f32.mrf.mxu0
    %v5484 = vadd.f32 %v4819, %v5483
    %v5485 = vpop.f32.mrf.mxu0
    %v5486 = vadd.f32 %v4821, %v5485
    %5487 = vmatprep.mubr.f32.mxu0 %v2588
    %5488 = vmatmul.mubr.f32.gmra.mxu0 %v2587
    %v5489 = vpop.f32.mrf.mxu0
    %v5490 = vadd.f32 %v4825, %v5489
    %v5491 = vpop.f32.mrf.mxu0
    %v5492 = vadd.f32 %v4827, %v5491
    %5493 = vmatprep.mubr.f32.mxu0 %v2595
    %5494 = vmatmul.mubr.f32.gmra.mxu0 %v2594
    %v5495 = vpop.f32.mrf.mxu0
    %v5496 = vadd.f32 %v4831, %v5495
    %v5497 = vpop.f32.mrf.mxu0
    %v5498 = vadd.f32 %v4833, %v5497
    %5499 = vmatprep.mubr.f32.mxu0 %v2602
    %5500 = vmatmul.mubr.f32.gmra.mxu0 %v2601
    %v5501 = vpop.f32.mrf.mxu0
    %v5502 = vadd.f32 %v4837, %v5501
    %v5503 = vpop.f32.mrf.mxu0
    %v5504 = vadd.f32 %v4839, %v5503
    %5505 = vmatprep.mubr.f32.mxu0 %v2609
    %5506 = vmatmul.mubr.f32.gmra.mxu0 %v2608
    %v5507 = vpop.f32.mrf.mxu0
    %v5508 = vadd.f32 %v4843, %v5507
    %v5509 = vpop.f32.mrf.mxu0
    %v5510 = vadd.f32 %v4845, %v5509
    %5511 = vmatprep.mubr.f32.mxu0 %v2616
    %5512 = vmatmul.mubr.f32.gmra.mxu0 %v2615
    %v5513 = vpop.f32.mrf.mxu0
    %v5514 = vadd.f32 %v4849, %v5513
    %v5515 = vpop.f32.mrf.mxu0
    %v5516 = vadd.f32 %v4851, %v5515
    %5517 = vmatprep.mubr.f32.mxu0 %v2623
    %5518 = vmatmul.mubr.f32.gmra.mxu0 %v2622
    %v5519 = vpop.f32.mrf.mxu0
    %v5520 = vadd.f32 %v4855, %v5519
    %v5521 = vpop.f32.mrf.mxu0
    %v5522 = vadd.f32 %v4857, %v5521
    %5523 = vmatprep.mubr.f32.mxu0 %v2630
    %5524 = vmatmul.mubr.f32.gmra.mxu0 %v2629
    %v5525 = vpop.f32.mrf.mxu0
    %v5526 = vadd.f32 %v4861, %v5525
    %v5527 = vpop.f32.mrf.mxu0
    %v5528 = vadd.f32 %v4863, %v5527
    %5529 = vmatprep.mubr.f32.mxu0 %v2637
    %5530 = vmatmul.mubr.f32.gmra.mxu0 %v2636
    %v5531 = vpop.f32.mrf.mxu0
    %v5532 = vadd.f32 %v4867, %v5531
    %v5533 = vpop.f32.mrf.mxu0
    %v5534 = vadd.f32 %v4869, %v5533
    %5535 = vmatprep.mubr.f32.mxu0 %v2644
    %5536 = vmatmul.mubr.f32.gmra.mxu0 %v2643
    %v5537 = vpop.f32.mrf.mxu0
    %v5538 = vadd.f32 %v4873, %v5537
    %v5539 = vpop.f32.mrf.mxu0
    %v5540 = vadd.f32 %v4875, %v5539
    %5541 = vdwg.mxu0
    %5542 = vmatprep.subr.mxu0 0.0
    %5543 = vmatpush1.msra.mxu0 0.0
    %5544 = vmatprep.subr.mxu0 0.0
    %5545 = vmatpush1.msra.mxu0 0.0
    %5546 = vmatprep.subr.mxu0 0.0
    %5547 = vmatpush1.msra.mxu0 0.0
    %5548 = vmatprep.subr.mxu0 0.0
    %5549 = vmatpush1.msra.mxu0 0.0
    %5550 = vmatprep.subr.mxu0 0.0
    %5551 = vmatpush1.msra.mxu0 0.0
    %5552 = vmatprep.subr.mxu0 0.0
    %5553 = vmatpush1.msra.mxu0 0.0
    %5554 = vmatprep.subr.mxu0 0.0
    %5555 = vmatpush1.msra.mxu0 0.0
    %5556 = vmatprep.subr.mxu0 0.0
    %5557 = vmatpush1.msra.mxu0 0.0
    %5558 = vmatprep.subr.mxu0 0.0
    %5559 = vmatpush1.msra.mxu0 0.0
    %5560 = vmatprep.subr.mxu0 0.0
    %5561 = vmatpush1.msra.mxu0 0.0
    %5562 = vmatprep.subr.mxu0 0.0
    %5563 = vmatpush1.msra.mxu0 0.0
    %5564 = vmatprep.subr.mxu0 0.0
    %5565 = vmatpush1.msra.mxu0 0.0
    %5566 = vmatprep.subr.mxu0 0.0
    %5567 = vmatpush1.msra.mxu0 0.0
    %5568 = vmatprep.subr.mxu0 0.0
    %5569 = vmatpush1.msra.mxu0 0.0
    %5570 = vmatprep.subr.mxu0 %v1945
    %5571 = vmatpush1.msra.mxu0 %v1944
    %5572 = vmatprep.subr.mxu0 %v1943
    %5573 = vmatpush1.msra.mxu0 %v1942
    %5574 = vmatprep.subr.mxu0 0.0
    %5575 = vmatpush2.msra.mxu0 0.0
    %5576 = vmatprep.subr.mxu0 0.0
    %5577 = vmatpush2.msra.mxu0 0.0
    %5578 = vmatprep.subr.mxu0 0.0
    %5579 = vmatpush2.msra.mxu0 0.0
    %5580 = vmatprep.subr.mxu0 0.0
    %5581 = vmatpush2.msra.mxu0 0.0
    %5582 = vmatprep.subr.mxu0 0.0
    %5583 = vmatpush2.msra.mxu0 0.0
    %5584 = vmatprep.subr.mxu0 0.0
    %5585 = vmatpush2.msra.mxu0 0.0
    %5586 = vmatprep.subr.mxu0 0.0
    %5587 = vmatpush2.msra.mxu0 0.0
    %5588 = vmatprep.subr.mxu0 0.0
    %5589 = vmatpush2.msra.mxu0 0.0
    %5590 = vmatprep.subr.mxu0 0.0
    %5591 = vmatpush2.msra.mxu0 0.0
    %5592 = vmatprep.subr.mxu0 0.0
    %5593 = vmatpush2.msra.mxu0 0.0
    %5594 = vmatprep.subr.mxu0 0.0
    %5595 = vmatpush2.msra.mxu0 0.0
    %5596 = vmatprep.subr.mxu0 0.0
    %5597 = vmatpush2.msra.mxu0 0.0
    %5598 = vmatprep.subr.mxu0 0.0
    %5599 = vmatpush2.msra.mxu0 0.0
    %5600 = vmatprep.subr.mxu0 0.0
    %5601 = vmatpush2.msra.mxu0 0.0
    %5602 = vmatprep.subr.mxu0 0.0
    %5603 = vmatpush2.msra.mxu0 0.0
    %5604 = vmatprep.subr.mxu0 0.0
    %5605 = vmatpush2.msra.mxu0 0.0
    %5606 = vmatprep.mubr.f32.mxu0 0.0
    %5607 = vmatmul.mubr.f32.gmra.mxu0 %v3248
    %v5608 = vpop.f32.mrf.mxu0
    %v5609 = vadd.f32 %v4944, %v5608
    %v5610 = vpop.f32.mrf.mxu0
    %v5611 = vadd.f32 %v4946, %v5610
    %5612 = vmatprep.mubr.f32.mxu0 0.0
    %5613 = vmatmul.mubr.f32.gmra.mxu0 %v3251
    %v5614 = vpop.f32.mrf.mxu0
    %v5615 = vadd.f32 %v4950, %v5614
    %v5616 = vpop.f32.mrf.mxu0
    %v5617 = vadd.f32 %v4952, %v5616
    %5618 = vmatprep.mubr.f32.mxu0 0.0
    %5619 = vmatmul.mubr.f32.gmra.mxu0 %v3254
    %v5620 = vpop.f32.mrf.mxu0
    %v5621 = vadd.f32 %v4956, %v5620
    %v5622 = vpop.f32.mrf.mxu0
    %v5623 = vadd.f32 %v4958, %v5622
    %5624 = vmatprep.mubr.f32.mxu0 0.0
    %5625 = vmatmul.mubr.f32.gmra.mxu0 %v3257
    %v5626 = vpop.f32.mrf.mxu0
    %v5627 = vadd.f32 %v4962, %v5626
    %v5628 = vpop.f32.mrf.mxu0
    %v5629 = vadd.f32 %v4964, %v5628
    %5630 = vmatprep.mubr.f32.mxu0 0.0
    %5631 = vmatmul.mubr.f32.gmra.mxu0 %v3260
    %v5632 = vpop.f32.mrf.mxu0
    %v5633 = vadd.f32 %v4968, %v5632
    %v5634 = vpop.f32.mrf.mxu0
    %v5635 = vadd.f32 %v4970, %v5634
    %5636 = vmatprep.mubr.f32.mxu0 0.0
    %5637 = vmatmul.mubr.f32.gmra.mxu0 %v3263
    %v5638 = vpop.f32.mrf.mxu0
    %v5639 = vadd.f32 %v4974, %v5638
    %v5640 = vpop.f32.mrf.mxu0
    %v5641 = vadd.f32 %v4976, %v5640
    %5642 = vmatprep.mubr.f32.mxu0 0.0
    %5643 = vmatmul.mubr.f32.gmra.mxu0 %v3266
    %v5644 = vpop.f32.mrf.mxu0
    %v5645 = vadd.f32 %v4980, %v5644
    %v5646 = vpop.f32.mrf.mxu0
    %v5647 = vadd.f32 %v4982, %v5646
    %5648 = vmatprep.mubr.f32.mxu0 0.0
    %5649 = vmatmul.mubr.f32.gmra.mxu0 %v3269
    %v5650 = vpop.f32.mrf.mxu0
    %v5651 = vadd.f32 %v4986, %v5650
    %v5652 = vpop.f32.mrf.mxu0
    %v5653 = vadd.f32 %v4988, %v5652
    %5654 = vmatprep.mubr.f32.mxu0 0.0
    %5655 = vmatmul.mubr.f32.gmra.mxu0 %v3272
    %v5656 = vpop.f32.mrf.mxu0
    %v5657 = vadd.f32 %v4992, %v5656
    %v5658 = vpop.f32.mrf.mxu0
    %v5659 = vadd.f32 %v4994, %v5658
    %5660 = vmatprep.mubr.f32.mxu0 0.0
    %5661 = vmatmul.mubr.f32.gmra.mxu0 %v3275
    %v5662 = vpop.f32.mrf.mxu0
    %v5663 = vadd.f32 %v4998, %v5662
    %v5664 = vpop.f32.mrf.mxu0
    %v5665 = vadd.f32 %v5000, %v5664
    %5666 = vmatprep.mubr.f32.mxu0 0.0
    %5667 = vmatmul.mubr.f32.gmra.mxu0 %v3278
    %v5668 = vpop.f32.mrf.mxu0
    %v5669 = vadd.f32 %v5004, %v5668
    %v5670 = vpop.f32.mrf.mxu0
    %v5671 = vadd.f32 %v5006, %v5670
    %5672 = vmatprep.mubr.f32.mxu0 0.0
    %5673 = vmatmul.mubr.f32.gmra.mxu0 %v3281
    %v5674 = vpop.f32.mrf.mxu0
    %v5675 = vadd.f32 %v5010, %v5674
    %v5676 = vpop.f32.mrf.mxu0
    %v5677 = vadd.f32 %v5012, %v5676
    %5678 = vmatprep.mubr.f32.mxu0 0.0
    %5679 = vmatmul.mubr.f32.gmra.mxu0 %v3284
    %v5680 = vpop.f32.mrf.mxu0
    %v5681 = vadd.f32 %v5016, %v5680
    %v5682 = vpop.f32.mrf.mxu0
    %v5683 = vadd.f32 %v5018, %v5682
    %5684 = vmatprep.mubr.f32.mxu0 0.0
    %5685 = vmatmul.mubr.f32.gmra.mxu0 %v3287
    %v5686 = vpop.f32.mrf.mxu0
    %v5687 = vadd.f32 %v5022, %v5686
    %v5688 = vpop.f32.mrf.mxu0
    %v5689 = vadd.f32 %v5024, %v5688
    %5690 = vmatprep.mubr.f32.mxu0 0.0
    %5691 = vmatmul.mubr.f32.gmra.mxu0 %v3290
    %v5692 = vpop.f32.mrf.mxu0
    %v5693 = vadd.f32 %v5028, %v5692
    %v5694 = vpop.f32.mrf.mxu0
    %v5695 = vadd.f32 %v5030, %v5694
    %5696 = vmatprep.mubr.f32.mxu0 0.0
    %5697 = vmatmul.mubr.f32.gmra.mxu0 %v3293
    %v5698 = vpop.f32.mrf.mxu0
    %v5699 = vadd.f32 %v5034, %v5698
    %v5700 = vpop.f32.mrf.mxu0
    %v5701 = vadd.f32 %v5036, %v5700
    %5702 = vmatprep.mubr.f32.mxu0 0.0
    %5703 = vmatmul.mubr.f32.gmra.mxu0 %v3296
    %v5704 = vpop.f32.mrf.mxu0
    %v5705 = vadd.f32 %v5040, %v5704
    %v5706 = vpop.f32.mrf.mxu0
    %v5707 = vadd.f32 %v5042, %v5706
    %5708 = vmatprep.mubr.f32.mxu0 0.0
    %5709 = vmatmul.mubr.f32.gmra.mxu0 %v3299
    %v5710 = vpop.f32.mrf.mxu0
    %v5711 = vadd.f32 %v5046, %v5710
    %v5712 = vpop.f32.mrf.mxu0
    %v5713 = vadd.f32 %v5048, %v5712
    %5714 = vmatprep.mubr.f32.mxu0 0.0
    %5715 = vmatmul.mubr.f32.gmra.mxu0 %v3302
    %v5716 = vpop.f32.mrf.mxu0
    %v5717 = vadd.f32 %v5052, %v5716
    %v5718 = vpop.f32.mrf.mxu0
    %v5719 = vadd.f32 %v5054, %v5718
    %5720 = vmatprep.mubr.f32.mxu0 0.0
    %5721 = vmatmul.mubr.f32.gmra.mxu0 %v3305
    %v5722 = vpop.f32.mrf.mxu0
    %v5723 = vadd.f32 %v5058, %v5722
    %v5724 = vpop.f32.mrf.mxu0
    %v5725 = vadd.f32 %v5060, %v5724
    %5726 = vmatprep.mubr.f32.mxu0 0.0
    %5727 = vmatmul.mubr.f32.gmra.mxu0 %v3308
    %v5728 = vpop.f32.mrf.mxu0
    %v5729 = vadd.f32 %v5064, %v5728
    %v5730 = vpop.f32.mrf.mxu0
    %v5731 = vadd.f32 %v5066, %v5730
    %5732 = vmatprep.mubr.f32.mxu0 0.0
    %5733 = vmatmul.mubr.f32.gmra.mxu0 %v3311
    %v5734 = vpop.f32.mrf.mxu0
    %v5735 = vadd.f32 %v5070, %v5734
    %v5736 = vpop.f32.mrf.mxu0
    %v5737 = vadd.f32 %v5072, %v5736
    %5738 = vmatprep.mubr.f32.mxu0 0.0
    %5739 = vmatmul.mubr.f32.gmra.mxu0 %v3314
    %v5740 = vpop.f32.mrf.mxu0
    %v5741 = vadd.f32 %v5076, %v5740
    %v5742 = vpop.f32.mrf.mxu0
    %v5743 = vadd.f32 %v5078, %v5742
    %5744 = vmatprep.mubr.f32.mxu0 0.0
    %5745 = vmatmul.mubr.f32.gmra.mxu0 %v3317
    %v5746 = vpop.f32.mrf.mxu0
    %v5747 = vadd.f32 %v5082, %v5746
    %v5748 = vpop.f32.mrf.mxu0
    %v5749 = vadd.f32 %v5084, %v5748
    %5750 = vmatprep.mubr.f32.mxu0 0.0
    %5751 = vmatmul.mubr.f32.gmra.mxu0 %v3320
    %v5752 = vpop.f32.mrf.mxu0
    %v5753 = vadd.f32 %v5088, %v5752
    %v5754 = vpop.f32.mrf.mxu0
    %v5755 = vadd.f32 %v5090, %v5754
    %5756 = vmatprep.mubr.f32.mxu0 0.0
    %5757 = vmatmul.mubr.f32.gmra.mxu0 %v3323
    %v5758 = vpop.f32.mrf.mxu0
    %v5759 = vadd.f32 %v5094, %v5758
    %v5760 = vpop.f32.mrf.mxu0
    %v5761 = vadd.f32 %v5096, %v5760
    %5762 = vmatprep.mubr.f32.mxu0 0.0
    %5763 = vmatmul.mubr.f32.gmra.mxu0 %v3326
    %v5764 = vpop.f32.mrf.mxu0
    %v5765 = vadd.f32 %v5100, %v5764
    %v5766 = vpop.f32.mrf.mxu0
    %v5767 = vadd.f32 %v5102, %v5766
    %5768 = vmatprep.mubr.f32.mxu0 0.0
    %5769 = vmatmul.mubr.f32.gmra.mxu0 %v3329
    %v5770 = vpop.f32.mrf.mxu0
    %v5771 = vadd.f32 %v5106, %v5770
    %v5772 = vpop.f32.mrf.mxu0
    %v5773 = vadd.f32 %v5108, %v5772
    %5774 = vmatprep.mubr.f32.mxu0 0.0
    %5775 = vmatmul.mubr.f32.gmra.mxu0 %v3332
    %v5776 = vpop.f32.mrf.mxu0
    %v5777 = vadd.f32 %v5112, %v5776
    %v5778 = vpop.f32.mrf.mxu0
    %v5779 = vadd.f32 %v5114, %v5778
    %5780 = vmatprep.mubr.f32.mxu0 0.0
    %5781 = vmatmul.mubr.f32.gmra.mxu0 %v3335
    %v5782 = vpop.f32.mrf.mxu0
    %v5783 = vadd.f32 %v5118, %v5782
    %v5784 = vpop.f32.mrf.mxu0
    %v5785 = vadd.f32 %v5120, %v5784
    %5786 = vmatprep.mubr.f32.mxu0 0.0
    %5787 = vmatmul.mubr.f32.gmra.mxu0 %v3338
    %v5788 = vpop.f32.mrf.mxu0
    %v5789 = vadd.f32 %v5124, %v5788
    %v5790 = vpop.f32.mrf.mxu0
    %v5791 = vadd.f32 %v5126, %v5790
    %5792 = vmatprep.mubr.f32.mxu0 0.0
    %5793 = vmatmul.mubr.f32.gmra.mxu0 %v3341
    %v5794 = vpop.f32.mrf.mxu0
    %v5795 = vadd.f32 %v5130, %v5794
    %v5796 = vpop.f32.mrf.mxu0
    %v5797 = vadd.f32 %v5132, %v5796
    %5798 = vmatprep.mubr.f32.mxu0 0.0
    %5799 = vmatmul.mubr.f32.gmra.mxu0 %v3344
    %v5800 = vpop.f32.mrf.mxu0
    %v5801 = vadd.f32 %v5136, %v5800
    %v5802 = vpop.f32.mrf.mxu0
    %v5803 = vadd.f32 %v5138, %v5802
    %5804 = vmatprep.mubr.f32.mxu0 0.0
    %5805 = vmatmul.mubr.f32.gmra.mxu0 %v3347
    %v5806 = vpop.f32.mrf.mxu0
    %v5807 = vadd.f32 %v5142, %v5806
    %v5808 = vpop.f32.mrf.mxu0
    %v5809 = vadd.f32 %v5144, %v5808
    %5810 = vmatprep.mubr.f32.mxu0 0.0
    %5811 = vmatmul.mubr.f32.gmra.mxu0 %v3350
    %v5812 = vpop.f32.mrf.mxu0
    %v5813 = vadd.f32 %v5148, %v5812
    %v5814 = vpop.f32.mrf.mxu0
    %v5815 = vadd.f32 %v5150, %v5814
    %5816 = vmatprep.mubr.f32.mxu0 0.0
    %5817 = vmatmul.mubr.f32.gmra.mxu0 %v3353
    %v5818 = vpop.f32.mrf.mxu0
    %v5819 = vadd.f32 %v5154, %v5818
    %v5820 = vpop.f32.mrf.mxu0
    %v5821 = vadd.f32 %v5156, %v5820
    %5822 = vmatprep.mubr.f32.mxu0 0.0
    %5823 = vmatmul.mubr.f32.gmra.mxu0 %v3356
    %v5824 = vpop.f32.mrf.mxu0
    %v5825 = vadd.f32 %v5160, %v5824
    %v5826 = vpop.f32.mrf.mxu0
    %v5827 = vadd.f32 %v5162, %v5826
    %5828 = vmatprep.mubr.f32.mxu0 0.0
    %5829 = vmatmul.mubr.f32.gmra.mxu0 %v3359
    %v5830 = vpop.f32.mrf.mxu0
    %v5831 = vadd.f32 %v5166, %v5830
    %v5832 = vpop.f32.mrf.mxu0
    %v5833 = vadd.f32 %v5168, %v5832
    %5834 = vmatprep.mubr.f32.mxu0 0.0
    %5835 = vmatmul.mubr.f32.gmra.mxu0 %v3362
    %v5836 = vpop.f32.mrf.mxu0
    %v5837 = vadd.f32 %v5172, %v5836
    %v5838 = vpop.f32.mrf.mxu0
    %v5839 = vadd.f32 %v5174, %v5838
    %5840 = vmatprep.mubr.f32.mxu0 0.0
    %5841 = vmatmul.mubr.f32.gmra.mxu0 %v3365
    %v5842 = vpop.f32.mrf.mxu0
    %v5843 = vadd.f32 %v5178, %v5842
    %v5844 = vpop.f32.mrf.mxu0
    %v5845 = vadd.f32 %v5180, %v5844
    %5846 = vmatprep.mubr.f32.mxu0 0.0
    %5847 = vmatmul.mubr.f32.gmra.mxu0 %v3368
    %v5848 = vpop.f32.mrf.mxu0
    %v5849 = vadd.f32 %v5184, %v5848
    %v5850 = vpop.f32.mrf.mxu0
    %v5851 = vadd.f32 %v5186, %v5850
    %5852 = vmatprep.mubr.f32.mxu0 0.0
    %5853 = vmatmul.mubr.f32.gmra.mxu0 %v3371
    %v5854 = vpop.f32.mrf.mxu0
    %v5855 = vadd.f32 %v5190, %v5854
    %v5856 = vpop.f32.mrf.mxu0
    %v5857 = vadd.f32 %v5192, %v5856
    %5858 = vmatprep.mubr.f32.mxu0 0.0
    %5859 = vmatmul.mubr.f32.gmra.mxu0 %v3374
    %v5860 = vpop.f32.mrf.mxu0
    %v5861 = vadd.f32 %v5196, %v5860
    %v5862 = vpop.f32.mrf.mxu0
    %v5863 = vadd.f32 %v5198, %v5862
    %5864 = vmatprep.mubr.f32.mxu0 0.0
    %5865 = vmatmul.mubr.f32.gmra.mxu0 %v3377
    %v5866 = vpop.f32.mrf.mxu0
    %v5867 = vadd.f32 %v5202, %v5866
    %v5868 = vpop.f32.mrf.mxu0
    %v5869 = vadd.f32 %v5204, %v5868
    %5870 = vmatprep.mubr.f32.mxu0 0.0
    %5871 = vmatmul.mubr.f32.gmra.mxu0 %v3380
    %v5872 = vpop.f32.mrf.mxu0
    %v5873 = vadd.f32 %v5208, %v5872
    %v5874 = vpop.f32.mrf.mxu0
    %v5875 = vadd.f32 %v5210, %v5874
    %5876 = vmatprep.mubr.f32.mxu0 0.0
    %5877 = vmatmul.mubr.f32.gmra.mxu0 %v3383
    %v5878 = vpop.f32.mrf.mxu0
    %v5879 = vadd.f32 %v5214, %v5878
    %v5880 = vpop.f32.mrf.mxu0
    %v5881 = vadd.f32 %v5216, %v5880
    %5882 = vmatprep.mubr.f32.mxu0 0.0
    %5883 = vmatmul.mubr.f32.gmra.mxu0 %v3386
    %v5884 = vpop.f32.mrf.mxu0
    %v5885 = vadd.f32 %v5220, %v5884
    %v5886 = vpop.f32.mrf.mxu0
    %v5887 = vadd.f32 %v5222, %v5886
    %5888 = vmatprep.mubr.f32.mxu0 0.0
    %5889 = vmatmul.mubr.f32.gmra.mxu0 %v3389
    %v5890 = vpop.f32.mrf.mxu0
    %v5891 = vadd.f32 %v5226, %v5890
    %v5892 = vpop.f32.mrf.mxu0
    %v5893 = vadd.f32 %v5228, %v5892
    %5894 = vmatprep.mubr.f32.mxu0 0.0
    %5895 = vmatmul.mubr.f32.gmra.mxu0 %v3392
    %v5896 = vpop.f32.mrf.mxu0
    %v5897 = vadd.f32 %v5232, %v5896
    %v5898 = vpop.f32.mrf.mxu0
    %v5899 = vadd.f32 %v5234, %v5898
    %5900 = vmatprep.mubr.f32.mxu0 0.0
    %5901 = vmatmul.mubr.f32.gmra.mxu0 %v3395
    %v5902 = vpop.f32.mrf.mxu0
    %v5903 = vadd.f32 %v5238, %v5902
    %v5904 = vpop.f32.mrf.mxu0
    %v5905 = vadd.f32 %v5240, %v5904
    %5906 = vmatprep.mubr.f32.mxu0 0.0
    %5907 = vmatmul.mubr.f32.gmra.mxu0 %v3398
    %v5908 = vpop.f32.mrf.mxu0
    %v5909 = vadd.f32 %v5244, %v5908
    %v5910 = vpop.f32.mrf.mxu0
    %v5911 = vadd.f32 %v5246, %v5910
    %5912 = vmatprep.mubr.f32.mxu0 0.0
    %5913 = vmatmul.mubr.f32.gmra.mxu0 %v3401
    %v5914 = vpop.f32.mrf.mxu0
    %v5915 = vadd.f32 %v5250, %v5914
    %v5916 = vpop.f32.mrf.mxu0
    %v5917 = vadd.f32 %v5252, %v5916
    %5918 = vmatprep.mubr.f32.mxu0 0.0
    %5919 = vmatmul.mubr.f32.gmra.mxu0 %v3404
    %v5920 = vpop.f32.mrf.mxu0
    %v5921 = vadd.f32 %v5256, %v5920
    %v5922 = vpop.f32.mrf.mxu0
    %v5923 = vadd.f32 %v5258, %v5922
    %5924 = vmatprep.mubr.f32.mxu0 0.0
    %5925 = vmatmul.mubr.f32.gmra.mxu0 %v3407
    %v5926 = vpop.f32.mrf.mxu0
    %v5927 = vadd.f32 %v5262, %v5926
    %v5928 = vpop.f32.mrf.mxu0
    %v5929 = vadd.f32 %v5264, %v5928
    %5930 = vmatprep.mubr.f32.mxu0 0.0
    %5931 = vmatmul.mubr.f32.gmra.mxu0 %v3410
    %v5932 = vpop.f32.mrf.mxu0
    %v5933 = vadd.f32 %v5268, %v5932
    %v5934 = vpop.f32.mrf.mxu0
    %v5935 = vadd.f32 %v5270, %v5934
    %5936 = vmatprep.mubr.f32.mxu0 0.0
    %5937 = vmatmul.mubr.f32.gmra.mxu0 %v3413
    %v5938 = vpop.f32.mrf.mxu0
    %v5939 = vadd.f32 %v5274, %v5938
    %v5940 = vpop.f32.mrf.mxu0
    %v5941 = vadd.f32 %v5276, %v5940
    %5942 = vmatprep.mubr.f32.mxu0 0.0
    %5943 = vmatmul.mubr.f32.gmra.mxu0 %v3416
    %v5944 = vpop.f32.mrf.mxu0
    %v5945 = vadd.f32 %v5280, %v5944
    %v5946 = vpop.f32.mrf.mxu0
    %v5947 = vadd.f32 %v5282, %v5946
    %5948 = vmatprep.mubr.f32.mxu0 0.0
    %5949 = vmatmul.mubr.f32.gmra.mxu0 %v3419
    %v5950 = vpop.f32.mrf.mxu0
    %v5951 = vadd.f32 %v5286, %v5950
    %v5952 = vpop.f32.mrf.mxu0
    %v5953 = vadd.f32 %v5288, %v5952
    %5954 = vmatprep.mubr.f32.mxu0 0.0
    %5955 = vmatmul.mubr.f32.gmra.mxu0 %v3422
    %v5956 = vpop.f32.mrf.mxu0
    %v5957 = vadd.f32 %v5292, %v5956
    %v5958 = vpop.f32.mrf.mxu0
    %v5959 = vadd.f32 %v5294, %v5958
    %5960 = vmatprep.mubr.f32.mxu0 0.0
    %5961 = vmatmul.mubr.f32.gmra.mxu0 %v3425
    %v5962 = vpop.f32.mrf.mxu0
    %v5963 = vadd.f32 %v5298, %v5962
    %v5964 = vpop.f32.mrf.mxu0
    %v5965 = vadd.f32 %v5300, %v5964
    %5966 = vmatprep.mubr.f32.mxu0 0.0
    %5967 = vmatmul.mubr.f32.gmra.mxu0 %v3428
    %v5968 = vpop.f32.mrf.mxu0
    %v5969 = vadd.f32 %v5304, %v5968
    %v5970 = vpop.f32.mrf.mxu0
    %v5971 = vadd.f32 %v5306, %v5970
    %5972 = vmatprep.mubr.f32.mxu0 0.0
    %5973 = vmatmul.mubr.f32.gmra.mxu0 %v3431
    %v5974 = vpop.f32.mrf.mxu0
    %v5975 = vadd.f32 %v5310, %v5974
    %v5976 = vpop.f32.mrf.mxu0
    %v5977 = vadd.f32 %v5312, %v5976
    %5978 = vmatprep.mubr.f32.mxu0 0.0
    %5979 = vmatmul.mubr.f32.gmra.mxu0 %v3434
    %v5980 = vpop.f32.mrf.mxu0
    %v5981 = vadd.f32 %v5316, %v5980
    %v5982 = vpop.f32.mrf.mxu0
    %v5983 = vadd.f32 %v5318, %v5982
    %5984 = vmatprep.mubr.f32.mxu0 0.0
    %5985 = vmatmul.mubr.f32.gmra.mxu0 %v3437
    %v5986 = vpop.f32.mrf.mxu0
    %v5987 = vadd.f32 %v5322, %v5986
    %v5988 = vpop.f32.mrf.mxu0
    %v5989 = vadd.f32 %v5324, %v5988
    %5990 = vmatprep.mubr.f32.mxu0 0.0
    %5991 = vmatmul.mubr.f32.gmra.mxu0 %v3440
    %v5992 = vpop.f32.mrf.mxu0
    %v5993 = vadd.f32 %v5328, %v5992
    %v5994 = vpop.f32.mrf.mxu0
    %v5995 = vadd.f32 %v5330, %v5994
    %5996 = vmatprep.mubr.f32.mxu0 0.0
    %5997 = vmatmul.mubr.f32.gmra.mxu0 %v3443
    %v5998 = vpop.f32.mrf.mxu0
    %v5999 = vadd.f32 %v5334, %v5998
    %v6000 = vpop.f32.mrf.mxu0
    %v6001 = vadd.f32 %v5336, %v6000
    %6002 = vmatprep.mubr.f32.mxu0 0.0
    %6003 = vmatmul.mubr.f32.gmra.mxu0 %v3446
    %v6004 = vpop.f32.mrf.mxu0
    %v6005 = vadd.f32 %v5340, %v6004
    %v6006 = vpop.f32.mrf.mxu0
    %v6007 = vadd.f32 %v5342, %v6006
    %6008 = vmatprep.mubr.f32.mxu0 0.0
    %6009 = vmatmul.mubr.f32.gmra.mxu0 %v3449
    %v6010 = vpop.f32.mrf.mxu0
    %v6011 = vadd.f32 %v5346, %v6010
    %v6012 = vpop.f32.mrf.mxu0
    %v6013 = vadd.f32 %v5348, %v6012
    %6014 = vmatprep.mubr.f32.mxu0 0.0
    %6015 = vmatmul.mubr.f32.gmra.mxu0 %v3452
    %v6016 = vpop.f32.mrf.mxu0
    %v6017 = vadd.f32 %v5352, %v6016
    %v6018 = vpop.f32.mrf.mxu0
    %v6019 = vadd.f32 %v5354, %v6018
    %6020 = vmatprep.mubr.f32.mxu0 0.0
    %6021 = vmatmul.mubr.f32.gmra.mxu0 %v3455
    %v6022 = vpop.f32.mrf.mxu0
    %v6023 = vadd.f32 %v5358, %v6022
    %v6024 = vpop.f32.mrf.mxu0
    %v6025 = vadd.f32 %v5360, %v6024
    %6026 = vmatprep.mubr.f32.mxu0 0.0
    %6027 = vmatmul.mubr.f32.gmra.mxu0 %v3458
    %v6028 = vpop.f32.mrf.mxu0
    %v6029 = vadd.f32 %v5364, %v6028
    %v6030 = vpop.f32.mrf.mxu0
    %v6031 = vadd.f32 %v5366, %v6030
    %6032 = vmatprep.mubr.f32.mxu0 0.0
    %6033 = vmatmul.mubr.f32.gmra.mxu0 %v3461
    %v6034 = vpop.f32.mrf.mxu0
    %v6035 = vadd.f32 %v5370, %v6034
    %v6036 = vpop.f32.mrf.mxu0
    %v6037 = vadd.f32 %v5372, %v6036
    %6038 = vmatprep.mubr.f32.mxu0 0.0
    %6039 = vmatmul.mubr.f32.gmra.mxu0 %v3464
    %v6040 = vpop.f32.mrf.mxu0
    %v6041 = vadd.f32 %v5376, %v6040
    %v6042 = vpop.f32.mrf.mxu0
    %v6043 = vadd.f32 %v5378, %v6042
    %6044 = vmatprep.mubr.f32.mxu0 0.0
    %6045 = vmatmul.mubr.f32.gmra.mxu0 %v3467
    %v6046 = vpop.f32.mrf.mxu0
    %v6047 = vadd.f32 %v5382, %v6046
    %v6048 = vpop.f32.mrf.mxu0
    %v6049 = vadd.f32 %v5384, %v6048
    %6050 = vmatprep.mubr.f32.mxu0 0.0
    %6051 = vmatmul.mubr.f32.gmra.mxu0 %v3470
    %v6052 = vpop.f32.mrf.mxu0
    %v6053 = vadd.f32 %v5388, %v6052
    %v6054 = vpop.f32.mrf.mxu0
    %v6055 = vadd.f32 %v5390, %v6054
    %6056 = vmatprep.mubr.f32.mxu0 0.0
    %6057 = vmatmul.mubr.f32.gmra.mxu0 %v3473
    %v6058 = vpop.f32.mrf.mxu0
    %v6059 = vadd.f32 %v5394, %v6058
    %v6060 = vpop.f32.mrf.mxu0
    %v6061 = vadd.f32 %v5396, %v6060
    %6062 = vmatprep.mubr.f32.mxu0 0.0
    %6063 = vmatmul.mubr.f32.gmra.mxu0 %v3476
    %v6064 = vpop.f32.mrf.mxu0
    %v6065 = vadd.f32 %v5400, %v6064
    %v6066 = vpop.f32.mrf.mxu0
    %v6067 = vadd.f32 %v5402, %v6066
    %6068 = vmatprep.mubr.f32.mxu0 0.0
    %6069 = vmatmul.mubr.f32.gmra.mxu0 %v3479
    %v6070 = vpop.f32.mrf.mxu0
    %v6071 = vadd.f32 %v5406, %v6070
    %v6072 = vpop.f32.mrf.mxu0
    %v6073 = vadd.f32 %v5408, %v6072
    %6074 = vmatprep.mubr.f32.mxu0 0.0
    %6075 = vmatmul.mubr.f32.gmra.mxu0 %v3482
    %v6076 = vpop.f32.mrf.mxu0
    %v6077 = vadd.f32 %v5412, %v6076
    %v6078 = vpop.f32.mrf.mxu0
    %v6079 = vadd.f32 %v5414, %v6078
    %6080 = vmatprep.mubr.f32.mxu0 0.0
    %6081 = vmatmul.mubr.f32.gmra.mxu0 %v3485
    %v6082 = vpop.f32.mrf.mxu0
    %v6083 = vadd.f32 %v5418, %v6082
    %v6084 = vpop.f32.mrf.mxu0
    %v6085 = vadd.f32 %v5420, %v6084
    %6086 = vmatprep.mubr.f32.mxu0 0.0
    %6087 = vmatmul.mubr.f32.gmra.mxu0 %v3488
    %v6088 = vpop.f32.mrf.mxu0
    %v6089 = vadd.f32 %v5424, %v6088
    %v6090 = vpop.f32.mrf.mxu0
    %v6091 = vadd.f32 %v5426, %v6090
    %6092 = vmatprep.mubr.f32.mxu0 0.0
    %6093 = vmatmul.mubr.f32.gmra.mxu0 %v3491
    %v6094 = vpop.f32.mrf.mxu0
    %v6095 = vadd.f32 %v5430, %v6094
    %v6096 = vpop.f32.mrf.mxu0
    %v6097 = vadd.f32 %v5432, %v6096
    %6098 = vmatprep.mubr.f32.mxu0 0.0
    %6099 = vmatmul.mubr.f32.gmra.mxu0 %v3494
    %v6100 = vpop.f32.mrf.mxu0
    %v6101 = vadd.f32 %v5436, %v6100
    %v6102 = vpop.f32.mrf.mxu0
    %v6103 = vadd.f32 %v5438, %v6102
    %6104 = vmatprep.mubr.f32.mxu0 0.0
    %6105 = vmatmul.mubr.f32.gmra.mxu0 %v3497
    %v6106 = vpop.f32.mrf.mxu0
    %v6107 = vadd.f32 %v5442, %v6106
    %v6108 = vpop.f32.mrf.mxu0
    %v6109 = vadd.f32 %v5444, %v6108
    %6110 = vmatprep.mubr.f32.mxu0 0.0
    %6111 = vmatmul.mubr.f32.gmra.mxu0 %v3500
    %v6112 = vpop.f32.mrf.mxu0
    %v6113 = vadd.f32 %v5448, %v6112
    %v6114 = vpop.f32.mrf.mxu0
    %v6115 = vadd.f32 %v5450, %v6114
    %6116 = vmatprep.mubr.f32.mxu0 0.0
    %6117 = vmatmul.mubr.f32.gmra.mxu0 %v3503
    %v6118 = vpop.f32.mrf.mxu0
    %v6119 = vadd.f32 %v5454, %v6118
    %v6120 = vpop.f32.mrf.mxu0
    %v6121 = vadd.f32 %v5456, %v6120
    %6122 = vmatprep.mubr.f32.mxu0 0.0
    %6123 = vmatmul.mubr.f32.gmra.mxu0 %v3506
    %v6124 = vpop.f32.mrf.mxu0
    %v6125 = vadd.f32 %v5460, %v6124
    %v6126 = vpop.f32.mrf.mxu0
    %v6127 = vadd.f32 %v5462, %v6126
    %6128 = vmatprep.mubr.f32.mxu0 0.0
    %6129 = vmatmul.mubr.f32.gmra.mxu0 %v3509
    %v6130 = vpop.f32.mrf.mxu0
    %v6131 = vadd.f32 %v5466, %v6130
    %v6132 = vpop.f32.mrf.mxu0
    %v6133 = vadd.f32 %v5468, %v6132
    %6134 = vmatprep.mubr.f32.mxu0 0.0
    %6135 = vmatmul.mubr.f32.gmra.mxu0 %v3512
    %v6136 = vpop.f32.mrf.mxu0
    %v6137 = vadd.f32 %v5472, %v6136
    %v6138 = vpop.f32.mrf.mxu0
    %v6139 = vadd.f32 %v5474, %v6138
    %6140 = vmatprep.mubr.f32.mxu0 0.0
    %6141 = vmatmul.mubr.f32.gmra.mxu0 %v3515
    %v6142 = vpop.f32.mrf.mxu0
    %v6143 = vadd.f32 %v5478, %v6142
    %v6144 = vpop.f32.mrf.mxu0
    %v6145 = vadd.f32 %v5480, %v6144
    %6146 = vmatprep.mubr.f32.mxu0 0.0
    %6147 = vmatmul.mubr.f32.gmra.mxu0 %v3518
    %v6148 = vpop.f32.mrf.mxu0
    %v6149 = vadd.f32 %v5484, %v6148
    %v6150 = vpop.f32.mrf.mxu0
    %v6151 = vadd.f32 %v5486, %v6150
    %6152 = vmatprep.mubr.f32.mxu0 0.0
    %6153 = vmatmul.mubr.f32.gmra.mxu0 %v3521
    %v6154 = vpop.f32.mrf.mxu0
    %v6155 = vadd.f32 %v5490, %v6154
    %v6156 = vpop.f32.mrf.mxu0
    %v6157 = vadd.f32 %v5492, %v6156
    %6158 = vmatprep.mubr.f32.mxu0 0.0
    %6159 = vmatmul.mubr.f32.gmra.mxu0 %v3524
    %v6160 = vpop.f32.mrf.mxu0
    %v6161 = vadd.f32 %v5496, %v6160
    %v6162 = vpop.f32.mrf.mxu0
    %v6163 = vadd.f32 %v5498, %v6162
    %6164 = vmatprep.mubr.f32.mxu0 0.0
    %6165 = vmatmul.mubr.f32.gmra.mxu0 %v3527
    %v6166 = vpop.f32.mrf.mxu0
    %v6167 = vadd.f32 %v5502, %v6166
    %v6168 = vpop.f32.mrf.mxu0
    %v6169 = vadd.f32 %v5504, %v6168
    %6170 = vmatprep.mubr.f32.mxu0 0.0
    %6171 = vmatmul.mubr.f32.gmra.mxu0 %v3530
    %v6172 = vpop.f32.mrf.mxu0
    %v6173 = vadd.f32 %v5508, %v6172
    %v6174 = vpop.f32.mrf.mxu0
    %v6175 = vadd.f32 %v5510, %v6174
    %6176 = vmatprep.mubr.f32.mxu0 0.0
    %6177 = vmatmul.mubr.f32.gmra.mxu0 %v3533
    %v6178 = vpop.f32.mrf.mxu0
    %v6179 = vadd.f32 %v5514, %v6178
    %v6180 = vpop.f32.mrf.mxu0
    %v6181 = vadd.f32 %v5516, %v6180
    %6182 = vmatprep.mubr.f32.mxu0 0.0
    %6183 = vmatmul.mubr.f32.gmra.mxu0 %v3536
    %v6184 = vpop.f32.mrf.mxu0
    %v6185 = vadd.f32 %v5520, %v6184
    %v6186 = vpop.f32.mrf.mxu0
    %v6187 = vadd.f32 %v5522, %v6186
    %6188 = vmatprep.mubr.f32.mxu0 0.0
    %6189 = vmatmul.mubr.f32.gmra.mxu0 %v3539
    %v6190 = vpop.f32.mrf.mxu0
    %v6191 = vadd.f32 %v5526, %v6190
    %v6192 = vpop.f32.mrf.mxu0
    %v6193 = vadd.f32 %v5528, %v6192
    %6194 = vmatprep.mubr.f32.mxu0 0.0
    %6195 = vmatmul.mubr.f32.gmra.mxu0 %v3542
    %v6196 = vpop.f32.mrf.mxu0
    %v6197 = vadd.f32 %v5532, %v6196
    %v6198 = vpop.f32.mrf.mxu0
    %v6199 = vadd.f32 %v5534, %v6198
    %6200 = vmatprep.mubr.f32.mxu0 0.0
    %6201 = vmatmul.mubr.f32.gmra.mxu0 %v3545
    %v6202 = vpop.f32.mrf.mxu0
    %v6203 = vadd.f32 %v5538, %v6202
    %v6204 = vpop.f32.mrf.mxu0
    %v6205 = vadd.f32 %v5540, %v6204
    %6206 = vdwg.mxu0
    %v6207 = vmax.f32 %v5609, 0.0
    %v6208 = vmax.f32 %v5611, 0.0
    %v6209 = vmax.f32 %v5615, 0.0
    %v6210 = vmax.f32 %v5617, 0.0
    %v6211 = vmax.f32 %v5621, 0.0
    %v6212 = vmax.f32 %v5623, 0.0
    %v6213 = vmax.f32 %v5627, 0.0
    %v6214 = vmax.f32 %v5629, 0.0
    %v6215 = vmax.f32 %v5633, 0.0
    %v6216 = vmax.f32 %v5635, 0.0
    %v6217 = vmax.f32 %v5639, 0.0
    %v6218 = vmax.f32 %v5641, 0.0
    %v6219 = vmax.f32 %v5645, 0.0
    %v6220 = vmax.f32 %v5647, 0.0
    %v6221 = vmax.f32 %v5651, 0.0
    %v6222 = vmax.f32 %v5653, 0.0
    %v6223 = vmax.f32 %v5657, 0.0
    %v6224 = vmax.f32 %v5659, 0.0
    %v6225 = vmax.f32 %v5663, 0.0
    %v6226 = vmax.f32 %v5665, 0.0
    %v6227 = vmax.f32 %v5669, 0.0
    %v6228 = vmax.f32 %v5671, 0.0
    %v6229 = vmax.f32 %v5675, 0.0
    %v6230 = vmax.f32 %v5677, 0.0
    %v6231 = vmax.f32 %v5681, 0.0
    %v6232 = vmax.f32 %v5683, 0.0
    %v6233 = vmax.f32 %v5687, 0.0
    %v6234 = vmax.f32 %v5689, 0.0
    %v6235 = vmax.f32 %v5693, 0.0
    %v6236 = vmax.f32 %v5695, 0.0
    %v6237 = vmax.f32 %v5699, 0.0
    %v6238 = vmax.f32 %v5701, 0.0
    %v6239 = vmax.f32 %v5705, 0.0
    %v6240 = vmax.f32 %v5707, 0.0
    %v6241 = vmax.f32 %v5711, 0.0
    %v6242 = vmax.f32 %v5713, 0.0
    %v6243 = vmax.f32 %v5717, 0.0
    %v6244 = vmax.f32 %v5719, 0.0
    %v6245 = vmax.f32 %v5723, 0.0
    %v6246 = vmax.f32 %v5725, 0.0
    %v6247 = vmax.f32 %v5729, 0.0
    %v6248 = vmax.f32 %v5731, 0.0
    %v6249 = vmax.f32 %v5735, 0.0
    %v6250 = vmax.f32 %v5737, 0.0
    %v6251 = vmax.f32 %v5741, 0.0
    %v6252 = vmax.f32 %v5743, 0.0
    %v6253 = vmax.f32 %v5747, 0.0
    %v6254 = vmax.f32 %v5749, 0.0
    %v6255 = vmax.f32 %v5753, 0.0
    %v6256 = vmax.f32 %v5755, 0.0
    %v6257 = vmax.f32 %v5759, 0.0
    %v6258 = vmax.f32 %v5761, 0.0
    %v6259 = vmax.f32 %v5765, 0.0
    %v6260 = vmax.f32 %v5767, 0.0
    %v6261 = vmax.f32 %v5771, 0.0
    %v6262 = vmax.f32 %v5773, 0.0
    %v6263 = vmax.f32 %v5777, 0.0
    %v6264 = vmax.f32 %v5779, 0.0
    %v6265 = vmax.f32 %v5783, 0.0
    %v6266 = vmax.f32 %v5785, 0.0
    %v6267 = vmax.f32 %v5789, 0.0
    %v6268 = vmax.f32 %v5791, 0.0
    %v6269 = vmax.f32 %v5795, 0.0
    %v6270 = vmax.f32 %v5797, 0.0
    %v6271 = vmax.f32 %v5801, 0.0
    %v6272 = vmax.f32 %v5803, 0.0
    %v6273 = vmax.f32 %v5807, 0.0
    %v6274 = vmax.f32 %v5809, 0.0
    %v6275 = vmax.f32 %v5813, 0.0
    %v6276 = vmax.f32 %v5815, 0.0
    %v6277 = vmax.f32 %v5819, 0.0
    %v6278 = vmax.f32 %v5821, 0.0
    %v6279 = vmax.f32 %v5825, 0.0
    %v6280 = vmax.f32 %v5827, 0.0
    %v6281 = vmax.f32 %v5831, 0.0
    %v6282 = vmax.f32 %v5833, 0.0
    %v6283 = vmax.f32 %v5837, 0.0
    %v6284 = vmax.f32 %v5839, 0.0
    %v6285 = vmax.f32 %v5843, 0.0
    %v6286 = vmax.f32 %v5845, 0.0
    %v6287 = vmax.f32 %v5849, 0.0
    %v6288 = vmax.f32 %v5851, 0.0
    %v6289 = vmax.f32 %v5855, 0.0
    %v6290 = vmax.f32 %v5857, 0.0
    %v6291 = vmax.f32 %v5861, 0.0
    %v6292 = vmax.f32 %v5863, 0.0
    %v6293 = vmax.f32 %v5867, 0.0
    %v6294 = vmax.f32 %v5869, 0.0
    %v6295 = vmax.f32 %v5873, 0.0
    %v6296 = vmax.f32 %v5875, 0.0
    %v6297 = vmax.f32 %v5879, 0.0
    %v6298 = vmax.f32 %v5881, 0.0
    %v6299 = vmax.f32 %v5885, 0.0
    %v6300 = vmax.f32 %v5887, 0.0
    %v6301 = vmax.f32 %v5891, 0.0
    %v6302 = vmax.f32 %v5893, 0.0
    %v6303 = vmax.f32 %v5897, 0.0
    %v6304 = vmax.f32 %v5899, 0.0
    %v6305 = vmax.f32 %v5903, 0.0
    %v6306 = vmax.f32 %v5905, 0.0
    %v6307 = vmax.f32 %v5909, 0.0
    %v6308 = vmax.f32 %v5911, 0.0
    %v6309 = vmax.f32 %v5915, 0.0
    %v6310 = vmax.f32 %v5917, 0.0
    %v6311 = vmax.f32 %v5921, 0.0
    %v6312 = vmax.f32 %v5923, 0.0
    %v6313 = vmax.f32 %v5927, 0.0
    %v6314 = vmax.f32 %v5929, 0.0
    %v6315 = vmax.f32 %v5933, 0.0
    %v6316 = vmax.f32 %v5935, 0.0
    %v6317 = vmax.f32 %v5939, 0.0
    %v6318 = vmax.f32 %v5941, 0.0
    %v6319 = vmax.f32 %v5945, 0.0
    %v6320 = vmax.f32 %v5947, 0.0
    %v6321 = vmax.f32 %v5951, 0.0
    %v6322 = vmax.f32 %v5953, 0.0
    %v6323 = vmax.f32 %v5957, 0.0
    %v6324 = vmax.f32 %v5959, 0.0
    %v6325 = vmax.f32 %v5963, 0.0
    %v6326 = vmax.f32 %v5965, 0.0
    %v6327 = vmax.f32 %v5969, 0.0
    %v6328 = vmax.f32 %v5971, 0.0
    %v6329 = vmax.f32 %v5975, 0.0
    %v6330 = vmax.f32 %v5977, 0.0
    %v6331 = vmax.f32 %v5981, 0.0
    %v6332 = vmax.f32 %v5983, 0.0
    %v6333 = vmax.f32 %v5987, 0.0
    %v6334 = vmax.f32 %v5989, 0.0
    %v6335 = vmax.f32 %v5993, 0.0
    %v6336 = vmax.f32 %v5995, 0.0
    %v6337 = vmax.f32 %v5999, 0.0
    %v6338 = vmax.f32 %v6001, 0.0
    %v6339 = vmax.f32 %v6005, 0.0
    %v6340 = vmax.f32 %v6007, 0.0
    %v6341 = vmax.f32 %v6011, 0.0
    %v6342 = vmax.f32 %v6013, 0.0
    %v6343 = vmax.f32 %v6017, 0.0
    %v6344 = vmax.f32 %v6019, 0.0
    %v6345 = vmax.f32 %v6023, 0.0
    %v6346 = vmax.f32 %v6025, 0.0
    %v6347 = vmax.f32 %v6029, 0.0
    %v6348 = vmax.f32 %v6031, 0.0
    %v6349 = vmax.f32 %v6035, 0.0
    %v6350 = vmax.f32 %v6037, 0.0
    %v6351 = vmax.f32 %v6041, 0.0
    %v6352 = vmax.f32 %v6043, 0.0
    %v6353 = vmax.f32 %v6047, 0.0
    %v6354 = vmax.f32 %v6049, 0.0
    %v6355 = vmax.f32 %v6053, 0.0
    %v6356 = vmax.f32 %v6055, 0.0
    %v6357 = vmax.f32 %v6059, 0.0
    %v6358 = vmax.f32 %v6061, 0.0
    %v6359 = vmax.f32 %v6065, 0.0
    %v6360 = vmax.f32 %v6067, 0.0
    %v6361 = vmax.f32 %v6071, 0.0
    %v6362 = vmax.f32 %v6073, 0.0
    %v6363 = vmax.f32 %v6077, 0.0
    %v6364 = vmax.f32 %v6079, 0.0
    %v6365 = vmax.f32 %v6083, 0.0
    %v6366 = vmax.f32 %v6085, 0.0
    %v6367 = vmax.f32 %v6089, 0.0
    %v6368 = vmax.f32 %v6091, 0.0
    %v6369 = vmax.f32 %v6095, 0.0
    %v6370 = vmax.f32 %v6097, 0.0
    %v6371 = vmax.f32 %v6101, 0.0
    %v6372 = vmax.f32 %v6103, 0.0
    %v6373 = vmax.f32 %v6107, 0.0
    %v6374 = vmax.f32 %v6109, 0.0
    %v6375 = vmax.f32 %v6113, 0.0
    %v6376 = vmax.f32 %v6115, 0.0
    %v6377 = vmax.f32 %v6119, 0.0
    %v6378 = vmax.f32 %v6121, 0.0
    %v6379 = vmax.f32 %v6125, 0.0
    %v6380 = vmax.f32 %v6127, 0.0
    %v6381 = vmax.f32 %v6131, 0.0
    %v6382 = vmax.f32 %v6133, 0.0
    %v6383 = vmax.f32 %v6137, 0.0
    %v6384 = vmax.f32 %v6139, 0.0
    %v6385 = vmax.f32 %v6143, 0.0
    %v6386 = vmax.f32 %v6145, 0.0
    %v6387 = vmax.f32 %v6149, 0.0
    %v6388 = vmax.f32 %v6151, 0.0
    %v6389 = vmax.f32 %v6155, 0.0
    %v6390 = vmax.f32 %v6157, 0.0
    %v6391 = vmax.f32 %v6161, 0.0
    %v6392 = vmax.f32 %v6163, 0.0
    %v6393 = vmax.f32 %v6167, 0.0
    %v6394 = vmax.f32 %v6169, 0.0
    %v6395 = vmax.f32 %v6173, 0.0
    %v6396 = vmax.f32 %v6175, 0.0
    %v6397 = vmax.f32 %v6179, 0.0
    %v6398 = vmax.f32 %v6181, 0.0
    %v6399 = vmax.f32 %v6185, 0.0
    %v6400 = vmax.f32 %v6187, 0.0
    %v6401 = vmax.f32 %v6191, 0.0
    %v6402 = vmax.f32 %v6193, 0.0
    %v6403 = vmax.f32 %v6197, 0.0
    %v6404 = vmax.f32 %v6199, 0.0
    %v6405 = vmax.f32 %v6203, 0.0
    %v6406 = vmax.f32 %v6205, 0.0
    %v6407 = vld [vmem:[#allocation6] sm:$0xff]
    %v6408 = vld [vmem:[#allocation6 + $0x8] sm:$0xff]
    %v6409 = vld [vmem:[#allocation6 + $0x10] sm:$0xff]
    %v6410 = vld [vmem:[#allocation6 + $0x18] sm:$0xff]
    %v6411 = vld [vmem:[#allocation6 + $0x20] sm:$0xff]
    %v6412 = vld [vmem:[#allocation6 + $0x28] sm:$0xff]
    %v6413 = vld [vmem:[#allocation6 + $0x30] sm:$0xff]
    %v6414 = vld [vmem:[#allocation6 + $0x38] sm:$0xff]
    %v6415 = vld [vmem:[#allocation6 + $0x40] sm:$0xff]
    %v6416 = vld [vmem:[#allocation6 + $0x48] sm:$0xff]
    %v6417 = vld [vmem:[#allocation6 + $0x50] sm:$0xff]
    %v6418 = vld [vmem:[#allocation6 + $0x58] sm:$0xff]
    %v6419 = vld [vmem:[#allocation6 + $0x60] sm:$0xff]
    %v6420 = vld [vmem:[#allocation6 + $0x68] sm:$0xff]
    %v6421 = vld [vmem:[#allocation6 + $0x70] sm:$0xff]
    %v6422 = vld [vmem:[#allocation6 + $0x78] sm:$0xff]
    %v6423 = vld [vmem:[#allocation6 + $0x80] sm:$0xff]
    %v6424 = vld [vmem:[#allocation6 + $0x88] sm:$0xff]
    %v6425 = vld [vmem:[#allocation6 + $0x90] sm:$0xff]
    %v6426 = vld [vmem:[#allocation6 + $0x98] sm:$0xff]
    %v6427 = vld [vmem:[#allocation6 + $0xa0] sm:$0xff]
    %v6428 = vld [vmem:[#allocation6 + $0xa8] sm:$0xff]
    %v6429 = vld [vmem:[#allocation6 + $0xb0] sm:$0xff]
    %v6430 = vld [vmem:[#allocation6 + $0xb8] sm:$0xff]
    %v6431 = vld [vmem:[#allocation6 + $0xc0] sm:$0xff]
    %v6432 = vld [vmem:[#allocation6 + $0xc8] sm:$0xff]
    %v6433 = vld [vmem:[#allocation6 + $0xd0] sm:$0xff]
    %v6434 = vld [vmem:[#allocation6 + $0xd8] sm:$0xff]
    %v6435 = vld [vmem:[%s7] sm:$0xff]
    %v6436 = vld [vmem:[%s7 + $0x8] sm:$0xff]
    %v6437 = vld [vmem:[%s7 + $0x10] sm:$0xff]
    %v6438 = vld [vmem:[%s7 + $0x18] sm:$0xff]
    %6440 = vset.pattern.permute.xlu0 0
    %6441 = vperm.xlu0 %6440, %v6435
    %v6442 = vpop.permute.xlu0 %6441
    %6445 = vset.pattern.permute.xlu0 0
    %6446 = vperm.xlu0 %6445, %v6436
    %v6447 = vpop.permute.xlu0 %6446
    %6450 = vset.pattern.permute.xlu0 0
    %6451 = vperm.xlu0 %6450, %v6437
    %v6452 = vpop.permute.xlu0 %6451
    %6455 = vset.pattern.permute.xlu0 0
    %6456 = vperm.xlu0 %6455, %v6438
    %v6457 = vpop.permute.xlu0 %6456
    %vm6459 = vcmask 261120
    %v6461 = vsel %vm6459, %v6413, 0
    %v6464 = vsel %vm6459, %v6420, 0
    %v6467 = vsel %vm6459, %v6427, 0
    %v6470 = vsel %vm6459, %v6434, 0
    %6472 = vmatprep.subr.mxu0 %v6238
    %6473 = vmatpush1.msra.mxu0 %v6237
    %6474 = vmatprep.subr.mxu0 %v6236
    %6475 = vmatpush1.msra.mxu0 %v6235
    %6476 = vmatprep.subr.mxu0 %v6234
    %6477 = vmatpush1.msra.mxu0 %v6233
    %6478 = vmatprep.subr.mxu0 %v6232
    %6479 = vmatpush1.msra.mxu0 %v6231
    %6480 = vmatprep.subr.mxu0 %v6230
    %6481 = vmatpush1.msra.mxu0 %v6229
    %6482 = vmatprep.subr.mxu0 %v6228
    %6483 = vmatpush1.msra.mxu0 %v6227
    %6484 = vmatprep.subr.mxu0 %v6226
    %6485 = vmatpush1.msra.mxu0 %v6225
    %6486 = vmatprep.subr.mxu0 %v6224
    %6487 = vmatpush1.msra.mxu0 %v6223
    %6488 = vmatprep.subr.mxu0 %v6222
    %6489 = vmatpush1.msra.mxu0 %v6221
    %6490 = vmatprep.subr.mxu0 %v6220
    %6491 = vmatpush1.msra.mxu0 %v6219
    %6492 = vmatprep.subr.mxu0 %v6218
    %6493 = vmatpush1.msra.mxu0 %v6217
    %6494 = vmatprep.subr.mxu0 %v6216
    %6495 = vmatpush1.msra.mxu0 %v6215
    %6496 = vmatprep.subr.mxu0 %v6214
    %6497 = vmatpush1.msra.mxu0 %v6213
    %6498 = vmatprep.subr.mxu0 %v6212
    %6499 = vmatpush1.msra.mxu0 %v6211
    %6500 = vmatprep.subr.mxu0 %v6210
    %6501 = vmatpush1.msra.mxu0 %v6209
    %6502 = vmatprep.subr.mxu0 %v6208
    %6503 = vmatpush1.msra.mxu0 %v6207
    %6504 = vmatprep.subr.mxu0 %v6270
    %6505 = vmatpush2.msra.mxu0 %v6269
    %6506 = vmatprep.subr.mxu0 %v6268
    %6507 = vmatpush2.msra.mxu0 %v6267
    %6508 = vmatprep.subr.mxu0 %v6266
    %6509 = vmatpush2.msra.mxu0 %v6265
    %6510 = vmatprep.subr.mxu0 %v6264
    %6511 = vmatpush2.msra.mxu0 %v6263
    %6512 = vmatprep.subr.mxu0 %v6262
    %6513 = vmatpush2.msra.mxu0 %v6261
    %6514 = vmatprep.subr.mxu0 %v6260
    %6515 = vmatpush2.msra.mxu0 %v6259
    %6516 = vmatprep.subr.mxu0 %v6258
    %6517 = vmatpush2.msra.mxu0 %v6257
    %6518 = vmatprep.subr.mxu0 %v6256
    %6519 = vmatpush2.msra.mxu0 %v6255
    %6520 = vmatprep.subr.mxu0 %v6254
    %6521 = vmatpush2.msra.mxu0 %v6253
    %6522 = vmatprep.subr.mxu0 %v6252
    %6523 = vmatpush2.msra.mxu0 %v6251
    %6524 = vmatprep.subr.mxu0 %v6250
    %6525 = vmatpush2.msra.mxu0 %v6249
    %6526 = vmatprep.subr.mxu0 %v6248
    %6527 = vmatpush2.msra.mxu0 %v6247
    %6528 = vmatprep.subr.mxu0 %v6246
    %6529 = vmatpush2.msra.mxu0 %v6245
    %6530 = vmatprep.subr.mxu0 %v6244
    %6531 = vmatpush2.msra.mxu0 %v6243
    %6532 = vmatprep.subr.mxu0 %v6242
    %6533 = vmatpush2.msra.mxu0 %v6241
    %6534 = vmatprep.subr.mxu0 %v6240
    %6535 = vmatpush2.msra.mxu0 %v6239
    %6536 = vmatprep.mubr.f32.mxu0 %v6408
    %6537 = vmatmul.mubr.f32.gmra.mxu0 %v6407
    %v6538 = vpop.f32.mrf.mxu0
    %v6539 = vadd.f32 %v6442, %v6538
    %v6540 = vpop.f32.mrf.mxu0
    %v6541 = vadd.f32 %v6442, %v6540
    %6542 = vmatprep.mubr.f32.mxu0 %v6415
    %6543 = vmatmul.mubr.f32.gmra.mxu0 %v6414
    %v6544 = vpop.f32.mrf.mxu0
    %v6545 = vadd.f32 %v6447, %v6544
    %v6546 = vpop.f32.mrf.mxu0
    %v6547 = vadd.f32 %v6447, %v6546
    %6548 = vmatprep.mubr.f32.mxu0 %v6422
    %6549 = vmatmul.mubr.f32.gmra.mxu0 %v6421
    %v6550 = vpop.f32.mrf.mxu0
    %v6551 = vadd.f32 %v6452, %v6550
    %v6552 = vpop.f32.mrf.mxu0
    %v6553 = vadd.f32 %v6452, %v6552
    %6554 = vmatprep.mubr.f32.mxu0 %v6429
    %6555 = vmatmul.mubr.f32.gmra.mxu0 %v6428
    %v6556 = vpop.f32.mrf.mxu0
    %v6557 = vadd.f32 %v6457, %v6556
    %v6558 = vpop.f32.mrf.mxu0
    %v6559 = vadd.f32 %v6457, %v6558
    %6560 = vdwg.mxu0
    %6561 = vmatprep.subr.mxu0 %v6302
    %6562 = vmatpush1.msra.mxu0 %v6301
    %6563 = vmatprep.subr.mxu0 %v6300
    %6564 = vmatpush1.msra.mxu0 %v6299
    %6565 = vmatprep.subr.mxu0 %v6298
    %6566 = vmatpush1.msra.mxu0 %v6297
    %6567 = vmatprep.subr.mxu0 %v6296
    %6568 = vmatpush1.msra.mxu0 %v6295
    %6569 = vmatprep.subr.mxu0 %v6294
    %6570 = vmatpush1.msra.mxu0 %v6293
    %6571 = vmatprep.subr.mxu0 %v6292
    %6572 = vmatpush1.msra.mxu0 %v6291
    %6573 = vmatprep.subr.mxu0 %v6290
    %6574 = vmatpush1.msra.mxu0 %v6289
    %6575 = vmatprep.subr.mxu0 %v6288
    %6576 = vmatpush1.msra.mxu0 %v6287
    %6577 = vmatprep.subr.mxu0 %v6286
    %6578 = vmatpush1.msra.mxu0 %v6285
    %6579 = vmatprep.subr.mxu0 %v6284
    %6580 = vmatpush1.msra.mxu0 %v6283
    %6581 = vmatprep.subr.mxu0 %v6282
    %6582 = vmatpush1.msra.mxu0 %v6281
    %6583 = vmatprep.subr.mxu0 %v6280
    %6584 = vmatpush1.msra.mxu0 %v6279
    %6585 = vmatprep.subr.mxu0 %v6278
    %6586 = vmatpush1.msra.mxu0 %v6277
    %6587 = vmatprep.subr.mxu0 %v6276
    %6588 = vmatpush1.msra.mxu0 %v6275
    %6589 = vmatprep.subr.mxu0 %v6274
    %6590 = vmatpush1.msra.mxu0 %v6273
    %6591 = vmatprep.subr.mxu0 %v6272
    %6592 = vmatpush1.msra.mxu0 %v6271
    %6593 = vmatprep.subr.mxu0 %v6334
    %6594 = vmatpush2.msra.mxu0 %v6333
    %6595 = vmatprep.subr.mxu0 %v6332
    %6596 = vmatpush2.msra.mxu0 %v6331
    %6597 = vmatprep.subr.mxu0 %v6330
    %6598 = vmatpush2.msra.mxu0 %v6329
    %6599 = vmatprep.subr.mxu0 %v6328
    %6600 = vmatpush2.msra.mxu0 %v6327
    %6601 = vmatprep.subr.mxu0 %v6326
    %6602 = vmatpush2.msra.mxu0 %v6325
    %6603 = vmatprep.subr.mxu0 %v6324
    %6604 = vmatpush2.msra.mxu0 %v6323
    %6605 = vmatprep.subr.mxu0 %v6322
    %6606 = vmatpush2.msra.mxu0 %v6321
    %6607 = vmatprep.subr.mxu0 %v6320
    %6608 = vmatpush2.msra.mxu0 %v6319
    %6609 = vmatprep.subr.mxu0 %v6318
    %6610 = vmatpush2.msra.mxu0 %v6317
    %6611 = vmatprep.subr.mxu0 %v6316
    %6612 = vmatpush2.msra.mxu0 %v6315
    %6613 = vmatprep.subr.mxu0 %v6314
    %6614 = vmatpush2.msra.mxu0 %v6313
    %6615 = vmatprep.subr.mxu0 %v6312
    %6616 = vmatpush2.msra.mxu0 %v6311
    %6617 = vmatprep.subr.mxu0 %v6310
    %6618 = vmatpush2.msra.mxu0 %v6309
    %6619 = vmatprep.subr.mxu0 %v6308
    %6620 = vmatpush2.msra.mxu0 %v6307
    %6621 = vmatprep.subr.mxu0 %v6306
    %6622 = vmatpush2.msra.mxu0 %v6305
    %6623 = vmatprep.subr.mxu0 %v6304
    %6624 = vmatpush2.msra.mxu0 %v6303
    %6625 = vmatprep.mubr.f32.mxu0 %v6410
    %6626 = vmatmul.mubr.f32.gmra.mxu0 %v6409
    %v6627 = vpop.f32.mrf.mxu0
    %v6628 = vadd.f32 %v6539, %v6627
    %v6629 = vpop.f32.mrf.mxu0
    %v6630 = vadd.f32 %v6541, %v6629
    %6631 = vmatprep.mubr.f32.mxu0 %v6417
    %6632 = vmatmul.mubr.f32.gmra.mxu0 %v6416
    %v6633 = vpop.f32.mrf.mxu0
    %v6634 = vadd.f32 %v6545, %v6633
    %v6635 = vpop.f32.mrf.mxu0
    %v6636 = vadd.f32 %v6547, %v6635
    %6637 = vmatprep.mubr.f32.mxu0 %v6424
    %6638 = vmatmul.mubr.f32.gmra.mxu0 %v6423
    %v6639 = vpop.f32.mrf.mxu0
    %v6640 = vadd.f32 %v6551, %v6639
    %v6641 = vpop.f32.mrf.mxu0
    %v6642 = vadd.f32 %v6553, %v6641
    %6643 = vmatprep.mubr.f32.mxu0 %v6431
    %6644 = vmatmul.mubr.f32.gmra.mxu0 %v6430
    %v6645 = vpop.f32.mrf.mxu0
    %v6646 = vadd.f32 %v6557, %v6645
    %v6647 = vpop.f32.mrf.mxu0
    %v6648 = vadd.f32 %v6559, %v6647
    %6649 = vdwg.mxu0
    %6650 = vmatprep.subr.mxu0 %v6366
    %6651 = vmatpush1.msra.mxu0 %v6365
    %6652 = vmatprep.subr.mxu0 %v6364
    %6653 = vmatpush1.msra.mxu0 %v6363
    %6654 = vmatprep.subr.mxu0 %v6362
    %6655 = vmatpush1.msra.mxu0 %v6361
    %6656 = vmatprep.subr.mxu0 %v6360
    %6657 = vmatpush1.msra.mxu0 %v6359
    %6658 = vmatprep.subr.mxu0 %v6358
    %6659 = vmatpush1.msra.mxu0 %v6357
    %6660 = vmatprep.subr.mxu0 %v6356
    %6661 = vmatpush1.msra.mxu0 %v6355
    %6662 = vmatprep.subr.mxu0 %v6354
    %6663 = vmatpush1.msra.mxu0 %v6353
    %6664 = vmatprep.subr.mxu0 %v6352
    %6665 = vmatpush1.msra.mxu0 %v6351
    %6666 = vmatprep.subr.mxu0 %v6350
    %6667 = vmatpush1.msra.mxu0 %v6349
    %6668 = vmatprep.subr.mxu0 %v6348
    %6669 = vmatpush1.msra.mxu0 %v6347
    %6670 = vmatprep.subr.mxu0 %v6346
    %6671 = vmatpush1.msra.mxu0 %v6345
    %6672 = vmatprep.subr.mxu0 %v6344
    %6673 = vmatpush1.msra.mxu0 %v6343
    %6674 = vmatprep.subr.mxu0 %v6342
    %6675 = vmatpush1.msra.mxu0 %v6341
    %6676 = vmatprep.subr.mxu0 %v6340
    %6677 = vmatpush1.msra.mxu0 %v6339
    %6678 = vmatprep.subr.mxu0 %v6338
    %6679 = vmatpush1.msra.mxu0 %v6337
    %6680 = vmatprep.subr.mxu0 %v6336
    %6681 = vmatpush1.msra.mxu0 %v6335
    %6682 = vmatprep.subr.mxu0 %v6398
    %6683 = vmatpush2.msra.mxu0 %v6397
    %6684 = vmatprep.subr.mxu0 %v6396
    %6685 = vmatpush2.msra.mxu0 %v6395
    %6686 = vmatprep.subr.mxu0 %v6394
    %6687 = vmatpush2.msra.mxu0 %v6393
    %6688 = vmatprep.subr.mxu0 %v6392
    %6689 = vmatpush2.msra.mxu0 %v6391
    %6690 = vmatprep.subr.mxu0 %v6390
    %6691 = vmatpush2.msra.mxu0 %v6389
    %6692 = vmatprep.subr.mxu0 %v6388
    %6693 = vmatpush2.msra.mxu0 %v6387
    %6694 = vmatprep.subr.mxu0 %v6386
    %6695 = vmatpush2.msra.mxu0 %v6385
    %6696 = vmatprep.subr.mxu0 %v6384
    %6697 = vmatpush2.msra.mxu0 %v6383
    %6698 = vmatprep.subr.mxu0 %v6382
    %6699 = vmatpush2.msra.mxu0 %v6381
    %6700 = vmatprep.subr.mxu0 %v6380
    %6701 = vmatpush2.msra.mxu0 %v6379
    %6702 = vmatprep.subr.mxu0 %v6378
    %6703 = vmatpush2.msra.mxu0 %v6377
    %6704 = vmatprep.subr.mxu0 %v6376
    %6705 = vmatpush2.msra.mxu0 %v6375
    %6706 = vmatprep.subr.mxu0 %v6374
    %6707 = vmatpush2.msra.mxu0 %v6373
    %6708 = vmatprep.subr.mxu0 %v6372
    %6709 = vmatpush2.msra.mxu0 %v6371
    %6710 = vmatprep.subr.mxu0 %v6370
    %6711 = vmatpush2.msra.mxu0 %v6369
    %6712 = vmatprep.subr.mxu0 %v6368
    %6713 = vmatpush2.msra.mxu0 %v6367
    %6714 = vmatprep.mubr.f32.mxu0 %v6412
    %6715 = vmatmul.mubr.f32.gmra.mxu0 %v6411
    %v6716 = vpop.f32.mrf.mxu0
    %v6717 = vadd.f32 %v6628, %v6716
    %v6718 = vpop.f32.mrf.mxu0
    %v6719 = vadd.f32 %v6630, %v6718
    %6720 = vmatprep.mubr.f32.mxu0 %v6419
    %6721 = vmatmul.mubr.f32.gmra.mxu0 %v6418
    %v6722 = vpop.f32.mrf.mxu0
    %v6723 = vadd.f32 %v6634, %v6722
    %v6724 = vpop.f32.mrf.mxu0
    %v6725 = vadd.f32 %v6636, %v6724
    %6726 = vmatprep.mubr.f32.mxu0 %v6426
    %6727 = vmatmul.mubr.f32.gmra.mxu0 %v6425
    %v6728 = vpop.f32.mrf.mxu0
    %v6729 = vadd.f32 %v6640, %v6728
    %v6730 = vpop.f32.mrf.mxu0
    %v6731 = vadd.f32 %v6642, %v6730
    %6732 = vmatprep.mubr.f32.mxu0 %v6433
    %6733 = vmatmul.mubr.f32.gmra.mxu0 %v6432
    %v6734 = vpop.f32.mrf.mxu0
    %v6735 = vadd.f32 %v6646, %v6734
    %v6736 = vpop.f32.mrf.mxu0
    %v6737 = vadd.f32 %v6648, %v6736
    %6738 = vdwg.mxu0
    %6739 = vmatprep.subr.mxu0 0.0
    %6740 = vmatpush1.msra.mxu0 0.0
    %6741 = vmatprep.subr.mxu0 0.0
    %6742 = vmatpush1.msra.mxu0 0.0
    %6743 = vmatprep.subr.mxu0 0.0
    %6744 = vmatpush1.msra.mxu0 0.0
    %6745 = vmatprep.subr.mxu0 0.0
    %6746 = vmatpush1.msra.mxu0 0.0
    %6747 = vmatprep.subr.mxu0 0.0
    %6748 = vmatpush1.msra.mxu0 0.0
    %6749 = vmatprep.subr.mxu0 0.0
    %6750 = vmatpush1.msra.mxu0 0.0
    %6751 = vmatprep.subr.mxu0 0.0
    %6752 = vmatpush1.msra.mxu0 0.0
    %6753 = vmatprep.subr.mxu0 0.0
    %6754 = vmatpush1.msra.mxu0 0.0
    %6755 = vmatprep.subr.mxu0 0.0
    %6756 = vmatpush1.msra.mxu0 0.0
    %6757 = vmatprep.subr.mxu0 0.0
    %6758 = vmatpush1.msra.mxu0 0.0
    %6759 = vmatprep.subr.mxu0 0.0
    %6760 = vmatpush1.msra.mxu0 0.0
    %6761 = vmatprep.subr.mxu0 0.0
    %6762 = vmatpush1.msra.mxu0 0.0
    %6763 = vmatprep.subr.mxu0 %v6406
    %6764 = vmatpush1.msra.mxu0 %v6405
    %6765 = vmatprep.subr.mxu0 %v6404
    %6766 = vmatpush1.msra.mxu0 %v6403
    %6767 = vmatprep.subr.mxu0 %v6402
    %6768 = vmatpush1.msra.mxu0 %v6401
    %6769 = vmatprep.subr.mxu0 %v6400
    %6770 = vmatpush1.msra.mxu0 %v6399
    %6771 = vmatprep.subr.mxu0 0.0
    %6772 = vmatpush2.msra.mxu0 0.0
    %6773 = vmatprep.subr.mxu0 0.0
    %6774 = vmatpush2.msra.mxu0 0.0
    %6775 = vmatprep.subr.mxu0 0.0
    %6776 = vmatpush2.msra.mxu0 0.0
    %6777 = vmatprep.subr.mxu0 0.0
    %6778 = vmatpush2.msra.mxu0 0.0
    %6779 = vmatprep.subr.mxu0 0.0
    %6780 = vmatpush2.msra.mxu0 0.0
    %6781 = vmatprep.subr.mxu0 0.0
    %6782 = vmatpush2.msra.mxu0 0.0
    %6783 = vmatprep.subr.mxu0 0.0
    %6784 = vmatpush2.msra.mxu0 0.0
    %6785 = vmatprep.subr.mxu0 0.0
    %6786 = vmatpush2.msra.mxu0 0.0
    %6787 = vmatprep.subr.mxu0 0.0
    %6788 = vmatpush2.msra.mxu0 0.0
    %6789 = vmatprep.subr.mxu0 0.0
    %6790 = vmatpush2.msra.mxu0 0.0
    %6791 = vmatprep.subr.mxu0 0.0
    %6792 = vmatpush2.msra.mxu0 0.0
    %6793 = vmatprep.subr.mxu0 0.0
    %6794 = vmatpush2.msra.mxu0 0.0
    %6795 = vmatprep.subr.mxu0 0.0
    %6796 = vmatpush2.msra.mxu0 0.0
    %6797 = vmatprep.subr.mxu0 0.0
    %6798 = vmatpush2.msra.mxu0 0.0
    %6799 = vmatprep.subr.mxu0 0.0
    %6800 = vmatpush2.msra.mxu0 0.0
    %6801 = vmatprep.subr.mxu0 0.0
    %6802 = vmatpush2.msra.mxu0 0.0
    %6803 = vmatprep.mubr.f32.mxu0 0.0
    %6804 = vmatmul.mubr.f32.gmra.mxu0 %v6461
    %v6805 = vpop.f32.mrf.mxu0
    %v6806 = vadd.f32 %v6717, %v6805
    %v6807 = vpop.f32.mrf.mxu0
    %v6808 = vadd.f32 %v6719, %v6807
    %6809 = vmatprep.mubr.f32.mxu0 0.0
    %6810 = vmatmul.mubr.f32.gmra.mxu0 %v6464
    %v6811 = vpop.f32.mrf.mxu0
    %v6812 = vadd.f32 %v6723, %v6811
    %v6813 = vpop.f32.mrf.mxu0
    %v6814 = vadd.f32 %v6725, %v6813
    %6815 = vmatprep.mubr.f32.mxu0 0.0
    %6816 = vmatmul.mubr.f32.gmra.mxu0 %v6467
    %v6817 = vpop.f32.mrf.mxu0
    %v6818 = vadd.f32 %v6729, %v6817
    %v6819 = vpop.f32.mrf.mxu0
    %v6820 = vadd.f32 %v6731, %v6819
    %6821 = vmatprep.mubr.f32.mxu0 0.0
    %6822 = vmatmul.mubr.f32.gmra.mxu0 %v6470
    %v6823 = vpop.f32.mrf.mxu0
    %v6824 = vadd.f32 %v6735, %v6823
    %v6825 = vpop.f32.mrf.mxu0
    %v6826 = vadd.f32 %v6737, %v6825
    %6827 = vdwg.mxu0
    %v6828 = vsub.f32 %v6806, %v6808
    %v6829 = vsub.f32 %v6812, %v6814
    %v6830 = vsub.f32 %v6818, %v6820
    %v6831 = vsub.f32 %v6824, %v6826
    %v6832 = vld [vmem:[#allocation7] sm:$0xff]
    %v6833 = vld [vmem:[#allocation7 + $0x8] sm:$0xff]
    %v6834 = vld [vmem:[#allocation7 + $0x10] sm:$0xff]
    %v6835 = vld [vmem:[#allocation7 + $0x18] sm:$0xff]
    %v6837 = vsel %vm6459, %v6832, 0
    %v6840 = vsel %vm6459, %v6833, 0
    %v6843 = vsel %vm6459, %v6834, 0
    %v6846 = vsel %vm6459, %v6835, 0
    %6848 = vmatprep.subr.mxu0 0.0
    %6849 = vmatpush1.msra.mxu0 0.0
    %6850 = vmatprep.subr.mxu0 0.0
    %6851 = vmatpush1.msra.mxu0 0.0
    %6852 = vmatprep.subr.mxu0 0.0
    %6853 = vmatpush1.msra.mxu0 0.0
    %6854 = vmatprep.subr.mxu0 0.0
    %6855 = vmatpush1.msra.mxu0 0.0
    %6856 = vmatprep.subr.mxu0 0.0
    %6857 = vmatpush1.msra.mxu0 0.0
    %6858 = vmatprep.subr.mxu0 0.0
    %6859 = vmatpush1.msra.mxu0 0.0
    %6860 = vmatprep.subr.mxu0 0.0
    %6861 = vmatpush1.msra.mxu0 0.0
    %6862 = vmatprep.subr.mxu0 0.0
    %6863 = vmatpush1.msra.mxu0 0.0
    %6864 = vmatprep.subr.mxu0 0.0
    %6865 = vmatpush1.msra.mxu0 0.0
    %6866 = vmatprep.subr.mxu0 0.0
    %6867 = vmatpush1.msra.mxu0 0.0
    %6868 = vmatprep.subr.mxu0 0.0
    %6869 = vmatpush1.msra.mxu0 0.0
    %6870 = vmatprep.subr.mxu0 0.0
    %6871 = vmatpush1.msra.mxu0 0.0
    %6872 = vmatprep.subr.mxu0 0.0
    %6873 = vmatpush1.msra.mxu0 %v6831
    %6874 = vmatprep.subr.mxu0 0.0
    %6875 = vmatpush1.msra.mxu0 %v6830
    %6876 = vmatprep.subr.mxu0 0.0
    %6877 = vmatpush1.msra.mxu0 %v6829
    %6878 = vmatprep.subr.mxu0 0.0
    %6879 = vmatpush1.msra.mxu0 %v6828
    %6880 = vmatprep.subr.mxu0 0.0
    %6881 = vmatpush2.msra.mxu0 0.0
    %6882 = vmatprep.subr.mxu0 0.0
    %6883 = vmatpush2.msra.mxu0 0.0
    %6884 = vmatprep.subr.mxu0 0.0
    %6885 = vmatpush2.msra.mxu0 0.0
    %6886 = vmatprep.subr.mxu0 0.0
    %6887 = vmatpush2.msra.mxu0 0.0
    %6888 = vmatprep.subr.mxu0 0.0
    %6889 = vmatpush2.msra.mxu0 0.0
    %6890 = vmatprep.subr.mxu0 0.0
    %6891 = vmatpush2.msra.mxu0 0.0
    %6892 = vmatprep.subr.mxu0 0.0
    %6893 = vmatpush2.msra.mxu0 0.0
    %6894 = vmatprep.subr.mxu0 0.0
    %6895 = vmatpush2.msra.mxu0 0.0
    %6896 = vmatprep.subr.mxu0 0.0
    %6897 = vmatpush2.msra.mxu0 0.0
    %6898 = vmatprep.subr.mxu0 0.0
    %6899 = vmatpush2.msra.mxu0 0.0
    %6900 = vmatprep.subr.mxu0 0.0
    %6901 = vmatpush2.msra.mxu0 0.0
    %6902 = vmatprep.subr.mxu0 0.0
    %6903 = vmatpush2.msra.mxu0 0.0
    %6904 = vmatprep.subr.mxu0 0.0
    %6905 = vmatpush2.msra.mxu0 0.0
    %6906 = vmatprep.subr.mxu0 0.0
    %6907 = vmatpush2.msra.mxu0 0.0
    %6908 = vmatprep.subr.mxu0 0.0
    %6909 = vmatpush2.msra.mxu0 0.0
    %6910 = vmatprep.subr.mxu0 0.0
    %6911 = vmatpush2.msra.mxu0 0.0
    %6912 = vmatprep.mubr.f32.mxu0 0.0
    %6913 = vmatmul.mubr.f32.gmra.mxu0 %v6837
    %v6914 = vpop.f32.mrf.mxu0
    %v6915 = vadd.f32 0.0, %v6914
    %v6916 = vpop.f32.mrf.mxu0
    %6917 = vmatprep.mubr.f32.mxu0 0.0
    %6918 = vmatmul.mubr.f32.gmra.mxu0 %v6840
    %v6919 = vpop.f32.mrf.mxu0
    %v6920 = vadd.f32 0.0, %v6919
    %v6921 = vpop.f32.mrf.mxu0
    %6922 = vmatprep.mubr.f32.mxu0 0.0
    %6923 = vmatmul.mubr.f32.gmra.mxu0 %v6843
    %v6924 = vpop.f32.mrf.mxu0
    %v6925 = vadd.f32 0.0, %v6924
    %v6926 = vpop.f32.mrf.mxu0
    %6927 = vmatprep.mubr.f32.mxu0 0.0
    %6928 = vmatmul.mubr.f32.gmra.mxu0 %v6846
    %v6929 = vpop.f32.mrf.mxu0
    %v6930 = vadd.f32 0.0, %v6929
    %v6931 = vpop.f32.mrf.mxu0
    %6932 = vdwg.mxu0
    %v6933 = vmul.f32 %v6915, %v6828
    %v6934 = vmul.f32 %v6920, %v6829
    %v6935 = vmul.f32 %v6925, %v6830
    %v6936 = vmul.f32 %v6930, %v6831
    %v6937 = vadd.f32 %v6933, %v6934
    %v6938 = vadd.f32 %v6937, %v6935
    %v6939 = vadd.f32 %v6938, %v6936
    %v6940 = vrot.slane %v6939, 4
    %v6941 = vadd.f32 %v6939, %v6940
    %v6942 = vrot.slane %v6941, 2
    %v6943 = vadd.f32 %v6941, %v6942
    %v6944 = vrot.slane %v6943, 1
    %v6945 = vadd.f32 %v6943, %v6944
    %6946 = vst [vmem:[%s9] sm:$0x1] %v6945
    // Predicated region
    $region54: #{forward.1} parent=1 // pred_check
      _
    $region55: #{forward.1} parent=1 // pred_check_branch
      %6948 = sbr.rel (0) target = $region57
    $region56: #{forward.1} parent=1 // pred_region
      _
    $region57: #{forward.1} parent=1 // pred_fallthru
      _
    // Predicated region
    $region58: #{forward.1} parent=1 // pred_check
      _
    $region59: #{forward.1} parent=1 // pred_check_branch
      %6950 = sbr.rel (0) target = $region61
    $region60: #{forward.1} parent=1 // pred_region
      _
    $region61: #{forward.1} parent=1 // pred_fallthru
      _
    %6951 = vsyncpa [#allocation3], 1
    %6952 = vsyncpa [#allocation5], 1
    %6953 = vsyncpa [#allocation8], 1

</llo_original>
